<compile_context>
chip_gen: v5e
topology: v5e:2x2
jax: 0.10.0
libtpu: 0.0.40
codegen_flags: <defaults>
</compile_context>

<pallas_src>
import functools

import jax
import jax.numpy as jnp
import numpy as np
from jax.experimental import pallas as pl
from jax.experimental.pallas import tpu as pltpu

X_DIM = 32       # x_dim   (positional-encoding width)
DIR_DIM = 16     # dir_dim (view-direction-encoding width)
W = 256          # hidden width
OUT_W = 128      # lane-dense packed output width
# Packed output lane layout (wrapper slices these):
#   0 alpha | 1 shininess | 2:5 ambient | 5:8 normal | 8:11 diffuse
#   | 11:14 specular | 14:17 rgb | 17:128 unused
_EPS = 1e-12
_EPS2 = _EPS * _EPS


def _round_up(n, m):
    return ((n + m - 1) // m) * m


# ----------------------------------------------------------------------------
# Pallas kernel: whole forward pass for one tile of tm points.
# ----------------------------------------------------------------------------
def nephong_kernel(
    # per-point inputs
    x_enc_ref, dir_enc_ref, x_ref, cam_ref, light_ref,
    # backbone weights (weight matrices bf16, biases f32)
    w0_ref, b0_ref,                       # layer 0:      (X_DIM, W), (1, W)
    wmidA_ref, bmidA_ref,                 # layers 1..4:  (4, W, W), (4, 1, W)
    wskip_x_ref, wskip_h_ref, bskip_ref,  # layer 5 split: (X_DIM,W),(W,W),(1,W)
    wmidB_ref, bmidB_ref,                 # layers 6..7:  (2, W, W), (2, 1, W)
    # heads (small heads lane-placed into OUT_W columns)
    wfeat_ref, bfeat_ref,                 # feature_linear: (W, W), (1, W)
    whead8_ref, bhead8_ref,               # alpha|shin|amb|normal at lanes 0..7: (W, OUT_W), (1, OUT_W)
    wdir_f_ref, wdir_d_ref, bdir_ref,     # dir_linears[0] split: (W,W//2),(DIR_DIM,W//2),(1,W//2)
    whead2_ref, bhead2_ref,               # diffuse|specular at lanes 8..13: (W//2, OUT_W), (1, OUT_W)
    # output (packed, lane-dense)
    out_ref,                              # (tm, OUT_W) f32
    *, ew_dtype,
):
    f32 = jnp.float32
    bf16 = jnp.bfloat16

    def mm(a, w):
        # bf16 MXU inputs, f32 accumulation.
        return jnp.dot(a, w, preferred_element_type=f32)

    def bias_relu(acc, b):
        # bias + ReLU in ew_dtype (bf16 on v6e/v7x halves VALU traffic; pass
        # f32 for v5e); result is bf16, fed straight to the next MXU matmul.
        h = jnp.maximum(acc.astype(ew_dtype) + b.astype(ew_dtype), 0)
        return h.astype(bf16)

    x_enc_b = x_enc_ref[...].astype(bf16)
    dir_enc_b = dir_enc_ref[...].astype(bf16)

    # ---------------- backbone MLP with skip concat after layer 4 -----------
    h = bias_relu(mm(x_enc_b, w0_ref[...]), b0_ref[...])
    for k in range(4):                                       # layers 1..4
        h = bias_relu(mm(h, wmidA_ref[k]), bmidA_ref[k])
    # layer 5: relu(cat([x_enc, h]) @ wskip + b) as split matmuls
    h = bias_relu(mm(x_enc_b, wskip_x_ref[...]) + mm(h, wskip_h_ref[...]),
                  bskip_ref[...])
    for k in range(2):                                       # layers 6..7
        h = bias_relu(mm(h, wmidB_ref[k]), bmidB_ref[k])

    # ---------------- heads: lane-placed small heads + feature --------------
    # whead8 already has [alpha|shin|ambient|normal] at columns 0..7 of OUT_W
    head_raw = mm(h, whead8_ref[...]) + bhead8_ref[...]      # (tm, OUT_W) f32
    feature = mm(h, wfeat_ref[...]) + bfeat_ref[...]         # (tm, W) f32

    # ---------------- view-direction branch ---------------------------------
    h2 = bias_relu(mm(feature.astype(bf16), wdir_f_ref[...])
                   + mm(dir_enc_b, wdir_d_ref[...]), bdir_ref[...])
    # whead2 already has [diffuse|specular] at columns 8..13 of OUT_W
    head_raw = head_raw + mm(h2, whead2_ref[...]) + bhead2_ref[...]

    # ---------------- single wide sigmoid + lane-mask select ----------------
    sg = jax.nn.sigmoid(head_raw)                            # (tm, OUT_W) f32
    lane = jax.lax.broadcasted_iota(jnp.int32, (1, OUT_W), 1)
    sig_lane = ((lane >= 2) & (lane < 5)) | ((lane >= 8) & (lane < 14))
    packed = jnp.where(sig_lane, sg, head_raw)
    # lanes: 0 alpha(raw) 1 shin(raw) 2:5 ambient 5:8 normal(raw)
    #        8:11 diffuse 11:14 specular, 14.. zero

    # ---------------- Phong shading (f32, column-slice dot products) --------
    def dot3(a, b):
        return (a[:, 0:1] * b[:, 0:1] + a[:, 1:2] * b[:, 1:2]
                + a[:, 2:3] * b[:, 2:3])

    def inv_norm(sq):            # 1 / max(||v||, eps)  via rsqrt on the EUP
        return jax.lax.rsqrt(jnp.maximum(sq, _EPS2))

    xyz = x_ref[...].astype(f32)
    v = xyz - cam_ref[...]                       # view_dir (un-normalized)
    l = xyz - light_ref[...]                     # light_dir (un-normalized)
    v = v * inv_norm(dot3(v, v))
    l = l * inv_norm(dot3(l, l))
    n = packed[:, 5:8]
    n = n * inv_norm(dot3(n, n))
    shin = sg[:, 1:2]                            # sigmoid(shininess)

    ndotl = dot3(n, l)
    diff = jnp.maximum(ndotl, 0.0)
    r = v - (2.0 * ndotl) * n                    # reflect dir, un-normalized
    # max(v . normalize(r), 0) == max(v . r, 0) / max(||r||, eps)
    spec = (jnp.maximum(dot3(v, r), 0.0) * inv_norm(dot3(r, r))) * shin

    rgb = packed[:, 2:5] + diff * packed[:, 8:11] + spec * packed[:, 11:14]

    # ---------------- stores: one full-width lane-dense store + rgb lanes ---
    out_ref[...] = packed
    out_ref[:, 14:17] = rgb


# ----------------------------------------------------------------------------
# Parameter packing (bf16 weights, split skip/dir, lane-placed small heads)
# ----------------------------------------------------------------------------
def pack_params(params):
    (w0, b0, wmidA, bmidA, wskip, bskip, wmidB, bmidB,
     whead1, bhead1, wfeat, bfeat, wdir, bdir, whead2, bhead2) = params
    bf16 = jnp.bfloat16
    f32 = jnp.float32

    def lane_place(w, b, col0):
        # Place the real head columns at output lanes [col0, col0+cols); all
        # other columns are exactly zero so the matmul output is lane-placed.
        cols = w.shape[1]
        wp = jnp.zeros((w.shape[0], OUT_W), f32).at[:, col0:col0 + cols].set(w)
        bp = jnp.zeros((1, OUT_W), f32).at[:, col0:col0 + cols].set(b)
        return wp.astype(bf16), bp

    whead8p, bhead8p = lane_place(whead1, bhead1, 0)   # alpha|shin|amb|normal -> 0..7
    whead2p, bhead2p = lane_place(whead2, bhead2, 8)   # diffuse|specular     -> 8..13

    return (
        w0.astype(bf16), b0,
        wmidA.astype(bf16), bmidA,
        wskip[:X_DIM].astype(bf16), wskip[X_DIM:].astype(bf16), bskip,
        wmidB.astype(bf16), bmidB,
        wfeat.astype(bf16), bfeat,
        whead8p, bhead8p,
        wdir[:W].astype(bf16), wdir[W:].astype(bf16), bdir,
        whead2p, bhead2p,
    )


# ----------------------------------------------------------------------------
# Row-tile selection: minimize padding + per-step overhead, keep grid >= 2 for
# mid-size M so both v7x TensorCores are used.
# ----------------------------------------------------------------------------
def _choose_tm(M, tm_max=1024):
    m8 = _round_up(max(int(M), 1), 8)
    if m8 <= 128:
        return m8                                   # tiny problem, single tile
    if m8 <= tm_max:
        return _round_up((m8 + 1) // 2, 8)          # two tiles, minimal padding
    best_tm, best_score = None, None
    for tm in range(256, tm_max + 1, 128):
        m_pad = _round_up(m8, tm)
        # padded rows + per-step overhead (~0.35us expressed in rows)
        score = m_pad + 128 * (m_pad // tm)
        if best_score is None or score < best_score:
            best_tm, best_score = tm, score
    return best_tm


# ----------------------------------------------------------------------------
# Wrapper
# ----------------------------------------------------------------------------
def nephong_forward(x_encoded, view_dir_encoded, x, cam_pos, light_pos,
                    params, *, tm=None, elementwise_bf16=True):
    # elementwise_bf16: bias+ReLU in bf16 (v6e/v7x). Set False on v5e.
    M = x_encoded.shape[0]
    f32 = jnp.float32

    if tm is None:
        tm = _choose_tm(M)
    else:
        tm = max(8, _round_up(int(tm), 8))
    M_pad = _round_up(max(M, 1), tm)
    if M_pad != M:
        pr = M_pad - M
        x_encoded = jnp.pad(x_encoded, ((0, pr), (0, 0)))
        view_dir_encoded = jnp.pad(view_dir_encoded, ((0, pr), (0, 0)))
        x = jnp.pad(x, ((0, pr), (0, 0)))

    cam = cam_pos[:3].reshape(1, 3).astype(f32)
    light = light_pos[:3].reshape(1, 3).astype(f32)
    packed_params = pack_params(params)

    def row_spec(c):
        return pl.BlockSpec((tm, c), lambda i: (i, 0))

    def full_spec(arr):
        nd = arr.ndim
        return pl.BlockSpec(arr.shape, lambda i, _nd=nd: (0,) * _nd)

    in_specs = ([row_spec(X_DIM), row_spec(DIR_DIM), row_spec(3),
                 full_spec(cam), full_spec(light)]
                + [full_spec(p) for p in packed_params])
    out_specs = pl.BlockSpec((tm, OUT_W), lambda i: (i, 0))
    out_shape = jax.ShapeDtypeStruct((M_pad, OUT_W), f32)

    # Advisory cost hint for XLA's scheduler.
    macs_pp = (X_DIM * W + 4 * W * W + (X_DIM + W) * W + 2 * W * W
               + W * W + W * OUT_W + (W + DIR_DIM) * (W // 2) + (W // 2) * OUT_W)
    weight_bytes = sum(int(np.prod(p.shape)) * p.dtype.itemsize
                       for p in packed_params)
    cost = pl.CostEstimate(
        flops=2 * macs_pp * M_pad,
        transcendentals=(OUT_W + 4) * M_pad,
        bytes_accessed=M_pad * (X_DIM + DIR_DIM + 3 + OUT_W) * 4
                       + weight_bytes + 24,
    )

    kernel = functools.partial(
        nephong_kernel,
        ew_dtype=jnp.bfloat16 if elementwise_bf16 else f32)

    packed_out = pl.pallas_call(
        kernel,
        out_shape=out_shape,
        grid_spec=pltpu.PrefetchScalarGridSpec(
            num_scalar_prefetch=0,
            grid=(M_pad // tm,),
            in_specs=in_specs,
            out_specs=out_specs,
        ),
        compiler_params=pltpu.CompilerParams(
            dimension_semantics=("parallel",),
            vmem_limit_bytes=32 * 1024 * 1024),
        cost_estimate=cost,
    )(x_encoded, view_dir_encoded, x, cam, light, *packed_params)

    packed_out = packed_out[:M]
    return {
        "alpha":     packed_out[:, 0:1],
        "shininess": packed_out[:, 1:2],
        "ambient":   packed_out[:, 2:5],
        "normal":    packed_out[:, 5:8],
        "diffuse":   packed_out[:, 8:11],
        "specular":  packed_out[:, 11:14],
        "rgb":       packed_out[:, 14:17],
    }


# ----------------------------------------------------------------------------
# Deterministic parameter init (matches the nn.Linear shapes of NePhong)
# ----------------------------------------------------------------------------
def init_params(key):
    ks = iter(jax.random.split(key, 64))

    def lin(din, dout):
        s = 1.0 / np.sqrt(din)
        w = jax.random.uniform(next(ks), (din, dout), jnp.float32, -s, s)
        b = jax.random.uniform(next(ks), (1, dout), jnp.float32, -s, s)
        return w, b

    w0, b0 = lin(X_DIM, W)
    wA, bA = zip(*(lin(W, W) for _ in range(4)))          # layers 1..4
    wmidA, bmidA = jnp.stack(wA), jnp.stack(bA)
    wskip, bskip = lin(X_DIM + W, W)                      # layer 5 (skip)
    wB, bB = zip(*(lin(W, W) for _ in range(2)))          # layers 6..7
    wmidB, bmidB = jnp.stack(wB), jnp.stack(bB)

    wa, ba = lin(W, 1)      # alpha_linear
    ws, bs = lin(W, 1)      # shininess_linear
    wam, bam = lin(W, 3)    # ambient_linear
    wn, bn = lin(W, 3)      # normal_linear
    whead1 = jnp.concatenate([wa, ws, wam, wn], axis=1)   # (W, 8)
    bhead1 = jnp.concatenate([ba, bs, bam, bn], axis=1)   # (1, 8)

    wfeat, bfeat = lin(W, W)                              # feature_linear
    wdir, bdir = lin(W + DIR_DIM, W // 2)                 # dir_linears[0]
    wd, bd = lin(W // 2, 3)                               # diffuse_linear
    wsp, bsp = lin(W // 2, 3)                             # specular_linear
    whead2 = jnp.concatenate([wd, wsp], axis=1)           # (W//2, 6)
    bhead2 = jnp.concatenate([bd, bsp], axis=1)           # (1, 6)

    return (w0, b0, wmidA, bmidA, wskip, bskip, wmidB, bmidB,
            whead1, bhead1, wfeat, bfeat, wdir, bdir, whead2, bhead2)


# ----------------------------------------------------------------------------
# Pure-JAX reference (mirrors the PyTorch forward; matmul_dtype / ew_dtype let
# us match the kernel's bf16-MXU / bf16-elementwise precision for tight tols)
# ----------------------------------------------------------------------------
def _normalize(v, eps=1e-12):
    n = jnp.sqrt(jnp.sum(v * v, axis=-1, keepdims=True))
    return v / jnp.maximum(n, eps)


def nephong_ref(x_encoded, view_dir_encoded, x, cam_pos, light_pos, params,
                matmul_dtype=jnp.float32, ew_dtype=jnp.float32):
    (w0, b0, wmidA, bmidA, wskip, bskip, wmidB, bmidB,
     whead1, bhead1, wfeat, bfeat, wdir, bdir, whead2, bhead2) = params

    def mm(a, w):
        return jnp.dot(a.astype(matmul_dtype), w.astype(matmul_dtype),
                       preferred_element_type=jnp.float32)

    def act(acc, b):
        return jnp.maximum(acc.astype(ew_dtype) + b.astype(ew_dtype),
                           0).astype(jnp.float32)

    h = act(mm(x_encoded, w0), b0)
    for k in range(4):
        h = act(mm(h, wmidA[k]), bmidA[k])
    h = jnp.concatenate([x_encoded, h], -1)               # skip concat
    h = act(mm(h, wskip), bskip)
    for k in range(2):
        h = act(mm(h, wmidB[k]), bmidB[k])
    h8 = mm(h, whead1) + bhead1
    alpha, shininess = h8[:, 0:1], h8[:, 1:2]
    ambient = jax.nn.sigmoid(h8[:, 2:5])
    normal = h8[:, 5:8]
    feature = mm(h, wfeat) + bfeat
    h2 = act(mm(jnp.concatenate([feature, view_dir_encoded], -1), wdir), bdir)
    h6 = mm(h2, whead2) + bhead2
    diffuse = jax.nn.sigmoid(h6[:, 0:3])
    specular = jax.nn.sigmoid(h6[:, 3:6])

    view_dir = _normalize(x - cam_pos[:3].reshape(1, 3))
    light_dir = _normalize(x - light_pos[:3].reshape(1, 3))
    n = _normalize(normal)
    shin = jax.nn.sigmoid(shininess)
    ndotl = jnp.sum(n * light_dir, -1, keepdims=True)
    diff = jnp.maximum(ndotl, 0.0)
    reflect = _normalize(view_dir - 2.0 * ndotl * n)
    spec = jnp.maximum(jnp.sum(view_dir * reflect, -1, keepdims=True), 0.0) * shin
    rgb = ambient + diff * diffuse + spec * specular
    return dict(alpha=alpha, rgb=rgb, diffuse=diffuse, specular=specular,
                ambient=ambient, shininess=shininess, normal=normal)


if __name__ == "__main__":
    B, N = 2, 64                      # M = B*N = 128 points (small demo)
    key = jax.random.PRNGKey(0)
    kp, k1, k2, k3, k4, k5 = jax.random.split(key, 6)
    params = init_params(kp)

    x_encoded = jax.random.normal(k1, (B, N, X_DIM), jnp.float32)
    view_dir_encoded = jax.random.normal(k2, (B, N, DIR_DIM), jnp.float32)
    x = jax.random.normal(k3, (B, N, 3), jnp.float32)
    cam_pos = jax.random.normal(k4, (3,), jnp.float32) * 2.0
    light_pos = jax.random.normal(k5, (3,), jnp.float32) * 2.0

    M = B * N
    out = nephong_forward(
        x_encoded.reshape(M, X_DIM),
        view_dir_encoded.reshape(M, DIR_DIM),
        x.reshape(M, 3),
        cam_pos, light_pos, params,
        elementwise_bf16=True)        # set False when running on v5e
    jax.block_until_ready(out)

    # Reference mirrors the PyTorch forward; matmul/elementwise precision
    # matched to the kernel so tolerances stay tight.
    ref = nephong_ref(
        x_encoded.reshape(M, X_DIM),
        view_dir_encoded.reshape(M, DIR_DIM),
        x.reshape(M, 3),
        cam_pos, light_pos, params,
        matmul_dtype=jnp.bfloat16, ew_dtype=jnp.bfloat16)
    for name in out:
        np.testing.assert_allclose(np.asarray(out[name]), np.asarray(ref[name]),
                                   rtol=5e-3, atol=5e-3)

    # restore PyTorch-style [B, N, C] outputs
    out_bnc = {k: v.reshape(B, N, -1) for k, v in out.items()}
    jax.block_until_ready(out_bnc)
    print("KERNEL_OK")
</pallas_src>

<mosaic_0001>
module attributes {stable_mosaic.version = 11 : i64} {
  func.func @nephong_kernel(%arg0: i32, %arg1: memref<128x32xf32, #tpu.memory_space<vmem>>, %arg2: memref<128x16xf32, #tpu.memory_space<vmem>>, %arg3: memref<128x3xf32, #tpu.memory_space<vmem>>, %arg4: memref<1x3xf32, #tpu.memory_space<vmem>>, %arg5: memref<1x3xf32, #tpu.memory_space<vmem>>, %arg6: memref<32x256xbf16, #tpu.memory_space<vmem>>, %arg7: memref<1x256xf32, #tpu.memory_space<vmem>>, %arg8: memref<4x256x256xbf16, #tpu.memory_space<vmem>>, %arg9: memref<4x1x256xf32, #tpu.memory_space<vmem>>, %arg10: memref<32x256xbf16, #tpu.memory_space<vmem>>, %arg11: memref<256x256xbf16, #tpu.memory_space<vmem>>, %arg12: memref<1x256xf32, #tpu.memory_space<vmem>>, %arg13: memref<2x256x256xbf16, #tpu.memory_space<vmem>>, %arg14: memref<2x1x256xf32, #tpu.memory_space<vmem>>, %arg15: memref<256x256xbf16, #tpu.memory_space<vmem>>, %arg16: memref<1x256xf32, #tpu.memory_space<vmem>>, %arg17: memref<256x128xbf16, #tpu.memory_space<vmem>>, %arg18: memref<1x128xf32, #tpu.memory_space<vmem>>, %arg19: memref<256x128xbf16, #tpu.memory_space<vmem>>, %arg20: memref<16x128xbf16, #tpu.memory_space<vmem>>, %arg21: memref<1x128xf32, #tpu.memory_space<vmem>>, %arg22: memref<128x128xbf16, #tpu.memory_space<vmem>>, %arg23: memref<1x128xf32, #tpu.memory_space<vmem>>, %arg24: memref<128x128xf32, #tpu.memory_space<vmem>>) attributes {dimension_semantics = [#tpu.dimension_semantics<parallel>], iteration_bounds = array<i64: 1>, scalar_prefetch = 0 : i64, scratch_operands = 0 : i64, tpu.core_type = #tpu.core_type<tc>, window_params = [{transform_indices = @transform_0, window_bounds = array<i64: 128, 32>}, {transform_indices = @transform_1, window_bounds = array<i64: 128, 16>}, {transform_indices = @transform_2, window_bounds = array<i64: 128, 3>}, {pipeline_mode = #tpu.pipeline_mode<synchronous>, transform_indices = @transform_3, window_bounds = array<i64: 1, 3>}, {pipeline_mode = #tpu.pipeline_mode<synchronous>, transform_indices = @transform_4, window_bounds = array<i64: 1, 3>}, {pipeline_mode = #tpu.pipeline_mode<synchronous>, transform_indices = @transform_5, window_bounds = array<i64: 32, 256>}, {pipeline_mode = #tpu.pipeline_mode<synchronous>, transform_indices = @transform_6, window_bounds = array<i64: 1, 256>}, {pipeline_mode = #tpu.pipeline_mode<synchronous>, transform_indices = @transform_7, window_bounds = array<i64: 4, 256, 256>}, {pipeline_mode = #tpu.pipeline_mode<synchronous>, transform_indices = @transform_8, window_bounds = array<i64: 4, 1, 256>}, {pipeline_mode = #tpu.pipeline_mode<synchronous>, transform_indices = @transform_9, window_bounds = array<i64: 32, 256>}, {pipeline_mode = #tpu.pipeline_mode<synchronous>, transform_indices = @transform_10, window_bounds = array<i64: 256, 256>}, {pipeline_mode = #tpu.pipeline_mode<synchronous>, transform_indices = @transform_11, window_bounds = array<i64: 1, 256>}, {pipeline_mode = #tpu.pipeline_mode<synchronous>, transform_indices = @transform_12, window_bounds = array<i64: 2, 256, 256>}, {pipeline_mode = #tpu.pipeline_mode<synchronous>, transform_indices = @transform_13, window_bounds = array<i64: 2, 1, 256>}, {pipeline_mode = #tpu.pipeline_mode<synchronous>, transform_indices = @transform_14, window_bounds = array<i64: 256, 256>}, {pipeline_mode = #tpu.pipeline_mode<synchronous>, transform_indices = @transform_15, window_bounds = array<i64: 1, 256>}, {pipeline_mode = #tpu.pipeline_mode<synchronous>, transform_indices = @transform_16, window_bounds = array<i64: 256, 128>}, {pipeline_mode = #tpu.pipeline_mode<synchronous>, transform_indices = @transform_17, window_bounds = array<i64: 1, 128>}, {pipeline_mode = #tpu.pipeline_mode<synchronous>, transform_indices = @transform_18, window_bounds = array<i64: 256, 128>}, {pipeline_mode = #tpu.pipeline_mode<synchronous>, transform_indices = @transform_19, window_bounds = array<i64: 16, 128>}, {pipeline_mode = #tpu.pipeline_mode<synchronous>, transform_indices = @transform_20, window_bounds = array<i64: 1, 128>}, {pipeline_mode = #tpu.pipeline_mode<synchronous>, transform_indices = @transform_21, window_bounds = array<i64: 128, 128>}, {pipeline_mode = #tpu.pipeline_mode<synchronous>, transform_indices = @transform_22, window_bounds = array<i64: 1, 128>}, {transform_indices = @transform_23, window_bounds = array<i64: 128, 128>}]} {
    %c0 = arith.constant 0 : index
    %c0_0 = arith.constant 0 : index
    %0 = vector.load %arg1[%c0, %c0_0] : memref<128x32xf32, #tpu.memory_space<vmem>>, vector<128x32xf32>
    %1 = arith.truncf %0 : vector<128x32xf32> to vector<128x32xbf16>
    %c0_1 = arith.constant 0 : index
    %c0_2 = arith.constant 0 : index
    %2 = vector.load %arg2[%c0_1, %c0_2] : memref<128x16xf32, #tpu.memory_space<vmem>>, vector<128x16xf32>
    %3 = arith.truncf %2 : vector<128x16xf32> to vector<128x16xbf16>
    %c0_3 = arith.constant 0 : index
    %c0_4 = arith.constant 0 : index
    %4 = vector.load %arg6[%c0_3, %c0_4] : memref<32x256xbf16, #tpu.memory_space<vmem>>, vector<32x256xbf16>
    %cst = arith.constant dense<0.000000e+00> : vector<128x256xf32>
    %5 = tpu.matmul %1, %4, %cst {dimension_numbers = #tpu.dot_dimension_numbers<[1], [0], [0], [1], [0, 0, 1, 1], [], []>} : vector<128x32xbf16>, vector<32x256xbf16>, vector<128x256xf32> -> vector<128x256xf32>
    %c0_5 = arith.constant 0 : index
    %c0_6 = arith.constant 0 : index
    %6 = vector.load %arg7[%c0_5, %c0_6] : memref<1x256xf32, #tpu.memory_space<vmem>>, vector<1x256xf32>
    %7 = arith.truncf %5 : vector<128x256xf32> to vector<128x256xbf16>
    %8 = arith.truncf %6 : vector<1x256xf32> to vector<1x256xbf16>
    %9 = vector.broadcast %8 : vector<1x256xbf16> to vector<128x256xbf16>
    %10 = arith.addf %7, %9 : vector<128x256xbf16>
    %cst_7 = arith.constant 0.000000e+00 : bf16
    %11 = vector.broadcast %cst_7 : bf16 to vector<128x256xbf16>
    %12 = arith.maximumf %10, %11 : vector<128x256xbf16>
    %c0_8 = arith.constant 0 : index
    %c0_9 = arith.constant 0 : index
    %c0_10 = arith.constant 0 : index
    %13 = vector.load %arg8[%c0_8, %c0_9, %c0_10] : memref<4x256x256xbf16, #tpu.memory_space<vmem>>, vector<1x256x256xbf16>
    %14 = vector.shape_cast %13 : vector<1x256x256xbf16> to vector<256x256xbf16>
    %cst_11 = arith.constant dense<0.000000e+00> : vector<128x256xf32>
    %15 = tpu.matmul %12, %14, %cst_11 {dimension_numbers = #tpu.dot_dimension_numbers<[1], [0], [0], [1], [0, 0, 1, 1], [], []>} : vector<128x256xbf16>, vector<256x256xbf16>, vector<128x256xf32> -> vector<128x256xf32>
    %c0_12 = arith.constant 0 : index
    %c0_13 = arith.constant 0 : index
    %c0_14 = arith.constant 0 : index
    %16 = vector.load %arg9[%c0_12, %c0_13, %c0_14] : memref<4x1x256xf32, #tpu.memory_space<vmem>>, vector<1x1x256xf32>
    %17 = vector.shape_cast %16 : vector<1x1x256xf32> to vector<1x256xf32>
    %18 = arith.truncf %15 : vector<128x256xf32> to vector<128x256xbf16>
    %19 = arith.truncf %17 : vector<1x256xf32> to vector<1x256xbf16>
    %20 = vector.broadcast %19 : vector<1x256xbf16> to vector<128x256xbf16>
    %21 = arith.addf %18, %20 : vector<128x256xbf16>
    %cst_15 = arith.constant 0.000000e+00 : bf16
    %22 = vector.broadcast %cst_15 : bf16 to vector<128x256xbf16>
    %23 = arith.maximumf %21, %22 : vector<128x256xbf16>
    %c1 = arith.constant 1 : index
    %c0_16 = arith.constant 0 : index
    %c0_17 = arith.constant 0 : index
    %24 = vector.load %arg8[%c1, %c0_16, %c0_17] : memref<4x256x256xbf16, #tpu.memory_space<vmem>>, vector<1x256x256xbf16>
    %25 = vector.shape_cast %24 : vector<1x256x256xbf16> to vector<256x256xbf16>
    %cst_18 = arith.constant dense<0.000000e+00> : vector<128x256xf32>
    %26 = tpu.matmul %23, %25, %cst_18 {dimension_numbers = #tpu.dot_dimension_numbers<[1], [0], [0], [1], [0, 0, 1, 1], [], []>} : vector<128x256xbf16>, vector<256x256xbf16>, vector<128x256xf32> -> vector<128x256xf32>
    %c1_19 = arith.constant 1 : index
    %c0_20 = arith.constant 0 : index
    %c0_21 = arith.constant 0 : index
    %27 = vector.load %arg9[%c1_19, %c0_20, %c0_21] : memref<4x1x256xf32, #tpu.memory_space<vmem>>, vector<1x1x256xf32>
    %28 = vector.shape_cast %27 : vector<1x1x256xf32> to vector<1x256xf32>
    %29 = arith.truncf %26 : vector<128x256xf32> to vector<128x256xbf16>
    %30 = arith.truncf %28 : vector<1x256xf32> to vector<1x256xbf16>
    %31 = vector.broadcast %30 : vector<1x256xbf16> to vector<128x256xbf16>
    %32 = arith.addf %29, %31 : vector<128x256xbf16>
    %cst_22 = arith.constant 0.000000e+00 : bf16
    %33 = vector.broadcast %cst_22 : bf16 to vector<128x256xbf16>
    %34 = arith.maximumf %32, %33 : vector<128x256xbf16>
    %c2 = arith.constant 2 : index
    %c0_23 = arith.constant 0 : index
    %c0_24 = arith.constant 0 : index
    %35 = vector.load %arg8[%c2, %c0_23, %c0_24] : memref<4x256x256xbf16, #tpu.memory_space<vmem>>, vector<1x256x256xbf16>
    %36 = vector.shape_cast %35 : vector<1x256x256xbf16> to vector<256x256xbf16>
    %cst_25 = arith.constant dense<0.000000e+00> : vector<128x256xf32>
    %37 = tpu.matmul %34, %36, %cst_25 {dimension_numbers = #tpu.dot_dimension_numbers<[1], [0], [0], [1], [0, 0, 1, 1], [], []>} : vector<128x256xbf16>, vector<256x256xbf16>, vector<128x256xf32> -> vector<128x256xf32>
    %c2_26 = arith.constant 2 : index
    %c0_27 = arith.constant 0 : index
    %c0_28 = arith.constant 0 : index
    %38 = vector.load %arg9[%c2_26, %c0_27, %c0_28] : memref<4x1x256xf32, #tpu.memory_space<vmem>>, vector<1x1x256xf32>
    %39 = vector.shape_cast %38 : vector<1x1x256xf32> to vector<1x256xf32>
    %40 = arith.truncf %37 : vector<128x256xf32> to vector<128x256xbf16>
    %41 = arith.truncf %39 : vector<1x256xf32> to vector<1x256xbf16>
    %42 = vector.broadcast %41 : vector<1x256xbf16> to vector<128x256xbf16>
    %43 = arith.addf %40, %42 : vector<128x256xbf16>
    %cst_29 = arith.constant 0.000000e+00 : bf16
    %44 = vector.broadcast %cst_29 : bf16 to vector<128x256xbf16>
    %45 = arith.maximumf %43, %44 : vector<128x256xbf16>
    %c3 = arith.constant 3 : index
    %c0_30 = arith.constant 0 : index
    %c0_31 = arith.constant 0 : index
    %46 = vector.load %arg8[%c3, %c0_30, %c0_31] : memref<4x256x256xbf16, #tpu.memory_space<vmem>>, vector<1x256x256xbf16>
    %47 = vector.shape_cast %46 : vector<1x256x256xbf16> to vector<256x256xbf16>
    %cst_32 = arith.constant dense<0.000000e+00> : vector<128x256xf32>
    %48 = tpu.matmul %45, %47, %cst_32 {dimension_numbers = #tpu.dot_dimension_numbers<[1], [0], [0], [1], [0, 0, 1, 1], [], []>} : vector<128x256xbf16>, vector<256x256xbf16>, vector<128x256xf32> -> vector<128x256xf32>
    %c3_33 = arith.constant 3 : index
    %c0_34 = arith.constant 0 : index
    %c0_35 = arith.constant 0 : index
    %49 = vector.load %arg9[%c3_33, %c0_34, %c0_35] : memref<4x1x256xf32, #tpu.memory_space<vmem>>, vector<1x1x256xf32>
    %50 = vector.shape_cast %49 : vector<1x1x256xf32> to vector<1x256xf32>
    %51 = arith.truncf %48 : vector<128x256xf32> to vector<128x256xbf16>
    %52 = arith.truncf %50 : vector<1x256xf32> to vector<1x256xbf16>
    %53 = vector.broadcast %52 : vector<1x256xbf16> to vector<128x256xbf16>
    %54 = arith.addf %51, %53 : vector<128x256xbf16>
    %cst_36 = arith.constant 0.000000e+00 : bf16
    %55 = vector.broadcast %cst_36 : bf16 to vector<128x256xbf16>
    %56 = arith.maximumf %54, %55 : vector<128x256xbf16>
    %c0_37 = arith.constant 0 : index
    %c0_38 = arith.constant 0 : index
    %57 = vector.load %arg10[%c0_37, %c0_38] : memref<32x256xbf16, #tpu.memory_space<vmem>>, vector<32x256xbf16>
    %cst_39 = arith.constant dense<0.000000e+00> : vector<128x256xf32>
    %58 = tpu.matmul %1, %57, %cst_39 {dimension_numbers = #tpu.dot_dimension_numbers<[1], [0], [0], [1], [0, 0, 1, 1], [], []>} : vector<128x32xbf16>, vector<32x256xbf16>, vector<128x256xf32> -> vector<128x256xf32>
    %c0_40 = arith.constant 0 : index
    %c0_41 = arith.constant 0 : index
    %59 = vector.load %arg11[%c0_40, %c0_41] : memref<256x256xbf16, #tpu.memory_space<vmem>>, vector<256x256xbf16>
    %cst_42 = arith.constant dense<0.000000e+00> : vector<128x256xf32>
    %60 = tpu.matmul %56, %59, %cst_42 {dimension_numbers = #tpu.dot_dimension_numbers<[1], [0], [0], [1], [0, 0, 1, 1], [], []>} : vector<128x256xbf16>, vector<256x256xbf16>, vector<128x256xf32> -> vector<128x256xf32>
    %61 = arith.addf %58, %60 : vector<128x256xf32>
    %c0_43 = arith.constant 0 : index
    %c0_44 = arith.constant 0 : index
    %62 = vector.load %arg12[%c0_43, %c0_44] : memref<1x256xf32, #tpu.memory_space<vmem>>, vector<1x256xf32>
    %63 = arith.truncf %61 : vector<128x256xf32> to vector<128x256xbf16>
    %64 = arith.truncf %62 : vector<1x256xf32> to vector<1x256xbf16>
    %65 = vector.broadcast %64 : vector<1x256xbf16> to vector<128x256xbf16>
    %66 = arith.addf %63, %65 : vector<128x256xbf16>
    %cst_45 = arith.constant 0.000000e+00 : bf16
    %67 = vector.broadcast %cst_45 : bf16 to vector<128x256xbf16>
    %68 = arith.maximumf %66, %67 : vector<128x256xbf16>
    %c0_46 = arith.constant 0 : index
    %c0_47 = arith.constant 0 : index
    %c0_48 = arith.constant 0 : index
    %69 = vector.load %arg13[%c0_46, %c0_47, %c0_48] : memref<2x256x256xbf16, #tpu.memory_space<vmem>>, vector<1x256x256xbf16>
    %70 = vector.shape_cast %69 : vector<1x256x256xbf16> to vector<256x256xbf16>
    %cst_49 = arith.constant dense<0.000000e+00> : vector<128x256xf32>
    %71 = tpu.matmul %68, %70, %cst_49 {dimension_numbers = #tpu.dot_dimension_numbers<[1], [0], [0], [1], [0, 0, 1, 1], [], []>} : vector<128x256xbf16>, vector<256x256xbf16>, vector<128x256xf32> -> vector<128x256xf32>
    %c0_50 = arith.constant 0 : index
    %c0_51 = arith.constant 0 : index
    %c0_52 = arith.constant 0 : index
    %72 = vector.load %arg14[%c0_50, %c0_51, %c0_52] : memref<2x1x256xf32, #tpu.memory_space<vmem>>, vector<1x1x256xf32>
    %73 = vector.shape_cast %72 : vector<1x1x256xf32> to vector<1x256xf32>
    %74 = arith.truncf %71 : vector<128x256xf32> to vector<128x256xbf16>
    %75 = arith.truncf %73 : vector<1x256xf32> to vector<1x256xbf16>
    %76 = vector.broadcast %75 : vector<1x256xbf16> to vector<128x256xbf16>
    %77 = arith.addf %74, %76 : vector<128x256xbf16>
    %cst_53 = arith.constant 0.000000e+00 : bf16
    %78 = vector.broadcast %cst_53 : bf16 to vector<128x256xbf16>
    %79 = arith.maximumf %77, %78 : vector<128x256xbf16>
    %c1_54 = arith.constant 1 : index
    %c0_55 = arith.constant 0 : index
    %c0_56 = arith.constant 0 : index
    %80 = vector.load %arg13[%c1_54, %c0_55, %c0_56] : memref<2x256x256xbf16, #tpu.memory_space<vmem>>, vector<1x256x256xbf16>
    %81 = vector.shape_cast %80 : vector<1x256x256xbf16> to vector<256x256xbf16>
    %cst_57 = arith.constant dense<0.000000e+00> : vector<128x256xf32>
    %82 = tpu.matmul %79, %81, %cst_57 {dimension_numbers = #tpu.dot_dimension_numbers<[1], [0], [0], [1], [0, 0, 1, 1], [], []>} : vector<128x256xbf16>, vector<256x256xbf16>, vector<128x256xf32> -> vector<128x256xf32>
    %c1_58 = arith.constant 1 : index
    %c0_59 = arith.constant 0 : index
    %c0_60 = arith.constant 0 : index
    %83 = vector.load %arg14[%c1_58, %c0_59, %c0_60] : memref<2x1x256xf32, #tpu.memory_space<vmem>>, vector<1x1x256xf32>
    %84 = vector.shape_cast %83 : vector<1x1x256xf32> to vector<1x256xf32>
    %85 = arith.truncf %82 : vector<128x256xf32> to vector<128x256xbf16>
    %86 = arith.truncf %84 : vector<1x256xf32> to vector<1x256xbf16>
    %87 = vector.broadcast %86 : vector<1x256xbf16> to vector<128x256xbf16>
    %88 = arith.addf %85, %87 : vector<128x256xbf16>
    %cst_61 = arith.constant 0.000000e+00 : bf16
    %89 = vector.broadcast %cst_61 : bf16 to vector<128x256xbf16>
    %90 = arith.maximumf %88, %89 : vector<128x256xbf16>
    %c0_62 = arith.constant 0 : index
    %c0_63 = arith.constant 0 : index
    %91 = vector.load %arg17[%c0_62, %c0_63] : memref<256x128xbf16, #tpu.memory_space<vmem>>, vector<256x128xbf16>
    %cst_64 = arith.constant dense<0.000000e+00> : vector<128x128xf32>
    %92 = tpu.matmul %90, %91, %cst_64 {dimension_numbers = #tpu.dot_dimension_numbers<[1], [0], [0], [1], [0, 0, 1, 1], [], []>} : vector<128x256xbf16>, vector<256x128xbf16>, vector<128x128xf32> -> vector<128x128xf32>
    %c0_65 = arith.constant 0 : index
    %c0_66 = arith.constant 0 : index
    %93 = vector.load %arg18[%c0_65, %c0_66] : memref<1x128xf32, #tpu.memory_space<vmem>>, vector<1x128xf32>
    %94 = vector.broadcast %93 : vector<1x128xf32> to vector<128x128xf32>
    %95 = arith.addf %92, %94 : vector<128x128xf32>
    %c0_67 = arith.constant 0 : index
    %c0_68 = arith.constant 0 : index
    %96 = vector.load %arg15[%c0_67, %c0_68] : memref<256x256xbf16, #tpu.memory_space<vmem>>, vector<256x256xbf16>
    %cst_69 = arith.constant dense<0.000000e+00> : vector<128x256xf32>
    %97 = tpu.matmul %90, %96, %cst_69 {dimension_numbers = #tpu.dot_dimension_numbers<[1], [0], [0], [1], [0, 0, 1, 1], [], []>} : vector<128x256xbf16>, vector<256x256xbf16>, vector<128x256xf32> -> vector<128x256xf32>
    %c0_70 = arith.constant 0 : index
    %c0_71 = arith.constant 0 : index
    %98 = vector.load %arg16[%c0_70, %c0_71] : memref<1x256xf32, #tpu.memory_space<vmem>>, vector<1x256xf32>
    %99 = vector.broadcast %98 : vector<1x256xf32> to vector<128x256xf32>
    %100 = arith.addf %97, %99 : vector<128x256xf32>
    %101 = arith.truncf %100 : vector<128x256xf32> to vector<128x256xbf16>
    %c0_72 = arith.constant 0 : index
    %c0_73 = arith.constant 0 : index
    %102 = vector.load %arg19[%c0_72, %c0_73] : memref<256x128xbf16, #tpu.memory_space<vmem>>, vector<256x128xbf16>
    %cst_74 = arith.constant dense<0.000000e+00> : vector<128x128xf32>
    %103 = tpu.matmul %101, %102, %cst_74 {dimension_numbers = #tpu.dot_dimension_numbers<[1], [0], [0], [1], [0, 0, 1, 1], [], []>} : vector<128x256xbf16>, vector<256x128xbf16>, vector<128x128xf32> -> vector<128x128xf32>
    %c0_75 = arith.constant 0 : index
    %c0_76 = arith.constant 0 : index
    %104 = vector.load %arg20[%c0_75, %c0_76] : memref<16x128xbf16, #tpu.memory_space<vmem>>, vector<16x128xbf16>
    %cst_77 = arith.constant dense<0.000000e+00> : vector<128x128xf32>
    %105 = tpu.matmul %3, %104, %cst_77 {dimension_numbers = #tpu.dot_dimension_numbers<[1], [0], [0], [1], [0, 0, 1, 1], [], []>} : vector<128x16xbf16>, vector<16x128xbf16>, vector<128x128xf32> -> vector<128x128xf32>
    %106 = arith.addf %103, %105 : vector<128x128xf32>
    %c0_78 = arith.constant 0 : index
    %c0_79 = arith.constant 0 : index
    %107 = vector.load %arg21[%c0_78, %c0_79] : memref<1x128xf32, #tpu.memory_space<vmem>>, vector<1x128xf32>
    %108 = arith.truncf %106 : vector<128x128xf32> to vector<128x128xbf16>
    %109 = arith.truncf %107 : vector<1x128xf32> to vector<1x128xbf16>
    %110 = vector.broadcast %109 : vector<1x128xbf16> to vector<128x128xbf16>
    %111 = arith.addf %108, %110 : vector<128x128xbf16>
    %cst_80 = arith.constant 0.000000e+00 : bf16
    %112 = vector.broadcast %cst_80 : bf16 to vector<128x128xbf16>
    %113 = arith.maximumf %111, %112 : vector<128x128xbf16>
    %c0_81 = arith.constant 0 : index
    %c0_82 = arith.constant 0 : index
    %114 = vector.load %arg22[%c0_81, %c0_82] : memref<128x128xbf16, #tpu.memory_space<vmem>>, vector<128x128xbf16>
    %cst_83 = arith.constant dense<0.000000e+00> : vector<128x128xf32>
    %115 = tpu.matmul %113, %114, %cst_83 {dimension_numbers = #tpu.dot_dimension_numbers<[1], [0], [0], [1], [0, 0, 1, 1], [], []>} : vector<128x128xbf16>, vector<128x128xbf16>, vector<128x128xf32> -> vector<128x128xf32>
    %116 = arith.addf %95, %115 : vector<128x128xf32>
    %c0_84 = arith.constant 0 : index
    %c0_85 = arith.constant 0 : index
    %117 = vector.load %arg23[%c0_84, %c0_85] : memref<1x128xf32, #tpu.memory_space<vmem>>, vector<1x128xf32>
    %118 = vector.broadcast %117 : vector<1x128xf32> to vector<128x128xf32>
    %119 = arith.addf %116, %118 : vector<128x128xf32>
    %120 = arith.negf %119 : vector<128x128xf32>
    %121 = math.exp %120 : vector<128x128xf32>
    %cst_86 = arith.constant 1.000000e+00 : f32
    %122 = vector.broadcast %cst_86 : f32 to vector<128x128xf32>
    %123 = arith.addf %122, %121 : vector<128x128xf32>
    %124 = arith.divf %122, %123 : vector<128x128xf32>
    %125 = tpu.iota {dimensions = array<i32: 1>} : vector<1x128xi32>
    %c2_i32 = arith.constant 2 : i32
    %126 = vector.broadcast %c2_i32 : i32 to vector<1x128xi32>
    %127 = arith.cmpi sge, %125, %126 : vector<1x128xi32>
    %c5_i32 = arith.constant 5 : i32
    %128 = vector.broadcast %c5_i32 : i32 to vector<1x128xi32>
    %129 = arith.cmpi slt, %125, %128 : vector<1x128xi32>
    %130 = arith.andi %127, %129 : vector<1x128xi1>
    %c8_i32 = arith.constant 8 : i32
    %131 = vector.broadcast %c8_i32 : i32 to vector<1x128xi32>
    %132 = arith.cmpi sge, %125, %131 : vector<1x128xi32>
    %c14_i32 = arith.constant 14 : i32
    %133 = vector.broadcast %c14_i32 : i32 to vector<1x128xi32>
    %134 = arith.cmpi slt, %125, %133 : vector<1x128xi32>
    %135 = arith.andi %132, %134 : vector<1x128xi1>
    %136 = arith.ori %130, %135 : vector<1x128xi1>
    %137 = vector.shape_cast %136 : vector<1x128xi1> to vector<1x128xi1>
    %138 = vector.broadcast %137 : vector<1x128xi1> to vector<128x128xi1>
    %139 = arith.select %138, %124, %119 : vector<128x128xi1>, vector<128x128xf32>
    %c0_87 = arith.constant 0 : index
    %c0_88 = arith.constant 0 : index
    %140 = vector.load %arg3[%c0_87, %c0_88] : memref<128x3xf32, #tpu.memory_space<vmem>>, vector<128x3xf32>
    %c0_89 = arith.constant 0 : index
    %c0_90 = arith.constant 0 : index
    %141 = vector.load %arg4[%c0_89, %c0_90] : memref<1x3xf32, #tpu.memory_space<vmem>>, vector<1x3xf32>
    %142 = vector.broadcast %141 : vector<1x3xf32> to vector<128x3xf32>
    %143 = arith.subf %140, %142 : vector<128x3xf32>
    %c0_91 = arith.constant 0 : index
    %c0_92 = arith.constant 0 : index
    %144 = vector.load %arg5[%c0_91, %c0_92] : memref<1x3xf32, #tpu.memory_space<vmem>>, vector<1x3xf32>
    %145 = vector.broadcast %144 : vector<1x3xf32> to vector<128x3xf32>
    %146 = arith.subf %140, %145 : vector<128x3xf32>
    %147 = vector.extract_strided_slice %143 {offsets = [0, 0], sizes = [128, 1], strides = [1, 1]} : vector<128x3xf32> to vector<128x1xf32>
    %148 = vector.extract_strided_slice %143 {offsets = [0, 0], sizes = [128, 1], strides = [1, 1]} : vector<128x3xf32> to vector<128x1xf32>
    %149 = arith.mulf %147, %148 : vector<128x1xf32>
    %150 = vector.extract_strided_slice %143 {offsets = [0, 1], sizes = [128, 1], strides = [1, 1]} : vector<128x3xf32> to vector<128x1xf32>
    %151 = vector.extract_strided_slice %143 {offsets = [0, 1], sizes = [128, 1], strides = [1, 1]} : vector<128x3xf32> to vector<128x1xf32>
    %152 = arith.mulf %150, %151 : vector<128x1xf32>
    %153 = arith.addf %149, %152 : vector<128x1xf32>
    %154 = vector.extract_strided_slice %143 {offsets = [0, 2], sizes = [128, 1], strides = [1, 1]} : vector<128x3xf32> to vector<128x1xf32>
    %155 = vector.extract_strided_slice %143 {offsets = [0, 2], sizes = [128, 1], strides = [1, 1]} : vector<128x3xf32> to vector<128x1xf32>
    %156 = arith.mulf %154, %155 : vector<128x1xf32>
    %157 = arith.addf %153, %156 : vector<128x1xf32>
    %cst_93 = arith.constant 1.000000e-24 : f32
    %158 = vector.broadcast %cst_93 : f32 to vector<128x1xf32>
    %159 = arith.maximumf %157, %158 : vector<128x1xf32>
    %160 = math.rsqrt %159 : vector<128x1xf32>
    %161 = vector.broadcast %160 : vector<128x1xf32> to vector<128x3xf32>
    %162 = arith.mulf %143, %161 : vector<128x3xf32>
    %163 = vector.extract_strided_slice %146 {offsets = [0, 0], sizes = [128, 1], strides = [1, 1]} : vector<128x3xf32> to vector<128x1xf32>
    %164 = vector.extract_strided_slice %146 {offsets = [0, 0], sizes = [128, 1], strides = [1, 1]} : vector<128x3xf32> to vector<128x1xf32>
    %165 = arith.mulf %163, %164 : vector<128x1xf32>
    %166 = vector.extract_strided_slice %146 {offsets = [0, 1], sizes = [128, 1], strides = [1, 1]} : vector<128x3xf32> to vector<128x1xf32>
    %167 = vector.extract_strided_slice %146 {offsets = [0, 1], sizes = [128, 1], strides = [1, 1]} : vector<128x3xf32> to vector<128x1xf32>
    %168 = arith.mulf %166, %167 : vector<128x1xf32>
    %169 = arith.addf %165, %168 : vector<128x1xf32>
    %170 = vector.extract_strided_slice %146 {offsets = [0, 2], sizes = [128, 1], strides = [1, 1]} : vector<128x3xf32> to vector<128x1xf32>
    %171 = vector.extract_strided_slice %146 {offsets = [0, 2], sizes = [128, 1], strides = [1, 1]} : vector<128x3xf32> to vector<128x1xf32>
    %172 = arith.mulf %170, %171 : vector<128x1xf32>
    %173 = arith.addf %169, %172 : vector<128x1xf32>
    %cst_94 = arith.constant 1.000000e-24 : f32
    %174 = vector.broadcast %cst_94 : f32 to vector<128x1xf32>
    %175 = arith.maximumf %173, %174 : vector<128x1xf32>
    %176 = math.rsqrt %175 : vector<128x1xf32>
    %177 = vector.broadcast %176 : vector<128x1xf32> to vector<128x3xf32>
    %178 = arith.mulf %146, %177 : vector<128x3xf32>
    %179 = vector.extract_strided_slice %139 {offsets = [0, 5], sizes = [128, 3], strides = [1, 1]} : vector<128x128xf32> to vector<128x3xf32>
    %180 = vector.extract_strided_slice %179 {offsets = [0, 0], sizes = [128, 1], strides = [1, 1]} : vector<128x3xf32> to vector<128x1xf32>
    %181 = vector.extract_strided_slice %179 {offsets = [0, 0], sizes = [128, 1], strides = [1, 1]} : vector<128x3xf32> to vector<128x1xf32>
    %182 = arith.mulf %180, %181 : vector<128x1xf32>
    %183 = vector.extract_strided_slice %179 {offsets = [0, 1], sizes = [128, 1], strides = [1, 1]} : vector<128x3xf32> to vector<128x1xf32>
    %184 = vector.extract_strided_slice %179 {offsets = [0, 1], sizes = [128, 1], strides = [1, 1]} : vector<128x3xf32> to vector<128x1xf32>
    %185 = arith.mulf %183, %184 : vector<128x1xf32>
    %186 = arith.addf %182, %185 : vector<128x1xf32>
    %187 = vector.extract_strided_slice %179 {offsets = [0, 2], sizes = [128, 1], strides = [1, 1]} : vector<128x3xf32> to vector<128x1xf32>
    %188 = vector.extract_strided_slice %179 {offsets = [0, 2], sizes = [128, 1], strides = [1, 1]} : vector<128x3xf32> to vector<128x1xf32>
    %189 = arith.mulf %187, %188 : vector<128x1xf32>
    %190 = arith.addf %186, %189 : vector<128x1xf32>
    %cst_95 = arith.constant 1.000000e-24 : f32
    %191 = vector.broadcast %cst_95 : f32 to vector<128x1xf32>
    %192 = arith.maximumf %190, %191 : vector<128x1xf32>
    %193 = math.rsqrt %192 : vector<128x1xf32>
    %194 = vector.broadcast %193 : vector<128x1xf32> to vector<128x3xf32>
    %195 = arith.mulf %179, %194 : vector<128x3xf32>
    %196 = vector.extract_strided_slice %124 {offsets = [0, 1], sizes = [128, 1], strides = [1, 1]} : vector<128x128xf32> to vector<128x1xf32>
    %197 = vector.extract_strided_slice %195 {offsets = [0, 0], sizes = [128, 1], strides = [1, 1]} : vector<128x3xf32> to vector<128x1xf32>
    %198 = vector.extract_strided_slice %178 {offsets = [0, 0], sizes = [128, 1], strides = [1, 1]} : vector<128x3xf32> to vector<128x1xf32>
    %199 = arith.mulf %197, %198 : vector<128x1xf32>
    %200 = vector.extract_strided_slice %195 {offsets = [0, 1], sizes = [128, 1], strides = [1, 1]} : vector<128x3xf32> to vector<128x1xf32>
    %201 = vector.extract_strided_slice %178 {offsets = [0, 1], sizes = [128, 1], strides = [1, 1]} : vector<128x3xf32> to vector<128x1xf32>
    %202 = arith.mulf %200, %201 : vector<128x1xf32>
    %203 = arith.addf %199, %202 : vector<128x1xf32>
    %204 = vector.extract_strided_slice %195 {offsets = [0, 2], sizes = [128, 1], strides = [1, 1]} : vector<128x3xf32> to vector<128x1xf32>
    %205 = vector.extract_strided_slice %178 {offsets = [0, 2], sizes = [128, 1], strides = [1, 1]} : vector<128x3xf32> to vector<128x1xf32>
    %206 = arith.mulf %204, %205 : vector<128x1xf32>
    %207 = arith.addf %203, %206 : vector<128x1xf32>
    %cst_96 = arith.constant 0.000000e+00 : f32
    %208 = vector.broadcast %cst_96 : f32 to vector<128x1xf32>
    %209 = arith.maximumf %207, %208 : vector<128x1xf32>
    %cst_97 = arith.constant 2.000000e+00 : f32
    %210 = vector.broadcast %cst_97 : f32 to vector<128x1xf32>
    %211 = arith.mulf %210, %207 : vector<128x1xf32>
    %212 = vector.broadcast %211 : vector<128x1xf32> to vector<128x3xf32>
    %213 = arith.mulf %212, %195 : vector<128x3xf32>
    %214 = arith.subf %162, %213 : vector<128x3xf32>
    %215 = vector.extract_strided_slice %162 {offsets = [0, 0], sizes = [128, 1], strides = [1, 1]} : vector<128x3xf32> to vector<128x1xf32>
    %216 = vector.extract_strided_slice %214 {offsets = [0, 0], sizes = [128, 1], strides = [1, 1]} : vector<128x3xf32> to vector<128x1xf32>
    %217 = arith.mulf %215, %216 : vector<128x1xf32>
    %218 = vector.extract_strided_slice %162 {offsets = [0, 1], sizes = [128, 1], strides = [1, 1]} : vector<128x3xf32> to vector<128x1xf32>
    %219 = vector.extract_strided_slice %214 {offsets = [0, 1], sizes = [128, 1], strides = [1, 1]} : vector<128x3xf32> to vector<128x1xf32>
    %220 = arith.mulf %218, %219 : vector<128x1xf32>
    %221 = arith.addf %217, %220 : vector<128x1xf32>
    %222 = vector.extract_strided_slice %162 {offsets = [0, 2], sizes = [128, 1], strides = [1, 1]} : vector<128x3xf32> to vector<128x1xf32>
    %223 = vector.extract_strided_slice %214 {offsets = [0, 2], sizes = [128, 1], strides = [1, 1]} : vector<128x3xf32> to vector<128x1xf32>
    %224 = arith.mulf %222, %223 : vector<128x1xf32>
    %225 = arith.addf %221, %224 : vector<128x1xf32>
    %cst_98 = arith.constant 0.000000e+00 : f32
    %226 = vector.broadcast %cst_98 : f32 to vector<128x1xf32>
    %227 = arith.maximumf %225, %226 : vector<128x1xf32>
    %228 = vector.extract_strided_slice %214 {offsets = [0, 0], sizes = [128, 1], strides = [1, 1]} : vector<128x3xf32> to vector<128x1xf32>
    %229 = vector.extract_strided_slice %214 {offsets = [0, 0], sizes = [128, 1], strides = [1, 1]} : vector<128x3xf32> to vector<128x1xf32>
    %230 = arith.mulf %228, %229 : vector<128x1xf32>
    %231 = vector.extract_strided_slice %214 {offsets = [0, 1], sizes = [128, 1], strides = [1, 1]} : vector<128x3xf32> to vector<128x1xf32>
    %232 = vector.extract_strided_slice %214 {offsets = [0, 1], sizes = [128, 1], strides = [1, 1]} : vector<128x3xf32> to vector<128x1xf32>
    %233 = arith.mulf %231, %232 : vector<128x1xf32>
    %234 = arith.addf %230, %233 : vector<128x1xf32>
    %235 = vector.extract_strided_slice %214 {offsets = [0, 2], sizes = [128, 1], strides = [1, 1]} : vector<128x3xf32> to vector<128x1xf32>
    %236 = vector.extract_strided_slice %214 {offsets = [0, 2], sizes = [128, 1], strides = [1, 1]} : vector<128x3xf32> to vector<128x1xf32>
    %237 = arith.mulf %235, %236 : vector<128x1xf32>
    %238 = arith.addf %234, %237 : vector<128x1xf32>
    %cst_99 = arith.constant 1.000000e-24 : f32
    %239 = vector.broadcast %cst_99 : f32 to vector<128x1xf32>
    %240 = arith.maximumf %238, %239 : vector<128x1xf32>
    %241 = math.rsqrt %240 : vector<128x1xf32>
    %242 = arith.mulf %227, %241 : vector<128x1xf32>
    %243 = arith.mulf %242, %196 : vector<128x1xf32>
    %244 = vector.extract_strided_slice %139 {offsets = [0, 2], sizes = [128, 3], strides = [1, 1]} : vector<128x128xf32> to vector<128x3xf32>
    %245 = vector.extract_strided_slice %139 {offsets = [0, 8], sizes = [128, 3], strides = [1, 1]} : vector<128x128xf32> to vector<128x3xf32>
    %246 = vector.broadcast %209 : vector<128x1xf32> to vector<128x3xf32>
    %247 = arith.mulf %246, %245 : vector<128x3xf32>
    %248 = arith.addf %244, %247 : vector<128x3xf32>
    %249 = vector.extract_strided_slice %139 {offsets = [0, 11], sizes = [128, 3], strides = [1, 1]} : vector<128x128xf32> to vector<128x3xf32>
    %250 = vector.broadcast %243 : vector<128x1xf32> to vector<128x3xf32>
    %251 = arith.mulf %250, %249 : vector<128x3xf32>
    %252 = arith.addf %248, %251 : vector<128x3xf32>
    %c0_100 = arith.constant 0 : index
    %c0_101 = arith.constant 0 : index
    %253 = vector.load %arg24[%c0_100, %c0_101] : memref<128x128xf32, #tpu.memory_space<vmem>>, vector<128x128xf32>
    tpu.vector_store %arg24[%c0_100, %c0_101], %139 {strides = array<i32>} : memref<128x128xf32, #tpu.memory_space<vmem>>, vector<128x128xf32>,
    %c0_102 = arith.constant 0 : index
    %c14 = arith.constant 14 : index
    %254 = vector.load %arg24[%c0_102, %c14] : memref<128x128xf32, #tpu.memory_space<vmem>>, vector<128x3xf32>
    tpu.vector_store %arg24[%c0_102, %c14], %252 {strides = array<i32>} : memref<128x128xf32, #tpu.memory_space<vmem>>, vector<128x3xf32>,
    return
  }
  func.func @transform_0(%arg0: i32) -> (i32, i32) {
    %c0_i32 = arith.constant 0 : i32
    %c0_i32_0 = arith.constant 0 : i32
    return %arg0, %c0_i32 : i32, i32
  }
  func.func @transform_1(%arg0: i32) -> (i32, i32) {
    %c0_i32 = arith.constant 0 : i32
    %c0_i32_0 = arith.constant 0 : i32
    return %arg0, %c0_i32 : i32, i32
  }
  func.func @transform_2(%arg0: i32) -> (i32, i32) {
    %c0_i32 = arith.constant 0 : i32
    %c0_i32_0 = arith.constant 0 : i32
    return %arg0, %c0_i32 : i32, i32
  }
  func.func @transform_3(%arg0: i32) -> (i32, i32) {
    %c0_i32 = arith.constant 0 : i32
    %c0_i32_0 = arith.constant 0 : i32
    %c0_i32_1 = arith.constant 0 : i32
    return %c0_i32, %c0_i32_0 : i32, i32
  }
  func.func @transform_4(%arg0: i32) -> (i32, i32) {
    %c0_i32 = arith.constant 0 : i32
    %c0_i32_0 = arith.constant 0 : i32
    %c0_i32_1 = arith.constant 0 : i32
    return %c0_i32, %c0_i32_0 : i32, i32
  }
  func.func @transform_5(%arg0: i32) -> (i32, i32) {
    %c0_i32 = arith.constant 0 : i32
    %c0_i32_0 = arith.constant 0 : i32
    %c0_i32_1 = arith.constant 0 : i32
    return %c0_i32, %c0_i32_0 : i32, i32
  }
  func.func @transform_6(%arg0: i32) -> (i32, i32) {
    %c0_i32 = arith.constant 0 : i32
    %c0_i32_0 = arith.constant 0 : i32
    %c0_i32_1 = arith.constant 0 : i32
    return %c0_i32, %c0_i32_0 : i32, i32
  }
  func.func @transform_7(%arg0: i32) -> (i32, i32, i32) {
    %c0_i32 = arith.constant 0 : i32
    %c0_i32_0 = arith.constant 0 : i32
    %c0_i32_1 = arith.constant 0 : i32
    %c0_i32_2 = arith.constant 0 : i32
    return %c0_i32, %c0_i32_0, %c0_i32_1 : i32, i32, i32
  }
  func.func @transform_8(%arg0: i32) -> (i32, i32, i32) {
    %c0_i32 = arith.constant 0 : i32
    %c0_i32_0 = arith.constant 0 : i32
    %c0_i32_1 = arith.constant 0 : i32
    %c0_i32_2 = arith.constant 0 : i32
    return %c0_i32, %c0_i32_0, %c0_i32_1 : i32, i32, i32
  }
  func.func @transform_9(%arg0: i32) -> (i32, i32) {
    %c0_i32 = arith.constant 0 : i32
    %c0_i32_0 = arith.constant 0 : i32
    %c0_i32_1 = arith.constant 0 : i32
    return %c0_i32, %c0_i32_0 : i32, i32
  }
  func.func @transform_10(%arg0: i32) -> (i32, i32) {
    %c0_i32 = arith.constant 0 : i32
    %c0_i32_0 = arith.constant 0 : i32
    %c0_i32_1 = arith.constant 0 : i32
    return %c0_i32, %c0_i32_0 : i32, i32
  }
  func.func @transform_11(%arg0: i32) -> (i32, i32) {
    %c0_i32 = arith.constant 0 : i32
    %c0_i32_0 = arith.constant 0 : i32
    %c0_i32_1 = arith.constant 0 : i32
    return %c0_i32, %c0_i32_0 : i32, i32
  }
  func.func @transform_12(%arg0: i32) -> (i32, i32, i32) {
    %c0_i32 = arith.constant 0 : i32
    %c0_i32_0 = arith.constant 0 : i32
    %c0_i32_1 = arith.constant 0 : i32
    %c0_i32_2 = arith.constant 0 : i32
    return %c0_i32, %c0_i32_0, %c0_i32_1 : i32, i32, i32
  }
  func.func @transform_13(%arg0: i32) -> (i32, i32, i32) {
    %c0_i32 = arith.constant 0 : i32
    %c0_i32_0 = arith.constant 0 : i32
    %c0_i32_1 = arith.constant 0 : i32
    %c0_i32_2 = arith.constant 0 : i32
    return %c0_i32, %c0_i32_0, %c0_i32_1 : i32, i32, i32
  }
  func.func @transform_14(%arg0: i32) -> (i32, i32) {
    %c0_i32 = arith.constant 0 : i32
    %c0_i32_0 = arith.constant 0 : i32
    %c0_i32_1 = arith.constant 0 : i32
    return %c0_i32, %c0_i32_0 : i32, i32
  }
  func.func @transform_15(%arg0: i32) -> (i32, i32) {
    %c0_i32 = arith.constant 0 : i32
    %c0_i32_0 = arith.constant 0 : i32
    %c0_i32_1 = arith.constant 0 : i32
    return %c0_i32, %c0_i32_0 : i32, i32
  }
  func.func @transform_16(%arg0: i32) -> (i32, i32) {
    %c0_i32 = arith.constant 0 : i32
    %c0_i32_0 = arith.constant 0 : i32
    %c0_i32_1 = arith.constant 0 : i32
    return %c0_i32, %c0_i32_0 : i32, i32
  }
  func.func @transform_17(%arg0: i32) -> (i32, i32) {
    %c0_i32 = arith.constant 0 : i32
    %c0_i32_0 = arith.constant 0 : i32
    %c0_i32_1 = arith.constant 0 : i32
    return %c0_i32, %c0_i32_0 : i32, i32
  }
  func.func @transform_18(%arg0: i32) -> (i32, i32) {
    %c0_i32 = arith.constant 0 : i32
    %c0_i32_0 = arith.constant 0 : i32
    %c0_i32_1 = arith.constant 0 : i32
    return %c0_i32, %c0_i32_0 : i32, i32
  }
  func.func @transform_19(%arg0: i32) -> (i32, i32) {
    %c0_i32 = arith.constant 0 : i32
    %c0_i32_0 = arith.constant 0 : i32
    %c0_i32_1 = arith.constant 0 : i32
    return %c0_i32, %c0_i32_0 : i32, i32
  }
  func.func @transform_20(%arg0: i32) -> (i32, i32) {
    %c0_i32 = arith.constant 0 : i32
    %c0_i32_0 = arith.constant 0 : i32
    %c0_i32_1 = arith.constant 0 : i32
    return %c0_i32, %c0_i32_0 : i32, i32
  }
  func.func @transform_21(%arg0: i32) -> (i32, i32) {
    %c0_i32 = arith.constant 0 : i32
    %c0_i32_0 = arith.constant 0 : i32
    %c0_i32_1 = arith.constant 0 : i32
    return %c0_i32, %c0_i32_0 : i32, i32
  }
  func.func @transform_22(%arg0: i32) -> (i32, i32) {
    %c0_i32 = arith.constant 0 : i32
    %c0_i32_0 = arith.constant 0 : i32
    %c0_i32_1 = arith.constant 0 : i32
    return %c0_i32, %c0_i32_0 : i32, i32
  }
  func.func @transform_23(%arg0: i32) -> (i32, i32) {
    %c0_i32 = arith.constant 0 : i32
    %c0_i32_0 = arith.constant 0 : i32
    return %arg0, %c0_i32 : i32, i32
  }
}

</mosaic_0001>

<llo_original>
// kernel: tpu_custom_call.1
$region0: #{tpu_custom_call.1}
  #allocation0 [shape = 'u32[]', space=smem, size = 0x4, offset = 0x4, fixed_abs, tag = 'smem constant byte address 0x4 - core index']
  #allocation1 [shape = 'u32[72,128]{1,0:T(1,128)}', space=vmem, size = 0x9000, scoped, tag = 'internal scratch']
  %s0 = inlined_call_operand.vmem [shape: f32[128,32], index: 0, kind: input, shape index: {}]
  %s1 = inlined_call_operand.vmem [shape: f32[128,16], index: 1, kind: input, shape index: {}]
  %s2 = inlined_call_operand.vmem [shape: f32[128,3], index: 2, kind: input, shape index: {}]
  %s3 = inlined_call_operand.hbm [shape: f32[1,3], index: 3, kind: input, shape index: {}]
  %s4 = inlined_call_operand.hbm [shape: f32[1,3], index: 4, kind: input, shape index: {}]
  %s5 = inlined_call_operand.hbm [shape: bf16[32,256], index: 5, kind: input, shape index: {}]
  %s6 = inlined_call_operand.vmem [shape: f32[1,256], index: 6, kind: input, shape index: {}]
  %s7 = inlined_call_operand.hbm [shape: bf16[4,256,256], index: 7, kind: input, shape index: {}]
  %s8 = inlined_call_operand.hbm [shape: f32[4,1,256], index: 8, kind: input, shape index: {}]
  %s9 = inlined_call_operand.hbm [shape: bf16[32,256], index: 9, kind: input, shape index: {}]
  %s10 = inlined_call_operand.vmem [shape: bf16[256,256], index: 10, kind: input, shape index: {}]
  %s11 = inlined_call_operand.hbm [shape: f32[1,256], index: 11, kind: input, shape index: {}]
  %s12 = inlined_call_operand.hbm [shape: bf16[2,256,256], index: 12, kind: input, shape index: {}]
  %s13 = inlined_call_operand.hbm [shape: f32[2,1,256], index: 13, kind: input, shape index: {}]
  %s14 = inlined_call_operand.hbm [shape: bf16[256,256], index: 14, kind: input, shape index: {}]
  %s15 = inlined_call_operand.hbm [shape: f32[1,256], index: 15, kind: input, shape index: {}]
  %s16 = inlined_call_operand.vmem [shape: bf16[256,128], index: 16, kind: input, shape index: {}]
  %s17 = inlined_call_operand.hbm [shape: f32[1,128], index: 17, kind: input, shape index: {}]
  %s18 = inlined_call_operand.hbm [shape: bf16[256,128], index: 18, kind: input, shape index: {}]
  %s19 = inlined_call_operand.hbm [shape: bf16[16,128], index: 19, kind: input, shape index: {}]
  %s20 = inlined_call_operand.vmem [shape: f32[1,128], index: 20, kind: input, shape index: {}]
  %s21 = inlined_call_operand.vmem [shape: bf16[128,128], index: 21, kind: input, shape index: {}]
  %s22 = inlined_call_operand.vmem [shape: f32[1,128], index: 22, kind: input, shape index: {}]
  %s23 = inlined_call_operand.hbm [shape: f32[128,128], index: 23, kind: output, shape index: {}]
  %s24 = sld [smem:[#allocation0]]
  $region158: #{tpu_custom_call.1} parent=0
    _
  %s26 = ssub.s32 1, %s24
  %s27 = scalar_select 0, %s26, %s24
  $region1: #{tpu_custom_call.1} parent=0
    #allocation2 [shape = 'u8[512]{0}', space=vmem, size = 0x400, scoped, tag = 'input window, operand 3, single buffered']
    #allocation3 [shape = 's32[1]{0}', space=sflag, size = 0x4, scoped, tag = 'scoped memory for tpu_custom_call.1']
    #allocation4 [shape = 's32[1]{0}', space=sflag, size = 0x4, scoped, tag = 'scoped memory for tpu_custom_call.1']
    #allocation5 [shape = 'u8[512]{0}', space=vmem, size = 0x400, scoped, tag = 'input window, operand 4, single buffered']
    #allocation6 [shape = 's32[1]{0}', space=sflag, size = 0x4, scoped, tag = 'scoped memory for tpu_custom_call.1']
    #allocation7 [shape = 'u8[16384]{0}', space=vmem, size = 0x4000, scoped, tag = 'input window, operand 5, single buffered']
    #allocation8 [shape = 'u8[524288]{0}', space=vmem, size = 0x80000, scoped, tag = 'input window, operand 7, single buffered']
    #allocation9 [shape = 's32[1]{0}', space=sflag, size = 0x4, scoped, tag = 'scoped memory for tpu_custom_call.1']
    #allocation10 [shape = 'u8[4096]{0}', space=vmem, size = 0x1000, scoped, tag = 'input window, operand 8, single buffered']
    #allocation11 [shape = 'u8[16384]{0}', space=vmem, size = 0x4000, scoped, tag = 'input window, operand 9, single buffered']
    #allocation12 [shape = 's32[1]{0}', space=sflag, size = 0x4, scoped, tag = 'scoped memory for tpu_custom_call.1']
    #allocation13 [shape = 'u8[1024]{0}', space=vmem, size = 0x400, scoped, tag = 'input window, operand 11, single buffered']
    #allocation14 [shape = 'u8[262144]{0}', space=vmem, size = 0x40000, scoped, tag = 'input window, operand 12, single buffered']
    #allocation15 [shape = 's32[1]{0}', space=sflag, size = 0x4, scoped, tag = 'scoped memory for tpu_custom_call.1']
    #allocation16 [shape = 'u8[2048]{0}', space=vmem, size = 0x800, scoped, tag = 'input window, operand 13, single buffered']
    #allocation17 [shape = 'u8[131072]{0}', space=vmem, size = 0x20000, scoped, tag = 'input window, operand 14, single buffered']
    #allocation18 [shape = 's32[1]{0}', space=sflag, size = 0x4, scoped, tag = 'scoped memory for tpu_custom_call.1']
    #allocation19 [shape = 'u8[1024]{0}', space=vmem, size = 0x400, scoped, tag = 'input window, operand 15, single buffered']
    #allocation20 [shape = 'u8[512]{0}', space=vmem, size = 0x400, scoped, tag = 'input window, operand 17, single buffered']
    #allocation21 [shape = 's32[1]{0}', space=sflag, size = 0x4, scoped, tag = 'scoped memory for tpu_custom_call.1']
    #allocation22 [shape = 'u8[65536]{0}', space=vmem, size = 0x10000, scoped, tag = 'input window, operand 18, single buffered']
    #allocation23 [shape = 'u8[4096]{0}', space=vmem, size = 0x1000, scoped, tag = 'input window, operand 19, single buffered']
    #allocation24 [shape = 's32[1]{0}', space=sflag, size = 0x4, scoped, tag = 'scoped memory for tpu_custom_call.1']
    #allocation25 [shape = 'u8[65536]{0}', space=vmem, size = 0x10000, scoped, tag = 'output window, operand 0, single buffered']
    %28 = vsyncpa [#allocation3], 0
    %29 = vsyncpa [#allocation6], 0
    %30 = vsyncpa [#allocation9], 0
    %31 = vsyncpa [#allocation12], 0
    %32 = vsyncpa [#allocation15], 0
    %33 = vsyncpa [#allocation18], 0
    %34 = vsyncpa [#allocation21], 0
    %35 = vsyncpa [#allocation24], 0
    %36 = vsyncpa [#allocation4], 0
    // Predicated region
    $region2: #{tpu_custom_call.1} parent=1 // pred_check
      _
    $region3: #{tpu_custom_call.1} parent=1 // pred_check_branch
      %38 = sbr.rel (0) target = $region5
    $region4: #{tpu_custom_call.1} parent=1 // pred_region
      _
    $region5: #{tpu_custom_call.1} parent=1 // pred_fallthru
      _
    // Predicated region
    $region6: #{tpu_custom_call.1} parent=1 // pred_check
      _
    $region7: #{tpu_custom_call.1} parent=1 // pred_check_branch
      %40 = sbr.rel (0) target = $region9
    $region8: #{tpu_custom_call.1} parent=1 // pred_region
      _
    $region9: #{tpu_custom_call.1} parent=1 // pred_fallthru
      _
    // Predicated region
    $region10: #{tpu_custom_call.1} parent=1 // pred_check
      _
    $region11: #{tpu_custom_call.1} parent=1 // pred_check_branch
      %42 = sbr.rel (0) target = $region13
    $region12: #{tpu_custom_call.1} parent=1 // pred_region
      _
    $region13: #{tpu_custom_call.1} parent=1 // pred_fallthru
      _
    // Predicated region
    $region14: #{tpu_custom_call.1} parent=1 // pred_check
      _
    $region15: #{tpu_custom_call.1} parent=1 // pred_check_branch
      %44 = sbr.rel (0) target = $region17
    $region16: #{tpu_custom_call.1} parent=1 // pred_region
      %46 = vsyncadd [#allocation3], 0
      %s48 = sshll.u32 %s3, 4
      %s49 = int_to_ptr.hbm [resolvable:$true] %s48
      %s50 = sshll.u32 [#allocation2], 4
      %s51 = int_to_ptr.vmem [resolvable:$true] %s50
      %53 = dma.hbm_to_vmem [thread:$0]  %s49, 16, %s51, [#allocation3]
    $region17: #{tpu_custom_call.1} parent=1 // pred_fallthru
      _
    // Predicated region
    $region18: #{tpu_custom_call.1} parent=1 // pred_check
      _
    $region19: #{tpu_custom_call.1} parent=1 // pred_check_branch
      %55 = sbr.rel (0) target = $region21
    $region20: #{tpu_custom_call.1} parent=1 // pred_region
      %57 = vsyncadd [#allocation6], 0
      %s59 = sshll.u32 %s4, 4
      %s60 = int_to_ptr.hbm [resolvable:$true] %s59
      %s61 = sshll.u32 [#allocation5], 4
      %s62 = int_to_ptr.vmem [resolvable:$true] %s61
      %64 = dma.hbm_to_vmem [thread:$0]  %s60, 16, %s62, [#allocation6]
    $region21: #{tpu_custom_call.1} parent=1 // pred_fallthru
      _
    // Predicated region
    $region22: #{tpu_custom_call.1} parent=1 // pred_check
      _
    $region23: #{tpu_custom_call.1} parent=1 // pred_check_branch
      %66 = sbr.rel (0) target = $region25
    $region24: #{tpu_custom_call.1} parent=1 // pred_region
      %68 = vsyncadd [#allocation6], 0
      %s69 = sshll.u32 %s5, 4
      %s70 = int_to_ptr.hbm [resolvable:$true] %s69
      %s71 = sshll.u32 [#allocation7], 4
      %s72 = int_to_ptr.vmem [resolvable:$true] %s71
      %77 = dma.hbm_to_vmem [thread:$0]  %s70, 512, %s72, [#allocation6], 128, 128, 8
    $region25: #{tpu_custom_call.1} parent=1 // pred_fallthru
      _
    // Predicated region
    $region26: #{tpu_custom_call.1} parent=1 // pred_check
      _
    $region27: #{tpu_custom_call.1} parent=1 // pred_check_branch
      %79 = sbr.rel (0) target = $region29
    $region28: #{tpu_custom_call.1} parent=1 // pred_region
      _
    $region29: #{tpu_custom_call.1} parent=1 // pred_fallthru
      _
    // Predicated region
    $region30: #{tpu_custom_call.1} parent=1 // pred_check
      _
    $region31: #{tpu_custom_call.1} parent=1 // pred_check_branch
      %81 = sbr.rel (0) target = $region33
    $region32: #{tpu_custom_call.1} parent=1 // pred_region
      %83 = vsyncadd [#allocation9], 0
      %s84 = sshll.u32 %s7, 4
      %s85 = int_to_ptr.hbm [resolvable:$true] %s84
      %s86 = sshll.u32 [#allocation8], 4
      %s87 = int_to_ptr.vmem [resolvable:$true] %s86
      %92 = dma.hbm_to_vmem [thread:$0]  %s85, 16384, %s87, [#allocation9], 128, 128, 8
    $region33: #{tpu_custom_call.1} parent=1 // pred_fallthru
      _
    // Predicated region
    $region34: #{tpu_custom_call.1} parent=1 // pred_check
      _
    $region35: #{tpu_custom_call.1} parent=1 // pred_check_branch
      %94 = sbr.rel (0) target = $region37
    $region36: #{tpu_custom_call.1} parent=1 // pred_region
      %96 = vsyncadd [#allocation9], 0
      %s97 = sshll.u32 %s8, 4
      %s98 = int_to_ptr.hbm [resolvable:$true] %s97
      %s99 = sshll.u32 [#allocation10], 4
      %s100 = int_to_ptr.vmem [resolvable:$true] %s99
      %105 = dma.hbm_to_vmem [thread:$0]  %s98, 128, %s100, [#allocation9], 32, 32, 2
    $region37: #{tpu_custom_call.1} parent=1 // pred_fallthru
      _
    // Predicated region
    $region38: #{tpu_custom_call.1} parent=1 // pred_check
      _
    $region39: #{tpu_custom_call.1} parent=1 // pred_check_branch
      %107 = sbr.rel (0) target = $region41
    $region40: #{tpu_custom_call.1} parent=1 // pred_region
      %109 = vsyncadd [#allocation12], 0
      %s110 = sshll.u32 %s9, 4
      %s111 = int_to_ptr.hbm [resolvable:$true] %s110
      %s112 = sshll.u32 [#allocation11], 4
      %s113 = int_to_ptr.vmem [resolvable:$true] %s112
      %118 = dma.hbm_to_vmem [thread:$0]  %s111, 512, %s113, [#allocation12], 128, 128, 8
    $region41: #{tpu_custom_call.1} parent=1 // pred_fallthru
      _
    // Predicated region
    $region42: #{tpu_custom_call.1} parent=1 // pred_check
      _
    $region43: #{tpu_custom_call.1} parent=1 // pred_check_branch
      %120 = sbr.rel (0) target = $region45
    $region44: #{tpu_custom_call.1} parent=1 // pred_region
      _
    $region45: #{tpu_custom_call.1} parent=1 // pred_fallthru
      _
    // Predicated region
    $region46: #{tpu_custom_call.1} parent=1 // pred_check
      _
    $region47: #{tpu_custom_call.1} parent=1 // pred_check_branch
      %122 = sbr.rel (0) target = $region49
    $region48: #{tpu_custom_call.1} parent=1 // pred_region
      %124 = vsyncadd [#allocation12], 0
      %s126 = sshll.u32 %s11, 4
      %s127 = int_to_ptr.hbm [resolvable:$true] %s126
      %s128 = sshll.u32 [#allocation13], 4
      %s129 = int_to_ptr.vmem [resolvable:$true] %s128
      %131 = dma.hbm_to_vmem [thread:$0]  %s127, 32, %s129, [#allocation12]
    $region49: #{tpu_custom_call.1} parent=1 // pred_fallthru
      _
    // Predicated region
    $region50: #{tpu_custom_call.1} parent=1 // pred_check
      _
    $region51: #{tpu_custom_call.1} parent=1 // pred_check_branch
      %133 = sbr.rel (0) target = $region53
    $region52: #{tpu_custom_call.1} parent=1 // pred_region
      %135 = vsyncadd [#allocation15], 0
      %s136 = sshll.u32 %s12, 4
      %s137 = int_to_ptr.hbm [resolvable:$true] %s136
      %s138 = sshll.u32 [#allocation14], 4
      %s139 = int_to_ptr.vmem [resolvable:$true] %s138
      %144 = dma.hbm_to_vmem [thread:$0]  %s137, 8192, %s139, [#allocation15], 128, 128, 8
    $region53: #{tpu_custom_call.1} parent=1 // pred_fallthru
      _
    // Predicated region
    $region54: #{tpu_custom_call.1} parent=1 // pred_check
      _
    $region55: #{tpu_custom_call.1} parent=1 // pred_check_branch
      %146 = sbr.rel (0) target = $region57
    $region56: #{tpu_custom_call.1} parent=1 // pred_region
      %148 = vsyncadd [#allocation15], 0
      %s149 = sshll.u32 %s13, 4
      %s150 = int_to_ptr.hbm [resolvable:$true] %s149
      %s151 = sshll.u32 [#allocation16], 4
      %s152 = int_to_ptr.vmem [resolvable:$true] %s151
      %157 = dma.hbm_to_vmem [thread:$0]  %s150, 64, %s152, [#allocation15], 32, 32, 2
    $region57: #{tpu_custom_call.1} parent=1 // pred_fallthru
      _
    // Predicated region
    $region58: #{tpu_custom_call.1} parent=1 // pred_check
      _
    $region59: #{tpu_custom_call.1} parent=1 // pred_check_branch
      %159 = sbr.rel (0) target = $region61
    $region60: #{tpu_custom_call.1} parent=1 // pred_region
      %161 = vsyncadd [#allocation18], 0
      %s162 = sshll.u32 %s14, 4
      %s163 = int_to_ptr.hbm [resolvable:$true] %s162
      %s164 = sshll.u32 [#allocation17], 4
      %s165 = int_to_ptr.vmem [resolvable:$true] %s164
      %170 = dma.hbm_to_vmem [thread:$0]  %s163, 4096, %s165, [#allocation18], 128, 128, 8
    $region61: #{tpu_custom_call.1} parent=1 // pred_fallthru
      _
    // Predicated region
    $region62: #{tpu_custom_call.1} parent=1 // pred_check
      _
    $region63: #{tpu_custom_call.1} parent=1 // pred_check_branch
      %172 = sbr.rel (0) target = $region65
    $region64: #{tpu_custom_call.1} parent=1 // pred_region
      %174 = vsyncadd [#allocation18], 0
      %s176 = sshll.u32 %s15, 4
      %s177 = int_to_ptr.hbm [resolvable:$true] %s176
      %s178 = sshll.u32 [#allocation19], 4
      %s179 = int_to_ptr.vmem [resolvable:$true] %s178
      %181 = dma.hbm_to_vmem [thread:$0]  %s177, 32, %s179, [#allocation18]
    $region65: #{tpu_custom_call.1} parent=1 // pred_fallthru
      _
    // Predicated region
    $region66: #{tpu_custom_call.1} parent=1 // pred_check
      _
    $region67: #{tpu_custom_call.1} parent=1 // pred_check_branch
      %183 = sbr.rel (0) target = $region69
    $region68: #{tpu_custom_call.1} parent=1 // pred_region
      _
    $region69: #{tpu_custom_call.1} parent=1 // pred_fallthru
      _
    // Predicated region
    $region70: #{tpu_custom_call.1} parent=1 // pred_check
      _
    $region71: #{tpu_custom_call.1} parent=1 // pred_check_branch
      %185 = sbr.rel (0) target = $region73
    $region72: #{tpu_custom_call.1} parent=1 // pred_region
      %187 = vsyncadd [#allocation21], 0
      %s189 = sshll.u32 %s17, 4
      %s190 = int_to_ptr.hbm [resolvable:$true] %s189
      %s191 = sshll.u32 [#allocation20], 4
      %s192 = int_to_ptr.vmem [resolvable:$true] %s191
      %194 = dma.hbm_to_vmem [thread:$0]  %s190, 16, %s192, [#allocation21]
    $region73: #{tpu_custom_call.1} parent=1 // pred_fallthru
      _
    // Predicated region
    $region74: #{tpu_custom_call.1} parent=1 // pred_check
      _
    $region75: #{tpu_custom_call.1} parent=1 // pred_check_branch
      %196 = sbr.rel (0) target = $region77
    $region76: #{tpu_custom_call.1} parent=1 // pred_region
      %198 = vsyncadd [#allocation21], 0
      %s199 = sshll.u32 %s18, 4
      %s200 = int_to_ptr.hbm [resolvable:$true] %s199
      %s201 = sshll.u32 [#allocation22], 4
      %s202 = int_to_ptr.vmem [resolvable:$true] %s201
      %207 = dma.hbm_to_vmem [thread:$0]  %s200, 2048, %s202, [#allocation21], 64, 64, 4
    $region77: #{tpu_custom_call.1} parent=1 // pred_fallthru
      _
    // Predicated region
    $region78: #{tpu_custom_call.1} parent=1 // pred_check
      _
    $region79: #{tpu_custom_call.1} parent=1 // pred_check_branch
      %209 = sbr.rel (0) target = $region81
    $region80: #{tpu_custom_call.1} parent=1 // pred_region
      %211 = vsyncadd [#allocation24], 0
      %s212 = sshll.u32 %s19, 4
      %s213 = int_to_ptr.hbm [resolvable:$true] %s212
      %s214 = sshll.u32 [#allocation23], 4
      %s215 = int_to_ptr.vmem [resolvable:$true] %s214
      %220 = dma.hbm_to_vmem [thread:$0]  %s213, 128, %s215, [#allocation24], 64, 64, 4
    $region81: #{tpu_custom_call.1} parent=1 // pred_fallthru
      _
    // Predicated region
    $region82: #{tpu_custom_call.1} parent=1 // pred_check
      _
    $region83: #{tpu_custom_call.1} parent=1 // pred_check_branch
      %222 = sbr.rel (0) target = $region85
    $region84: #{tpu_custom_call.1} parent=1 // pred_region
      _
    $region85: #{tpu_custom_call.1} parent=1 // pred_fallthru
      _
    // Predicated region
    $region86: #{tpu_custom_call.1} parent=1 // pred_check
      _
    $region87: #{tpu_custom_call.1} parent=1 // pred_check_branch
      %224 = sbr.rel (0) target = $region89
    $region88: #{tpu_custom_call.1} parent=1 // pred_region
      _
    $region89: #{tpu_custom_call.1} parent=1 // pred_fallthru
      _
    // Predicated region
    $region90: #{tpu_custom_call.1} parent=1 // pred_check
      _
    $region91: #{tpu_custom_call.1} parent=1 // pred_check_branch
      %226 = sbr.rel (0) target = $region93
    $region92: #{tpu_custom_call.1} parent=1 // pred_region
      _
    $region93: #{tpu_custom_call.1} parent=1 // pred_fallthru
      _
    // Predicated region
    $region94: #{tpu_custom_call.1} parent=1 // pred_check
      _
    $region95: #{tpu_custom_call.1} parent=1 // pred_check_branch
      %228 = sbr.rel (0) target = $region97
    $region96: #{tpu_custom_call.1} parent=1 // pred_region
      %230 = dma.done [#allocation3], 16
    $region97: #{tpu_custom_call.1} parent=1 // pred_fallthru
      _
    // Predicated region
    $region98: #{tpu_custom_call.1} parent=1 // pred_check
      _
    $region99: #{tpu_custom_call.1} parent=1 // pred_check_branch
      %232 = sbr.rel (0) target = $region101
    $region100: #{tpu_custom_call.1} parent=1 // pred_region
      %234 = dma.done [#allocation6], 16
    $region101: #{tpu_custom_call.1} parent=1 // pred_fallthru
      _
    // Predicated region
    $region102: #{tpu_custom_call.1} parent=1 // pred_check
      _
    $region103: #{tpu_custom_call.1} parent=1 // pred_check_branch
      %236 = sbr.rel (0) target = $region105
    $region104: #{tpu_custom_call.1} parent=1 // pred_region
      %238 = dma.done [#allocation6], 512
    $region105: #{tpu_custom_call.1} parent=1 // pred_fallthru
      _
    // Predicated region
    $region106: #{tpu_custom_call.1} parent=1 // pred_check
      _
    $region107: #{tpu_custom_call.1} parent=1 // pred_check_branch
      %240 = sbr.rel (0) target = $region109
    $region108: #{tpu_custom_call.1} parent=1 // pred_region
      %242 = dma.done [#allocation9], 16384
    $region109: #{tpu_custom_call.1} parent=1 // pred_fallthru
      _
    // Predicated region
    $region110: #{tpu_custom_call.1} parent=1 // pred_check
      _
    $region111: #{tpu_custom_call.1} parent=1 // pred_check_branch
      %244 = sbr.rel (0) target = $region113
    $region112: #{tpu_custom_call.1} parent=1 // pred_region
      %246 = dma.done [#allocation9], 128
    $region113: #{tpu_custom_call.1} parent=1 // pred_fallthru
      _
    // Predicated region
    $region114: #{tpu_custom_call.1} parent=1 // pred_check
      _
    $region115: #{tpu_custom_call.1} parent=1 // pred_check_branch
      %248 = sbr.rel (0) target = $region117
    $region116: #{tpu_custom_call.1} parent=1 // pred_region
      %250 = dma.done [#allocation12], 512
    $region117: #{tpu_custom_call.1} parent=1 // pred_fallthru
      _
    // Predicated region
    $region118: #{tpu_custom_call.1} parent=1 // pred_check
      _
    $region119: #{tpu_custom_call.1} parent=1 // pred_check_branch
      %252 = sbr.rel (0) target = $region121
    $region120: #{tpu_custom_call.1} parent=1 // pred_region
      %254 = dma.done [#allocation12], 32
    $region121: #{tpu_custom_call.1} parent=1 // pred_fallthru
      _
    // Predicated region
    $region122: #{tpu_custom_call.1} parent=1 // pred_check
      _
    $region123: #{tpu_custom_call.1} parent=1 // pred_check_branch
      %256 = sbr.rel (0) target = $region125
    $region124: #{tpu_custom_call.1} parent=1 // pred_region
      %258 = dma.done [#allocation15], 8192
    $region125: #{tpu_custom_call.1} parent=1 // pred_fallthru
      _
    // Predicated region
    $region126: #{tpu_custom_call.1} parent=1 // pred_check
      _
    $region127: #{tpu_custom_call.1} parent=1 // pred_check_branch
      %260 = sbr.rel (0) target = $region129
    $region128: #{tpu_custom_call.1} parent=1 // pred_region
      %262 = dma.done [#allocation15], 64
    $region129: #{tpu_custom_call.1} parent=1 // pred_fallthru
      _
    // Predicated region
    $region130: #{tpu_custom_call.1} parent=1 // pred_check
      _
    $region131: #{tpu_custom_call.1} parent=1 // pred_check_branch
      %264 = sbr.rel (0) target = $region133
    $region132: #{tpu_custom_call.1} parent=1 // pred_region
      %266 = dma.done [#allocation18], 4096
    $region133: #{tpu_custom_call.1} parent=1 // pred_fallthru
      _
    // Predicated region
    $region134: #{tpu_custom_call.1} parent=1 // pred_check
      _
    $region135: #{tpu_custom_call.1} parent=1 // pred_check_branch
      %268 = sbr.rel (0) target = $region137
    $region136: #{tpu_custom_call.1} parent=1 // pred_region
      %270 = dma.done [#allocation18], 32
    $region137: #{tpu_custom_call.1} parent=1 // pred_fallthru
      _
    // Predicated region
    $region138: #{tpu_custom_call.1} parent=1 // pred_check
      _
    $region139: #{tpu_custom_call.1} parent=1 // pred_check_branch
      %272 = sbr.rel (0) target = $region141
    $region140: #{tpu_custom_call.1} parent=1 // pred_region
      %274 = dma.done [#allocation21], 16
    $region141: #{tpu_custom_call.1} parent=1 // pred_fallthru
      _
    // Predicated region
    $region142: #{tpu_custom_call.1} parent=1 // pred_check
      _
    $region143: #{tpu_custom_call.1} parent=1 // pred_check_branch
      %276 = sbr.rel (0) target = $region145
    $region144: #{tpu_custom_call.1} parent=1 // pred_region
      %278 = dma.done [#allocation21], 2048
    $region145: #{tpu_custom_call.1} parent=1 // pred_fallthru
      _
    // Predicated region
    $region146: #{tpu_custom_call.1} parent=1 // pred_check
      _
    $region147: #{tpu_custom_call.1} parent=1 // pred_check_branch
      %280 = sbr.rel (0) target = $region149
    $region148: #{tpu_custom_call.1} parent=1 // pred_region
      %282 = dma.done [#allocation24], 128
    $region149: #{tpu_custom_call.1} parent=1 // pred_fallthru
      _
    %v284 = vld [vmem:[%s0] sm:$0xff]
    %v285 = vld [vmem:[%s0 + $0x8] sm:$0xff]
    %v286 = vld [vmem:[%s0 + $0x10] sm:$0xff]
    %v287 = vld [vmem:[%s0 + $0x18] sm:$0xff]
    %v288 = vld [vmem:[%s0 + $0x20] sm:$0xff]
    %v289 = vld [vmem:[%s0 + $0x28] sm:$0xff]
    %v290 = vld [vmem:[%s0 + $0x30] sm:$0xff]
    %v291 = vld [vmem:[%s0 + $0x38] sm:$0xff]
    %v292 = vld [vmem:[%s0 + $0x40] sm:$0xff]
    %v293 = vld [vmem:[%s0 + $0x48] sm:$0xff]
    %v294 = vld [vmem:[%s0 + $0x50] sm:$0xff]
    %v295 = vld [vmem:[%s0 + $0x58] sm:$0xff]
    %v296 = vld [vmem:[%s0 + $0x60] sm:$0xff]
    %v297 = vld [vmem:[%s0 + $0x68] sm:$0xff]
    %v298 = vld [vmem:[%s0 + $0x70] sm:$0xff]
    %v299 = vld [vmem:[%s0 + $0x78] sm:$0xff]
    %v300 = vpack.c.bf16 %v285, %v284
    %v301 = vpack.c.bf16 %v287, %v286
    %v302 = vpack.c.bf16 %v289, %v288
    %v303 = vpack.c.bf16 %v291, %v290
    %v304 = vpack.c.bf16 %v293, %v292
    %v305 = vpack.c.bf16 %v295, %v294
    %v306 = vpack.c.bf16 %v297, %v296
    %v307 = vpack.c.bf16 %v299, %v298
    %v308 = vld [vmem:[%s1] sm:$0xff]
    %v309 = vld [vmem:[%s1 + $0x8] sm:$0xff]
    %v310 = vld [vmem:[%s1 + $0x10] sm:$0xff]
    %v311 = vld [vmem:[%s1 + $0x18] sm:$0xff]
    %v312 = vld [vmem:[%s1 + $0x20] sm:$0xff]
    %v313 = vld [vmem:[%s1 + $0x28] sm:$0xff]
    %v314 = vld [vmem:[%s1 + $0x30] sm:$0xff]
    %v315 = vld [vmem:[%s1 + $0x38] sm:$0xff]
    %v316 = vld [vmem:[%s1 + $0x40] sm:$0xff]
    %v317 = vld [vmem:[%s1 + $0x48] sm:$0xff]
    %v318 = vld [vmem:[%s1 + $0x50] sm:$0xff]
    %v319 = vld [vmem:[%s1 + $0x58] sm:$0xff]
    %v320 = vld [vmem:[%s1 + $0x60] sm:$0xff]
    %v321 = vld [vmem:[%s1 + $0x68] sm:$0xff]
    %v322 = vld [vmem:[%s1 + $0x70] sm:$0xff]
    %v323 = vld [vmem:[%s1 + $0x78] sm:$0xff]
    %v324 = vpack.c.bf16 %v309, %v308
    %v325 = vpack.c.bf16 %v311, %v310
    %v326 = vpack.c.bf16 %v313, %v312
    %v327 = vpack.c.bf16 %v315, %v314
    %v328 = vpack.c.bf16 %v317, %v316
    %v329 = vpack.c.bf16 %v319, %v318
    %v330 = vpack.c.bf16 %v321, %v320
    %v331 = vpack.c.bf16 %v323, %v322
    %v332 = vld [vmem:[#allocation7] sm:$0xff]
    %v333 = vld [vmem:[#allocation7 + $0x8] sm:$0xff]
    %v334 = vld [vmem:[#allocation7 + $0x10] sm:$0xff]
    %v335 = vld [vmem:[#allocation7 + $0x18] sm:$0xff]
    %v340 = vunpack.c.l.b16 %v332
    %v341 = vunpack.c.h.b16 %v332
    %v342 = vunpack.c.l.b16 %v333
    %v343 = vunpack.c.h.b16 %v333
    %v344 = vunpack.c.l.b16 %v334
    %v345 = vunpack.c.h.b16 %v334
    %v346 = vunpack.c.l.b16 %v335
    %v347 = vunpack.c.h.b16 %v335
    %v348 = vpack.c.b16 %v342, %v340
    %v349 = vpack.c.b16 %v343, %v341
    %v350 = vpack.c.b16 %v346, %v344
    %v351 = vpack.c.b16 %v347, %v345
    %vm356 = vcmask 261120
    %v358 = vsel %vm356, %v300, 0
    %v361 = vsel %vm356, %v301, 0
    %v364 = vsel %vm356, %v302, 0
    %v367 = vsel %vm356, %v303, 0
    %v370 = vsel %vm356, %v304, 0
    %v373 = vsel %vm356, %v305, 0
    %v376 = vsel %vm356, %v306, 0
    %v379 = vsel %vm356, %v307, 0
    %381 = vmatpush.bf16.msra.mxu0 0
    %382 = vmatpush.bf16.msra.mxu0 0
    %383 = vmatpush.bf16.msra.mxu0 0
    %384 = vmatpush.bf16.msra.mxu0 0
    %385 = vmatpush.bf16.msra.mxu0 0
    %386 = vmatpush.bf16.msra.mxu0 0
    %387 = vmatpush.bf16.msra.mxu0 %v350
    %388 = vmatpush.bf16.msra.mxu0 %v348
    %389 = vmatmul.bf16.gmra.mxu0 %v358
    %v390 = vpop.f32.mrf.mxu0
    %v391 = vadd.f32 0.0, %v390
    %v392 = vpop.f32.mrf.mxu0
    %v393 = vadd.f32 0.0, %v392
    %394 = vmatmul.bf16.gmra.mxu0 %v361
    %v395 = vpop.f32.mrf.mxu0
    %v396 = vadd.f32 0.0, %v395
    %v397 = vpop.f32.mrf.mxu0
    %v398 = vadd.f32 0.0, %v397
    %399 = vmatmul.bf16.gmra.mxu0 %v364
    %v400 = vpop.f32.mrf.mxu0
    %v401 = vadd.f32 0.0, %v400
    %v402 = vpop.f32.mrf.mxu0
    %v403 = vadd.f32 0.0, %v402
    %404 = vmatmul.bf16.gmra.mxu0 %v367
    %v405 = vpop.f32.mrf.mxu0
    %v406 = vadd.f32 0.0, %v405
    %v407 = vpop.f32.mrf.mxu0
    %v408 = vadd.f32 0.0, %v407
    %409 = vmatmul.bf16.gmra.mxu0 %v370
    %v410 = vpop.f32.mrf.mxu0
    %v411 = vadd.f32 0.0, %v410
    %v412 = vpop.f32.mrf.mxu0
    %v413 = vadd.f32 0.0, %v412
    %414 = vmatmul.bf16.gmra.mxu0 %v373
    %v415 = vpop.f32.mrf.mxu0
    %v416 = vadd.f32 0.0, %v415
    %v417 = vpop.f32.mrf.mxu0
    %v418 = vadd.f32 0.0, %v417
    %419 = vmatmul.bf16.gmra.mxu0 %v376
    %v420 = vpop.f32.mrf.mxu0
    %v421 = vadd.f32 0.0, %v420
    %v422 = vpop.f32.mrf.mxu0
    %v423 = vadd.f32 0.0, %v422
    %424 = vmatmul.bf16.gmra.mxu0 %v379
    %v425 = vpop.f32.mrf.mxu0
    %v426 = vadd.f32 0.0, %v425
    %v427 = vpop.f32.mrf.mxu0
    %v428 = vadd.f32 0.0, %v427
    %429 = vdwg.mxu0
    %430 = vmatpush.bf16.msra.mxu0 0
    %431 = vmatpush.bf16.msra.mxu0 0
    %432 = vmatpush.bf16.msra.mxu0 0
    %433 = vmatpush.bf16.msra.mxu0 0
    %434 = vmatpush.bf16.msra.mxu0 0
    %435 = vmatpush.bf16.msra.mxu0 0
    %436 = vmatpush.bf16.msra.mxu0 %v351
    %437 = vmatpush.bf16.msra.mxu0 %v349
    %438 = vmatmul.bf16.gmra.mxu0 %v358
    %v439 = vpop.f32.mrf.mxu0
    %v440 = vadd.f32 0.0, %v439
    %v441 = vpop.f32.mrf.mxu0
    %v442 = vadd.f32 0.0, %v441
    %443 = vmatmul.bf16.gmra.mxu0 %v361
    %v444 = vpop.f32.mrf.mxu0
    %v445 = vadd.f32 0.0, %v444
    %v446 = vpop.f32.mrf.mxu0
    %v447 = vadd.f32 0.0, %v446
    %448 = vmatmul.bf16.gmra.mxu0 %v364
    %v449 = vpop.f32.mrf.mxu0
    %v450 = vadd.f32 0.0, %v449
    %v451 = vpop.f32.mrf.mxu0
    %v452 = vadd.f32 0.0, %v451
    %453 = vmatmul.bf16.gmra.mxu0 %v367
    %v454 = vpop.f32.mrf.mxu0
    %v455 = vadd.f32 0.0, %v454
    %v456 = vpop.f32.mrf.mxu0
    %v457 = vadd.f32 0.0, %v456
    %458 = vmatmul.bf16.gmra.mxu0 %v370
    %v459 = vpop.f32.mrf.mxu0
    %v460 = vadd.f32 0.0, %v459
    %v461 = vpop.f32.mrf.mxu0
    %v462 = vadd.f32 0.0, %v461
    %463 = vmatmul.bf16.gmra.mxu0 %v373
    %v464 = vpop.f32.mrf.mxu0
    %v465 = vadd.f32 0.0, %v464
    %v466 = vpop.f32.mrf.mxu0
    %v467 = vadd.f32 0.0, %v466
    %468 = vmatmul.bf16.gmra.mxu0 %v376
    %v469 = vpop.f32.mrf.mxu0
    %v470 = vadd.f32 0.0, %v469
    %v471 = vpop.f32.mrf.mxu0
    %v472 = vadd.f32 0.0, %v471
    %473 = vmatmul.bf16.gmra.mxu0 %v379
    %v474 = vpop.f32.mrf.mxu0
    %v475 = vadd.f32 0.0, %v474
    %v476 = vpop.f32.mrf.mxu0
    %v477 = vadd.f32 0.0, %v476
    %478 = vdwg.mxu0
    %v479 = vld [vmem:[%s6] sm:$0x3]
    %v480 = vpack.c.bf16 %v440, %v391
    %v481 = vpack.c.bf16 %v442, %v393
    %v482 = vpack.c.bf16 %v445, %v396
    %v483 = vpack.c.bf16 %v447, %v398
    %v484 = vpack.c.bf16 %v450, %v401
    %v485 = vpack.c.bf16 %v452, %v403
    %v486 = vpack.c.bf16 %v455, %v406
    %v487 = vpack.c.bf16 %v457, %v408
    %v488 = vpack.c.bf16 %v460, %v411
    %v489 = vpack.c.bf16 %v462, %v413
    %v490 = vpack.c.bf16 %v465, %v416
    %v491 = vpack.c.bf16 %v467, %v418
    %v492 = vpack.c.bf16 %v470, %v421
    %v493 = vpack.c.bf16 %v472, %v423
    %v494 = vpack.c.bf16 %v475, %v426
    %v495 = vpack.c.bf16 %v477, %v428
    %v497 = vperm.slane %v479, 0
    %v498 = vperm.slane %v479, 1
    %v501 = vpack.c.bf16 %v498, %v497
    %v503 = vunpack.c.l.b16 %v501
    %v504 = vunpack.c.h.b16 %v501
    %v505 = vpack.c.b16 %v503, %v503
    %v506 = vpack.c.b16 %v504, %v504
    %v508 = vpack.i.b16 %v505, %v505
    %v510 = vperm.slane %v508, 0
    %v512 = vpack.i.b16 %v506, %v506
    %v514 = vperm.slane %v512, 0
    %v515 = vunpack.c.l.bf16 %v480
    %v516 = vunpack.c.h.bf16 %v480
    %v517 = vunpack.c.l.bf16 %v481
    %v518 = vunpack.c.h.bf16 %v481
    %v519 = vunpack.c.l.bf16 %v482
    %v520 = vunpack.c.h.bf16 %v482
    %v521 = vunpack.c.l.bf16 %v483
    %v522 = vunpack.c.h.bf16 %v483
    %v523 = vunpack.c.l.bf16 %v484
    %v524 = vunpack.c.h.bf16 %v484
    %v525 = vunpack.c.l.bf16 %v485
    %v526 = vunpack.c.h.bf16 %v485
    %v527 = vunpack.c.l.bf16 %v486
    %v528 = vunpack.c.h.bf16 %v486
    %v529 = vunpack.c.l.bf16 %v487
    %v530 = vunpack.c.h.bf16 %v487
    %v531 = vunpack.c.l.bf16 %v488
    %v532 = vunpack.c.h.bf16 %v488
    %v533 = vunpack.c.l.bf16 %v489
    %v534 = vunpack.c.h.bf16 %v489
    %v535 = vunpack.c.l.bf16 %v490
    %v536 = vunpack.c.h.bf16 %v490
    %v537 = vunpack.c.l.bf16 %v491
    %v538 = vunpack.c.h.bf16 %v491
    %v539 = vunpack.c.l.bf16 %v492
    %v540 = vunpack.c.h.bf16 %v492
    %v541 = vunpack.c.l.bf16 %v493
    %v542 = vunpack.c.h.bf16 %v493
    %v543 = vunpack.c.l.bf16 %v494
    %v544 = vunpack.c.h.bf16 %v494
    %v545 = vunpack.c.l.bf16 %v495
    %v546 = vunpack.c.h.bf16 %v495
    %v547 = vunpack.c.l.bf16 %v510
    %v548 = vunpack.c.l.bf16 %v514
    %v549 = vadd.f32 %v515, %v547
    %v550 = vadd.f32 %v516, %v548
    %v551 = vadd.f32 %v517, %v547
    %v552 = vadd.f32 %v518, %v548
    %v553 = vadd.f32 %v519, %v547
    %v554 = vadd.f32 %v520, %v548
    %v555 = vadd.f32 %v521, %v547
    %v556 = vadd.f32 %v522, %v548
    %v557 = vadd.f32 %v523, %v547
    %v558 = vadd.f32 %v524, %v548
    %v559 = vadd.f32 %v525, %v547
    %v560 = vadd.f32 %v526, %v548
    %v561 = vadd.f32 %v527, %v547
    %v562 = vadd.f32 %v528, %v548
    %v563 = vadd.f32 %v529, %v547
    %v564 = vadd.f32 %v530, %v548
    %v565 = vadd.f32 %v531, %v547
    %v566 = vadd.f32 %v532, %v548
    %v567 = vadd.f32 %v533, %v547
    %v568 = vadd.f32 %v534, %v548
    %v569 = vadd.f32 %v535, %v547
    %v570 = vadd.f32 %v536, %v548
    %v571 = vadd.f32 %v537, %v547
    %v572 = vadd.f32 %v538, %v548
    %v573 = vadd.f32 %v539, %v547
    %v574 = vadd.f32 %v540, %v548
    %v575 = vadd.f32 %v541, %v547
    %v576 = vadd.f32 %v542, %v548
    %v577 = vadd.f32 %v543, %v547
    %v578 = vadd.f32 %v544, %v548
    %v579 = vadd.f32 %v545, %v547
    %v580 = vadd.f32 %v546, %v548
    %v581 = vpack.c.bf16 %v550, %v549
    %v582 = vpack.c.bf16 %v552, %v551
    %v583 = vpack.c.bf16 %v554, %v553
    %v584 = vpack.c.bf16 %v556, %v555
    %v585 = vpack.c.bf16 %v558, %v557
    %v586 = vpack.c.bf16 %v560, %v559
    %v587 = vpack.c.bf16 %v562, %v561
    %v588 = vpack.c.bf16 %v564, %v563
    %v589 = vpack.c.bf16 %v566, %v565
    %v590 = vpack.c.bf16 %v568, %v567
    %v591 = vpack.c.bf16 %v570, %v569
    %v592 = vpack.c.bf16 %v572, %v571
    %v593 = vpack.c.bf16 %v574, %v573
    %v594 = vpack.c.bf16 %v576, %v575
    %v595 = vpack.c.bf16 %v578, %v577
    %v596 = vpack.c.bf16 %v580, %v579
    %v597 = vunpack.c.l.bf16 %v581
    %v598 = vunpack.c.h.bf16 %v581
    %v599 = vunpack.c.l.bf16 %v582
    %v600 = vunpack.c.h.bf16 %v582
    %v601 = vunpack.c.l.bf16 %v583
    %v602 = vunpack.c.h.bf16 %v583
    %v603 = vunpack.c.l.bf16 %v584
    %v604 = vunpack.c.h.bf16 %v584
    %v605 = vunpack.c.l.bf16 %v585
    %v606 = vunpack.c.h.bf16 %v585
    %v607 = vunpack.c.l.bf16 %v586
    %v608 = vunpack.c.h.bf16 %v586
    %v609 = vunpack.c.l.bf16 %v587
    %v610 = vunpack.c.h.bf16 %v587
    %v611 = vunpack.c.l.bf16 %v588
    %v612 = vunpack.c.h.bf16 %v588
    %v613 = vunpack.c.l.bf16 %v589
    %v614 = vunpack.c.h.bf16 %v589
    %v615 = vunpack.c.l.bf16 %v590
    %v616 = vunpack.c.h.bf16 %v590
    %v617 = vunpack.c.l.bf16 %v591
    %v618 = vunpack.c.h.bf16 %v591
    %v619 = vunpack.c.l.bf16 %v592
    %v620 = vunpack.c.h.bf16 %v592
    %v621 = vunpack.c.l.bf16 %v593
    %v622 = vunpack.c.h.bf16 %v593
    %v623 = vunpack.c.l.bf16 %v594
    %v624 = vunpack.c.h.bf16 %v594
    %v625 = vunpack.c.l.bf16 %v595
    %v626 = vunpack.c.h.bf16 %v595
    %v627 = vunpack.c.l.bf16 %v596
    %v628 = vunpack.c.h.bf16 %v596
    %v629 = vmax.f32 %v597, 0.0
    %v630 = vmax.f32 %v598, 0.0
    %v631 = vmax.f32 %v599, 0.0
    %v632 = vmax.f32 %v600, 0.0
    %v633 = vmax.f32 %v601, 0.0
    %v634 = vmax.f32 %v602, 0.0
    %v635 = vmax.f32 %v603, 0.0
    %v636 = vmax.f32 %v604, 0.0
    %v637 = vmax.f32 %v605, 0.0
    %v638 = vmax.f32 %v606, 0.0
    %v639 = vmax.f32 %v607, 0.0
    %v640 = vmax.f32 %v608, 0.0
    %v641 = vmax.f32 %v609, 0.0
    %v642 = vmax.f32 %v610, 0.0
    %v643 = vmax.f32 %v611, 0.0
    %v644 = vmax.f32 %v612, 0.0
    %v645 = vmax.f32 %v613, 0.0
    %v646 = vmax.f32 %v614, 0.0
    %v647 = vmax.f32 %v615, 0.0
    %v648 = vmax.f32 %v616, 0.0
    %v649 = vmax.f32 %v617, 0.0
    %v650 = vmax.f32 %v618, 0.0
    %v651 = vmax.f32 %v619, 0.0
    %v652 = vmax.f32 %v620, 0.0
    %v653 = vmax.f32 %v621, 0.0
    %v654 = vmax.f32 %v622, 0.0
    %v655 = vmax.f32 %v623, 0.0
    %v656 = vmax.f32 %v624, 0.0
    %v657 = vmax.f32 %v625, 0.0
    %v658 = vmax.f32 %v626, 0.0
    %v659 = vmax.f32 %v627, 0.0
    %v660 = vmax.f32 %v628, 0.0
    %v661 = vpack.c.bf16 %v631, %v629
    %v662 = vpack.c.bf16 %v632, %v630
    %v663 = vpack.c.bf16 %v635, %v633
    %v664 = vpack.c.bf16 %v636, %v634
    %v665 = vpack.c.bf16 %v639, %v637
    %v666 = vpack.c.bf16 %v640, %v638
    %v667 = vpack.c.bf16 %v643, %v641
    %v668 = vpack.c.bf16 %v644, %v642
    %v669 = vpack.c.bf16 %v647, %v645
    %v670 = vpack.c.bf16 %v648, %v646
    %v671 = vpack.c.bf16 %v651, %v649
    %v672 = vpack.c.bf16 %v652, %v650
    %v673 = vpack.c.bf16 %v655, %v653
    %v674 = vpack.c.bf16 %v656, %v654
    %v675 = vpack.c.bf16 %v659, %v657
    %v676 = vpack.c.bf16 %v660, %v658
    %v677 = vld [vmem:[#allocation8] sm:$0xff]
    %v678 = vld [vmem:[#allocation8 + $0x8] sm:$0xff]
    %v679 = vld [vmem:[#allocation8 + $0x10] sm:$0xff]
    %v680 = vld [vmem:[#allocation8 + $0x18] sm:$0xff]
    %v681 = vld [vmem:[#allocation8 + $0x20] sm:$0xff]
    %v682 = vld [vmem:[#allocation8 + $0x28] sm:$0xff]
    %v683 = vld [vmem:[#allocation8 + $0x30] sm:$0xff]
    %v684 = vld [vmem:[#allocation8 + $0x38] sm:$0xff]
    %v685 = vld [vmem:[#allocation8 + $0x40] sm:$0xff]
    %v686 = vld [vmem:[#allocation8 + $0x48] sm:$0xff]
    %v687 = vld [vmem:[#allocation8 + $0x50] sm:$0xff]
    %v688 = vld [vmem:[#allocation8 + $0x58] sm:$0xff]
    %v689 = vld [vmem:[#allocation8 + $0x60] sm:$0xff]
    %v690 = vld [vmem:[#allocation8 + $0x68] sm:$0xff]
    %v691 = vld [vmem:[#allocation8 + $0x70] sm:$0xff]
    %v692 = vld [vmem:[#allocation8 + $0x78] sm:$0xff]
    %v693 = vld [vmem:[#allocation8 + $0x80] sm:$0xff]
    %v694 = vld [vmem:[#allocation8 + $0x88] sm:$0xff]
    %v695 = vld [vmem:[#allocation8 + $0x90] sm:$0xff]
    %v696 = vld [vmem:[#allocation8 + $0x98] sm:$0xff]
    %v697 = vld [vmem:[#allocation8 + $0xa0] sm:$0xff]
    %v698 = vld [vmem:[#allocation8 + $0xa8] sm:$0xff]
    %v699 = vld [vmem:[#allocation8 + $0xb0] sm:$0xff]
    %v700 = vld [vmem:[#allocation8 + $0xb8] sm:$0xff]
    %v701 = vld [vmem:[#allocation8 + $0xc0] sm:$0xff]
    %v702 = vld [vmem:[#allocation8 + $0xc8] sm:$0xff]
    %v703 = vld [vmem:[#allocation8 + $0xd0] sm:$0xff]
    %v704 = vld [vmem:[#allocation8 + $0xd8] sm:$0xff]
    %v705 = vld [vmem:[#allocation8 + $0xe0] sm:$0xff]
    %v706 = vld [vmem:[#allocation8 + $0xe8] sm:$0xff]
    %v707 = vld [vmem:[#allocation8 + $0xf0] sm:$0xff]
    %v708 = vld [vmem:[#allocation8 + $0xf8] sm:$0xff]
    %v741 = vunpack.c.l.b16 %v677
    %v742 = vunpack.c.h.b16 %v677
    %v743 = vunpack.c.l.b16 %v678
    %v744 = vunpack.c.h.b16 %v678
    %v745 = vunpack.c.l.b16 %v679
    %v746 = vunpack.c.h.b16 %v679
    %v747 = vunpack.c.l.b16 %v680
    %v748 = vunpack.c.h.b16 %v680
    %v749 = vunpack.c.l.b16 %v681
    %v750 = vunpack.c.h.b16 %v681
    %v751 = vunpack.c.l.b16 %v682
    %v752 = vunpack.c.h.b16 %v682
    %v753 = vunpack.c.l.b16 %v683
    %v754 = vunpack.c.h.b16 %v683
    %v755 = vunpack.c.l.b16 %v684
    %v756 = vunpack.c.h.b16 %v684
    %v757 = vunpack.c.l.b16 %v685
    %v758 = vunpack.c.h.b16 %v685
    %v759 = vunpack.c.l.b16 %v686
    %v760 = vunpack.c.h.b16 %v686
    %v761 = vunpack.c.l.b16 %v687
    %v762 = vunpack.c.h.b16 %v687
    %v763 = vunpack.c.l.b16 %v688
    %v764 = vunpack.c.h.b16 %v688
    %v765 = vunpack.c.l.b16 %v689
    %v766 = vunpack.c.h.b16 %v689
    %v767 = vunpack.c.l.b16 %v690
    %v768 = vunpack.c.h.b16 %v690
    %v769 = vunpack.c.l.b16 %v691
    %v770 = vunpack.c.h.b16 %v691
    %v771 = vunpack.c.l.b16 %v692
    %v772 = vunpack.c.h.b16 %v692
    %v773 = vunpack.c.l.b16 %v693
    %v774 = vunpack.c.h.b16 %v693
    %v775 = vunpack.c.l.b16 %v694
    %v776 = vunpack.c.h.b16 %v694
    %v777 = vunpack.c.l.b16 %v695
    %v778 = vunpack.c.h.b16 %v695
    %v779 = vunpack.c.l.b16 %v696
    %v780 = vunpack.c.h.b16 %v696
    %v781 = vunpack.c.l.b16 %v697
    %v782 = vunpack.c.h.b16 %v697
    %v783 = vunpack.c.l.b16 %v698
    %v784 = vunpack.c.h.b16 %v698
    %v785 = vunpack.c.l.b16 %v699
    %v786 = vunpack.c.h.b16 %v699
    %v787 = vunpack.c.l.b16 %v700
    %v788 = vunpack.c.h.b16 %v700
    %v789 = vunpack.c.l.b16 %v701
    %v790 = vunpack.c.h.b16 %v701
    %v791 = vunpack.c.l.b16 %v702
    %v792 = vunpack.c.h.b16 %v702
    %v793 = vunpack.c.l.b16 %v703
    %v794 = vunpack.c.h.b16 %v703
    %v795 = vunpack.c.l.b16 %v704
    %v796 = vunpack.c.h.b16 %v704
    %v797 = vunpack.c.l.b16 %v705
    %v798 = vunpack.c.h.b16 %v705
    %v799 = vunpack.c.l.b16 %v706
    %v800 = vunpack.c.h.b16 %v706
    %v801 = vunpack.c.l.b16 %v707
    %v802 = vunpack.c.h.b16 %v707
    %v803 = vunpack.c.l.b16 %v708
    %v804 = vunpack.c.h.b16 %v708
    %v805 = vpack.c.b16 %v743, %v741
    %v806 = vpack.c.b16 %v744, %v742
    %v807 = vpack.c.b16 %v747, %v745
    %v808 = vpack.c.b16 %v748, %v746
    %v809 = vpack.c.b16 %v751, %v749
    %v810 = vpack.c.b16 %v752, %v750
    %v811 = vpack.c.b16 %v755, %v753
    %v812 = vpack.c.b16 %v756, %v754
    %v813 = vpack.c.b16 %v759, %v757
    %v814 = vpack.c.b16 %v760, %v758
    %v815 = vpack.c.b16 %v763, %v761
    %v816 = vpack.c.b16 %v764, %v762
    %v817 = vpack.c.b16 %v767, %v765
    %v818 = vpack.c.b16 %v768, %v766
    %v819 = vpack.c.b16 %v771, %v769
    %v820 = vpack.c.b16 %v772, %v770
    %v821 = vpack.c.b16 %v775, %v773
    %v822 = vpack.c.b16 %v776, %v774
    %v823 = vpack.c.b16 %v779, %v777
    %v824 = vpack.c.b16 %v780, %v778
    %v825 = vpack.c.b16 %v783, %v781
    %v826 = vpack.c.b16 %v784, %v782
    %v827 = vpack.c.b16 %v787, %v785
    %v828 = vpack.c.b16 %v788, %v786
    %v829 = vpack.c.b16 %v791, %v789
    %v830 = vpack.c.b16 %v792, %v790
    %v831 = vpack.c.b16 %v795, %v793
    %v832 = vpack.c.b16 %v796, %v794
    %v833 = vpack.c.b16 %v799, %v797
    %v834 = vpack.c.b16 %v800, %v798
    %v835 = vpack.c.b16 %v803, %v801
    %v836 = vpack.c.b16 %v804, %v802
    %869 = vmatpush.bf16.msra.mxu0 %v819
    %870 = vmatpush.bf16.msra.mxu0 %v817
    %871 = vmatpush.bf16.msra.mxu0 %v815
    %872 = vmatpush.bf16.msra.mxu0 %v813
    %873 = vmatpush.bf16.msra.mxu0 %v811
    %874 = vmatpush.bf16.msra.mxu0 %v809
    %875 = vmatpush.bf16.msra.mxu0 %v807
    %876 = vmatpush.bf16.msra.mxu0 %v805
    %877 = vmatmul.bf16.gmra.mxu0 %v661
    %v878 = vpop.f32.mrf.mxu0
    %v879 = vadd.f32 0.0, %v878
    %v880 = vpop.f32.mrf.mxu0
    %v881 = vadd.f32 0.0, %v880
    %882 = vmatmul.bf16.gmra.mxu0 %v663
    %v883 = vpop.f32.mrf.mxu0
    %v884 = vadd.f32 0.0, %v883
    %v885 = vpop.f32.mrf.mxu0
    %v886 = vadd.f32 0.0, %v885
    %887 = vmatmul.bf16.gmra.mxu0 %v665
    %v888 = vpop.f32.mrf.mxu0
    %v889 = vadd.f32 0.0, %v888
    %v890 = vpop.f32.mrf.mxu0
    %v891 = vadd.f32 0.0, %v890
    %892 = vmatmul.bf16.gmra.mxu0 %v667
    %v893 = vpop.f32.mrf.mxu0
    %v894 = vadd.f32 0.0, %v893
    %v895 = vpop.f32.mrf.mxu0
    %v896 = vadd.f32 0.0, %v895
    %897 = vmatmul.bf16.gmra.mxu0 %v669
    %v898 = vpop.f32.mrf.mxu0
    %v899 = vadd.f32 0.0, %v898
    %v900 = vpop.f32.mrf.mxu0
    %v901 = vadd.f32 0.0, %v900
    %902 = vmatmul.bf16.gmra.mxu0 %v671
    %v903 = vpop.f32.mrf.mxu0
    %v904 = vadd.f32 0.0, %v903
    %v905 = vpop.f32.mrf.mxu0
    %v906 = vadd.f32 0.0, %v905
    %907 = vmatmul.bf16.gmra.mxu0 %v673
    %v908 = vpop.f32.mrf.mxu0
    %v909 = vadd.f32 0.0, %v908
    %v910 = vpop.f32.mrf.mxu0
    %v911 = vadd.f32 0.0, %v910
    %912 = vmatmul.bf16.gmra.mxu0 %v675
    %v913 = vpop.f32.mrf.mxu0
    %v914 = vadd.f32 0.0, %v913
    %v915 = vpop.f32.mrf.mxu0
    %v916 = vadd.f32 0.0, %v915
    %917 = vdwg.mxu0
    %918 = vmatpush.bf16.msra.mxu0 %v835
    %919 = vmatpush.bf16.msra.mxu0 %v833
    %920 = vmatpush.bf16.msra.mxu0 %v831
    %921 = vmatpush.bf16.msra.mxu0 %v829
    %922 = vmatpush.bf16.msra.mxu0 %v827
    %923 = vmatpush.bf16.msra.mxu0 %v825
    %924 = vmatpush.bf16.msra.mxu0 %v823
    %925 = vmatpush.bf16.msra.mxu0 %v821
    %926 = vmatmul.bf16.gmra.mxu0 %v662
    %v927 = vpop.f32.mrf.mxu0
    %v928 = vadd.f32 %v879, %v927
    %v929 = vpop.f32.mrf.mxu0
    %v930 = vadd.f32 %v881, %v929
    %931 = vmatmul.bf16.gmra.mxu0 %v664
    %v932 = vpop.f32.mrf.mxu0
    %v933 = vadd.f32 %v884, %v932
    %v934 = vpop.f32.mrf.mxu0
    %v935 = vadd.f32 %v886, %v934
    %936 = vmatmul.bf16.gmra.mxu0 %v666
    %v937 = vpop.f32.mrf.mxu0
    %v938 = vadd.f32 %v889, %v937
    %v939 = vpop.f32.mrf.mxu0
    %v940 = vadd.f32 %v891, %v939
    %941 = vmatmul.bf16.gmra.mxu0 %v668
    %v942 = vpop.f32.mrf.mxu0
    %v943 = vadd.f32 %v894, %v942
    %v944 = vpop.f32.mrf.mxu0
    %v945 = vadd.f32 %v896, %v944
    %946 = vmatmul.bf16.gmra.mxu0 %v670
    %v947 = vpop.f32.mrf.mxu0
    %v948 = vadd.f32 %v899, %v947
    %v949 = vpop.f32.mrf.mxu0
    %v950 = vadd.f32 %v901, %v949
    %951 = vmatmul.bf16.gmra.mxu0 %v672
    %v952 = vpop.f32.mrf.mxu0
    %v953 = vadd.f32 %v904, %v952
    %v954 = vpop.f32.mrf.mxu0
    %v955 = vadd.f32 %v906, %v954
    %956 = vmatmul.bf16.gmra.mxu0 %v674
    %v957 = vpop.f32.mrf.mxu0
    %v958 = vadd.f32 %v909, %v957
    %v959 = vpop.f32.mrf.mxu0
    %v960 = vadd.f32 %v911, %v959
    %961 = vmatmul.bf16.gmra.mxu0 %v676
    %v962 = vpop.f32.mrf.mxu0
    %v963 = vadd.f32 %v914, %v962
    %v964 = vpop.f32.mrf.mxu0
    %v965 = vadd.f32 %v916, %v964
    %966 = vdwg.mxu0
    %967 = vmatpush.bf16.msra.mxu0 %v820
    %968 = vmatpush.bf16.msra.mxu0 %v818
    %969 = vmatpush.bf16.msra.mxu0 %v816
    %970 = vmatpush.bf16.msra.mxu0 %v814
    %971 = vmatpush.bf16.msra.mxu0 %v812
    %972 = vmatpush.bf16.msra.mxu0 %v810
    %973 = vmatpush.bf16.msra.mxu0 %v808
    %974 = vmatpush.bf16.msra.mxu0 %v806
    %975 = vmatmul.bf16.gmra.mxu0 %v661
    %v976 = vpop.f32.mrf.mxu0
    %v977 = vadd.f32 0.0, %v976
    %v978 = vpop.f32.mrf.mxu0
    %v979 = vadd.f32 0.0, %v978
    %980 = vmatmul.bf16.gmra.mxu0 %v663
    %v981 = vpop.f32.mrf.mxu0
    %v982 = vadd.f32 0.0, %v981
    %v983 = vpop.f32.mrf.mxu0
    %v984 = vadd.f32 0.0, %v983
    %985 = vmatmul.bf16.gmra.mxu0 %v665
    %v986 = vpop.f32.mrf.mxu0
    %v987 = vadd.f32 0.0, %v986
    %v988 = vpop.f32.mrf.mxu0
    %v989 = vadd.f32 0.0, %v988
    %990 = vmatmul.bf16.gmra.mxu0 %v667
    %v991 = vpop.f32.mrf.mxu0
    %v992 = vadd.f32 0.0, %v991
    %v993 = vpop.f32.mrf.mxu0
    %v994 = vadd.f32 0.0, %v993
    %995 = vmatmul.bf16.gmra.mxu0 %v669
    %v996 = vpop.f32.mrf.mxu0
    %v997 = vadd.f32 0.0, %v996
    %v998 = vpop.f32.mrf.mxu0
    %v999 = vadd.f32 0.0, %v998
    %1000 = vmatmul.bf16.gmra.mxu0 %v671
    %v1001 = vpop.f32.mrf.mxu0
    %v1002 = vadd.f32 0.0, %v1001
    %v1003 = vpop.f32.mrf.mxu0
    %v1004 = vadd.f32 0.0, %v1003
    %1005 = vmatmul.bf16.gmra.mxu0 %v673
    %v1006 = vpop.f32.mrf.mxu0
    %v1007 = vadd.f32 0.0, %v1006
    %v1008 = vpop.f32.mrf.mxu0
    %v1009 = vadd.f32 0.0, %v1008
    %1010 = vmatmul.bf16.gmra.mxu0 %v675
    %v1011 = vpop.f32.mrf.mxu0
    %v1012 = vadd.f32 0.0, %v1011
    %v1013 = vpop.f32.mrf.mxu0
    %v1014 = vadd.f32 0.0, %v1013
    %1015 = vdwg.mxu0
    %1016 = vmatpush.bf16.msra.mxu0 %v836
    %1017 = vmatpush.bf16.msra.mxu0 %v834
    %1018 = vmatpush.bf16.msra.mxu0 %v832
    %1019 = vmatpush.bf16.msra.mxu0 %v830
    %1020 = vmatpush.bf16.msra.mxu0 %v828
    %1021 = vmatpush.bf16.msra.mxu0 %v826
    %1022 = vmatpush.bf16.msra.mxu0 %v824
    %1023 = vmatpush.bf16.msra.mxu0 %v822
    %1024 = vmatmul.bf16.gmra.mxu0 %v662
    %v1025 = vpop.f32.mrf.mxu0
    %v1026 = vadd.f32 %v977, %v1025
    %v1027 = vpop.f32.mrf.mxu0
    %v1028 = vadd.f32 %v979, %v1027
    %1029 = vmatmul.bf16.gmra.mxu0 %v664
    %v1030 = vpop.f32.mrf.mxu0
    %v1031 = vadd.f32 %v982, %v1030
    %v1032 = vpop.f32.mrf.mxu0
    %v1033 = vadd.f32 %v984, %v1032
    %1034 = vmatmul.bf16.gmra.mxu0 %v666
    %v1035 = vpop.f32.mrf.mxu0
    %v1036 = vadd.f32 %v987, %v1035
    %v1037 = vpop.f32.mrf.mxu0
    %v1038 = vadd.f32 %v989, %v1037
    %1039 = vmatmul.bf16.gmra.mxu0 %v668
    %v1040 = vpop.f32.mrf.mxu0
    %v1041 = vadd.f32 %v992, %v1040
    %v1042 = vpop.f32.mrf.mxu0
    %v1043 = vadd.f32 %v994, %v1042
    %1044 = vmatmul.bf16.gmra.mxu0 %v670
    %v1045 = vpop.f32.mrf.mxu0
    %v1046 = vadd.f32 %v997, %v1045
    %v1047 = vpop.f32.mrf.mxu0
    %v1048 = vadd.f32 %v999, %v1047
    %1049 = vmatmul.bf16.gmra.mxu0 %v672
    %v1050 = vpop.f32.mrf.mxu0
    %v1051 = vadd.f32 %v1002, %v1050
    %v1052 = vpop.f32.mrf.mxu0
    %v1053 = vadd.f32 %v1004, %v1052
    %1054 = vmatmul.bf16.gmra.mxu0 %v674
    %v1055 = vpop.f32.mrf.mxu0
    %v1056 = vadd.f32 %v1007, %v1055
    %v1057 = vpop.f32.mrf.mxu0
    %v1058 = vadd.f32 %v1009, %v1057
    %1059 = vmatmul.bf16.gmra.mxu0 %v676
    %v1060 = vpop.f32.mrf.mxu0
    %v1061 = vadd.f32 %v1012, %v1060
    %v1062 = vpop.f32.mrf.mxu0
    %v1063 = vadd.f32 %v1014, %v1062
    %1064 = vdwg.mxu0
    %v1065 = vld [vmem:[#allocation10] sm:$0x3]
    %v1066 = vpack.c.bf16 %v1026, %v928
    %v1067 = vpack.c.bf16 %v1028, %v930
    %v1068 = vpack.c.bf16 %v1031, %v933
    %v1069 = vpack.c.bf16 %v1033, %v935
    %v1070 = vpack.c.bf16 %v1036, %v938
    %v1071 = vpack.c.bf16 %v1038, %v940
    %v1072 = vpack.c.bf16 %v1041, %v943
    %v1073 = vpack.c.bf16 %v1043, %v945
    %v1074 = vpack.c.bf16 %v1046, %v948
    %v1075 = vpack.c.bf16 %v1048, %v950
    %v1076 = vpack.c.bf16 %v1051, %v953
    %v1077 = vpack.c.bf16 %v1053, %v955
    %v1078 = vpack.c.bf16 %v1056, %v958
    %v1079 = vpack.c.bf16 %v1058, %v960
    %v1080 = vpack.c.bf16 %v1061, %v963
    %v1081 = vpack.c.bf16 %v1063, %v965
    %v1083 = vperm.slane %v1065, 0
    %v1084 = vperm.slane %v1065, 1
    %v1087 = vpack.c.bf16 %v1084, %v1083
    %v1089 = vunpack.c.l.b16 %v1087
    %v1090 = vunpack.c.h.b16 %v1087
    %v1091 = vpack.c.b16 %v1089, %v1089
    %v1092 = vpack.c.b16 %v1090, %v1090
    %v1094 = vpack.i.b16 %v1091, %v1091
    %v1096 = vperm.slane %v1094, 0
    %v1098 = vpack.i.b16 %v1092, %v1092
    %v1100 = vperm.slane %v1098, 0
    %v1101 = vunpack.c.l.bf16 %v1066
    %v1102 = vunpack.c.h.bf16 %v1066
    %v1103 = vunpack.c.l.bf16 %v1067
    %v1104 = vunpack.c.h.bf16 %v1067
    %v1105 = vunpack.c.l.bf16 %v1068
    %v1106 = vunpack.c.h.bf16 %v1068
    %v1107 = vunpack.c.l.bf16 %v1069
    %v1108 = vunpack.c.h.bf16 %v1069
    %v1109 = vunpack.c.l.bf16 %v1070
    %v1110 = vunpack.c.h.bf16 %v1070
    %v1111 = vunpack.c.l.bf16 %v1071
    %v1112 = vunpack.c.h.bf16 %v1071
    %v1113 = vunpack.c.l.bf16 %v1072
    %v1114 = vunpack.c.h.bf16 %v1072
    %v1115 = vunpack.c.l.bf16 %v1073
    %v1116 = vunpack.c.h.bf16 %v1073
    %v1117 = vunpack.c.l.bf16 %v1074
    %v1118 = vunpack.c.h.bf16 %v1074
    %v1119 = vunpack.c.l.bf16 %v1075
    %v1120 = vunpack.c.h.bf16 %v1075
    %v1121 = vunpack.c.l.bf16 %v1076
    %v1122 = vunpack.c.h.bf16 %v1076
    %v1123 = vunpack.c.l.bf16 %v1077
    %v1124 = vunpack.c.h.bf16 %v1077
    %v1125 = vunpack.c.l.bf16 %v1078
    %v1126 = vunpack.c.h.bf16 %v1078
    %v1127 = vunpack.c.l.bf16 %v1079
    %v1128 = vunpack.c.h.bf16 %v1079
    %v1129 = vunpack.c.l.bf16 %v1080
    %v1130 = vunpack.c.h.bf16 %v1080
    %v1131 = vunpack.c.l.bf16 %v1081
    %v1132 = vunpack.c.h.bf16 %v1081
    %v1133 = vunpack.c.l.bf16 %v1096
    %v1134 = vunpack.c.l.bf16 %v1100
    %v1135 = vadd.f32 %v1101, %v1133
    %v1136 = vadd.f32 %v1102, %v1134
    %v1137 = vadd.f32 %v1103, %v1133
    %v1138 = vadd.f32 %v1104, %v1134
    %v1139 = vadd.f32 %v1105, %v1133
    %v1140 = vadd.f32 %v1106, %v1134
    %v1141 = vadd.f32 %v1107, %v1133
    %v1142 = vadd.f32 %v1108, %v1134
    %v1143 = vadd.f32 %v1109, %v1133
    %v1144 = vadd.f32 %v1110, %v1134
    %v1145 = vadd.f32 %v1111, %v1133
    %v1146 = vadd.f32 %v1112, %v1134
    %v1147 = vadd.f32 %v1113, %v1133
    %v1148 = vadd.f32 %v1114, %v1134
    %v1149 = vadd.f32 %v1115, %v1133
    %v1150 = vadd.f32 %v1116, %v1134
    %v1151 = vadd.f32 %v1117, %v1133
    %v1152 = vadd.f32 %v1118, %v1134
    %v1153 = vadd.f32 %v1119, %v1133
    %v1154 = vadd.f32 %v1120, %v1134
    %v1155 = vadd.f32 %v1121, %v1133
    %v1156 = vadd.f32 %v1122, %v1134
    %v1157 = vadd.f32 %v1123, %v1133
    %v1158 = vadd.f32 %v1124, %v1134
    %v1159 = vadd.f32 %v1125, %v1133
    %v1160 = vadd.f32 %v1126, %v1134
    %v1161 = vadd.f32 %v1127, %v1133
    %v1162 = vadd.f32 %v1128, %v1134
    %v1163 = vadd.f32 %v1129, %v1133
    %v1164 = vadd.f32 %v1130, %v1134
    %v1165 = vadd.f32 %v1131, %v1133
    %v1166 = vadd.f32 %v1132, %v1134
    %v1167 = vpack.c.bf16 %v1136, %v1135
    %v1168 = vpack.c.bf16 %v1138, %v1137
    %v1169 = vpack.c.bf16 %v1140, %v1139
    %v1170 = vpack.c.bf16 %v1142, %v1141
    %v1171 = vpack.c.bf16 %v1144, %v1143
    %v1172 = vpack.c.bf16 %v1146, %v1145
    %v1173 = vpack.c.bf16 %v1148, %v1147
    %v1174 = vpack.c.bf16 %v1150, %v1149
    %v1175 = vpack.c.bf16 %v1152, %v1151
    %v1176 = vpack.c.bf16 %v1154, %v1153
    %v1177 = vpack.c.bf16 %v1156, %v1155
    %v1178 = vpack.c.bf16 %v1158, %v1157
    %v1179 = vpack.c.bf16 %v1160, %v1159
    %v1180 = vpack.c.bf16 %v1162, %v1161
    %v1181 = vpack.c.bf16 %v1164, %v1163
    %v1182 = vpack.c.bf16 %v1166, %v1165
    %v1183 = vunpack.c.l.bf16 %v1167
    %v1184 = vunpack.c.h.bf16 %v1167
    %v1185 = vunpack.c.l.bf16 %v1168
    %v1186 = vunpack.c.h.bf16 %v1168
    %v1187 = vunpack.c.l.bf16 %v1169
    %v1188 = vunpack.c.h.bf16 %v1169
    %v1189 = vunpack.c.l.bf16 %v1170
    %v1190 = vunpack.c.h.bf16 %v1170
    %v1191 = vunpack.c.l.bf16 %v1171
    %v1192 = vunpack.c.h.bf16 %v1171
    %v1193 = vunpack.c.l.bf16 %v1172
    %v1194 = vunpack.c.h.bf16 %v1172
    %v1195 = vunpack.c.l.bf16 %v1173
    %v1196 = vunpack.c.h.bf16 %v1173
    %v1197 = vunpack.c.l.bf16 %v1174
    %v1198 = vunpack.c.h.bf16 %v1174
    %v1199 = vunpack.c.l.bf16 %v1175
    %v1200 = vunpack.c.h.bf16 %v1175
    %v1201 = vunpack.c.l.bf16 %v1176
    %v1202 = vunpack.c.h.bf16 %v1176
    %v1203 = vunpack.c.l.bf16 %v1177
    %v1204 = vunpack.c.h.bf16 %v1177
    %v1205 = vunpack.c.l.bf16 %v1178
    %v1206 = vunpack.c.h.bf16 %v1178
    %v1207 = vunpack.c.l.bf16 %v1179
    %v1208 = vunpack.c.h.bf16 %v1179
    %v1209 = vunpack.c.l.bf16 %v1180
    %v1210 = vunpack.c.h.bf16 %v1180
    %v1211 = vunpack.c.l.bf16 %v1181
    %v1212 = vunpack.c.h.bf16 %v1181
    %v1213 = vunpack.c.l.bf16 %v1182
    %v1214 = vunpack.c.h.bf16 %v1182
    %v1215 = vmax.f32 %v1183, 0.0
    %v1216 = vmax.f32 %v1184, 0.0
    %v1217 = vmax.f32 %v1185, 0.0
    %v1218 = vmax.f32 %v1186, 0.0
    %v1219 = vmax.f32 %v1187, 0.0
    %v1220 = vmax.f32 %v1188, 0.0
    %v1221 = vmax.f32 %v1189, 0.0
    %v1222 = vmax.f32 %v1190, 0.0
    %v1223 = vmax.f32 %v1191, 0.0
    %v1224 = vmax.f32 %v1192, 0.0
    %v1225 = vmax.f32 %v1193, 0.0
    %v1226 = vmax.f32 %v1194, 0.0
    %v1227 = vmax.f32 %v1195, 0.0
    %v1228 = vmax.f32 %v1196, 0.0
    %v1229 = vmax.f32 %v1197, 0.0
    %v1230 = vmax.f32 %v1198, 0.0
    %v1231 = vmax.f32 %v1199, 0.0
    %v1232 = vmax.f32 %v1200, 0.0
    %v1233 = vmax.f32 %v1201, 0.0
    %v1234 = vmax.f32 %v1202, 0.0
    %v1235 = vmax.f32 %v1203, 0.0
    %v1236 = vmax.f32 %v1204, 0.0
    %v1237 = vmax.f32 %v1205, 0.0
    %v1238 = vmax.f32 %v1206, 0.0
    %v1239 = vmax.f32 %v1207, 0.0
    %v1240 = vmax.f32 %v1208, 0.0
    %v1241 = vmax.f32 %v1209, 0.0
    %v1242 = vmax.f32 %v1210, 0.0
    %v1243 = vmax.f32 %v1211, 0.0
    %v1244 = vmax.f32 %v1212, 0.0
    %v1245 = vmax.f32 %v1213, 0.0
    %v1246 = vmax.f32 %v1214, 0.0
    %v1247 = vpack.c.bf16 %v1217, %v1215
    %v1248 = vpack.c.bf16 %v1218, %v1216
    %v1249 = vpack.c.bf16 %v1221, %v1219
    %v1250 = vpack.c.bf16 %v1222, %v1220
    %v1251 = vpack.c.bf16 %v1225, %v1223
    %v1252 = vpack.c.bf16 %v1226, %v1224
    %v1253 = vpack.c.bf16 %v1229, %v1227
    %v1254 = vpack.c.bf16 %v1230, %v1228
    %v1255 = vpack.c.bf16 %v1233, %v1231
    %v1256 = vpack.c.bf16 %v1234, %v1232
    %v1257 = vpack.c.bf16 %v1237, %v1235
    %v1258 = vpack.c.bf16 %v1238, %v1236
    %v1259 = vpack.c.bf16 %v1241, %v1239
    %v1260 = vpack.c.bf16 %v1242, %v1240
    %v1261 = vpack.c.bf16 %v1245, %v1243
    %v1262 = vpack.c.bf16 %v1246, %v1244
    %s1263 = scalar_lea.vmem [#allocation8], 256
    %v1264 = vld [vmem:[%s1263] sm:$0xff]
    %v1265 = vld [vmem:[%s1263 + $0x8] sm:$0xff]
    %v1266 = vld [vmem:[%s1263 + $0x10] sm:$0xff]
    %v1267 = vld [vmem:[%s1263 + $0x18] sm:$0xff]
    %v1268 = vld [vmem:[%s1263 + $0x20] sm:$0xff]
    %v1269 = vld [vmem:[%s1263 + $0x28] sm:$0xff]
    %v1270 = vld [vmem:[%s1263 + $0x30] sm:$0xff]
    %v1271 = vld [vmem:[%s1263 + $0x38] sm:$0xff]
    %v1272 = vld [vmem:[%s1263 + $0x40] sm:$0xff]
    %v1273 = vld [vmem:[%s1263 + $0x48] sm:$0xff]
    %v1274 = vld [vmem:[%s1263 + $0x50] sm:$0xff]
    %v1275 = vld [vmem:[%s1263 + $0x58] sm:$0xff]
    %v1276 = vld [vmem:[%s1263 + $0x60] sm:$0xff]
    %v1277 = vld [vmem:[%s1263 + $0x68] sm:$0xff]
    %v1278 = vld [vmem:[%s1263 + $0x70] sm:$0xff]
    %v1279 = vld [vmem:[%s1263 + $0x78] sm:$0xff]
    %v1280 = vld [vmem:[%s1263 + $0x80] sm:$0xff]
    %v1281 = vld [vmem:[%s1263 + $0x88] sm:$0xff]
    %v1282 = vld [vmem:[%s1263 + $0x90] sm:$0xff]
    %v1283 = vld [vmem:[%s1263 + $0x98] sm:$0xff]
    %v1284 = vld [vmem:[%s1263 + $0xa0] sm:$0xff]
    %v1285 = vld [vmem:[%s1263 + $0xa8] sm:$0xff]
    %v1286 = vld [vmem:[%s1263 + $0xb0] sm:$0xff]
    %v1287 = vld [vmem:[%s1263 + $0xb8] sm:$0xff]
    %v1288 = vld [vmem:[%s1263 + $0xc0] sm:$0xff]
    %v1289 = vld [vmem:[%s1263 + $0xc8] sm:$0xff]
    %v1290 = vld [vmem:[%s1263 + $0xd0] sm:$0xff]
    %v1291 = vld [vmem:[%s1263 + $0xd8] sm:$0xff]
    %v1292 = vld [vmem:[%s1263 + $0xe0] sm:$0xff]
    %v1293 = vld [vmem:[%s1263 + $0xe8] sm:$0xff]
    %v1294 = vld [vmem:[%s1263 + $0xf0] sm:$0xff]
    %v1295 = vld [vmem:[%s1263 + $0xf8] sm:$0xff]
    %v1328 = vunpack.c.l.b16 %v1264
    %v1329 = vunpack.c.h.b16 %v1264
    %v1330 = vunpack.c.l.b16 %v1265
    %v1331 = vunpack.c.h.b16 %v1265
    %v1332 = vunpack.c.l.b16 %v1266
    %v1333 = vunpack.c.h.b16 %v1266
    %v1334 = vunpack.c.l.b16 %v1267
    %v1335 = vunpack.c.h.b16 %v1267
    %v1336 = vunpack.c.l.b16 %v1268
    %v1337 = vunpack.c.h.b16 %v1268
    %v1338 = vunpack.c.l.b16 %v1269
    %v1339 = vunpack.c.h.b16 %v1269
    %v1340 = vunpack.c.l.b16 %v1270
    %v1341 = vunpack.c.h.b16 %v1270
    %v1342 = vunpack.c.l.b16 %v1271
    %v1343 = vunpack.c.h.b16 %v1271
    %v1344 = vunpack.c.l.b16 %v1272
    %v1345 = vunpack.c.h.b16 %v1272
    %v1346 = vunpack.c.l.b16 %v1273
    %v1347 = vunpack.c.h.b16 %v1273
    %v1348 = vunpack.c.l.b16 %v1274
    %v1349 = vunpack.c.h.b16 %v1274
    %v1350 = vunpack.c.l.b16 %v1275
    %v1351 = vunpack.c.h.b16 %v1275
    %v1352 = vunpack.c.l.b16 %v1276
    %v1353 = vunpack.c.h.b16 %v1276
    %v1354 = vunpack.c.l.b16 %v1277
    %v1355 = vunpack.c.h.b16 %v1277
    %v1356 = vunpack.c.l.b16 %v1278
    %v1357 = vunpack.c.h.b16 %v1278
    %v1358 = vunpack.c.l.b16 %v1279
    %v1359 = vunpack.c.h.b16 %v1279
    %v1360 = vunpack.c.l.b16 %v1280
    %v1361 = vunpack.c.h.b16 %v1280
    %v1362 = vunpack.c.l.b16 %v1281
    %v1363 = vunpack.c.h.b16 %v1281
    %v1364 = vunpack.c.l.b16 %v1282
    %v1365 = vunpack.c.h.b16 %v1282
    %v1366 = vunpack.c.l.b16 %v1283
    %v1367 = vunpack.c.h.b16 %v1283
    %v1368 = vunpack.c.l.b16 %v1284
    %v1369 = vunpack.c.h.b16 %v1284
    %v1370 = vunpack.c.l.b16 %v1285
    %v1371 = vunpack.c.h.b16 %v1285
    %v1372 = vunpack.c.l.b16 %v1286
    %v1373 = vunpack.c.h.b16 %v1286
    %v1374 = vunpack.c.l.b16 %v1287
    %v1375 = vunpack.c.h.b16 %v1287
    %v1376 = vunpack.c.l.b16 %v1288
    %v1377 = vunpack.c.h.b16 %v1288
    %v1378 = vunpack.c.l.b16 %v1289
    %v1379 = vunpack.c.h.b16 %v1289
    %v1380 = vunpack.c.l.b16 %v1290
    %v1381 = vunpack.c.h.b16 %v1290
    %v1382 = vunpack.c.l.b16 %v1291
    %v1383 = vunpack.c.h.b16 %v1291
    %v1384 = vunpack.c.l.b16 %v1292
    %v1385 = vunpack.c.h.b16 %v1292
    %v1386 = vunpack.c.l.b16 %v1293
    %v1387 = vunpack.c.h.b16 %v1293
    %v1388 = vunpack.c.l.b16 %v1294
    %v1389 = vunpack.c.h.b16 %v1294
    %v1390 = vunpack.c.l.b16 %v1295
    %v1391 = vunpack.c.h.b16 %v1295
    %v1392 = vpack.c.b16 %v1330, %v1328
    %v1393 = vpack.c.b16 %v1331, %v1329
    %v1394 = vpack.c.b16 %v1334, %v1332
    %v1395 = vpack.c.b16 %v1335, %v1333
    %v1396 = vpack.c.b16 %v1338, %v1336
    %v1397 = vpack.c.b16 %v1339, %v1337
    %v1398 = vpack.c.b16 %v1342, %v1340
    %v1399 = vpack.c.b16 %v1343, %v1341
    %v1400 = vpack.c.b16 %v1346, %v1344
    %v1401 = vpack.c.b16 %v1347, %v1345
    %v1402 = vpack.c.b16 %v1350, %v1348
    %v1403 = vpack.c.b16 %v1351, %v1349
    %v1404 = vpack.c.b16 %v1354, %v1352
    %v1405 = vpack.c.b16 %v1355, %v1353
    %v1406 = vpack.c.b16 %v1358, %v1356
    %v1407 = vpack.c.b16 %v1359, %v1357
    %v1408 = vpack.c.b16 %v1362, %v1360
    %v1409 = vpack.c.b16 %v1363, %v1361
    %v1410 = vpack.c.b16 %v1366, %v1364
    %v1411 = vpack.c.b16 %v1367, %v1365
    %v1412 = vpack.c.b16 %v1370, %v1368
    %v1413 = vpack.c.b16 %v1371, %v1369
    %v1414 = vpack.c.b16 %v1374, %v1372
    %v1415 = vpack.c.b16 %v1375, %v1373
    %v1416 = vpack.c.b16 %v1378, %v1376
    %v1417 = vpack.c.b16 %v1379, %v1377
    %v1418 = vpack.c.b16 %v1382, %v1380
    %v1419 = vpack.c.b16 %v1383, %v1381
    %v1420 = vpack.c.b16 %v1386, %v1384
    %v1421 = vpack.c.b16 %v1387, %v1385
    %v1422 = vpack.c.b16 %v1390, %v1388
    %v1423 = vpack.c.b16 %v1391, %v1389
    %1456 = vmatpush.bf16.msra.mxu0 %v1406
    %1457 = vmatpush.bf16.msra.mxu0 %v1404
    %1458 = vmatpush.bf16.msra.mxu0 %v1402
    %1459 = vmatpush.bf16.msra.mxu0 %v1400
    %1460 = vmatpush.bf16.msra.mxu0 %v1398
    %1461 = vmatpush.bf16.msra.mxu0 %v1396
    %1462 = vmatpush.bf16.msra.mxu0 %v1394
    %1463 = vmatpush.bf16.msra.mxu0 %v1392
    %1464 = vmatmul.bf16.gmra.mxu0 %v1247
    %v1465 = vpop.f32.mrf.mxu0
    %v1466 = vadd.f32 0.0, %v1465
    %v1467 = vpop.f32.mrf.mxu0
    %v1468 = vadd.f32 0.0, %v1467
    %1469 = vmatmul.bf16.gmra.mxu0 %v1249
    %v1470 = vpop.f32.mrf.mxu0
    %v1471 = vadd.f32 0.0, %v1470
    %v1472 = vpop.f32.mrf.mxu0
    %v1473 = vadd.f32 0.0, %v1472
    %1474 = vmatmul.bf16.gmra.mxu0 %v1251
    %v1475 = vpop.f32.mrf.mxu0
    %v1476 = vadd.f32 0.0, %v1475
    %v1477 = vpop.f32.mrf.mxu0
    %v1478 = vadd.f32 0.0, %v1477
    %1479 = vmatmul.bf16.gmra.mxu0 %v1253
    %v1480 = vpop.f32.mrf.mxu0
    %v1481 = vadd.f32 0.0, %v1480
    %v1482 = vpop.f32.mrf.mxu0
    %v1483 = vadd.f32 0.0, %v1482
    %1484 = vmatmul.bf16.gmra.mxu0 %v1255
    %v1485 = vpop.f32.mrf.mxu0
    %v1486 = vadd.f32 0.0, %v1485
    %v1487 = vpop.f32.mrf.mxu0
    %v1488 = vadd.f32 0.0, %v1487
    %1489 = vmatmul.bf16.gmra.mxu0 %v1257
    %v1490 = vpop.f32.mrf.mxu0
    %v1491 = vadd.f32 0.0, %v1490
    %v1492 = vpop.f32.mrf.mxu0
    %v1493 = vadd.f32 0.0, %v1492
    %1494 = vmatmul.bf16.gmra.mxu0 %v1259
    %v1495 = vpop.f32.mrf.mxu0
    %v1496 = vadd.f32 0.0, %v1495
    %v1497 = vpop.f32.mrf.mxu0
    %v1498 = vadd.f32 0.0, %v1497
    %1499 = vmatmul.bf16.gmra.mxu0 %v1261
    %v1500 = vpop.f32.mrf.mxu0
    %v1501 = vadd.f32 0.0, %v1500
    %v1502 = vpop.f32.mrf.mxu0
    %v1503 = vadd.f32 0.0, %v1502
    %1504 = vdwg.mxu0
    %1505 = vmatpush.bf16.msra.mxu0 %v1422
    %1506 = vmatpush.bf16.msra.mxu0 %v1420
    %1507 = vmatpush.bf16.msra.mxu0 %v1418
    %1508 = vmatpush.bf16.msra.mxu0 %v1416
    %1509 = vmatpush.bf16.msra.mxu0 %v1414
    %1510 = vmatpush.bf16.msra.mxu0 %v1412
    %1511 = vmatpush.bf16.msra.mxu0 %v1410
    %1512 = vmatpush.bf16.msra.mxu0 %v1408
    %1513 = vmatmul.bf16.gmra.mxu0 %v1248
    %v1514 = vpop.f32.mrf.mxu0
    %v1515 = vadd.f32 %v1466, %v1514
    %v1516 = vpop.f32.mrf.mxu0
    %v1517 = vadd.f32 %v1468, %v1516
    %1518 = vmatmul.bf16.gmra.mxu0 %v1250
    %v1519 = vpop.f32.mrf.mxu0
    %v1520 = vadd.f32 %v1471, %v1519
    %v1521 = vpop.f32.mrf.mxu0
    %v1522 = vadd.f32 %v1473, %v1521
    %1523 = vmatmul.bf16.gmra.mxu0 %v1252
    %v1524 = vpop.f32.mrf.mxu0
    %v1525 = vadd.f32 %v1476, %v1524
    %v1526 = vpop.f32.mrf.mxu0
    %v1527 = vadd.f32 %v1478, %v1526
    %1528 = vmatmul.bf16.gmra.mxu0 %v1254
    %v1529 = vpop.f32.mrf.mxu0
    %v1530 = vadd.f32 %v1481, %v1529
    %v1531 = vpop.f32.mrf.mxu0
    %v1532 = vadd.f32 %v1483, %v1531
    %1533 = vmatmul.bf16.gmra.mxu0 %v1256
    %v1534 = vpop.f32.mrf.mxu0
    %v1535 = vadd.f32 %v1486, %v1534
    %v1536 = vpop.f32.mrf.mxu0
    %v1537 = vadd.f32 %v1488, %v1536
    %1538 = vmatmul.bf16.gmra.mxu0 %v1258
    %v1539 = vpop.f32.mrf.mxu0
    %v1540 = vadd.f32 %v1491, %v1539
    %v1541 = vpop.f32.mrf.mxu0
    %v1542 = vadd.f32 %v1493, %v1541
    %1543 = vmatmul.bf16.gmra.mxu0 %v1260
    %v1544 = vpop.f32.mrf.mxu0
    %v1545 = vadd.f32 %v1496, %v1544
    %v1546 = vpop.f32.mrf.mxu0
    %v1547 = vadd.f32 %v1498, %v1546
    %1548 = vmatmul.bf16.gmra.mxu0 %v1262
    %v1549 = vpop.f32.mrf.mxu0
    %v1550 = vadd.f32 %v1501, %v1549
    %v1551 = vpop.f32.mrf.mxu0
    %v1552 = vadd.f32 %v1503, %v1551
    %1553 = vdwg.mxu0
    %1554 = vmatpush.bf16.msra.mxu0 %v1407
    %1555 = vmatpush.bf16.msra.mxu0 %v1405
    %1556 = vmatpush.bf16.msra.mxu0 %v1403
    %1557 = vmatpush.bf16.msra.mxu0 %v1401
    %1558 = vmatpush.bf16.msra.mxu0 %v1399
    %1559 = vmatpush.bf16.msra.mxu0 %v1397
    %1560 = vmatpush.bf16.msra.mxu0 %v1395
    %1561 = vmatpush.bf16.msra.mxu0 %v1393
    %1562 = vmatmul.bf16.gmra.mxu0 %v1247
    %v1563 = vpop.f32.mrf.mxu0
    %v1564 = vadd.f32 0.0, %v1563
    %v1565 = vpop.f32.mrf.mxu0
    %v1566 = vadd.f32 0.0, %v1565
    %1567 = vmatmul.bf16.gmra.mxu0 %v1249
    %v1568 = vpop.f32.mrf.mxu0
    %v1569 = vadd.f32 0.0, %v1568
    %v1570 = vpop.f32.mrf.mxu0
    %v1571 = vadd.f32 0.0, %v1570
    %1572 = vmatmul.bf16.gmra.mxu0 %v1251
    %v1573 = vpop.f32.mrf.mxu0
    %v1574 = vadd.f32 0.0, %v1573
    %v1575 = vpop.f32.mrf.mxu0
    %v1576 = vadd.f32 0.0, %v1575
    %1577 = vmatmul.bf16.gmra.mxu0 %v1253
    %v1578 = vpop.f32.mrf.mxu0
    %v1579 = vadd.f32 0.0, %v1578
    %v1580 = vpop.f32.mrf.mxu0
    %v1581 = vadd.f32 0.0, %v1580
    %1582 = vmatmul.bf16.gmra.mxu0 %v1255
    %v1583 = vpop.f32.mrf.mxu0
    %v1584 = vadd.f32 0.0, %v1583
    %v1585 = vpop.f32.mrf.mxu0
    %v1586 = vadd.f32 0.0, %v1585
    %1587 = vmatmul.bf16.gmra.mxu0 %v1257
    %v1588 = vpop.f32.mrf.mxu0
    %v1589 = vadd.f32 0.0, %v1588
    %v1590 = vpop.f32.mrf.mxu0
    %v1591 = vadd.f32 0.0, %v1590
    %1592 = vmatmul.bf16.gmra.mxu0 %v1259
    %v1593 = vpop.f32.mrf.mxu0
    %v1594 = vadd.f32 0.0, %v1593
    %v1595 = vpop.f32.mrf.mxu0
    %v1596 = vadd.f32 0.0, %v1595
    %1597 = vmatmul.bf16.gmra.mxu0 %v1261
    %v1598 = vpop.f32.mrf.mxu0
    %v1599 = vadd.f32 0.0, %v1598
    %v1600 = vpop.f32.mrf.mxu0
    %v1601 = vadd.f32 0.0, %v1600
    %1602 = vdwg.mxu0
    %1603 = vmatpush.bf16.msra.mxu0 %v1423
    %1604 = vmatpush.bf16.msra.mxu0 %v1421
    %1605 = vmatpush.bf16.msra.mxu0 %v1419
    %1606 = vmatpush.bf16.msra.mxu0 %v1417
    %1607 = vmatpush.bf16.msra.mxu0 %v1415
    %1608 = vmatpush.bf16.msra.mxu0 %v1413
    %1609 = vmatpush.bf16.msra.mxu0 %v1411
    %1610 = vmatpush.bf16.msra.mxu0 %v1409
    %1611 = vmatmul.bf16.gmra.mxu0 %v1248
    %v1612 = vpop.f32.mrf.mxu0
    %v1613 = vadd.f32 %v1564, %v1612
    %v1614 = vpop.f32.mrf.mxu0
    %v1615 = vadd.f32 %v1566, %v1614
    %1616 = vmatmul.bf16.gmra.mxu0 %v1250
    %v1617 = vpop.f32.mrf.mxu0
    %v1618 = vadd.f32 %v1569, %v1617
    %v1619 = vpop.f32.mrf.mxu0
    %v1620 = vadd.f32 %v1571, %v1619
    %1621 = vmatmul.bf16.gmra.mxu0 %v1252
    %v1622 = vpop.f32.mrf.mxu0
    %v1623 = vadd.f32 %v1574, %v1622
    %v1624 = vpop.f32.mrf.mxu0
    %v1625 = vadd.f32 %v1576, %v1624
    %1626 = vmatmul.bf16.gmra.mxu0 %v1254
    %v1627 = vpop.f32.mrf.mxu0
    %v1628 = vadd.f32 %v1579, %v1627
    %v1629 = vpop.f32.mrf.mxu0
    %v1630 = vadd.f32 %v1581, %v1629
    %1631 = vmatmul.bf16.gmra.mxu0 %v1256
    %v1632 = vpop.f32.mrf.mxu0
    %v1633 = vadd.f32 %v1584, %v1632
    %v1634 = vpop.f32.mrf.mxu0
    %v1635 = vadd.f32 %v1586, %v1634
    %1636 = vmatmul.bf16.gmra.mxu0 %v1258
    %v1637 = vpop.f32.mrf.mxu0
    %v1638 = vadd.f32 %v1589, %v1637
    %v1639 = vpop.f32.mrf.mxu0
    %v1640 = vadd.f32 %v1591, %v1639
    %1641 = vmatmul.bf16.gmra.mxu0 %v1260
    %v1642 = vpop.f32.mrf.mxu0
    %v1643 = vadd.f32 %v1594, %v1642
    %v1644 = vpop.f32.mrf.mxu0
    %v1645 = vadd.f32 %v1596, %v1644
    %1646 = vmatmul.bf16.gmra.mxu0 %v1262
    %v1647 = vpop.f32.mrf.mxu0
    %v1648 = vadd.f32 %v1599, %v1647
    %v1649 = vpop.f32.mrf.mxu0
    %v1650 = vadd.f32 %v1601, %v1649
    %1651 = vdwg.mxu0
    %s1652 = scalar_lea.vmem [#allocation10], 2
    %v1653 = vld [vmem:[%s1652] sm:$0x3]
    %v1654 = vpack.c.bf16 %v1613, %v1515
    %v1655 = vpack.c.bf16 %v1615, %v1517
    %v1656 = vpack.c.bf16 %v1618, %v1520
    %v1657 = vpack.c.bf16 %v1620, %v1522
    %v1658 = vpack.c.bf16 %v1623, %v1525
    %v1659 = vpack.c.bf16 %v1625, %v1527
    %v1660 = vpack.c.bf16 %v1628, %v1530
    %v1661 = vpack.c.bf16 %v1630, %v1532
    %v1662 = vpack.c.bf16 %v1633, %v1535
    %v1663 = vpack.c.bf16 %v1635, %v1537
    %v1664 = vpack.c.bf16 %v1638, %v1540
    %v1665 = vpack.c.bf16 %v1640, %v1542
    %v1666 = vpack.c.bf16 %v1643, %v1545
    %v1667 = vpack.c.bf16 %v1645, %v1547
    %v1668 = vpack.c.bf16 %v1648, %v1550
    %v1669 = vpack.c.bf16 %v1650, %v1552
    %v1671 = vperm.slane %v1653, 0
    %v1672 = vperm.slane %v1653, 1
    %v1675 = vpack.c.bf16 %v1672, %v1671
    %v1677 = vunpack.c.l.b16 %v1675
    %v1678 = vunpack.c.h.b16 %v1675
    %v1679 = vpack.c.b16 %v1677, %v1677
    %v1680 = vpack.c.b16 %v1678, %v1678
    %v1682 = vpack.i.b16 %v1679, %v1679
    %v1684 = vperm.slane %v1682, 0
    %v1686 = vpack.i.b16 %v1680, %v1680
    %v1688 = vperm.slane %v1686, 0
    %v1689 = vunpack.c.l.bf16 %v1654
    %v1690 = vunpack.c.h.bf16 %v1654
    %v1691 = vunpack.c.l.bf16 %v1655
    %v1692 = vunpack.c.h.bf16 %v1655
    %v1693 = vunpack.c.l.bf16 %v1656
    %v1694 = vunpack.c.h.bf16 %v1656
    %v1695 = vunpack.c.l.bf16 %v1657
    %v1696 = vunpack.c.h.bf16 %v1657
    %v1697 = vunpack.c.l.bf16 %v1658
    %v1698 = vunpack.c.h.bf16 %v1658
    %v1699 = vunpack.c.l.bf16 %v1659
    %v1700 = vunpack.c.h.bf16 %v1659
    %v1701 = vunpack.c.l.bf16 %v1660
    %v1702 = vunpack.c.h.bf16 %v1660
    %v1703 = vunpack.c.l.bf16 %v1661
    %v1704 = vunpack.c.h.bf16 %v1661
    %v1705 = vunpack.c.l.bf16 %v1662
    %v1706 = vunpack.c.h.bf16 %v1662
    %v1707 = vunpack.c.l.bf16 %v1663
    %v1708 = vunpack.c.h.bf16 %v1663
    %v1709 = vunpack.c.l.bf16 %v1664
    %v1710 = vunpack.c.h.bf16 %v1664
    %v1711 = vunpack.c.l.bf16 %v1665
    %v1712 = vunpack.c.h.bf16 %v1665
    %v1713 = vunpack.c.l.bf16 %v1666
    %v1714 = vunpack.c.h.bf16 %v1666
    %v1715 = vunpack.c.l.bf16 %v1667
    %v1716 = vunpack.c.h.bf16 %v1667
    %v1717 = vunpack.c.l.bf16 %v1668
    %v1718 = vunpack.c.h.bf16 %v1668
    %v1719 = vunpack.c.l.bf16 %v1669
    %v1720 = vunpack.c.h.bf16 %v1669
    %v1721 = vunpack.c.l.bf16 %v1684
    %v1722 = vunpack.c.l.bf16 %v1688
    %v1723 = vadd.f32 %v1689, %v1721
    %v1724 = vadd.f32 %v1690, %v1722
    %v1725 = vadd.f32 %v1691, %v1721
    %v1726 = vadd.f32 %v1692, %v1722
    %v1727 = vadd.f32 %v1693, %v1721
    %v1728 = vadd.f32 %v1694, %v1722
    %v1729 = vadd.f32 %v1695, %v1721
    %v1730 = vadd.f32 %v1696, %v1722
    %v1731 = vadd.f32 %v1697, %v1721
    %v1732 = vadd.f32 %v1698, %v1722
    %v1733 = vadd.f32 %v1699, %v1721
    %v1734 = vadd.f32 %v1700, %v1722
    %v1735 = vadd.f32 %v1701, %v1721
    %v1736 = vadd.f32 %v1702, %v1722
    %v1737 = vadd.f32 %v1703, %v1721
    %v1738 = vadd.f32 %v1704, %v1722
    %v1739 = vadd.f32 %v1705, %v1721
    %v1740 = vadd.f32 %v1706, %v1722
    %v1741 = vadd.f32 %v1707, %v1721
    %v1742 = vadd.f32 %v1708, %v1722
    %v1743 = vadd.f32 %v1709, %v1721
    %v1744 = vadd.f32 %v1710, %v1722
    %v1745 = vadd.f32 %v1711, %v1721
    %v1746 = vadd.f32 %v1712, %v1722
    %v1747 = vadd.f32 %v1713, %v1721
    %v1748 = vadd.f32 %v1714, %v1722
    %v1749 = vadd.f32 %v1715, %v1721
    %v1750 = vadd.f32 %v1716, %v1722
    %v1751 = vadd.f32 %v1717, %v1721
    %v1752 = vadd.f32 %v1718, %v1722
    %v1753 = vadd.f32 %v1719, %v1721
    %v1754 = vadd.f32 %v1720, %v1722
    %v1755 = vpack.c.bf16 %v1724, %v1723
    %v1756 = vpack.c.bf16 %v1726, %v1725
    %v1757 = vpack.c.bf16 %v1728, %v1727
    %v1758 = vpack.c.bf16 %v1730, %v1729
    %v1759 = vpack.c.bf16 %v1732, %v1731
    %v1760 = vpack.c.bf16 %v1734, %v1733
    %v1761 = vpack.c.bf16 %v1736, %v1735
    %v1762 = vpack.c.bf16 %v1738, %v1737
    %v1763 = vpack.c.bf16 %v1740, %v1739
    %v1764 = vpack.c.bf16 %v1742, %v1741
    %v1765 = vpack.c.bf16 %v1744, %v1743
    %v1766 = vpack.c.bf16 %v1746, %v1745
    %v1767 = vpack.c.bf16 %v1748, %v1747
    %v1768 = vpack.c.bf16 %v1750, %v1749
    %v1769 = vpack.c.bf16 %v1752, %v1751
    %v1770 = vpack.c.bf16 %v1754, %v1753
    %v1771 = vunpack.c.l.bf16 %v1755
    %v1772 = vunpack.c.h.bf16 %v1755
    %v1773 = vunpack.c.l.bf16 %v1756
    %v1774 = vunpack.c.h.bf16 %v1756
    %v1775 = vunpack.c.l.bf16 %v1757
    %v1776 = vunpack.c.h.bf16 %v1757
    %v1777 = vunpack.c.l.bf16 %v1758
    %v1778 = vunpack.c.h.bf16 %v1758
    %v1779 = vunpack.c.l.bf16 %v1759
    %v1780 = vunpack.c.h.bf16 %v1759
    %v1781 = vunpack.c.l.bf16 %v1760
    %v1782 = vunpack.c.h.bf16 %v1760
    %v1783 = vunpack.c.l.bf16 %v1761
    %v1784 = vunpack.c.h.bf16 %v1761
    %v1785 = vunpack.c.l.bf16 %v1762
    %v1786 = vunpack.c.h.bf16 %v1762
    %v1787 = vunpack.c.l.bf16 %v1763
    %v1788 = vunpack.c.h.bf16 %v1763
    %v1789 = vunpack.c.l.bf16 %v1764
    %v1790 = vunpack.c.h.bf16 %v1764
    %v1791 = vunpack.c.l.bf16 %v1765
    %v1792 = vunpack.c.h.bf16 %v1765
    %v1793 = vunpack.c.l.bf16 %v1766
    %v1794 = vunpack.c.h.bf16 %v1766
    %v1795 = vunpack.c.l.bf16 %v1767
    %v1796 = vunpack.c.h.bf16 %v1767
    %v1797 = vunpack.c.l.bf16 %v1768
    %v1798 = vunpack.c.h.bf16 %v1768
    %v1799 = vunpack.c.l.bf16 %v1769
    %v1800 = vunpack.c.h.bf16 %v1769
    %v1801 = vunpack.c.l.bf16 %v1770
    %v1802 = vunpack.c.h.bf16 %v1770
    %v1803 = vmax.f32 %v1771, 0.0
    %v1804 = vmax.f32 %v1772, 0.0
    %v1805 = vmax.f32 %v1773, 0.0
    %v1806 = vmax.f32 %v1774, 0.0
    %v1807 = vmax.f32 %v1775, 0.0
    %v1808 = vmax.f32 %v1776, 0.0
    %v1809 = vmax.f32 %v1777, 0.0
    %v1810 = vmax.f32 %v1778, 0.0
    %v1811 = vmax.f32 %v1779, 0.0
    %v1812 = vmax.f32 %v1780, 0.0
    %v1813 = vmax.f32 %v1781, 0.0
    %v1814 = vmax.f32 %v1782, 0.0
    %v1815 = vmax.f32 %v1783, 0.0
    %v1816 = vmax.f32 %v1784, 0.0
    %v1817 = vmax.f32 %v1785, 0.0
    %v1818 = vmax.f32 %v1786, 0.0
    %v1819 = vmax.f32 %v1787, 0.0
    %v1820 = vmax.f32 %v1788, 0.0
    %v1821 = vmax.f32 %v1789, 0.0
    %v1822 = vmax.f32 %v1790, 0.0
    %v1823 = vmax.f32 %v1791, 0.0
    %v1824 = vmax.f32 %v1792, 0.0
    %v1825 = vmax.f32 %v1793, 0.0
    %v1826 = vmax.f32 %v1794, 0.0
    %v1827 = vmax.f32 %v1795, 0.0
    %v1828 = vmax.f32 %v1796, 0.0
    %v1829 = vmax.f32 %v1797, 0.0
    %v1830 = vmax.f32 %v1798, 0.0
    %v1831 = vmax.f32 %v1799, 0.0
    %v1832 = vmax.f32 %v1800, 0.0
    %v1833 = vmax.f32 %v1801, 0.0
    %v1834 = vmax.f32 %v1802, 0.0
    %v1835 = vpack.c.bf16 %v1805, %v1803
    %v1836 = vpack.c.bf16 %v1806, %v1804
    %v1837 = vpack.c.bf16 %v1809, %v1807
    %v1838 = vpack.c.bf16 %v1810, %v1808
    %v1839 = vpack.c.bf16 %v1813, %v1811
    %v1840 = vpack.c.bf16 %v1814, %v1812
    %v1841 = vpack.c.bf16 %v1817, %v1815
    %v1842 = vpack.c.bf16 %v1818, %v1816
    %v1843 = vpack.c.bf16 %v1821, %v1819
    %v1844 = vpack.c.bf16 %v1822, %v1820
    %v1845 = vpack.c.bf16 %v1825, %v1823
    %v1846 = vpack.c.bf16 %v1826, %v1824
    %v1847 = vpack.c.bf16 %v1829, %v1827
    %v1848 = vpack.c.bf16 %v1830, %v1828
    %v1849 = vpack.c.bf16 %v1833, %v1831
    %v1850 = vpack.c.bf16 %v1834, %v1832
    %s1851 = scalar_lea.vmem [#allocation8], 512
    %v1852 = vld [vmem:[%s1851] sm:$0xff]
    %v1853 = vld [vmem:[%s1851 + $0x8] sm:$0xff]
    %v1854 = vld [vmem:[%s1851 + $0x10] sm:$0xff]
    %v1855 = vld [vmem:[%s1851 + $0x18] sm:$0xff]
    %v1856 = vld [vmem:[%s1851 + $0x20] sm:$0xff]
    %v1857 = vld [vmem:[%s1851 + $0x28] sm:$0xff]
    %v1858 = vld [vmem:[%s1851 + $0x30] sm:$0xff]
    %v1859 = vld [vmem:[%s1851 + $0x38] sm:$0xff]
    %v1860 = vld [vmem:[%s1851 + $0x40] sm:$0xff]
    %v1861 = vld [vmem:[%s1851 + $0x48] sm:$0xff]
    %v1862 = vld [vmem:[%s1851 + $0x50] sm:$0xff]
    %v1863 = vld [vmem:[%s1851 + $0x58] sm:$0xff]
    %v1864 = vld [vmem:[%s1851 + $0x60] sm:$0xff]
    %v1865 = vld [vmem:[%s1851 + $0x68] sm:$0xff]
    %v1866 = vld [vmem:[%s1851 + $0x70] sm:$0xff]
    %v1867 = vld [vmem:[%s1851 + $0x78] sm:$0xff]
    %v1868 = vld [vmem:[%s1851 + $0x80] sm:$0xff]
    %v1869 = vld [vmem:[%s1851 + $0x88] sm:$0xff]
    %v1870 = vld [vmem:[%s1851 + $0x90] sm:$0xff]
    %v1871 = vld [vmem:[%s1851 + $0x98] sm:$0xff]
    %v1872 = vld [vmem:[%s1851 + $0xa0] sm:$0xff]
    %v1873 = vld [vmem:[%s1851 + $0xa8] sm:$0xff]
    %v1874 = vld [vmem:[%s1851 + $0xb0] sm:$0xff]
    %v1875 = vld [vmem:[%s1851 + $0xb8] sm:$0xff]
    %v1876 = vld [vmem:[%s1851 + $0xc0] sm:$0xff]
    %v1877 = vld [vmem:[%s1851 + $0xc8] sm:$0xff]
    %v1878 = vld [vmem:[%s1851 + $0xd0] sm:$0xff]
    %v1879 = vld [vmem:[%s1851 + $0xd8] sm:$0xff]
    %v1880 = vld [vmem:[%s1851 + $0xe0] sm:$0xff]
    %v1881 = vld [vmem:[%s1851 + $0xe8] sm:$0xff]
    %v1882 = vld [vmem:[%s1851 + $0xf0] sm:$0xff]
    %v1883 = vld [vmem:[%s1851 + $0xf8] sm:$0xff]
    %v1916 = vunpack.c.l.b16 %v1852
    %v1917 = vunpack.c.h.b16 %v1852
    %v1918 = vunpack.c.l.b16 %v1853
    %v1919 = vunpack.c.h.b16 %v1853
    %v1920 = vunpack.c.l.b16 %v1854
    %v1921 = vunpack.c.h.b16 %v1854
    %v1922 = vunpack.c.l.b16 %v1855
    %v1923 = vunpack.c.h.b16 %v1855
    %v1924 = vunpack.c.l.b16 %v1856
    %v1925 = vunpack.c.h.b16 %v1856
    %v1926 = vunpack.c.l.b16 %v1857
    %v1927 = vunpack.c.h.b16 %v1857
    %v1928 = vunpack.c.l.b16 %v1858
    %v1929 = vunpack.c.h.b16 %v1858
    %v1930 = vunpack.c.l.b16 %v1859
    %v1931 = vunpack.c.h.b16 %v1859
    %v1932 = vunpack.c.l.b16 %v1860
    %v1933 = vunpack.c.h.b16 %v1860
    %v1934 = vunpack.c.l.b16 %v1861
    %v1935 = vunpack.c.h.b16 %v1861
    %v1936 = vunpack.c.l.b16 %v1862
    %v1937 = vunpack.c.h.b16 %v1862
    %v1938 = vunpack.c.l.b16 %v1863
    %v1939 = vunpack.c.h.b16 %v1863
    %v1940 = vunpack.c.l.b16 %v1864
    %v1941 = vunpack.c.h.b16 %v1864
    %v1942 = vunpack.c.l.b16 %v1865
    %v1943 = vunpack.c.h.b16 %v1865
    %v1944 = vunpack.c.l.b16 %v1866
    %v1945 = vunpack.c.h.b16 %v1866
    %v1946 = vunpack.c.l.b16 %v1867
    %v1947 = vunpack.c.h.b16 %v1867
    %v1948 = vunpack.c.l.b16 %v1868
    %v1949 = vunpack.c.h.b16 %v1868
    %v1950 = vunpack.c.l.b16 %v1869
    %v1951 = vunpack.c.h.b16 %v1869
    %v1952 = vunpack.c.l.b16 %v1870
    %v1953 = vunpack.c.h.b16 %v1870
    %v1954 = vunpack.c.l.b16 %v1871
    %v1955 = vunpack.c.h.b16 %v1871
    %v1956 = vunpack.c.l.b16 %v1872
    %v1957 = vunpack.c.h.b16 %v1872
    %v1958 = vunpack.c.l.b16 %v1873
    %v1959 = vunpack.c.h.b16 %v1873
    %v1960 = vunpack.c.l.b16 %v1874
    %v1961 = vunpack.c.h.b16 %v1874
    %v1962 = vunpack.c.l.b16 %v1875
    %v1963 = vunpack.c.h.b16 %v1875
    %v1964 = vunpack.c.l.b16 %v1876
    %v1965 = vunpack.c.h.b16 %v1876
    %v1966 = vunpack.c.l.b16 %v1877
    %v1967 = vunpack.c.h.b16 %v1877
    %v1968 = vunpack.c.l.b16 %v1878
    %v1969 = vunpack.c.h.b16 %v1878
    %v1970 = vunpack.c.l.b16 %v1879
    %v1971 = vunpack.c.h.b16 %v1879
    %v1972 = vunpack.c.l.b16 %v1880
    %v1973 = vunpack.c.h.b16 %v1880
    %v1974 = vunpack.c.l.b16 %v1881
    %v1975 = vunpack.c.h.b16 %v1881
    %v1976 = vunpack.c.l.b16 %v1882
    %v1977 = vunpack.c.h.b16 %v1882
    %v1978 = vunpack.c.l.b16 %v1883
    %v1979 = vunpack.c.h.b16 %v1883
    %v1980 = vpack.c.b16 %v1918, %v1916
    %v1981 = vpack.c.b16 %v1919, %v1917
    %v1982 = vpack.c.b16 %v1922, %v1920
    %v1983 = vpack.c.b16 %v1923, %v1921
    %v1984 = vpack.c.b16 %v1926, %v1924
    %v1985 = vpack.c.b16 %v1927, %v1925
    %v1986 = vpack.c.b16 %v1930, %v1928
    %v1987 = vpack.c.b16 %v1931, %v1929
    %v1988 = vpack.c.b16 %v1934, %v1932
    %v1989 = vpack.c.b16 %v1935, %v1933
    %v1990 = vpack.c.b16 %v1938, %v1936
    %v1991 = vpack.c.b16 %v1939, %v1937
    %v1992 = vpack.c.b16 %v1942, %v1940
    %v1993 = vpack.c.b16 %v1943, %v1941
    %v1994 = vpack.c.b16 %v1946, %v1944
    %v1995 = vpack.c.b16 %v1947, %v1945
    %v1996 = vpack.c.b16 %v1950, %v1948
    %v1997 = vpack.c.b16 %v1951, %v1949
    %v1998 = vpack.c.b16 %v1954, %v1952
    %v1999 = vpack.c.b16 %v1955, %v1953
    %v2000 = vpack.c.b16 %v1958, %v1956
    %v2001 = vpack.c.b16 %v1959, %v1957
    %v2002 = vpack.c.b16 %v1962, %v1960
    %v2003 = vpack.c.b16 %v1963, %v1961
    %v2004 = vpack.c.b16 %v1966, %v1964
    %v2005 = vpack.c.b16 %v1967, %v1965
    %v2006 = vpack.c.b16 %v1970, %v1968
    %v2007 = vpack.c.b16 %v1971, %v1969
    %v2008 = vpack.c.b16 %v1974, %v1972
    %v2009 = vpack.c.b16 %v1975, %v1973
    %v2010 = vpack.c.b16 %v1978, %v1976
    %v2011 = vpack.c.b16 %v1979, %v1977
    %2044 = vmatpush.bf16.msra.mxu0 %v1994
    %2045 = vmatpush.bf16.msra.mxu0 %v1992
    %2046 = vmatpush.bf16.msra.mxu0 %v1990
    %2047 = vmatpush.bf16.msra.mxu0 %v1988
    %2048 = vmatpush.bf16.msra.mxu0 %v1986
    %2049 = vmatpush.bf16.msra.mxu0 %v1984
    %2050 = vmatpush.bf16.msra.mxu0 %v1982
    %2051 = vmatpush.bf16.msra.mxu0 %v1980
    %2052 = vmatmul.bf16.gmra.mxu0 %v1835
    %v2053 = vpop.f32.mrf.mxu0
    %v2054 = vadd.f32 0.0, %v2053
    %v2055 = vpop.f32.mrf.mxu0
    %v2056 = vadd.f32 0.0, %v2055
    %2057 = vmatmul.bf16.gmra.mxu0 %v1837
    %v2058 = vpop.f32.mrf.mxu0
    %v2059 = vadd.f32 0.0, %v2058
    %v2060 = vpop.f32.mrf.mxu0
    %v2061 = vadd.f32 0.0, %v2060
    %2062 = vmatmul.bf16.gmra.mxu0 %v1839
    %v2063 = vpop.f32.mrf.mxu0
    %v2064 = vadd.f32 0.0, %v2063
    %v2065 = vpop.f32.mrf.mxu0
    %v2066 = vadd.f32 0.0, %v2065
    %2067 = vmatmul.bf16.gmra.mxu0 %v1841
    %v2068 = vpop.f32.mrf.mxu0
    %v2069 = vadd.f32 0.0, %v2068
    %v2070 = vpop.f32.mrf.mxu0
    %v2071 = vadd.f32 0.0, %v2070
    %2072 = vmatmul.bf16.gmra.mxu0 %v1843
    %v2073 = vpop.f32.mrf.mxu0
    %v2074 = vadd.f32 0.0, %v2073
    %v2075 = vpop.f32.mrf.mxu0
    %v2076 = vadd.f32 0.0, %v2075
    %2077 = vmatmul.bf16.gmra.mxu0 %v1845
    %v2078 = vpop.f32.mrf.mxu0
    %v2079 = vadd.f32 0.0, %v2078
    %v2080 = vpop.f32.mrf.mxu0
    %v2081 = vadd.f32 0.0, %v2080
    %2082 = vmatmul.bf16.gmra.mxu0 %v1847
    %v2083 = vpop.f32.mrf.mxu0
    %v2084 = vadd.f32 0.0, %v2083
    %v2085 = vpop.f32.mrf.mxu0
    %v2086 = vadd.f32 0.0, %v2085
    %2087 = vmatmul.bf16.gmra.mxu0 %v1849
    %v2088 = vpop.f32.mrf.mxu0
    %v2089 = vadd.f32 0.0, %v2088
    %v2090 = vpop.f32.mrf.mxu0
    %v2091 = vadd.f32 0.0, %v2090
    %2092 = vdwg.mxu0
    %2093 = vmatpush.bf16.msra.mxu0 %v2010
    %2094 = vmatpush.bf16.msra.mxu0 %v2008
    %2095 = vmatpush.bf16.msra.mxu0 %v2006
    %2096 = vmatpush.bf16.msra.mxu0 %v2004
    %2097 = vmatpush.bf16.msra.mxu0 %v2002
    %2098 = vmatpush.bf16.msra.mxu0 %v2000
    %2099 = vmatpush.bf16.msra.mxu0 %v1998
    %2100 = vmatpush.bf16.msra.mxu0 %v1996
    %2101 = vmatmul.bf16.gmra.mxu0 %v1836
    %v2102 = vpop.f32.mrf.mxu0
    %v2103 = vadd.f32 %v2054, %v2102
    %v2104 = vpop.f32.mrf.mxu0
    %v2105 = vadd.f32 %v2056, %v2104
    %2106 = vmatmul.bf16.gmra.mxu0 %v1838
    %v2107 = vpop.f32.mrf.mxu0
    %v2108 = vadd.f32 %v2059, %v2107
    %v2109 = vpop.f32.mrf.mxu0
    %v2110 = vadd.f32 %v2061, %v2109
    %2111 = vmatmul.bf16.gmra.mxu0 %v1840
    %v2112 = vpop.f32.mrf.mxu0
    %v2113 = vadd.f32 %v2064, %v2112
    %v2114 = vpop.f32.mrf.mxu0
    %v2115 = vadd.f32 %v2066, %v2114
    %2116 = vmatmul.bf16.gmra.mxu0 %v1842
    %v2117 = vpop.f32.mrf.mxu0
    %v2118 = vadd.f32 %v2069, %v2117
    %v2119 = vpop.f32.mrf.mxu0
    %v2120 = vadd.f32 %v2071, %v2119
    %2121 = vmatmul.bf16.gmra.mxu0 %v1844
    %v2122 = vpop.f32.mrf.mxu0
    %v2123 = vadd.f32 %v2074, %v2122
    %v2124 = vpop.f32.mrf.mxu0
    %v2125 = vadd.f32 %v2076, %v2124
    %2126 = vmatmul.bf16.gmra.mxu0 %v1846
    %v2127 = vpop.f32.mrf.mxu0
    %v2128 = vadd.f32 %v2079, %v2127
    %v2129 = vpop.f32.mrf.mxu0
    %v2130 = vadd.f32 %v2081, %v2129
    %2131 = vmatmul.bf16.gmra.mxu0 %v1848
    %v2132 = vpop.f32.mrf.mxu0
    %v2133 = vadd.f32 %v2084, %v2132
    %v2134 = vpop.f32.mrf.mxu0
    %v2135 = vadd.f32 %v2086, %v2134
    %2136 = vmatmul.bf16.gmra.mxu0 %v1850
    %v2137 = vpop.f32.mrf.mxu0
    %v2138 = vadd.f32 %v2089, %v2137
    %v2139 = vpop.f32.mrf.mxu0
    %v2140 = vadd.f32 %v2091, %v2139
    %2141 = vdwg.mxu0
    %2142 = vmatpush.bf16.msra.mxu0 %v1995
    %2143 = vmatpush.bf16.msra.mxu0 %v1993
    %2144 = vmatpush.bf16.msra.mxu0 %v1991
    %2145 = vmatpush.bf16.msra.mxu0 %v1989
    %2146 = vmatpush.bf16.msra.mxu0 %v1987
    %2147 = vmatpush.bf16.msra.mxu0 %v1985
    %2148 = vmatpush.bf16.msra.mxu0 %v1983
    %2149 = vmatpush.bf16.msra.mxu0 %v1981
    %2150 = vmatmul.bf16.gmra.mxu0 %v1835
    %v2151 = vpop.f32.mrf.mxu0
    %v2152 = vadd.f32 0.0, %v2151
    %v2153 = vpop.f32.mrf.mxu0
    %v2154 = vadd.f32 0.0, %v2153
    %2155 = vmatmul.bf16.gmra.mxu0 %v1837
    %v2156 = vpop.f32.mrf.mxu0
    %v2157 = vadd.f32 0.0, %v2156
    %v2158 = vpop.f32.mrf.mxu0
    %v2159 = vadd.f32 0.0, %v2158
    %2160 = vmatmul.bf16.gmra.mxu0 %v1839
    %v2161 = vpop.f32.mrf.mxu0
    %v2162 = vadd.f32 0.0, %v2161
    %v2163 = vpop.f32.mrf.mxu0
    %v2164 = vadd.f32 0.0, %v2163
    %2165 = vmatmul.bf16.gmra.mxu0 %v1841
    %v2166 = vpop.f32.mrf.mxu0
    %v2167 = vadd.f32 0.0, %v2166
    %v2168 = vpop.f32.mrf.mxu0
    %v2169 = vadd.f32 0.0, %v2168
    %2170 = vmatmul.bf16.gmra.mxu0 %v1843
    %v2171 = vpop.f32.mrf.mxu0
    %v2172 = vadd.f32 0.0, %v2171
    %v2173 = vpop.f32.mrf.mxu0
    %v2174 = vadd.f32 0.0, %v2173
    %2175 = vmatmul.bf16.gmra.mxu0 %v1845
    %v2176 = vpop.f32.mrf.mxu0
    %v2177 = vadd.f32 0.0, %v2176
    %v2178 = vpop.f32.mrf.mxu0
    %v2179 = vadd.f32 0.0, %v2178
    %2180 = vmatmul.bf16.gmra.mxu0 %v1847
    %v2181 = vpop.f32.mrf.mxu0
    %v2182 = vadd.f32 0.0, %v2181
    %v2183 = vpop.f32.mrf.mxu0
    %v2184 = vadd.f32 0.0, %v2183
    %2185 = vmatmul.bf16.gmra.mxu0 %v1849
    %v2186 = vpop.f32.mrf.mxu0
    %v2187 = vadd.f32 0.0, %v2186
    %v2188 = vpop.f32.mrf.mxu0
    %v2189 = vadd.f32 0.0, %v2188
    %2190 = vdwg.mxu0
    %2191 = vmatpush.bf16.msra.mxu0 %v2011
    %2192 = vmatpush.bf16.msra.mxu0 %v2009
    %2193 = vmatpush.bf16.msra.mxu0 %v2007
    %2194 = vmatpush.bf16.msra.mxu0 %v2005
    %2195 = vmatpush.bf16.msra.mxu0 %v2003
    %2196 = vmatpush.bf16.msra.mxu0 %v2001
    %2197 = vmatpush.bf16.msra.mxu0 %v1999
    %2198 = vmatpush.bf16.msra.mxu0 %v1997
    %2199 = vmatmul.bf16.gmra.mxu0 %v1836
    %v2200 = vpop.f32.mrf.mxu0
    %v2201 = vadd.f32 %v2152, %v2200
    %v2202 = vpop.f32.mrf.mxu0
    %v2203 = vadd.f32 %v2154, %v2202
    %2204 = vmatmul.bf16.gmra.mxu0 %v1838
    %v2205 = vpop.f32.mrf.mxu0
    %v2206 = vadd.f32 %v2157, %v2205
    %v2207 = vpop.f32.mrf.mxu0
    %v2208 = vadd.f32 %v2159, %v2207
    %2209 = vmatmul.bf16.gmra.mxu0 %v1840
    %v2210 = vpop.f32.mrf.mxu0
    %v2211 = vadd.f32 %v2162, %v2210
    %v2212 = vpop.f32.mrf.mxu0
    %v2213 = vadd.f32 %v2164, %v2212
    %2214 = vmatmul.bf16.gmra.mxu0 %v1842
    %v2215 = vpop.f32.mrf.mxu0
    %v2216 = vadd.f32 %v2167, %v2215
    %v2217 = vpop.f32.mrf.mxu0
    %v2218 = vadd.f32 %v2169, %v2217
    %2219 = vmatmul.bf16.gmra.mxu0 %v1844
    %v2220 = vpop.f32.mrf.mxu0
    %v2221 = vadd.f32 %v2172, %v2220
    %v2222 = vpop.f32.mrf.mxu0
    %v2223 = vadd.f32 %v2174, %v2222
    %2224 = vmatmul.bf16.gmra.mxu0 %v1846
    %v2225 = vpop.f32.mrf.mxu0
    %v2226 = vadd.f32 %v2177, %v2225
    %v2227 = vpop.f32.mrf.mxu0
    %v2228 = vadd.f32 %v2179, %v2227
    %2229 = vmatmul.bf16.gmra.mxu0 %v1848
    %v2230 = vpop.f32.mrf.mxu0
    %v2231 = vadd.f32 %v2182, %v2230
    %v2232 = vpop.f32.mrf.mxu0
    %v2233 = vadd.f32 %v2184, %v2232
    %2234 = vmatmul.bf16.gmra.mxu0 %v1850
    %v2235 = vpop.f32.mrf.mxu0
    %v2236 = vadd.f32 %v2187, %v2235
    %v2237 = vpop.f32.mrf.mxu0
    %v2238 = vadd.f32 %v2189, %v2237
    %2239 = vdwg.mxu0
    %s2240 = scalar_lea.vmem [#allocation10], 4
    %v2241 = vld [vmem:[%s2240] sm:$0x3]
    %v2242 = vpack.c.bf16 %v2201, %v2103
    %v2243 = vpack.c.bf16 %v2203, %v2105
    %v2244 = vpack.c.bf16 %v2206, %v2108
    %v2245 = vpack.c.bf16 %v2208, %v2110
    %v2246 = vpack.c.bf16 %v2211, %v2113
    %v2247 = vpack.c.bf16 %v2213, %v2115
    %v2248 = vpack.c.bf16 %v2216, %v2118
    %v2249 = vpack.c.bf16 %v2218, %v2120
    %v2250 = vpack.c.bf16 %v2221, %v2123
    %v2251 = vpack.c.bf16 %v2223, %v2125
    %v2252 = vpack.c.bf16 %v2226, %v2128
    %v2253 = vpack.c.bf16 %v2228, %v2130
    %v2254 = vpack.c.bf16 %v2231, %v2133
    %v2255 = vpack.c.bf16 %v2233, %v2135
    %v2256 = vpack.c.bf16 %v2236, %v2138
    %v2257 = vpack.c.bf16 %v2238, %v2140
    %v2259 = vperm.slane %v2241, 0
    %v2260 = vperm.slane %v2241, 1
    %v2263 = vpack.c.bf16 %v2260, %v2259
    %v2265 = vunpack.c.l.b16 %v2263
    %v2266 = vunpack.c.h.b16 %v2263
    %v2267 = vpack.c.b16 %v2265, %v2265
    %v2268 = vpack.c.b16 %v2266, %v2266
    %v2270 = vpack.i.b16 %v2267, %v2267
    %v2272 = vperm.slane %v2270, 0
    %v2274 = vpack.i.b16 %v2268, %v2268
    %v2276 = vperm.slane %v2274, 0
    %v2277 = vunpack.c.l.bf16 %v2242
    %v2278 = vunpack.c.h.bf16 %v2242
    %v2279 = vunpack.c.l.bf16 %v2243
    %v2280 = vunpack.c.h.bf16 %v2243
    %v2281 = vunpack.c.l.bf16 %v2244
    %v2282 = vunpack.c.h.bf16 %v2244
    %v2283 = vunpack.c.l.bf16 %v2245
    %v2284 = vunpack.c.h.bf16 %v2245
    %v2285 = vunpack.c.l.bf16 %v2246
    %v2286 = vunpack.c.h.bf16 %v2246
    %v2287 = vunpack.c.l.bf16 %v2247
    %v2288 = vunpack.c.h.bf16 %v2247
    %v2289 = vunpack.c.l.bf16 %v2248
    %v2290 = vunpack.c.h.bf16 %v2248
    %v2291 = vunpack.c.l.bf16 %v2249
    %v2292 = vunpack.c.h.bf16 %v2249
    %v2293 = vunpack.c.l.bf16 %v2250
    %v2294 = vunpack.c.h.bf16 %v2250
    %v2295 = vunpack.c.l.bf16 %v2251
    %v2296 = vunpack.c.h.bf16 %v2251
    %v2297 = vunpack.c.l.bf16 %v2252
    %v2298 = vunpack.c.h.bf16 %v2252
    %v2299 = vunpack.c.l.bf16 %v2253
    %v2300 = vunpack.c.h.bf16 %v2253
    %v2301 = vunpack.c.l.bf16 %v2254
    %v2302 = vunpack.c.h.bf16 %v2254
    %v2303 = vunpack.c.l.bf16 %v2255
    %v2304 = vunpack.c.h.bf16 %v2255
    %v2305 = vunpack.c.l.bf16 %v2256
    %v2306 = vunpack.c.h.bf16 %v2256
    %v2307 = vunpack.c.l.bf16 %v2257
    %v2308 = vunpack.c.h.bf16 %v2257
    %v2309 = vunpack.c.l.bf16 %v2272
    %v2310 = vunpack.c.l.bf16 %v2276
    %v2311 = vadd.f32 %v2277, %v2309
    %v2312 = vadd.f32 %v2278, %v2310
    %v2313 = vadd.f32 %v2279, %v2309
    %v2314 = vadd.f32 %v2280, %v2310
    %v2315 = vadd.f32 %v2281, %v2309
    %v2316 = vadd.f32 %v2282, %v2310
    %v2317 = vadd.f32 %v2283, %v2309
    %v2318 = vadd.f32 %v2284, %v2310
    %v2319 = vadd.f32 %v2285, %v2309
    %v2320 = vadd.f32 %v2286, %v2310
    %v2321 = vadd.f32 %v2287, %v2309
    %v2322 = vadd.f32 %v2288, %v2310
    %v2323 = vadd.f32 %v2289, %v2309
    %v2324 = vadd.f32 %v2290, %v2310
    %v2325 = vadd.f32 %v2291, %v2309
    %v2326 = vadd.f32 %v2292, %v2310
    %v2327 = vadd.f32 %v2293, %v2309
    %v2328 = vadd.f32 %v2294, %v2310
    %v2329 = vadd.f32 %v2295, %v2309
    %v2330 = vadd.f32 %v2296, %v2310
    %v2331 = vadd.f32 %v2297, %v2309
    %v2332 = vadd.f32 %v2298, %v2310
    %v2333 = vadd.f32 %v2299, %v2309
    %v2334 = vadd.f32 %v2300, %v2310
    %v2335 = vadd.f32 %v2301, %v2309
    %v2336 = vadd.f32 %v2302, %v2310
    %v2337 = vadd.f32 %v2303, %v2309
    %v2338 = vadd.f32 %v2304, %v2310
    %v2339 = vadd.f32 %v2305, %v2309
    %v2340 = vadd.f32 %v2306, %v2310
    %v2341 = vadd.f32 %v2307, %v2309
    %v2342 = vadd.f32 %v2308, %v2310
    %v2343 = vpack.c.bf16 %v2312, %v2311
    %v2344 = vpack.c.bf16 %v2314, %v2313
    %v2345 = vpack.c.bf16 %v2316, %v2315
    %v2346 = vpack.c.bf16 %v2318, %v2317
    %v2347 = vpack.c.bf16 %v2320, %v2319
    %v2348 = vpack.c.bf16 %v2322, %v2321
    %v2349 = vpack.c.bf16 %v2324, %v2323
    %v2350 = vpack.c.bf16 %v2326, %v2325
    %v2351 = vpack.c.bf16 %v2328, %v2327
    %v2352 = vpack.c.bf16 %v2330, %v2329
    %v2353 = vpack.c.bf16 %v2332, %v2331
    %v2354 = vpack.c.bf16 %v2334, %v2333
    %v2355 = vpack.c.bf16 %v2336, %v2335
    %v2356 = vpack.c.bf16 %v2338, %v2337
    %v2357 = vpack.c.bf16 %v2340, %v2339
    %v2358 = vpack.c.bf16 %v2342, %v2341
    %v2359 = vunpack.c.l.bf16 %v2343
    %v2360 = vunpack.c.h.bf16 %v2343
    %v2361 = vunpack.c.l.bf16 %v2344
    %v2362 = vunpack.c.h.bf16 %v2344
    %v2363 = vunpack.c.l.bf16 %v2345
    %v2364 = vunpack.c.h.bf16 %v2345
    %v2365 = vunpack.c.l.bf16 %v2346
    %v2366 = vunpack.c.h.bf16 %v2346
    %v2367 = vunpack.c.l.bf16 %v2347
    %v2368 = vunpack.c.h.bf16 %v2347
    %v2369 = vunpack.c.l.bf16 %v2348
    %v2370 = vunpack.c.h.bf16 %v2348
    %v2371 = vunpack.c.l.bf16 %v2349
    %v2372 = vunpack.c.h.bf16 %v2349
    %v2373 = vunpack.c.l.bf16 %v2350
    %v2374 = vunpack.c.h.bf16 %v2350
    %v2375 = vunpack.c.l.bf16 %v2351
    %v2376 = vunpack.c.h.bf16 %v2351
    %v2377 = vunpack.c.l.bf16 %v2352
    %v2378 = vunpack.c.h.bf16 %v2352
    %v2379 = vunpack.c.l.bf16 %v2353
    %v2380 = vunpack.c.h.bf16 %v2353
    %v2381 = vunpack.c.l.bf16 %v2354
    %v2382 = vunpack.c.h.bf16 %v2354
    %v2383 = vunpack.c.l.bf16 %v2355
    %v2384 = vunpack.c.h.bf16 %v2355
    %v2385 = vunpack.c.l.bf16 %v2356
    %v2386 = vunpack.c.h.bf16 %v2356
    %v2387 = vunpack.c.l.bf16 %v2357
    %v2388 = vunpack.c.h.bf16 %v2357
    %v2389 = vunpack.c.l.bf16 %v2358
    %v2390 = vunpack.c.h.bf16 %v2358
    %v2391 = vmax.f32 %v2359, 0.0
    %v2392 = vmax.f32 %v2360, 0.0
    %v2393 = vmax.f32 %v2361, 0.0
    %v2394 = vmax.f32 %v2362, 0.0
    %v2395 = vmax.f32 %v2363, 0.0
    %v2396 = vmax.f32 %v2364, 0.0
    %v2397 = vmax.f32 %v2365, 0.0
    %v2398 = vmax.f32 %v2366, 0.0
    %v2399 = vmax.f32 %v2367, 0.0
    %v2400 = vmax.f32 %v2368, 0.0
    %v2401 = vmax.f32 %v2369, 0.0
    %v2402 = vmax.f32 %v2370, 0.0
    %v2403 = vmax.f32 %v2371, 0.0
    %v2404 = vmax.f32 %v2372, 0.0
    %v2405 = vmax.f32 %v2373, 0.0
    %v2406 = vmax.f32 %v2374, 0.0
    %v2407 = vmax.f32 %v2375, 0.0
    %v2408 = vmax.f32 %v2376, 0.0
    %v2409 = vmax.f32 %v2377, 0.0
    %v2410 = vmax.f32 %v2378, 0.0
    %v2411 = vmax.f32 %v2379, 0.0
    %v2412 = vmax.f32 %v2380, 0.0
    %v2413 = vmax.f32 %v2381, 0.0
    %v2414 = vmax.f32 %v2382, 0.0
    %v2415 = vmax.f32 %v2383, 0.0
    %v2416 = vmax.f32 %v2384, 0.0
    %v2417 = vmax.f32 %v2385, 0.0
    %v2418 = vmax.f32 %v2386, 0.0
    %v2419 = vmax.f32 %v2387, 0.0
    %v2420 = vmax.f32 %v2388, 0.0
    %v2421 = vmax.f32 %v2389, 0.0
    %v2422 = vmax.f32 %v2390, 0.0
    %v2423 = vpack.c.bf16 %v2393, %v2391
    %v2424 = vpack.c.bf16 %v2394, %v2392
    %v2425 = vpack.c.bf16 %v2397, %v2395
    %v2426 = vpack.c.bf16 %v2398, %v2396
    %v2427 = vpack.c.bf16 %v2401, %v2399
    %v2428 = vpack.c.bf16 %v2402, %v2400
    %v2429 = vpack.c.bf16 %v2405, %v2403
    %v2430 = vpack.c.bf16 %v2406, %v2404
    %v2431 = vpack.c.bf16 %v2409, %v2407
    %v2432 = vpack.c.bf16 %v2410, %v2408
    %v2433 = vpack.c.bf16 %v2413, %v2411
    %v2434 = vpack.c.bf16 %v2414, %v2412
    %v2435 = vpack.c.bf16 %v2417, %v2415
    %v2436 = vpack.c.bf16 %v2418, %v2416
    %v2437 = vpack.c.bf16 %v2421, %v2419
    %v2438 = vpack.c.bf16 %v2422, %v2420
    %s2439 = scalar_lea.vmem [#allocation8], 768
    %v2440 = vld [vmem:[%s2439] sm:$0xff]
    %v2441 = vld [vmem:[%s2439 + $0x8] sm:$0xff]
    %v2442 = vld [vmem:[%s2439 + $0x10] sm:$0xff]
    %v2443 = vld [vmem:[%s2439 + $0x18] sm:$0xff]
    %v2444 = vld [vmem:[%s2439 + $0x20] sm:$0xff]
    %v2445 = vld [vmem:[%s2439 + $0x28] sm:$0xff]
    %v2446 = vld [vmem:[%s2439 + $0x30] sm:$0xff]
    %v2447 = vld [vmem:[%s2439 + $0x38] sm:$0xff]
    %v2448 = vld [vmem:[%s2439 + $0x40] sm:$0xff]
    %v2449 = vld [vmem:[%s2439 + $0x48] sm:$0xff]
    %v2450 = vld [vmem:[%s2439 + $0x50] sm:$0xff]
    %v2451 = vld [vmem:[%s2439 + $0x58] sm:$0xff]
    %v2452 = vld [vmem:[%s2439 + $0x60] sm:$0xff]
    %v2453 = vld [vmem:[%s2439 + $0x68] sm:$0xff]
    %v2454 = vld [vmem:[%s2439 + $0x70] sm:$0xff]
    %v2455 = vld [vmem:[%s2439 + $0x78] sm:$0xff]
    %v2456 = vld [vmem:[%s2439 + $0x80] sm:$0xff]
    %v2457 = vld [vmem:[%s2439 + $0x88] sm:$0xff]
    %v2458 = vld [vmem:[%s2439 + $0x90] sm:$0xff]
    %v2459 = vld [vmem:[%s2439 + $0x98] sm:$0xff]
    %v2460 = vld [vmem:[%s2439 + $0xa0] sm:$0xff]
    %v2461 = vld [vmem:[%s2439 + $0xa8] sm:$0xff]
    %v2462 = vld [vmem:[%s2439 + $0xb0] sm:$0xff]
    %v2463 = vld [vmem:[%s2439 + $0xb8] sm:$0xff]
    %v2464 = vld [vmem:[%s2439 + $0xc0] sm:$0xff]
    %v2465 = vld [vmem:[%s2439 + $0xc8] sm:$0xff]
    %v2466 = vld [vmem:[%s2439 + $0xd0] sm:$0xff]
    %v2467 = vld [vmem:[%s2439 + $0xd8] sm:$0xff]
    %v2468 = vld [vmem:[%s2439 + $0xe0] sm:$0xff]
    %v2469 = vld [vmem:[%s2439 + $0xe8] sm:$0xff]
    %v2470 = vld [vmem:[%s2439 + $0xf0] sm:$0xff]
    %v2471 = vld [vmem:[%s2439 + $0xf8] sm:$0xff]
    %v2504 = vunpack.c.l.b16 %v2440
    %v2505 = vunpack.c.h.b16 %v2440
    %v2506 = vunpack.c.l.b16 %v2441
    %v2507 = vunpack.c.h.b16 %v2441
    %v2508 = vunpack.c.l.b16 %v2442
    %v2509 = vunpack.c.h.b16 %v2442
    %v2510 = vunpack.c.l.b16 %v2443
    %v2511 = vunpack.c.h.b16 %v2443
    %v2512 = vunpack.c.l.b16 %v2444
    %v2513 = vunpack.c.h.b16 %v2444
    %v2514 = vunpack.c.l.b16 %v2445
    %v2515 = vunpack.c.h.b16 %v2445
    %v2516 = vunpack.c.l.b16 %v2446
    %v2517 = vunpack.c.h.b16 %v2446
    %v2518 = vunpack.c.l.b16 %v2447
    %v2519 = vunpack.c.h.b16 %v2447
    %v2520 = vunpack.c.l.b16 %v2448
    %v2521 = vunpack.c.h.b16 %v2448
    %v2522 = vunpack.c.l.b16 %v2449
    %v2523 = vunpack.c.h.b16 %v2449
    %v2524 = vunpack.c.l.b16 %v2450
    %v2525 = vunpack.c.h.b16 %v2450
    %v2526 = vunpack.c.l.b16 %v2451
    %v2527 = vunpack.c.h.b16 %v2451
    %v2528 = vunpack.c.l.b16 %v2452
    %v2529 = vunpack.c.h.b16 %v2452
    %v2530 = vunpack.c.l.b16 %v2453
    %v2531 = vunpack.c.h.b16 %v2453
    %v2532 = vunpack.c.l.b16 %v2454
    %v2533 = vunpack.c.h.b16 %v2454
    %v2534 = vunpack.c.l.b16 %v2455
    %v2535 = vunpack.c.h.b16 %v2455
    %v2536 = vunpack.c.l.b16 %v2456
    %v2537 = vunpack.c.h.b16 %v2456
    %v2538 = vunpack.c.l.b16 %v2457
    %v2539 = vunpack.c.h.b16 %v2457
    %v2540 = vunpack.c.l.b16 %v2458
    %v2541 = vunpack.c.h.b16 %v2458
    %v2542 = vunpack.c.l.b16 %v2459
    %v2543 = vunpack.c.h.b16 %v2459
    %v2544 = vunpack.c.l.b16 %v2460
    %v2545 = vunpack.c.h.b16 %v2460
    %v2546 = vunpack.c.l.b16 %v2461
    %v2547 = vunpack.c.h.b16 %v2461
    %v2548 = vunpack.c.l.b16 %v2462
    %v2549 = vunpack.c.h.b16 %v2462
    %v2550 = vunpack.c.l.b16 %v2463
    %v2551 = vunpack.c.h.b16 %v2463
    %v2552 = vunpack.c.l.b16 %v2464
    %v2553 = vunpack.c.h.b16 %v2464
    %v2554 = vunpack.c.l.b16 %v2465
    %v2555 = vunpack.c.h.b16 %v2465
    %v2556 = vunpack.c.l.b16 %v2466
    %v2557 = vunpack.c.h.b16 %v2466
    %v2558 = vunpack.c.l.b16 %v2467
    %v2559 = vunpack.c.h.b16 %v2467
    %v2560 = vunpack.c.l.b16 %v2468
    %v2561 = vunpack.c.h.b16 %v2468
    %v2562 = vunpack.c.l.b16 %v2469
    %v2563 = vunpack.c.h.b16 %v2469
    %v2564 = vunpack.c.l.b16 %v2470
    %v2565 = vunpack.c.h.b16 %v2470
    %v2566 = vunpack.c.l.b16 %v2471
    %v2567 = vunpack.c.h.b16 %v2471
    %v2568 = vpack.c.b16 %v2506, %v2504
    %v2569 = vpack.c.b16 %v2507, %v2505
    %v2570 = vpack.c.b16 %v2510, %v2508
    %v2571 = vpack.c.b16 %v2511, %v2509
    %v2572 = vpack.c.b16 %v2514, %v2512
    %v2573 = vpack.c.b16 %v2515, %v2513
    %v2574 = vpack.c.b16 %v2518, %v2516
    %v2575 = vpack.c.b16 %v2519, %v2517
    %v2576 = vpack.c.b16 %v2522, %v2520
    %v2577 = vpack.c.b16 %v2523, %v2521
    %v2578 = vpack.c.b16 %v2526, %v2524
    %v2579 = vpack.c.b16 %v2527, %v2525
    %v2580 = vpack.c.b16 %v2530, %v2528
    %v2581 = vpack.c.b16 %v2531, %v2529
    %v2582 = vpack.c.b16 %v2534, %v2532
    %v2583 = vpack.c.b16 %v2535, %v2533
    %v2584 = vpack.c.b16 %v2538, %v2536
    %v2585 = vpack.c.b16 %v2539, %v2537
    %v2586 = vpack.c.b16 %v2542, %v2540
    %v2587 = vpack.c.b16 %v2543, %v2541
    %v2588 = vpack.c.b16 %v2546, %v2544
    %v2589 = vpack.c.b16 %v2547, %v2545
    %v2590 = vpack.c.b16 %v2550, %v2548
    %v2591 = vpack.c.b16 %v2551, %v2549
    %v2592 = vpack.c.b16 %v2554, %v2552
    %v2593 = vpack.c.b16 %v2555, %v2553
    %v2594 = vpack.c.b16 %v2558, %v2556
    %v2595 = vpack.c.b16 %v2559, %v2557
    %v2596 = vpack.c.b16 %v2562, %v2560
    %v2597 = vpack.c.b16 %v2563, %v2561
    %v2598 = vpack.c.b16 %v2566, %v2564
    %v2599 = vpack.c.b16 %v2567, %v2565
    %2632 = vmatpush.bf16.msra.mxu0 %v2582
    %2633 = vmatpush.bf16.msra.mxu0 %v2580
    %2634 = vmatpush.bf16.msra.mxu0 %v2578
    %2635 = vmatpush.bf16.msra.mxu0 %v2576
    %2636 = vmatpush.bf16.msra.mxu0 %v2574
    %2637 = vmatpush.bf16.msra.mxu0 %v2572
    %2638 = vmatpush.bf16.msra.mxu0 %v2570
    %2639 = vmatpush.bf16.msra.mxu0 %v2568
    %2640 = vmatmul.bf16.gmra.mxu0 %v2423
    %v2641 = vpop.f32.mrf.mxu0
    %v2642 = vadd.f32 0.0, %v2641
    %v2643 = vpop.f32.mrf.mxu0
    %v2644 = vadd.f32 0.0, %v2643
    %2645 = vmatmul.bf16.gmra.mxu0 %v2425
    %v2646 = vpop.f32.mrf.mxu0
    %v2647 = vadd.f32 0.0, %v2646
    %v2648 = vpop.f32.mrf.mxu0
    %v2649 = vadd.f32 0.0, %v2648
    %2650 = vmatmul.bf16.gmra.mxu0 %v2427
    %v2651 = vpop.f32.mrf.mxu0
    %v2652 = vadd.f32 0.0, %v2651
    %v2653 = vpop.f32.mrf.mxu0
    %v2654 = vadd.f32 0.0, %v2653
    %2655 = vmatmul.bf16.gmra.mxu0 %v2429
    %v2656 = vpop.f32.mrf.mxu0
    %v2657 = vadd.f32 0.0, %v2656
    %v2658 = vpop.f32.mrf.mxu0
    %v2659 = vadd.f32 0.0, %v2658
    %2660 = vmatmul.bf16.gmra.mxu0 %v2431
    %v2661 = vpop.f32.mrf.mxu0
    %v2662 = vadd.f32 0.0, %v2661
    %v2663 = vpop.f32.mrf.mxu0
    %v2664 = vadd.f32 0.0, %v2663
    %2665 = vmatmul.bf16.gmra.mxu0 %v2433
    %v2666 = vpop.f32.mrf.mxu0
    %v2667 = vadd.f32 0.0, %v2666
    %v2668 = vpop.f32.mrf.mxu0
    %v2669 = vadd.f32 0.0, %v2668
    %2670 = vmatmul.bf16.gmra.mxu0 %v2435
    %v2671 = vpop.f32.mrf.mxu0
    %v2672 = vadd.f32 0.0, %v2671
    %v2673 = vpop.f32.mrf.mxu0
    %v2674 = vadd.f32 0.0, %v2673
    %2675 = vmatmul.bf16.gmra.mxu0 %v2437
    %v2676 = vpop.f32.mrf.mxu0
    %v2677 = vadd.f32 0.0, %v2676
    %v2678 = vpop.f32.mrf.mxu0
    %v2679 = vadd.f32 0.0, %v2678
    %2680 = vdwg.mxu0
    %2681 = vmatpush.bf16.msra.mxu0 %v2598
    %2682 = vmatpush.bf16.msra.mxu0 %v2596
    %2683 = vmatpush.bf16.msra.mxu0 %v2594
    %2684 = vmatpush.bf16.msra.mxu0 %v2592
    %2685 = vmatpush.bf16.msra.mxu0 %v2590
    %2686 = vmatpush.bf16.msra.mxu0 %v2588
    %2687 = vmatpush.bf16.msra.mxu0 %v2586
    %2688 = vmatpush.bf16.msra.mxu0 %v2584
    %2689 = vmatmul.bf16.gmra.mxu0 %v2424
    %v2690 = vpop.f32.mrf.mxu0
    %v2691 = vadd.f32 %v2642, %v2690
    %v2692 = vpop.f32.mrf.mxu0
    %v2693 = vadd.f32 %v2644, %v2692
    %2694 = vmatmul.bf16.gmra.mxu0 %v2426
    %v2695 = vpop.f32.mrf.mxu0
    %v2696 = vadd.f32 %v2647, %v2695
    %v2697 = vpop.f32.mrf.mxu0
    %v2698 = vadd.f32 %v2649, %v2697
    %2699 = vmatmul.bf16.gmra.mxu0 %v2428
    %v2700 = vpop.f32.mrf.mxu0
    %v2701 = vadd.f32 %v2652, %v2700
    %v2702 = vpop.f32.mrf.mxu0
    %v2703 = vadd.f32 %v2654, %v2702
    %2704 = vmatmul.bf16.gmra.mxu0 %v2430
    %v2705 = vpop.f32.mrf.mxu0
    %v2706 = vadd.f32 %v2657, %v2705
    %v2707 = vpop.f32.mrf.mxu0
    %v2708 = vadd.f32 %v2659, %v2707
    %2709 = vmatmul.bf16.gmra.mxu0 %v2432
    %v2710 = vpop.f32.mrf.mxu0
    %v2711 = vadd.f32 %v2662, %v2710
    %v2712 = vpop.f32.mrf.mxu0
    %v2713 = vadd.f32 %v2664, %v2712
    %2714 = vmatmul.bf16.gmra.mxu0 %v2434
    %v2715 = vpop.f32.mrf.mxu0
    %v2716 = vadd.f32 %v2667, %v2715
    %v2717 = vpop.f32.mrf.mxu0
    %v2718 = vadd.f32 %v2669, %v2717
    %2719 = vmatmul.bf16.gmra.mxu0 %v2436
    %v2720 = vpop.f32.mrf.mxu0
    %v2721 = vadd.f32 %v2672, %v2720
    %v2722 = vpop.f32.mrf.mxu0
    %v2723 = vadd.f32 %v2674, %v2722
    %2724 = vmatmul.bf16.gmra.mxu0 %v2438
    %v2725 = vpop.f32.mrf.mxu0
    %v2726 = vadd.f32 %v2677, %v2725
    %v2727 = vpop.f32.mrf.mxu0
    %v2728 = vadd.f32 %v2679, %v2727
    %2729 = vdwg.mxu0
    %2730 = vmatpush.bf16.msra.mxu0 %v2583
    %2731 = vmatpush.bf16.msra.mxu0 %v2581
    %2732 = vmatpush.bf16.msra.mxu0 %v2579
    %2733 = vmatpush.bf16.msra.mxu0 %v2577
    %2734 = vmatpush.bf16.msra.mxu0 %v2575
    %2735 = vmatpush.bf16.msra.mxu0 %v2573
    %2736 = vmatpush.bf16.msra.mxu0 %v2571
    %2737 = vmatpush.bf16.msra.mxu0 %v2569
    %2738 = vmatmul.bf16.gmra.mxu0 %v2423
    %v2739 = vpop.f32.mrf.mxu0
    %v2740 = vadd.f32 0.0, %v2739
    %v2741 = vpop.f32.mrf.mxu0
    %v2742 = vadd.f32 0.0, %v2741
    %2743 = vmatmul.bf16.gmra.mxu0 %v2425
    %v2744 = vpop.f32.mrf.mxu0
    %v2745 = vadd.f32 0.0, %v2744
    %v2746 = vpop.f32.mrf.mxu0
    %v2747 = vadd.f32 0.0, %v2746
    %2748 = vmatmul.bf16.gmra.mxu0 %v2427
    %v2749 = vpop.f32.mrf.mxu0
    %v2750 = vadd.f32 0.0, %v2749
    %v2751 = vpop.f32.mrf.mxu0
    %v2752 = vadd.f32 0.0, %v2751
    %2753 = vmatmul.bf16.gmra.mxu0 %v2429
    %v2754 = vpop.f32.mrf.mxu0
    %v2755 = vadd.f32 0.0, %v2754
    %v2756 = vpop.f32.mrf.mxu0
    %v2757 = vadd.f32 0.0, %v2756
    %2758 = vmatmul.bf16.gmra.mxu0 %v2431
    %v2759 = vpop.f32.mrf.mxu0
    %v2760 = vadd.f32 0.0, %v2759
    %v2761 = vpop.f32.mrf.mxu0
    %v2762 = vadd.f32 0.0, %v2761
    %2763 = vmatmul.bf16.gmra.mxu0 %v2433
    %v2764 = vpop.f32.mrf.mxu0
    %v2765 = vadd.f32 0.0, %v2764
    %v2766 = vpop.f32.mrf.mxu0
    %v2767 = vadd.f32 0.0, %v2766
    %2768 = vmatmul.bf16.gmra.mxu0 %v2435
    %v2769 = vpop.f32.mrf.mxu0
    %v2770 = vadd.f32 0.0, %v2769
    %v2771 = vpop.f32.mrf.mxu0
    %v2772 = vadd.f32 0.0, %v2771
    %2773 = vmatmul.bf16.gmra.mxu0 %v2437
    %v2774 = vpop.f32.mrf.mxu0
    %v2775 = vadd.f32 0.0, %v2774
    %v2776 = vpop.f32.mrf.mxu0
    %v2777 = vadd.f32 0.0, %v2776
    %2778 = vdwg.mxu0
    %2779 = vmatpush.bf16.msra.mxu0 %v2599
    %2780 = vmatpush.bf16.msra.mxu0 %v2597
    %2781 = vmatpush.bf16.msra.mxu0 %v2595
    %2782 = vmatpush.bf16.msra.mxu0 %v2593
    %2783 = vmatpush.bf16.msra.mxu0 %v2591
    %2784 = vmatpush.bf16.msra.mxu0 %v2589
    %2785 = vmatpush.bf16.msra.mxu0 %v2587
    %2786 = vmatpush.bf16.msra.mxu0 %v2585
    %2787 = vmatmul.bf16.gmra.mxu0 %v2424
    %v2788 = vpop.f32.mrf.mxu0
    %v2789 = vadd.f32 %v2740, %v2788
    %v2790 = vpop.f32.mrf.mxu0
    %v2791 = vadd.f32 %v2742, %v2790
    %2792 = vmatmul.bf16.gmra.mxu0 %v2426
    %v2793 = vpop.f32.mrf.mxu0
    %v2794 = vadd.f32 %v2745, %v2793
    %v2795 = vpop.f32.mrf.mxu0
    %v2796 = vadd.f32 %v2747, %v2795
    %2797 = vmatmul.bf16.gmra.mxu0 %v2428
    %v2798 = vpop.f32.mrf.mxu0
    %v2799 = vadd.f32 %v2750, %v2798
    %v2800 = vpop.f32.mrf.mxu0
    %v2801 = vadd.f32 %v2752, %v2800
    %2802 = vmatmul.bf16.gmra.mxu0 %v2430
    %v2803 = vpop.f32.mrf.mxu0
    %v2804 = vadd.f32 %v2755, %v2803
    %v2805 = vpop.f32.mrf.mxu0
    %v2806 = vadd.f32 %v2757, %v2805
    %2807 = vmatmul.bf16.gmra.mxu0 %v2432
    %v2808 = vpop.f32.mrf.mxu0
    %v2809 = vadd.f32 %v2760, %v2808
    %v2810 = vpop.f32.mrf.mxu0
    %v2811 = vadd.f32 %v2762, %v2810
    %2812 = vmatmul.bf16.gmra.mxu0 %v2434
    %v2813 = vpop.f32.mrf.mxu0
    %v2814 = vadd.f32 %v2765, %v2813
    %v2815 = vpop.f32.mrf.mxu0
    %v2816 = vadd.f32 %v2767, %v2815
    %2817 = vmatmul.bf16.gmra.mxu0 %v2436
    %v2818 = vpop.f32.mrf.mxu0
    %v2819 = vadd.f32 %v2770, %v2818
    %v2820 = vpop.f32.mrf.mxu0
    %v2821 = vadd.f32 %v2772, %v2820
    %2822 = vmatmul.bf16.gmra.mxu0 %v2438
    %v2823 = vpop.f32.mrf.mxu0
    %v2824 = vadd.f32 %v2775, %v2823
    %v2825 = vpop.f32.mrf.mxu0
    %v2826 = vadd.f32 %v2777, %v2825
    %2827 = vdwg.mxu0
    %s2828 = scalar_lea.vmem [#allocation10], 6
    %v2829 = vld [vmem:[%s2828] sm:$0x3]
    %v2830 = vpack.c.bf16 %v2789, %v2691
    %v2831 = vpack.c.bf16 %v2791, %v2693
    %v2832 = vpack.c.bf16 %v2794, %v2696
    %v2833 = vpack.c.bf16 %v2796, %v2698
    %v2834 = vpack.c.bf16 %v2799, %v2701
    %v2835 = vpack.c.bf16 %v2801, %v2703
    %v2836 = vpack.c.bf16 %v2804, %v2706
    %v2837 = vpack.c.bf16 %v2806, %v2708
    %v2838 = vpack.c.bf16 %v2809, %v2711
    %v2839 = vpack.c.bf16 %v2811, %v2713
    %v2840 = vpack.c.bf16 %v2814, %v2716
    %v2841 = vpack.c.bf16 %v2816, %v2718
    %v2842 = vpack.c.bf16 %v2819, %v2721
    %v2843 = vpack.c.bf16 %v2821, %v2723
    %v2844 = vpack.c.bf16 %v2824, %v2726
    %v2845 = vpack.c.bf16 %v2826, %v2728
    %v2847 = vperm.slane %v2829, 0
    %v2848 = vperm.slane %v2829, 1
    %v2851 = vpack.c.bf16 %v2848, %v2847
    %v2853 = vunpack.c.l.b16 %v2851
    %v2854 = vunpack.c.h.b16 %v2851
    %v2855 = vpack.c.b16 %v2853, %v2853
    %v2856 = vpack.c.b16 %v2854, %v2854
    %v2858 = vpack.i.b16 %v2855, %v2855
    %v2860 = vperm.slane %v2858, 0
    %v2862 = vpack.i.b16 %v2856, %v2856
    %v2864 = vperm.slane %v2862, 0
    %v2865 = vunpack.c.l.bf16 %v2830
    %v2866 = vunpack.c.h.bf16 %v2830
    %v2867 = vunpack.c.l.bf16 %v2831
    %v2868 = vunpack.c.h.bf16 %v2831
    %v2869 = vunpack.c.l.bf16 %v2832
    %v2870 = vunpack.c.h.bf16 %v2832
    %v2871 = vunpack.c.l.bf16 %v2833
    %v2872 = vunpack.c.h.bf16 %v2833
    %v2873 = vunpack.c.l.bf16 %v2834
    %v2874 = vunpack.c.h.bf16 %v2834
    %v2875 = vunpack.c.l.bf16 %v2835
    %v2876 = vunpack.c.h.bf16 %v2835
    %v2877 = vunpack.c.l.bf16 %v2836
    %v2878 = vunpack.c.h.bf16 %v2836
    %v2879 = vunpack.c.l.bf16 %v2837
    %v2880 = vunpack.c.h.bf16 %v2837
    %v2881 = vunpack.c.l.bf16 %v2838
    %v2882 = vunpack.c.h.bf16 %v2838
    %v2883 = vunpack.c.l.bf16 %v2839
    %v2884 = vunpack.c.h.bf16 %v2839
    %v2885 = vunpack.c.l.bf16 %v2840
    %v2886 = vunpack.c.h.bf16 %v2840
    %v2887 = vunpack.c.l.bf16 %v2841
    %v2888 = vunpack.c.h.bf16 %v2841
    %v2889 = vunpack.c.l.bf16 %v2842
    %v2890 = vunpack.c.h.bf16 %v2842
    %v2891 = vunpack.c.l.bf16 %v2843
    %v2892 = vunpack.c.h.bf16 %v2843
    %v2893 = vunpack.c.l.bf16 %v2844
    %v2894 = vunpack.c.h.bf16 %v2844
    %v2895 = vunpack.c.l.bf16 %v2845
    %v2896 = vunpack.c.h.bf16 %v2845
    %v2897 = vunpack.c.l.bf16 %v2860
    %v2898 = vunpack.c.l.bf16 %v2864
    %v2899 = vadd.f32 %v2865, %v2897
    %v2900 = vadd.f32 %v2866, %v2898
    %v2901 = vadd.f32 %v2867, %v2897
    %v2902 = vadd.f32 %v2868, %v2898
    %v2903 = vadd.f32 %v2869, %v2897
    %v2904 = vadd.f32 %v2870, %v2898
    %v2905 = vadd.f32 %v2871, %v2897
    %v2906 = vadd.f32 %v2872, %v2898
    %v2907 = vadd.f32 %v2873, %v2897
    %v2908 = vadd.f32 %v2874, %v2898
    %v2909 = vadd.f32 %v2875, %v2897
    %v2910 = vadd.f32 %v2876, %v2898
    %v2911 = vadd.f32 %v2877, %v2897
    %v2912 = vadd.f32 %v2878, %v2898
    %v2913 = vadd.f32 %v2879, %v2897
    %v2914 = vadd.f32 %v2880, %v2898
    %v2915 = vadd.f32 %v2881, %v2897
    %v2916 = vadd.f32 %v2882, %v2898
    %v2917 = vadd.f32 %v2883, %v2897
    %v2918 = vadd.f32 %v2884, %v2898
    %v2919 = vadd.f32 %v2885, %v2897
    %v2920 = vadd.f32 %v2886, %v2898
    %v2921 = vadd.f32 %v2887, %v2897
    %v2922 = vadd.f32 %v2888, %v2898
    %v2923 = vadd.f32 %v2889, %v2897
    %v2924 = vadd.f32 %v2890, %v2898
    %v2925 = vadd.f32 %v2891, %v2897
    %v2926 = vadd.f32 %v2892, %v2898
    %v2927 = vadd.f32 %v2893, %v2897
    %v2928 = vadd.f32 %v2894, %v2898
    %v2929 = vadd.f32 %v2895, %v2897
    %v2930 = vadd.f32 %v2896, %v2898
    %v2931 = vpack.c.bf16 %v2900, %v2899
    %v2932 = vpack.c.bf16 %v2902, %v2901
    %v2933 = vpack.c.bf16 %v2904, %v2903
    %v2934 = vpack.c.bf16 %v2906, %v2905
    %v2935 = vpack.c.bf16 %v2908, %v2907
    %v2936 = vpack.c.bf16 %v2910, %v2909
    %v2937 = vpack.c.bf16 %v2912, %v2911
    %v2938 = vpack.c.bf16 %v2914, %v2913
    %v2939 = vpack.c.bf16 %v2916, %v2915
    %v2940 = vpack.c.bf16 %v2918, %v2917
    %v2941 = vpack.c.bf16 %v2920, %v2919
    %v2942 = vpack.c.bf16 %v2922, %v2921
    %v2943 = vpack.c.bf16 %v2924, %v2923
    %v2944 = vpack.c.bf16 %v2926, %v2925
    %v2945 = vpack.c.bf16 %v2928, %v2927
    %v2946 = vpack.c.bf16 %v2930, %v2929
    %v2947 = vunpack.c.l.bf16 %v2931
    %v2948 = vunpack.c.h.bf16 %v2931
    %v2949 = vunpack.c.l.bf16 %v2932
    %v2950 = vunpack.c.h.bf16 %v2932
    %v2951 = vunpack.c.l.bf16 %v2933
    %v2952 = vunpack.c.h.bf16 %v2933
    %v2953 = vunpack.c.l.bf16 %v2934
    %v2954 = vunpack.c.h.bf16 %v2934
    %v2955 = vunpack.c.l.bf16 %v2935
    %v2956 = vunpack.c.h.bf16 %v2935
    %v2957 = vunpack.c.l.bf16 %v2936
    %v2958 = vunpack.c.h.bf16 %v2936
    %v2959 = vunpack.c.l.bf16 %v2937
    %v2960 = vunpack.c.h.bf16 %v2937
    %v2961 = vunpack.c.l.bf16 %v2938
    %v2962 = vunpack.c.h.bf16 %v2938
    %v2963 = vunpack.c.l.bf16 %v2939
    %v2964 = vunpack.c.h.bf16 %v2939
    %v2965 = vunpack.c.l.bf16 %v2940
    %v2966 = vunpack.c.h.bf16 %v2940
    %v2967 = vunpack.c.l.bf16 %v2941
    %v2968 = vunpack.c.h.bf16 %v2941
    %v2969 = vunpack.c.l.bf16 %v2942
    %v2970 = vunpack.c.h.bf16 %v2942
    %v2971 = vunpack.c.l.bf16 %v2943
    %v2972 = vunpack.c.h.bf16 %v2943
    %v2973 = vunpack.c.l.bf16 %v2944
    %v2974 = vunpack.c.h.bf16 %v2944
    %v2975 = vunpack.c.l.bf16 %v2945
    %v2976 = vunpack.c.h.bf16 %v2945
    %v2977 = vunpack.c.l.bf16 %v2946
    %v2978 = vunpack.c.h.bf16 %v2946
    %v2979 = vmax.f32 %v2947, 0.0
    %v2980 = vmax.f32 %v2948, 0.0
    %v2981 = vmax.f32 %v2949, 0.0
    %v2982 = vmax.f32 %v2950, 0.0
    %v2983 = vmax.f32 %v2951, 0.0
    %v2984 = vmax.f32 %v2952, 0.0
    %v2985 = vmax.f32 %v2953, 0.0
    %v2986 = vmax.f32 %v2954, 0.0
    %v2987 = vmax.f32 %v2955, 0.0
    %v2988 = vmax.f32 %v2956, 0.0
    %v2989 = vmax.f32 %v2957, 0.0
    %v2990 = vmax.f32 %v2958, 0.0
    %v2991 = vmax.f32 %v2959, 0.0
    %v2992 = vmax.f32 %v2960, 0.0
    %v2993 = vmax.f32 %v2961, 0.0
    %v2994 = vmax.f32 %v2962, 0.0
    %v2995 = vmax.f32 %v2963, 0.0
    %v2996 = vmax.f32 %v2964, 0.0
    %v2997 = vmax.f32 %v2965, 0.0
    %v2998 = vmax.f32 %v2966, 0.0
    %v2999 = vmax.f32 %v2967, 0.0
    %v3000 = vmax.f32 %v2968, 0.0
    %v3001 = vmax.f32 %v2969, 0.0
    %v3002 = vmax.f32 %v2970, 0.0
    %v3003 = vmax.f32 %v2971, 0.0
    %v3004 = vmax.f32 %v2972, 0.0
    %v3005 = vmax.f32 %v2973, 0.0
    %v3006 = vmax.f32 %v2974, 0.0
    %v3007 = vmax.f32 %v2975, 0.0
    %v3008 = vmax.f32 %v2976, 0.0
    %v3009 = vmax.f32 %v2977, 0.0
    %v3010 = vmax.f32 %v2978, 0.0
    %v3011 = vpack.c.bf16 %v2981, %v2979
    %v3012 = vpack.c.bf16 %v2982, %v2980
    %v3013 = vpack.c.bf16 %v2985, %v2983
    %v3014 = vpack.c.bf16 %v2986, %v2984
    %v3015 = vpack.c.bf16 %v2989, %v2987
    %v3016 = vpack.c.bf16 %v2990, %v2988
    %v3017 = vpack.c.bf16 %v2993, %v2991
    %v3018 = vpack.c.bf16 %v2994, %v2992
    %v3019 = vpack.c.bf16 %v2997, %v2995
    %v3020 = vpack.c.bf16 %v2998, %v2996
    %v3021 = vpack.c.bf16 %v3001, %v2999
    %v3022 = vpack.c.bf16 %v3002, %v3000
    %v3023 = vpack.c.bf16 %v3005, %v3003
    %v3024 = vpack.c.bf16 %v3006, %v3004
    %v3025 = vpack.c.bf16 %v3009, %v3007
    %v3026 = vpack.c.bf16 %v3010, %v3008
    %v3027 = vld [vmem:[#allocation11] sm:$0xff]
    %v3028 = vld [vmem:[#allocation11 + $0x8] sm:$0xff]
    %v3029 = vld [vmem:[#allocation11 + $0x10] sm:$0xff]
    %v3030 = vld [vmem:[#allocation11 + $0x18] sm:$0xff]
    %v3031 = vld [vmem:[%s10] sm:$0xff]
    %v3032 = vld [vmem:[%s10 + $0x8] sm:$0xff]
    %v3033 = vld [vmem:[%s10 + $0x10] sm:$0xff]
    %v3034 = vld [vmem:[%s10 + $0x18] sm:$0xff]
    %v3035 = vld [vmem:[%s10 + $0x20] sm:$0xff]
    %v3036 = vld [vmem:[%s10 + $0x28] sm:$0xff]
    %v3037 = vld [vmem:[%s10 + $0x30] sm:$0xff]
    %v3038 = vld [vmem:[%s10 + $0x38] sm:$0xff]
    %v3039 = vld [vmem:[%s10 + $0x40] sm:$0xff]
    %v3040 = vld [vmem:[%s10 + $0x48] sm:$0xff]
    %v3041 = vld [vmem:[%s10 + $0x50] sm:$0xff]
    %v3042 = vld [vmem:[%s10 + $0x58] sm:$0xff]
    %v3043 = vld [vmem:[%s10 + $0x60] sm:$0xff]
    %v3044 = vld [vmem:[%s10 + $0x68] sm:$0xff]
    %v3045 = vld [vmem:[%s10 + $0x70] sm:$0xff]
    %v3046 = vld [vmem:[%s10 + $0x78] sm:$0xff]
    %v3047 = vld [vmem:[%s10 + $0x80] sm:$0xff]
    %v3048 = vld [vmem:[%s10 + $0x88] sm:$0xff]
    %v3049 = vld [vmem:[%s10 + $0x90] sm:$0xff]
    %v3050 = vld [vmem:[%s10 + $0x98] sm:$0xff]
    %v3051 = vld [vmem:[%s10 + $0xa0] sm:$0xff]
    %v3052 = vld [vmem:[%s10 + $0xa8] sm:$0xff]
    %v3053 = vld [vmem:[%s10 + $0xb0] sm:$0xff]
    %v3054 = vld [vmem:[%s10 + $0xb8] sm:$0xff]
    %v3055 = vld [vmem:[%s10 + $0xc0] sm:$0xff]
    %v3056 = vld [vmem:[%s10 + $0xc8] sm:$0xff]
    %v3057 = vld [vmem:[%s10 + $0xd0] sm:$0xff]
    %v3058 = vld [vmem:[%s10 + $0xd8] sm:$0xff]
    %v3059 = vld [vmem:[%s10 + $0xe0] sm:$0xff]
    %v3060 = vld [vmem:[%s10 + $0xe8] sm:$0xff]
    %v3061 = vld [vmem:[%s10 + $0xf0] sm:$0xff]
    %v3062 = vld [vmem:[%s10 + $0xf8] sm:$0xff]
    %v3095 = vunpack.c.l.b16 %v3031
    %v3096 = vunpack.c.h.b16 %v3031
    %v3097 = vunpack.c.l.b16 %v3032
    %v3098 = vunpack.c.h.b16 %v3032
    %v3099 = vunpack.c.l.b16 %v3033
    %v3100 = vunpack.c.h.b16 %v3033
    %v3101 = vunpack.c.l.b16 %v3034
    %v3102 = vunpack.c.h.b16 %v3034
    %v3103 = vunpack.c.l.b16 %v3035
    %v3104 = vunpack.c.h.b16 %v3035
    %v3105 = vunpack.c.l.b16 %v3036
    %v3106 = vunpack.c.h.b16 %v3036
    %v3107 = vunpack.c.l.b16 %v3037
    %v3108 = vunpack.c.h.b16 %v3037
    %v3109 = vunpack.c.l.b16 %v3038
    %v3110 = vunpack.c.h.b16 %v3038
    %v3111 = vunpack.c.l.b16 %v3039
    %v3112 = vunpack.c.h.b16 %v3039
    %v3113 = vunpack.c.l.b16 %v3040
    %v3114 = vunpack.c.h.b16 %v3040
    %v3115 = vunpack.c.l.b16 %v3041
    %v3116 = vunpack.c.h.b16 %v3041
    %v3117 = vunpack.c.l.b16 %v3042
    %v3118 = vunpack.c.h.b16 %v3042
    %v3119 = vunpack.c.l.b16 %v3043
    %v3120 = vunpack.c.h.b16 %v3043
    %v3121 = vunpack.c.l.b16 %v3044
    %v3122 = vunpack.c.h.b16 %v3044
    %v3123 = vunpack.c.l.b16 %v3045
    %v3124 = vunpack.c.h.b16 %v3045
    %v3125 = vunpack.c.l.b16 %v3046
    %v3126 = vunpack.c.h.b16 %v3046
    %v3127 = vunpack.c.l.b16 %v3047
    %v3128 = vunpack.c.h.b16 %v3047
    %v3129 = vunpack.c.l.b16 %v3048
    %v3130 = vunpack.c.h.b16 %v3048
    %v3131 = vunpack.c.l.b16 %v3049
    %v3132 = vunpack.c.h.b16 %v3049
    %v3133 = vunpack.c.l.b16 %v3050
    %v3134 = vunpack.c.h.b16 %v3050
    %v3135 = vunpack.c.l.b16 %v3051
    %v3136 = vunpack.c.h.b16 %v3051
    %v3137 = vunpack.c.l.b16 %v3052
    %v3138 = vunpack.c.h.b16 %v3052
    %v3139 = vunpack.c.l.b16 %v3053
    %v3140 = vunpack.c.h.b16 %v3053
    %v3141 = vunpack.c.l.b16 %v3054
    %v3142 = vunpack.c.h.b16 %v3054
    %v3143 = vunpack.c.l.b16 %v3055
    %v3144 = vunpack.c.h.b16 %v3055
    %v3145 = vunpack.c.l.b16 %v3056
    %v3146 = vunpack.c.h.b16 %v3056
    %v3147 = vunpack.c.l.b16 %v3057
    %v3148 = vunpack.c.h.b16 %v3057
    %v3149 = vunpack.c.l.b16 %v3058
    %v3150 = vunpack.c.h.b16 %v3058
    %v3151 = vunpack.c.l.b16 %v3059
    %v3152 = vunpack.c.h.b16 %v3059
    %v3153 = vunpack.c.l.b16 %v3060
    %v3154 = vunpack.c.h.b16 %v3060
    %v3155 = vunpack.c.l.b16 %v3061
    %v3156 = vunpack.c.h.b16 %v3061
    %v3157 = vunpack.c.l.b16 %v3062
    %v3158 = vunpack.c.h.b16 %v3062
    %v3159 = vpack.c.b16 %v3097, %v3095
    %v3160 = vpack.c.b16 %v3098, %v3096
    %v3161 = vpack.c.b16 %v3101, %v3099
    %v3162 = vpack.c.b16 %v3102, %v3100
    %v3163 = vpack.c.b16 %v3105, %v3103
    %v3164 = vpack.c.b16 %v3106, %v3104
    %v3165 = vpack.c.b16 %v3109, %v3107
    %v3166 = vpack.c.b16 %v3110, %v3108
    %v3167 = vpack.c.b16 %v3113, %v3111
    %v3168 = vpack.c.b16 %v3114, %v3112
    %v3169 = vpack.c.b16 %v3117, %v3115
    %v3170 = vpack.c.b16 %v3118, %v3116
    %v3171 = vpack.c.b16 %v3121, %v3119
    %v3172 = vpack.c.b16 %v3122, %v3120
    %v3173 = vpack.c.b16 %v3125, %v3123
    %v3174 = vpack.c.b16 %v3126, %v3124
    %v3175 = vpack.c.b16 %v3129, %v3127
    %v3176 = vpack.c.b16 %v3130, %v3128
    %v3177 = vpack.c.b16 %v3133, %v3131
    %v3178 = vpack.c.b16 %v3134, %v3132
    %v3179 = vpack.c.b16 %v3137, %v3135
    %v3180 = vpack.c.b16 %v3138, %v3136
    %v3181 = vpack.c.b16 %v3141, %v3139
    %v3182 = vpack.c.b16 %v3142, %v3140
    %v3183 = vpack.c.b16 %v3145, %v3143
    %v3184 = vpack.c.b16 %v3146, %v3144
    %v3185 = vpack.c.b16 %v3149, %v3147
    %v3186 = vpack.c.b16 %v3150, %v3148
    %v3187 = vpack.c.b16 %v3153, %v3151
    %v3188 = vpack.c.b16 %v3154, %v3152
    %v3189 = vpack.c.b16 %v3157, %v3155
    %v3190 = vpack.c.b16 %v3158, %v3156
    %3223 = vmatpush.bf16.msra.mxu0 %v3173
    %3224 = vmatpush.bf16.msra.mxu0 %v3171
    %3225 = vmatpush.bf16.msra.mxu0 %v3169
    %3226 = vmatpush.bf16.msra.mxu0 %v3167
    %3227 = vmatpush.bf16.msra.mxu0 %v3165
    %3228 = vmatpush.bf16.msra.mxu0 %v3163
    %3229 = vmatpush.bf16.msra.mxu0 %v3161
    %3230 = vmatpush.bf16.msra.mxu0 %v3159
    %3231 = vmatmul.bf16.gmra.mxu0 %v3011
    %v3232 = vpop.f32.mrf.mxu0
    %v3233 = vadd.f32 0.0, %v3232
    %v3234 = vpop.f32.mrf.mxu0
    %v3235 = vadd.f32 0.0, %v3234
    %3236 = vmatmul.bf16.gmra.mxu0 %v3013
    %v3237 = vpop.f32.mrf.mxu0
    %v3238 = vadd.f32 0.0, %v3237
    %v3239 = vpop.f32.mrf.mxu0
    %v3240 = vadd.f32 0.0, %v3239
    %3241 = vmatmul.bf16.gmra.mxu0 %v3015
    %v3242 = vpop.f32.mrf.mxu0
    %v3243 = vadd.f32 0.0, %v3242
    %v3244 = vpop.f32.mrf.mxu0
    %v3245 = vadd.f32 0.0, %v3244
    %3246 = vmatmul.bf16.gmra.mxu0 %v3017
    %v3247 = vpop.f32.mrf.mxu0
    %v3248 = vadd.f32 0.0, %v3247
    %v3249 = vpop.f32.mrf.mxu0
    %v3250 = vadd.f32 0.0, %v3249
    %3251 = vmatmul.bf16.gmra.mxu0 %v3019
    %v3252 = vpop.f32.mrf.mxu0
    %v3253 = vadd.f32 0.0, %v3252
    %v3254 = vpop.f32.mrf.mxu0
    %v3255 = vadd.f32 0.0, %v3254
    %3256 = vmatmul.bf16.gmra.mxu0 %v3021
    %v3257 = vpop.f32.mrf.mxu0
    %v3258 = vadd.f32 0.0, %v3257
    %v3259 = vpop.f32.mrf.mxu0
    %v3260 = vadd.f32 0.0, %v3259
    %3261 = vmatmul.bf16.gmra.mxu0 %v3023
    %v3262 = vpop.f32.mrf.mxu0
    %v3263 = vadd.f32 0.0, %v3262
    %v3264 = vpop.f32.mrf.mxu0
    %v3265 = vadd.f32 0.0, %v3264
    %3266 = vmatmul.bf16.gmra.mxu0 %v3025
    %v3267 = vpop.f32.mrf.mxu0
    %v3268 = vadd.f32 0.0, %v3267
    %v3269 = vpop.f32.mrf.mxu0
    %v3270 = vadd.f32 0.0, %v3269
    %3271 = vdwg.mxu0
    %3272 = vmatpush.bf16.msra.mxu0 %v3189
    %3273 = vmatpush.bf16.msra.mxu0 %v3187
    %3274 = vmatpush.bf16.msra.mxu0 %v3185
    %3275 = vmatpush.bf16.msra.mxu0 %v3183
    %3276 = vmatpush.bf16.msra.mxu0 %v3181
    %3277 = vmatpush.bf16.msra.mxu0 %v3179
    %3278 = vmatpush.bf16.msra.mxu0 %v3177
    %3279 = vmatpush.bf16.msra.mxu0 %v3175
    %3280 = vmatmul.bf16.gmra.mxu0 %v3012
    %v3281 = vpop.f32.mrf.mxu0
    %v3282 = vadd.f32 %v3233, %v3281
    %v3283 = vpop.f32.mrf.mxu0
    %v3284 = vadd.f32 %v3235, %v3283
    %3285 = vmatmul.bf16.gmra.mxu0 %v3014
    %v3286 = vpop.f32.mrf.mxu0
    %v3287 = vadd.f32 %v3238, %v3286
    %v3288 = vpop.f32.mrf.mxu0
    %v3289 = vadd.f32 %v3240, %v3288
    %3290 = vmatmul.bf16.gmra.mxu0 %v3016
    %v3291 = vpop.f32.mrf.mxu0
    %v3292 = vadd.f32 %v3243, %v3291
    %v3293 = vpop.f32.mrf.mxu0
    %v3294 = vadd.f32 %v3245, %v3293
    %3295 = vmatmul.bf16.gmra.mxu0 %v3018
    %v3296 = vpop.f32.mrf.mxu0
    %v3297 = vadd.f32 %v3248, %v3296
    %v3298 = vpop.f32.mrf.mxu0
    %v3299 = vadd.f32 %v3250, %v3298
    %3300 = vmatmul.bf16.gmra.mxu0 %v3020
    %v3301 = vpop.f32.mrf.mxu0
    %v3302 = vadd.f32 %v3253, %v3301
    %v3303 = vpop.f32.mrf.mxu0
    %v3304 = vadd.f32 %v3255, %v3303
    %3305 = vmatmul.bf16.gmra.mxu0 %v3022
    %v3306 = vpop.f32.mrf.mxu0
    %v3307 = vadd.f32 %v3258, %v3306
    %v3308 = vpop.f32.mrf.mxu0
    %v3309 = vadd.f32 %v3260, %v3308
    %3310 = vmatmul.bf16.gmra.mxu0 %v3024
    %v3311 = vpop.f32.mrf.mxu0
    %v3312 = vadd.f32 %v3263, %v3311
    %v3313 = vpop.f32.mrf.mxu0
    %v3314 = vadd.f32 %v3265, %v3313
    %3315 = vmatmul.bf16.gmra.mxu0 %v3026
    %v3316 = vpop.f32.mrf.mxu0
    %v3317 = vadd.f32 %v3268, %v3316
    %v3318 = vpop.f32.mrf.mxu0
    %v3319 = vadd.f32 %v3270, %v3318
    %3320 = vdwg.mxu0
    %3321 = vmatpush.bf16.msra.mxu0 %v3174
    %3322 = vmatpush.bf16.msra.mxu0 %v3172
    %3323 = vmatpush.bf16.msra.mxu0 %v3170
    %3324 = vmatpush.bf16.msra.mxu0 %v3168
    %3325 = vmatpush.bf16.msra.mxu0 %v3166
    %3326 = vmatpush.bf16.msra.mxu0 %v3164
    %3327 = vmatpush.bf16.msra.mxu0 %v3162
    %3328 = vmatpush.bf16.msra.mxu0 %v3160
    %3329 = vmatmul.bf16.gmra.mxu0 %v3011
    %v3330 = vpop.f32.mrf.mxu0
    %v3331 = vadd.f32 0.0, %v3330
    %v3332 = vpop.f32.mrf.mxu0
    %v3333 = vadd.f32 0.0, %v3332
    %3334 = vmatmul.bf16.gmra.mxu0 %v3013
    %v3335 = vpop.f32.mrf.mxu0
    %v3336 = vadd.f32 0.0, %v3335
    %v3337 = vpop.f32.mrf.mxu0
    %v3338 = vadd.f32 0.0, %v3337
    %3339 = vmatmul.bf16.gmra.mxu0 %v3015
    %v3340 = vpop.f32.mrf.mxu0
    %v3341 = vadd.f32 0.0, %v3340
    %v3342 = vpop.f32.mrf.mxu0
    %v3343 = vadd.f32 0.0, %v3342
    %3344 = vmatmul.bf16.gmra.mxu0 %v3017
    %v3345 = vpop.f32.mrf.mxu0
    %v3346 = vadd.f32 0.0, %v3345
    %v3347 = vpop.f32.mrf.mxu0
    %v3348 = vadd.f32 0.0, %v3347
    %3349 = vmatmul.bf16.gmra.mxu0 %v3019
    %v3350 = vpop.f32.mrf.mxu0
    %v3351 = vadd.f32 0.0, %v3350
    %v3352 = vpop.f32.mrf.mxu0
    %v3353 = vadd.f32 0.0, %v3352
    %3354 = vmatmul.bf16.gmra.mxu0 %v3021
    %v3355 = vpop.f32.mrf.mxu0
    %v3356 = vadd.f32 0.0, %v3355
    %v3357 = vpop.f32.mrf.mxu0
    %v3358 = vadd.f32 0.0, %v3357
    %3359 = vmatmul.bf16.gmra.mxu0 %v3023
    %v3360 = vpop.f32.mrf.mxu0
    %v3361 = vadd.f32 0.0, %v3360
    %v3362 = vpop.f32.mrf.mxu0
    %v3363 = vadd.f32 0.0, %v3362
    %3364 = vmatmul.bf16.gmra.mxu0 %v3025
    %v3365 = vpop.f32.mrf.mxu0
    %v3366 = vadd.f32 0.0, %v3365
    %v3367 = vpop.f32.mrf.mxu0
    %v3368 = vadd.f32 0.0, %v3367
    %3369 = vdwg.mxu0
    %3370 = vmatpush.bf16.msra.mxu0 %v3190
    %3371 = vmatpush.bf16.msra.mxu0 %v3188
    %3372 = vmatpush.bf16.msra.mxu0 %v3186
    %3373 = vmatpush.bf16.msra.mxu0 %v3184
    %3374 = vmatpush.bf16.msra.mxu0 %v3182
    %3375 = vmatpush.bf16.msra.mxu0 %v3180
    %3376 = vmatpush.bf16.msra.mxu0 %v3178
    %3377 = vmatpush.bf16.msra.mxu0 %v3176
    %3378 = vmatmul.bf16.gmra.mxu0 %v3012
    %v3379 = vpop.f32.mrf.mxu0
    %v3380 = vadd.f32 %v3331, %v3379
    %v3381 = vpop.f32.mrf.mxu0
    %v3382 = vadd.f32 %v3333, %v3381
    %3383 = vmatmul.bf16.gmra.mxu0 %v3014
    %v3384 = vpop.f32.mrf.mxu0
    %v3385 = vadd.f32 %v3336, %v3384
    %v3386 = vpop.f32.mrf.mxu0
    %v3387 = vadd.f32 %v3338, %v3386
    %3388 = vmatmul.bf16.gmra.mxu0 %v3016
    %v3389 = vpop.f32.mrf.mxu0
    %v3390 = vadd.f32 %v3341, %v3389
    %v3391 = vpop.f32.mrf.mxu0
    %v3392 = vadd.f32 %v3343, %v3391
    %3393 = vmatmul.bf16.gmra.mxu0 %v3018
    %v3394 = vpop.f32.mrf.mxu0
    %v3395 = vadd.f32 %v3346, %v3394
    %v3396 = vpop.f32.mrf.mxu0
    %v3397 = vadd.f32 %v3348, %v3396
    %3398 = vmatmul.bf16.gmra.mxu0 %v3020
    %v3399 = vpop.f32.mrf.mxu0
    %v3400 = vadd.f32 %v3351, %v3399
    %v3401 = vpop.f32.mrf.mxu0
    %v3402 = vadd.f32 %v3353, %v3401
    %3403 = vmatmul.bf16.gmra.mxu0 %v3022
    %v3404 = vpop.f32.mrf.mxu0
    %v3405 = vadd.f32 %v3356, %v3404
    %v3406 = vpop.f32.mrf.mxu0
    %v3407 = vadd.f32 %v3358, %v3406
    %3408 = vmatmul.bf16.gmra.mxu0 %v3024
    %v3409 = vpop.f32.mrf.mxu0
    %v3410 = vadd.f32 %v3361, %v3409
    %v3411 = vpop.f32.mrf.mxu0
    %v3412 = vadd.f32 %v3363, %v3411
    %3413 = vmatmul.bf16.gmra.mxu0 %v3026
    %v3414 = vpop.f32.mrf.mxu0
    %v3415 = vadd.f32 %v3366, %v3414
    %v3416 = vpop.f32.mrf.mxu0
    %v3417 = vadd.f32 %v3368, %v3416
    %3418 = vdwg.mxu0
    %v3423 = vunpack.c.l.b16 %v3027
    %v3424 = vunpack.c.h.b16 %v3027
    %v3425 = vunpack.c.l.b16 %v3028
    %v3426 = vunpack.c.h.b16 %v3028
    %v3427 = vunpack.c.l.b16 %v3029
    %v3428 = vunpack.c.h.b16 %v3029
    %v3429 = vunpack.c.l.b16 %v3030
    %v3430 = vunpack.c.h.b16 %v3030
    %v3431 = vpack.c.b16 %v3425, %v3423
    %v3432 = vpack.c.b16 %v3426, %v3424
    %v3433 = vpack.c.b16 %v3429, %v3427
    %v3434 = vpack.c.b16 %v3430, %v3428
    %3439 = vmatpush.bf16.msra.mxu0 0
    %3440 = vmatpush.bf16.msra.mxu0 0
    %3441 = vmatpush.bf16.msra.mxu0 0
    %3442 = vmatpush.bf16.msra.mxu0 0
    %3443 = vmatpush.bf16.msra.mxu0 0
    %3444 = vmatpush.bf16.msra.mxu0 0
    %3445 = vmatpush.bf16.msra.mxu0 %v3433
    %3446 = vmatpush.bf16.msra.mxu0 %v3431
    %3447 = vmatmul.bf16.gmra.mxu0 %v358
    %v3448 = vpop.f32.mrf.mxu0
    %v3449 = vadd.f32 %v3282, %v3448
    %v3450 = vpop.f32.mrf.mxu0
    %v3451 = vadd.f32 %v3284, %v3450
    %3452 = vmatmul.bf16.gmra.mxu0 %v361
    %v3453 = vpop.f32.mrf.mxu0
    %v3454 = vadd.f32 %v3287, %v3453
    %v3455 = vpop.f32.mrf.mxu0
    %v3456 = vadd.f32 %v3289, %v3455
    %3457 = vmatmul.bf16.gmra.mxu0 %v364
    %v3458 = vpop.f32.mrf.mxu0
    %v3459 = vadd.f32 %v3292, %v3458
    %v3460 = vpop.f32.mrf.mxu0
    %v3461 = vadd.f32 %v3294, %v3460
    %3462 = vmatmul.bf16.gmra.mxu0 %v367
    %v3463 = vpop.f32.mrf.mxu0
    %v3464 = vadd.f32 %v3297, %v3463
    %v3465 = vpop.f32.mrf.mxu0
    %v3466 = vadd.f32 %v3299, %v3465
    %3467 = vmatmul.bf16.gmra.mxu0 %v370
    %v3468 = vpop.f32.mrf.mxu0
    %v3469 = vadd.f32 %v3302, %v3468
    %v3470 = vpop.f32.mrf.mxu0
    %v3471 = vadd.f32 %v3304, %v3470
    %3472 = vmatmul.bf16.gmra.mxu0 %v373
    %v3473 = vpop.f32.mrf.mxu0
    %v3474 = vadd.f32 %v3307, %v3473
    %v3475 = vpop.f32.mrf.mxu0
    %v3476 = vadd.f32 %v3309, %v3475
    %3477 = vmatmul.bf16.gmra.mxu0 %v376
    %v3478 = vpop.f32.mrf.mxu0
    %v3479 = vadd.f32 %v3312, %v3478
    %v3480 = vpop.f32.mrf.mxu0
    %v3481 = vadd.f32 %v3314, %v3480
    %3482 = vmatmul.bf16.gmra.mxu0 %v379
    %v3483 = vpop.f32.mrf.mxu0
    %v3484 = vadd.f32 %v3317, %v3483
    %v3485 = vpop.f32.mrf.mxu0
    %v3486 = vadd.f32 %v3319, %v3485
    %3487 = vdwg.mxu0
    %3488 = vmatpush.bf16.msra.mxu0 0
    %3489 = vmatpush.bf16.msra.mxu0 0
    %3490 = vmatpush.bf16.msra.mxu0 0
    %3491 = vmatpush.bf16.msra.mxu0 0
    %3492 = vmatpush.bf16.msra.mxu0 0
    %3493 = vmatpush.bf16.msra.mxu0 0
    %3494 = vmatpush.bf16.msra.mxu0 %v3434
    %3495 = vmatpush.bf16.msra.mxu0 %v3432
    %3496 = vmatmul.bf16.gmra.mxu0 %v358
    %v3497 = vpop.f32.mrf.mxu0
    %v3498 = vadd.f32 %v3380, %v3497
    %v3499 = vpop.f32.mrf.mxu0
    %v3500 = vadd.f32 %v3382, %v3499
    %3501 = vmatmul.bf16.gmra.mxu0 %v361
    %v3502 = vpop.f32.mrf.mxu0
    %v3503 = vadd.f32 %v3385, %v3502
    %v3504 = vpop.f32.mrf.mxu0
    %v3505 = vadd.f32 %v3387, %v3504
    %3506 = vmatmul.bf16.gmra.mxu0 %v364
    %v3507 = vpop.f32.mrf.mxu0
    %v3508 = vadd.f32 %v3390, %v3507
    %v3509 = vpop.f32.mrf.mxu0
    %v3510 = vadd.f32 %v3392, %v3509
    %3511 = vmatmul.bf16.gmra.mxu0 %v367
    %v3512 = vpop.f32.mrf.mxu0
    %v3513 = vadd.f32 %v3395, %v3512
    %v3514 = vpop.f32.mrf.mxu0
    %v3515 = vadd.f32 %v3397, %v3514
    %3516 = vmatmul.bf16.gmra.mxu0 %v370
    %v3517 = vpop.f32.mrf.mxu0
    %v3518 = vadd.f32 %v3400, %v3517
    %v3519 = vpop.f32.mrf.mxu0
    %v3520 = vadd.f32 %v3402, %v3519
    %3521 = vmatmul.bf16.gmra.mxu0 %v373
    %v3522 = vpop.f32.mrf.mxu0
    %v3523 = vadd.f32 %v3405, %v3522
    %v3524 = vpop.f32.mrf.mxu0
    %v3525 = vadd.f32 %v3407, %v3524
    %3526 = vmatmul.bf16.gmra.mxu0 %v376
    %v3527 = vpop.f32.mrf.mxu0
    %v3528 = vadd.f32 %v3410, %v3527
    %v3529 = vpop.f32.mrf.mxu0
    %v3530 = vadd.f32 %v3412, %v3529
    %3531 = vmatmul.bf16.gmra.mxu0 %v379
    %v3532 = vpop.f32.mrf.mxu0
    %v3533 = vadd.f32 %v3415, %v3532
    %v3534 = vpop.f32.mrf.mxu0
    %v3535 = vadd.f32 %v3417, %v3534
    %3536 = vdwg.mxu0
    %v3537 = vld [vmem:[#allocation13] sm:$0x3]
    %v3538 = vpack.c.bf16 %v3498, %v3449
    %v3539 = vpack.c.bf16 %v3500, %v3451
    %v3540 = vpack.c.bf16 %v3503, %v3454
    %v3541 = vpack.c.bf16 %v3505, %v3456
    %v3542 = vpack.c.bf16 %v3508, %v3459
    %v3543 = vpack.c.bf16 %v3510, %v3461
    %v3544 = vpack.c.bf16 %v3513, %v3464
    %v3545 = vpack.c.bf16 %v3515, %v3466
    %v3546 = vpack.c.bf16 %v3518, %v3469
    %v3547 = vpack.c.bf16 %v3520, %v3471
    %v3548 = vpack.c.bf16 %v3523, %v3474
    %v3549 = vpack.c.bf16 %v3525, %v3476
    %v3550 = vpack.c.bf16 %v3528, %v3479
    %v3551 = vpack.c.bf16 %v3530, %v3481
    %v3552 = vpack.c.bf16 %v3533, %v3484
    %v3553 = vpack.c.bf16 %v3535, %v3486
    %v3555 = vperm.slane %v3537, 0
    %v3556 = vperm.slane %v3537, 1
    %v3559 = vpack.c.bf16 %v3556, %v3555
    %v3561 = vunpack.c.l.b16 %v3559
    %v3562 = vunpack.c.h.b16 %v3559
    %v3563 = vpack.c.b16 %v3561, %v3561
    %v3564 = vpack.c.b16 %v3562, %v3562
    %v3566 = vpack.i.b16 %v3563, %v3563
    %v3568 = vperm.slane %v3566, 0
    %v3570 = vpack.i.b16 %v3564, %v3564
    %v3572 = vperm.slane %v3570, 0
    %v3573 = vunpack.c.l.bf16 %v3538
    %v3574 = vunpack.c.h.bf16 %v3538
    %v3575 = vunpack.c.l.bf16 %v3539
    %v3576 = vunpack.c.h.bf16 %v3539
    %v3577 = vunpack.c.l.bf16 %v3540
    %v3578 = vunpack.c.h.bf16 %v3540
    %v3579 = vunpack.c.l.bf16 %v3541
    %v3580 = vunpack.c.h.bf16 %v3541
    %v3581 = vunpack.c.l.bf16 %v3542
    %v3582 = vunpack.c.h.bf16 %v3542
    %v3583 = vunpack.c.l.bf16 %v3543
    %v3584 = vunpack.c.h.bf16 %v3543
    %v3585 = vunpack.c.l.bf16 %v3544
    %v3586 = vunpack.c.h.bf16 %v3544
    %v3587 = vunpack.c.l.bf16 %v3545
    %v3588 = vunpack.c.h.bf16 %v3545
    %v3589 = vunpack.c.l.bf16 %v3546
    %v3590 = vunpack.c.h.bf16 %v3546
    %v3591 = vunpack.c.l.bf16 %v3547
    %v3592 = vunpack.c.h.bf16 %v3547
    %v3593 = vunpack.c.l.bf16 %v3548
    %v3594 = vunpack.c.h.bf16 %v3548
    %v3595 = vunpack.c.l.bf16 %v3549
    %v3596 = vunpack.c.h.bf16 %v3549
    %v3597 = vunpack.c.l.bf16 %v3550
    %v3598 = vunpack.c.h.bf16 %v3550
    %v3599 = vunpack.c.l.bf16 %v3551
    %v3600 = vunpack.c.h.bf16 %v3551
    %v3601 = vunpack.c.l.bf16 %v3552
    %v3602 = vunpack.c.h.bf16 %v3552
    %v3603 = vunpack.c.l.bf16 %v3553
    %v3604 = vunpack.c.h.bf16 %v3553
    %v3605 = vunpack.c.l.bf16 %v3568
    %v3606 = vunpack.c.l.bf16 %v3572
    %v3607 = vadd.f32 %v3573, %v3605
    %v3608 = vadd.f32 %v3574, %v3606
    %v3609 = vadd.f32 %v3575, %v3605
    %v3610 = vadd.f32 %v3576, %v3606
    %v3611 = vadd.f32 %v3577, %v3605
    %v3612 = vadd.f32 %v3578, %v3606
    %v3613 = vadd.f32 %v3579, %v3605
    %v3614 = vadd.f32 %v3580, %v3606
    %v3615 = vadd.f32 %v3581, %v3605
    %v3616 = vadd.f32 %v3582, %v3606
    %v3617 = vadd.f32 %v3583, %v3605
    %v3618 = vadd.f32 %v3584, %v3606
    %v3619 = vadd.f32 %v3585, %v3605
    %v3620 = vadd.f32 %v3586, %v3606
    %v3621 = vadd.f32 %v3587, %v3605
    %v3622 = vadd.f32 %v3588, %v3606
    %v3623 = vadd.f32 %v3589, %v3605
    %v3624 = vadd.f32 %v3590, %v3606
    %v3625 = vadd.f32 %v3591, %v3605
    %v3626 = vadd.f32 %v3592, %v3606
    %v3627 = vadd.f32 %v3593, %v3605
    %v3628 = vadd.f32 %v3594, %v3606
    %v3629 = vadd.f32 %v3595, %v3605
    %v3630 = vadd.f32 %v3596, %v3606
    %v3631 = vadd.f32 %v3597, %v3605
    %v3632 = vadd.f32 %v3598, %v3606
    %v3633 = vadd.f32 %v3599, %v3605
    %v3634 = vadd.f32 %v3600, %v3606
    %v3635 = vadd.f32 %v3601, %v3605
    %v3636 = vadd.f32 %v3602, %v3606
    %v3637 = vadd.f32 %v3603, %v3605
    %v3638 = vadd.f32 %v3604, %v3606
    %v3639 = vpack.c.bf16 %v3608, %v3607
    %v3640 = vpack.c.bf16 %v3610, %v3609
    %v3641 = vpack.c.bf16 %v3612, %v3611
    %v3642 = vpack.c.bf16 %v3614, %v3613
    %v3643 = vpack.c.bf16 %v3616, %v3615
    %v3644 = vpack.c.bf16 %v3618, %v3617
    %v3645 = vpack.c.bf16 %v3620, %v3619
    %v3646 = vpack.c.bf16 %v3622, %v3621
    %v3647 = vpack.c.bf16 %v3624, %v3623
    %v3648 = vpack.c.bf16 %v3626, %v3625
    %v3649 = vpack.c.bf16 %v3628, %v3627
    %v3650 = vpack.c.bf16 %v3630, %v3629
    %v3651 = vpack.c.bf16 %v3632, %v3631
    %v3652 = vpack.c.bf16 %v3634, %v3633
    %v3653 = vpack.c.bf16 %v3636, %v3635
    %v3654 = vpack.c.bf16 %v3638, %v3637
    %v3655 = vunpack.c.l.bf16 %v3639
    %v3656 = vunpack.c.h.bf16 %v3639
    %v3657 = vunpack.c.l.bf16 %v3640
    %v3658 = vunpack.c.h.bf16 %v3640
    %v3659 = vunpack.c.l.bf16 %v3641
    %v3660 = vunpack.c.h.bf16 %v3641
    %v3661 = vunpack.c.l.bf16 %v3642
    %v3662 = vunpack.c.h.bf16 %v3642
    %v3663 = vunpack.c.l.bf16 %v3643
    %v3664 = vunpack.c.h.bf16 %v3643
    %v3665 = vunpack.c.l.bf16 %v3644
    %v3666 = vunpack.c.h.bf16 %v3644
    %v3667 = vunpack.c.l.bf16 %v3645
    %v3668 = vunpack.c.h.bf16 %v3645
    %v3669 = vunpack.c.l.bf16 %v3646
    %v3670 = vunpack.c.h.bf16 %v3646
    %v3671 = vunpack.c.l.bf16 %v3647
    %v3672 = vunpack.c.h.bf16 %v3647
    %v3673 = vunpack.c.l.bf16 %v3648
    %v3674 = vunpack.c.h.bf16 %v3648
    %v3675 = vunpack.c.l.bf16 %v3649
    %v3676 = vunpack.c.h.bf16 %v3649
    %v3677 = vunpack.c.l.bf16 %v3650
    %v3678 = vunpack.c.h.bf16 %v3650
    %v3679 = vunpack.c.l.bf16 %v3651
    %v3680 = vunpack.c.h.bf16 %v3651
    %v3681 = vunpack.c.l.bf16 %v3652
    %v3682 = vunpack.c.h.bf16 %v3652
    %v3683 = vunpack.c.l.bf16 %v3653
    %v3684 = vunpack.c.h.bf16 %v3653
    %v3685 = vunpack.c.l.bf16 %v3654
    %v3686 = vunpack.c.h.bf16 %v3654
    %v3687 = vmax.f32 %v3655, 0.0
    %v3688 = vmax.f32 %v3656, 0.0
    %v3689 = vmax.f32 %v3657, 0.0
    %v3690 = vmax.f32 %v3658, 0.0
    %v3691 = vmax.f32 %v3659, 0.0
    %v3692 = vmax.f32 %v3660, 0.0
    %v3693 = vmax.f32 %v3661, 0.0
    %v3694 = vmax.f32 %v3662, 0.0
    %v3695 = vmax.f32 %v3663, 0.0
    %v3696 = vmax.f32 %v3664, 0.0
    %v3697 = vmax.f32 %v3665, 0.0
    %v3698 = vmax.f32 %v3666, 0.0
    %v3699 = vmax.f32 %v3667, 0.0
    %v3700 = vmax.f32 %v3668, 0.0
    %v3701 = vmax.f32 %v3669, 0.0
    %v3702 = vmax.f32 %v3670, 0.0
    %v3703 = vmax.f32 %v3671, 0.0
    %v3704 = vmax.f32 %v3672, 0.0
    %v3705 = vmax.f32 %v3673, 0.0
    %v3706 = vmax.f32 %v3674, 0.0
    %v3707 = vmax.f32 %v3675, 0.0
    %v3708 = vmax.f32 %v3676, 0.0
    %v3709 = vmax.f32 %v3677, 0.0
    %v3710 = vmax.f32 %v3678, 0.0
    %v3711 = vmax.f32 %v3679, 0.0
    %v3712 = vmax.f32 %v3680, 0.0
    %v3713 = vmax.f32 %v3681, 0.0
    %v3714 = vmax.f32 %v3682, 0.0
    %v3715 = vmax.f32 %v3683, 0.0
    %v3716 = vmax.f32 %v3684, 0.0
    %v3717 = vmax.f32 %v3685, 0.0
    %v3718 = vmax.f32 %v3686, 0.0
    %v3719 = vpack.c.bf16 %v3689, %v3687
    %v3720 = vpack.c.bf16 %v3690, %v3688
    %v3721 = vpack.c.bf16 %v3693, %v3691
    %v3722 = vpack.c.bf16 %v3694, %v3692
    %v3723 = vpack.c.bf16 %v3697, %v3695
    %v3724 = vpack.c.bf16 %v3698, %v3696
    %v3725 = vpack.c.bf16 %v3701, %v3699
    %v3726 = vpack.c.bf16 %v3702, %v3700
    %v3727 = vpack.c.bf16 %v3705, %v3703
    %v3728 = vpack.c.bf16 %v3706, %v3704
    %v3729 = vpack.c.bf16 %v3709, %v3707
    %v3730 = vpack.c.bf16 %v3710, %v3708
    %v3731 = vpack.c.bf16 %v3713, %v3711
    %v3732 = vpack.c.bf16 %v3714, %v3712
    %v3733 = vpack.c.bf16 %v3717, %v3715
    %v3734 = vpack.c.bf16 %v3718, %v3716
    %v3735 = vld [vmem:[#allocation14] sm:$0xff]
    %v3736 = vld [vmem:[#allocation14 + $0x8] sm:$0xff]
    %v3737 = vld [vmem:[#allocation14 + $0x10] sm:$0xff]
    %v3738 = vld [vmem:[#allocation14 + $0x18] sm:$0xff]
    %v3739 = vld [vmem:[#allocation14 + $0x20] sm:$0xff]
    %v3740 = vld [vmem:[#allocation14 + $0x28] sm:$0xff]
    %v3741 = vld [vmem:[#allocation14 + $0x30] sm:$0xff]
    %v3742 = vld [vmem:[#allocation14 + $0x38] sm:$0xff]
    %v3743 = vld [vmem:[#allocation14 + $0x40] sm:$0xff]
    %v3744 = vld [vmem:[#allocation14 + $0x48] sm:$0xff]
    %v3745 = vld [vmem:[#allocation14 + $0x50] sm:$0xff]
    %v3746 = vld [vmem:[#allocation14 + $0x58] sm:$0xff]
    %v3747 = vld [vmem:[#allocation14 + $0x60] sm:$0xff]
    %v3748 = vld [vmem:[#allocation14 + $0x68] sm:$0xff]
    %v3749 = vld [vmem:[#allocation14 + $0x70] sm:$0xff]
    %v3750 = vld [vmem:[#allocation14 + $0x78] sm:$0xff]
    %v3751 = vld [vmem:[#allocation14 + $0x80] sm:$0xff]
    %v3752 = vld [vmem:[#allocation14 + $0x88] sm:$0xff]
    %v3753 = vld [vmem:[#allocation14 + $0x90] sm:$0xff]
    %v3754 = vld [vmem:[#allocation14 + $0x98] sm:$0xff]
    %v3755 = vld [vmem:[#allocation14 + $0xa0] sm:$0xff]
    %v3756 = vld [vmem:[#allocation14 + $0xa8] sm:$0xff]
    %v3757 = vld [vmem:[#allocation14 + $0xb0] sm:$0xff]
    %v3758 = vld [vmem:[#allocation14 + $0xb8] sm:$0xff]
    %v3759 = vld [vmem:[#allocation14 + $0xc0] sm:$0xff]
    %v3760 = vld [vmem:[#allocation14 + $0xc8] sm:$0xff]
    %v3761 = vld [vmem:[#allocation14 + $0xd0] sm:$0xff]
    %v3762 = vld [vmem:[#allocation14 + $0xd8] sm:$0xff]
    %v3763 = vld [vmem:[#allocation14 + $0xe0] sm:$0xff]
    %v3764 = vld [vmem:[#allocation14 + $0xe8] sm:$0xff]
    %v3765 = vld [vmem:[#allocation14 + $0xf0] sm:$0xff]
    %v3766 = vld [vmem:[#allocation14 + $0xf8] sm:$0xff]
    %v3799 = vunpack.c.l.b16 %v3735
    %v3800 = vunpack.c.h.b16 %v3735
    %v3801 = vunpack.c.l.b16 %v3736
    %v3802 = vunpack.c.h.b16 %v3736
    %v3803 = vunpack.c.l.b16 %v3737
    %v3804 = vunpack.c.h.b16 %v3737
    %v3805 = vunpack.c.l.b16 %v3738
    %v3806 = vunpack.c.h.b16 %v3738
    %v3807 = vunpack.c.l.b16 %v3739
    %v3808 = vunpack.c.h.b16 %v3739
    %v3809 = vunpack.c.l.b16 %v3740
    %v3810 = vunpack.c.h.b16 %v3740
    %v3811 = vunpack.c.l.b16 %v3741
    %v3812 = vunpack.c.h.b16 %v3741
    %v3813 = vunpack.c.l.b16 %v3742
    %v3814 = vunpack.c.h.b16 %v3742
    %v3815 = vunpack.c.l.b16 %v3743
    %v3816 = vunpack.c.h.b16 %v3743
    %v3817 = vunpack.c.l.b16 %v3744
    %v3818 = vunpack.c.h.b16 %v3744
    %v3819 = vunpack.c.l.b16 %v3745
    %v3820 = vunpack.c.h.b16 %v3745
    %v3821 = vunpack.c.l.b16 %v3746
    %v3822 = vunpack.c.h.b16 %v3746
    %v3823 = vunpack.c.l.b16 %v3747
    %v3824 = vunpack.c.h.b16 %v3747
    %v3825 = vunpack.c.l.b16 %v3748
    %v3826 = vunpack.c.h.b16 %v3748
    %v3827 = vunpack.c.l.b16 %v3749
    %v3828 = vunpack.c.h.b16 %v3749
    %v3829 = vunpack.c.l.b16 %v3750
    %v3830 = vunpack.c.h.b16 %v3750
    %v3831 = vunpack.c.l.b16 %v3751
    %v3832 = vunpack.c.h.b16 %v3751
    %v3833 = vunpack.c.l.b16 %v3752
    %v3834 = vunpack.c.h.b16 %v3752
    %v3835 = vunpack.c.l.b16 %v3753
    %v3836 = vunpack.c.h.b16 %v3753
    %v3837 = vunpack.c.l.b16 %v3754
    %v3838 = vunpack.c.h.b16 %v3754
    %v3839 = vunpack.c.l.b16 %v3755
    %v3840 = vunpack.c.h.b16 %v3755
    %v3841 = vunpack.c.l.b16 %v3756
    %v3842 = vunpack.c.h.b16 %v3756
    %v3843 = vunpack.c.l.b16 %v3757
    %v3844 = vunpack.c.h.b16 %v3757
    %v3845 = vunpack.c.l.b16 %v3758
    %v3846 = vunpack.c.h.b16 %v3758
    %v3847 = vunpack.c.l.b16 %v3759
    %v3848 = vunpack.c.h.b16 %v3759
    %v3849 = vunpack.c.l.b16 %v3760
    %v3850 = vunpack.c.h.b16 %v3760
    %v3851 = vunpack.c.l.b16 %v3761
    %v3852 = vunpack.c.h.b16 %v3761
    %v3853 = vunpack.c.l.b16 %v3762
    %v3854 = vunpack.c.h.b16 %v3762
    %v3855 = vunpack.c.l.b16 %v3763
    %v3856 = vunpack.c.h.b16 %v3763
    %v3857 = vunpack.c.l.b16 %v3764
    %v3858 = vunpack.c.h.b16 %v3764
    %v3859 = vunpack.c.l.b16 %v3765
    %v3860 = vunpack.c.h.b16 %v3765
    %v3861 = vunpack.c.l.b16 %v3766
    %v3862 = vunpack.c.h.b16 %v3766
    %v3863 = vpack.c.b16 %v3801, %v3799
    %v3864 = vpack.c.b16 %v3802, %v3800
    %v3865 = vpack.c.b16 %v3805, %v3803
    %v3866 = vpack.c.b16 %v3806, %v3804
    %v3867 = vpack.c.b16 %v3809, %v3807
    %v3868 = vpack.c.b16 %v3810, %v3808
    %v3869 = vpack.c.b16 %v3813, %v3811
    %v3870 = vpack.c.b16 %v3814, %v3812
    %v3871 = vpack.c.b16 %v3817, %v3815
    %v3872 = vpack.c.b16 %v3818, %v3816
    %v3873 = vpack.c.b16 %v3821, %v3819
    %v3874 = vpack.c.b16 %v3822, %v3820
    %v3875 = vpack.c.b16 %v3825, %v3823
    %v3876 = vpack.c.b16 %v3826, %v3824
    %v3877 = vpack.c.b16 %v3829, %v3827
    %v3878 = vpack.c.b16 %v3830, %v3828
    %v3879 = vpack.c.b16 %v3833, %v3831
    %v3880 = vpack.c.b16 %v3834, %v3832
    %v3881 = vpack.c.b16 %v3837, %v3835
    %v3882 = vpack.c.b16 %v3838, %v3836
    %v3883 = vpack.c.b16 %v3841, %v3839
    %v3884 = vpack.c.b16 %v3842, %v3840
    %v3885 = vpack.c.b16 %v3845, %v3843
    %v3886 = vpack.c.b16 %v3846, %v3844
    %v3887 = vpack.c.b16 %v3849, %v3847
    %v3888 = vpack.c.b16 %v3850, %v3848
    %v3889 = vpack.c.b16 %v3853, %v3851
    %v3890 = vpack.c.b16 %v3854, %v3852
    %v3891 = vpack.c.b16 %v3857, %v3855
    %v3892 = vpack.c.b16 %v3858, %v3856
    %v3893 = vpack.c.b16 %v3861, %v3859
    %v3894 = vpack.c.b16 %v3862, %v3860
    %3927 = vmatpush.bf16.msra.mxu0 %v3877
    %3928 = vmatpush.bf16.msra.mxu0 %v3875
    %3929 = vmatpush.bf16.msra.mxu0 %v3873
    %3930 = vmatpush.bf16.msra.mxu0 %v3871
    %3931 = vmatpush.bf16.msra.mxu0 %v3869
    %3932 = vmatpush.bf16.msra.mxu0 %v3867
    %3933 = vmatpush.bf16.msra.mxu0 %v3865
    %3934 = vmatpush.bf16.msra.mxu0 %v3863
    %3935 = vmatmul.bf16.gmra.mxu0 %v3719
    %v3936 = vpop.f32.mrf.mxu0
    %v3937 = vadd.f32 0.0, %v3936
    %v3938 = vpop.f32.mrf.mxu0
    %v3939 = vadd.f32 0.0, %v3938
    %3940 = vmatmul.bf16.gmra.mxu0 %v3721
    %v3941 = vpop.f32.mrf.mxu0
    %v3942 = vadd.f32 0.0, %v3941
    %v3943 = vpop.f32.mrf.mxu0
    %v3944 = vadd.f32 0.0, %v3943
    %3945 = vmatmul.bf16.gmra.mxu0 %v3723
    %v3946 = vpop.f32.mrf.mxu0
    %v3947 = vadd.f32 0.0, %v3946
    %v3948 = vpop.f32.mrf.mxu0
    %v3949 = vadd.f32 0.0, %v3948
    %3950 = vmatmul.bf16.gmra.mxu0 %v3725
    %v3951 = vpop.f32.mrf.mxu0
    %v3952 = vadd.f32 0.0, %v3951
    %v3953 = vpop.f32.mrf.mxu0
    %v3954 = vadd.f32 0.0, %v3953
    %3955 = vmatmul.bf16.gmra.mxu0 %v3727
    %v3956 = vpop.f32.mrf.mxu0
    %v3957 = vadd.f32 0.0, %v3956
    %v3958 = vpop.f32.mrf.mxu0
    %v3959 = vadd.f32 0.0, %v3958
    %3960 = vmatmul.bf16.gmra.mxu0 %v3729
    %v3961 = vpop.f32.mrf.mxu0
    %v3962 = vadd.f32 0.0, %v3961
    %v3963 = vpop.f32.mrf.mxu0
    %v3964 = vadd.f32 0.0, %v3963
    %3965 = vmatmul.bf16.gmra.mxu0 %v3731
    %v3966 = vpop.f32.mrf.mxu0
    %v3967 = vadd.f32 0.0, %v3966
    %v3968 = vpop.f32.mrf.mxu0
    %v3969 = vadd.f32 0.0, %v3968
    %3970 = vmatmul.bf16.gmra.mxu0 %v3733
    %v3971 = vpop.f32.mrf.mxu0
    %v3972 = vadd.f32 0.0, %v3971
    %v3973 = vpop.f32.mrf.mxu0
    %v3974 = vadd.f32 0.0, %v3973
    %3975 = vdwg.mxu0
    %3976 = vmatpush.bf16.msra.mxu0 %v3893
    %3977 = vmatpush.bf16.msra.mxu0 %v3891
    %3978 = vmatpush.bf16.msra.mxu0 %v3889
    %3979 = vmatpush.bf16.msra.mxu0 %v3887
    %3980 = vmatpush.bf16.msra.mxu0 %v3885
    %3981 = vmatpush.bf16.msra.mxu0 %v3883
    %3982 = vmatpush.bf16.msra.mxu0 %v3881
    %3983 = vmatpush.bf16.msra.mxu0 %v3879
    %3984 = vmatmul.bf16.gmra.mxu0 %v3720
    %v3985 = vpop.f32.mrf.mxu0
    %v3986 = vadd.f32 %v3937, %v3985
    %v3987 = vpop.f32.mrf.mxu0
    %v3988 = vadd.f32 %v3939, %v3987
    %3989 = vmatmul.bf16.gmra.mxu0 %v3722
    %v3990 = vpop.f32.mrf.mxu0
    %v3991 = vadd.f32 %v3942, %v3990
    %v3992 = vpop.f32.mrf.mxu0
    %v3993 = vadd.f32 %v3944, %v3992
    %3994 = vmatmul.bf16.gmra.mxu0 %v3724
    %v3995 = vpop.f32.mrf.mxu0
    %v3996 = vadd.f32 %v3947, %v3995
    %v3997 = vpop.f32.mrf.mxu0
    %v3998 = vadd.f32 %v3949, %v3997
    %3999 = vmatmul.bf16.gmra.mxu0 %v3726
    %v4000 = vpop.f32.mrf.mxu0
    %v4001 = vadd.f32 %v3952, %v4000
    %v4002 = vpop.f32.mrf.mxu0
    %v4003 = vadd.f32 %v3954, %v4002
    %4004 = vmatmul.bf16.gmra.mxu0 %v3728
    %v4005 = vpop.f32.mrf.mxu0
    %v4006 = vadd.f32 %v3957, %v4005
    %v4007 = vpop.f32.mrf.mxu0
    %v4008 = vadd.f32 %v3959, %v4007
    %4009 = vmatmul.bf16.gmra.mxu0 %v3730
    %v4010 = vpop.f32.mrf.mxu0
    %v4011 = vadd.f32 %v3962, %v4010
    %v4012 = vpop.f32.mrf.mxu0
    %v4013 = vadd.f32 %v3964, %v4012
    %4014 = vmatmul.bf16.gmra.mxu0 %v3732
    %v4015 = vpop.f32.mrf.mxu0
    %v4016 = vadd.f32 %v3967, %v4015
    %v4017 = vpop.f32.mrf.mxu0
    %v4018 = vadd.f32 %v3969, %v4017
    %4019 = vmatmul.bf16.gmra.mxu0 %v3734
    %v4020 = vpop.f32.mrf.mxu0
    %v4021 = vadd.f32 %v3972, %v4020
    %v4022 = vpop.f32.mrf.mxu0
    %v4023 = vadd.f32 %v3974, %v4022
    %4024 = vdwg.mxu0
    %4025 = vmatpush.bf16.msra.mxu0 %v3878
    %4026 = vmatpush.bf16.msra.mxu0 %v3876
    %4027 = vmatpush.bf16.msra.mxu0 %v3874
    %4028 = vmatpush.bf16.msra.mxu0 %v3872
    %4029 = vmatpush.bf16.msra.mxu0 %v3870
    %4030 = vmatpush.bf16.msra.mxu0 %v3868
    %4031 = vmatpush.bf16.msra.mxu0 %v3866
    %4032 = vmatpush.bf16.msra.mxu0 %v3864
    %4033 = vmatmul.bf16.gmra.mxu0 %v3719
    %v4034 = vpop.f32.mrf.mxu0
    %v4035 = vadd.f32 0.0, %v4034
    %v4036 = vpop.f32.mrf.mxu0
    %v4037 = vadd.f32 0.0, %v4036
    %4038 = vmatmul.bf16.gmra.mxu0 %v3721
    %v4039 = vpop.f32.mrf.mxu0
    %v4040 = vadd.f32 0.0, %v4039
    %v4041 = vpop.f32.mrf.mxu0
    %v4042 = vadd.f32 0.0, %v4041
    %4043 = vmatmul.bf16.gmra.mxu0 %v3723
    %v4044 = vpop.f32.mrf.mxu0
    %v4045 = vadd.f32 0.0, %v4044
    %v4046 = vpop.f32.mrf.mxu0
    %v4047 = vadd.f32 0.0, %v4046
    %4048 = vmatmul.bf16.gmra.mxu0 %v3725
    %v4049 = vpop.f32.mrf.mxu0
    %v4050 = vadd.f32 0.0, %v4049
    %v4051 = vpop.f32.mrf.mxu0
    %v4052 = vadd.f32 0.0, %v4051
    %4053 = vmatmul.bf16.gmra.mxu0 %v3727
    %v4054 = vpop.f32.mrf.mxu0
    %v4055 = vadd.f32 0.0, %v4054
    %v4056 = vpop.f32.mrf.mxu0
    %v4057 = vadd.f32 0.0, %v4056
    %4058 = vmatmul.bf16.gmra.mxu0 %v3729
    %v4059 = vpop.f32.mrf.mxu0
    %v4060 = vadd.f32 0.0, %v4059
    %v4061 = vpop.f32.mrf.mxu0
    %v4062 = vadd.f32 0.0, %v4061
    %4063 = vmatmul.bf16.gmra.mxu0 %v3731
    %v4064 = vpop.f32.mrf.mxu0
    %v4065 = vadd.f32 0.0, %v4064
    %v4066 = vpop.f32.mrf.mxu0
    %v4067 = vadd.f32 0.0, %v4066
    %4068 = vmatmul.bf16.gmra.mxu0 %v3733
    %v4069 = vpop.f32.mrf.mxu0
    %v4070 = vadd.f32 0.0, %v4069
    %v4071 = vpop.f32.mrf.mxu0
    %v4072 = vadd.f32 0.0, %v4071
    %4073 = vdwg.mxu0
    %4074 = vmatpush.bf16.msra.mxu0 %v3894
    %4075 = vmatpush.bf16.msra.mxu0 %v3892
    %4076 = vmatpush.bf16.msra.mxu0 %v3890
    %4077 = vmatpush.bf16.msra.mxu0 %v3888
    %4078 = vmatpush.bf16.msra.mxu0 %v3886
    %4079 = vmatpush.bf16.msra.mxu0 %v3884
    %4080 = vmatpush.bf16.msra.mxu0 %v3882
    %4081 = vmatpush.bf16.msra.mxu0 %v3880
    %4082 = vmatmul.bf16.gmra.mxu0 %v3720
    %v4083 = vpop.f32.mrf.mxu0
    %v4084 = vadd.f32 %v4035, %v4083
    %v4085 = vpop.f32.mrf.mxu0
    %v4086 = vadd.f32 %v4037, %v4085
    %4087 = vmatmul.bf16.gmra.mxu0 %v3722
    %v4088 = vpop.f32.mrf.mxu0
    %v4089 = vadd.f32 %v4040, %v4088
    %v4090 = vpop.f32.mrf.mxu0
    %v4091 = vadd.f32 %v4042, %v4090
    %4092 = vmatmul.bf16.gmra.mxu0 %v3724
    %v4093 = vpop.f32.mrf.mxu0
    %v4094 = vadd.f32 %v4045, %v4093
    %v4095 = vpop.f32.mrf.mxu0
    %v4096 = vadd.f32 %v4047, %v4095
    %4097 = vmatmul.bf16.gmra.mxu0 %v3726
    %v4098 = vpop.f32.mrf.mxu0
    %v4099 = vadd.f32 %v4050, %v4098
    %v4100 = vpop.f32.mrf.mxu0
    %v4101 = vadd.f32 %v4052, %v4100
    %4102 = vmatmul.bf16.gmra.mxu0 %v3728
    %v4103 = vpop.f32.mrf.mxu0
    %v4104 = vadd.f32 %v4055, %v4103
    %v4105 = vpop.f32.mrf.mxu0
    %v4106 = vadd.f32 %v4057, %v4105
    %4107 = vmatmul.bf16.gmra.mxu0 %v3730
    %v4108 = vpop.f32.mrf.mxu0
    %v4109 = vadd.f32 %v4060, %v4108
    %v4110 = vpop.f32.mrf.mxu0
    %v4111 = vadd.f32 %v4062, %v4110
    %4112 = vmatmul.bf16.gmra.mxu0 %v3732
    %v4113 = vpop.f32.mrf.mxu0
    %v4114 = vadd.f32 %v4065, %v4113
    %v4115 = vpop.f32.mrf.mxu0
    %v4116 = vadd.f32 %v4067, %v4115
    %4117 = vmatmul.bf16.gmra.mxu0 %v3734
    %v4118 = vpop.f32.mrf.mxu0
    %v4119 = vadd.f32 %v4070, %v4118
    %v4120 = vpop.f32.mrf.mxu0
    %v4121 = vadd.f32 %v4072, %v4120
    %4122 = vdwg.mxu0
    %v4123 = vld [vmem:[#allocation16] sm:$0x3]
    %v4124 = vpack.c.bf16 %v4084, %v3986
    %v4125 = vpack.c.bf16 %v4086, %v3988
    %v4126 = vpack.c.bf16 %v4089, %v3991
    %v4127 = vpack.c.bf16 %v4091, %v3993
    %v4128 = vpack.c.bf16 %v4094, %v3996
    %v4129 = vpack.c.bf16 %v4096, %v3998
    %v4130 = vpack.c.bf16 %v4099, %v4001
    %v4131 = vpack.c.bf16 %v4101, %v4003
    %v4132 = vpack.c.bf16 %v4104, %v4006
    %v4133 = vpack.c.bf16 %v4106, %v4008
    %v4134 = vpack.c.bf16 %v4109, %v4011
    %v4135 = vpack.c.bf16 %v4111, %v4013
    %v4136 = vpack.c.bf16 %v4114, %v4016
    %v4137 = vpack.c.bf16 %v4116, %v4018
    %v4138 = vpack.c.bf16 %v4119, %v4021
    %v4139 = vpack.c.bf16 %v4121, %v4023
    %v4141 = vperm.slane %v4123, 0
    %v4142 = vperm.slane %v4123, 1
    %v4145 = vpack.c.bf16 %v4142, %v4141
    %v4147 = vunpack.c.l.b16 %v4145
    %v4148 = vunpack.c.h.b16 %v4145
    %v4149 = vpack.c.b16 %v4147, %v4147
    %v4150 = vpack.c.b16 %v4148, %v4148
    %v4152 = vpack.i.b16 %v4149, %v4149
    %v4154 = vperm.slane %v4152, 0
    %v4156 = vpack.i.b16 %v4150, %v4150
    %v4158 = vperm.slane %v4156, 0
    %v4159 = vunpack.c.l.bf16 %v4124
    %v4160 = vunpack.c.h.bf16 %v4124
    %v4161 = vunpack.c.l.bf16 %v4125
    %v4162 = vunpack.c.h.bf16 %v4125
    %v4163 = vunpack.c.l.bf16 %v4126
    %v4164 = vunpack.c.h.bf16 %v4126
    %v4165 = vunpack.c.l.bf16 %v4127
    %v4166 = vunpack.c.h.bf16 %v4127
    %v4167 = vunpack.c.l.bf16 %v4128
    %v4168 = vunpack.c.h.bf16 %v4128
    %v4169 = vunpack.c.l.bf16 %v4129
    %v4170 = vunpack.c.h.bf16 %v4129
    %v4171 = vunpack.c.l.bf16 %v4130
    %v4172 = vunpack.c.h.bf16 %v4130
    %v4173 = vunpack.c.l.bf16 %v4131
    %v4174 = vunpack.c.h.bf16 %v4131
    %v4175 = vunpack.c.l.bf16 %v4132
    %v4176 = vunpack.c.h.bf16 %v4132
    %v4177 = vunpack.c.l.bf16 %v4133
    %v4178 = vunpack.c.h.bf16 %v4133
    %v4179 = vunpack.c.l.bf16 %v4134
    %v4180 = vunpack.c.h.bf16 %v4134
    %v4181 = vunpack.c.l.bf16 %v4135
    %v4182 = vunpack.c.h.bf16 %v4135
    %v4183 = vunpack.c.l.bf16 %v4136
    %v4184 = vunpack.c.h.bf16 %v4136
    %v4185 = vunpack.c.l.bf16 %v4137
    %v4186 = vunpack.c.h.bf16 %v4137
    %v4187 = vunpack.c.l.bf16 %v4138
    %v4188 = vunpack.c.h.bf16 %v4138
    %v4189 = vunpack.c.l.bf16 %v4139
    %v4190 = vunpack.c.h.bf16 %v4139
    %v4191 = vunpack.c.l.bf16 %v4154
    %v4192 = vunpack.c.l.bf16 %v4158
    %v4193 = vadd.f32 %v4159, %v4191
    %v4194 = vadd.f32 %v4160, %v4192
    %v4195 = vadd.f32 %v4161, %v4191
    %v4196 = vadd.f32 %v4162, %v4192
    %v4197 = vadd.f32 %v4163, %v4191
    %v4198 = vadd.f32 %v4164, %v4192
    %v4199 = vadd.f32 %v4165, %v4191
    %v4200 = vadd.f32 %v4166, %v4192
    %v4201 = vadd.f32 %v4167, %v4191
    %v4202 = vadd.f32 %v4168, %v4192
    %v4203 = vadd.f32 %v4169, %v4191
    %v4204 = vadd.f32 %v4170, %v4192
    %v4205 = vadd.f32 %v4171, %v4191
    %v4206 = vadd.f32 %v4172, %v4192
    %v4207 = vadd.f32 %v4173, %v4191
    %v4208 = vadd.f32 %v4174, %v4192
    %v4209 = vadd.f32 %v4175, %v4191
    %v4210 = vadd.f32 %v4176, %v4192
    %v4211 = vadd.f32 %v4177, %v4191
    %v4212 = vadd.f32 %v4178, %v4192
    %v4213 = vadd.f32 %v4179, %v4191
    %v4214 = vadd.f32 %v4180, %v4192
    %v4215 = vadd.f32 %v4181, %v4191
    %v4216 = vadd.f32 %v4182, %v4192
    %v4217 = vadd.f32 %v4183, %v4191
    %v4218 = vadd.f32 %v4184, %v4192
    %v4219 = vadd.f32 %v4185, %v4191
    %v4220 = vadd.f32 %v4186, %v4192
    %v4221 = vadd.f32 %v4187, %v4191
    %v4222 = vadd.f32 %v4188, %v4192
    %v4223 = vadd.f32 %v4189, %v4191
    %v4224 = vadd.f32 %v4190, %v4192
    %v4225 = vpack.c.bf16 %v4194, %v4193
    %v4226 = vpack.c.bf16 %v4196, %v4195
    %v4227 = vpack.c.bf16 %v4198, %v4197
    %v4228 = vpack.c.bf16 %v4200, %v4199
    %v4229 = vpack.c.bf16 %v4202, %v4201
    %v4230 = vpack.c.bf16 %v4204, %v4203
    %v4231 = vpack.c.bf16 %v4206, %v4205
    %v4232 = vpack.c.bf16 %v4208, %v4207
    %v4233 = vpack.c.bf16 %v4210, %v4209
    %v4234 = vpack.c.bf16 %v4212, %v4211
    %v4235 = vpack.c.bf16 %v4214, %v4213
    %v4236 = vpack.c.bf16 %v4216, %v4215
    %v4237 = vpack.c.bf16 %v4218, %v4217
    %v4238 = vpack.c.bf16 %v4220, %v4219
    %v4239 = vpack.c.bf16 %v4222, %v4221
    %v4240 = vpack.c.bf16 %v4224, %v4223
    %v4241 = vunpack.c.l.bf16 %v4225
    %v4242 = vunpack.c.h.bf16 %v4225
    %v4243 = vunpack.c.l.bf16 %v4226
    %v4244 = vunpack.c.h.bf16 %v4226
    %v4245 = vunpack.c.l.bf16 %v4227
    %v4246 = vunpack.c.h.bf16 %v4227
    %v4247 = vunpack.c.l.bf16 %v4228
    %v4248 = vunpack.c.h.bf16 %v4228
    %v4249 = vunpack.c.l.bf16 %v4229
    %v4250 = vunpack.c.h.bf16 %v4229
    %v4251 = vunpack.c.l.bf16 %v4230
    %v4252 = vunpack.c.h.bf16 %v4230
    %v4253 = vunpack.c.l.bf16 %v4231
    %v4254 = vunpack.c.h.bf16 %v4231
    %v4255 = vunpack.c.l.bf16 %v4232
    %v4256 = vunpack.c.h.bf16 %v4232
    %v4257 = vunpack.c.l.bf16 %v4233
    %v4258 = vunpack.c.h.bf16 %v4233
    %v4259 = vunpack.c.l.bf16 %v4234
    %v4260 = vunpack.c.h.bf16 %v4234
    %v4261 = vunpack.c.l.bf16 %v4235
    %v4262 = vunpack.c.h.bf16 %v4235
    %v4263 = vunpack.c.l.bf16 %v4236
    %v4264 = vunpack.c.h.bf16 %v4236
    %v4265 = vunpack.c.l.bf16 %v4237
    %v4266 = vunpack.c.h.bf16 %v4237
    %v4267 = vunpack.c.l.bf16 %v4238
    %v4268 = vunpack.c.h.bf16 %v4238
    %v4269 = vunpack.c.l.bf16 %v4239
    %v4270 = vunpack.c.h.bf16 %v4239
    %v4271 = vunpack.c.l.bf16 %v4240
    %v4272 = vunpack.c.h.bf16 %v4240
    %v4273 = vmax.f32 %v4241, 0.0
    %v4274 = vmax.f32 %v4242, 0.0
    %v4275 = vmax.f32 %v4243, 0.0
    %v4276 = vmax.f32 %v4244, 0.0
    %v4277 = vmax.f32 %v4245, 0.0
    %v4278 = vmax.f32 %v4246, 0.0
    %v4279 = vmax.f32 %v4247, 0.0
    %v4280 = vmax.f32 %v4248, 0.0
    %v4281 = vmax.f32 %v4249, 0.0
    %v4282 = vmax.f32 %v4250, 0.0
    %v4283 = vmax.f32 %v4251, 0.0
    %v4284 = vmax.f32 %v4252, 0.0
    %v4285 = vmax.f32 %v4253, 0.0
    %v4286 = vmax.f32 %v4254, 0.0
    %v4287 = vmax.f32 %v4255, 0.0
    %v4288 = vmax.f32 %v4256, 0.0
    %v4289 = vmax.f32 %v4257, 0.0
    %v4290 = vmax.f32 %v4258, 0.0
    %v4291 = vmax.f32 %v4259, 0.0
    %v4292 = vmax.f32 %v4260, 0.0
    %v4293 = vmax.f32 %v4261, 0.0
    %v4294 = vmax.f32 %v4262, 0.0
    %v4295 = vmax.f32 %v4263, 0.0
    %v4296 = vmax.f32 %v4264, 0.0
    %v4297 = vmax.f32 %v4265, 0.0
    %v4298 = vmax.f32 %v4266, 0.0
    %v4299 = vmax.f32 %v4267, 0.0
    %v4300 = vmax.f32 %v4268, 0.0
    %v4301 = vmax.f32 %v4269, 0.0
    %v4302 = vmax.f32 %v4270, 0.0
    %v4303 = vmax.f32 %v4271, 0.0
    %v4304 = vmax.f32 %v4272, 0.0
    %v4305 = vpack.c.bf16 %v4275, %v4273
    %v4306 = vpack.c.bf16 %v4276, %v4274
    %v4307 = vpack.c.bf16 %v4279, %v4277
    %v4308 = vpack.c.bf16 %v4280, %v4278
    %v4309 = vpack.c.bf16 %v4283, %v4281
    %v4310 = vpack.c.bf16 %v4284, %v4282
    %v4311 = vpack.c.bf16 %v4287, %v4285
    %v4312 = vpack.c.bf16 %v4288, %v4286
    %v4313 = vpack.c.bf16 %v4291, %v4289
    %v4314 = vpack.c.bf16 %v4292, %v4290
    %v4315 = vpack.c.bf16 %v4295, %v4293
    %v4316 = vpack.c.bf16 %v4296, %v4294
    %v4317 = vpack.c.bf16 %v4299, %v4297
    %v4318 = vpack.c.bf16 %v4300, %v4298
    %v4319 = vpack.c.bf16 %v4303, %v4301
    %v4320 = vpack.c.bf16 %v4304, %v4302
    %s4321 = scalar_lea.vmem [#allocation14], 256
    %v4322 = vld [vmem:[%s4321] sm:$0xff]
    %v4323 = vld [vmem:[%s4321 + $0x8] sm:$0xff]
    %v4324 = vld [vmem:[%s4321 + $0x10] sm:$0xff]
    %v4325 = vld [vmem:[%s4321 + $0x18] sm:$0xff]
    %v4326 = vld [vmem:[%s4321 + $0x20] sm:$0xff]
    %v4327 = vld [vmem:[%s4321 + $0x28] sm:$0xff]
    %v4328 = vld [vmem:[%s4321 + $0x30] sm:$0xff]
    %v4329 = vld [vmem:[%s4321 + $0x38] sm:$0xff]
    %v4330 = vld [vmem:[%s4321 + $0x40] sm:$0xff]
    %v4331 = vld [vmem:[%s4321 + $0x48] sm:$0xff]
    %v4332 = vld [vmem:[%s4321 + $0x50] sm:$0xff]
    %v4333 = vld [vmem:[%s4321 + $0x58] sm:$0xff]
    %v4334 = vld [vmem:[%s4321 + $0x60] sm:$0xff]
    %v4335 = vld [vmem:[%s4321 + $0x68] sm:$0xff]
    %v4336 = vld [vmem:[%s4321 + $0x70] sm:$0xff]
    %v4337 = vld [vmem:[%s4321 + $0x78] sm:$0xff]
    %v4338 = vld [vmem:[%s4321 + $0x80] sm:$0xff]
    %v4339 = vld [vmem:[%s4321 + $0x88] sm:$0xff]
    %v4340 = vld [vmem:[%s4321 + $0x90] sm:$0xff]
    %v4341 = vld [vmem:[%s4321 + $0x98] sm:$0xff]
    %v4342 = vld [vmem:[%s4321 + $0xa0] sm:$0xff]
    %v4343 = vld [vmem:[%s4321 + $0xa8] sm:$0xff]
    %v4344 = vld [vmem:[%s4321 + $0xb0] sm:$0xff]
    %v4345 = vld [vmem:[%s4321 + $0xb8] sm:$0xff]
    %v4346 = vld [vmem:[%s4321 + $0xc0] sm:$0xff]
    %v4347 = vld [vmem:[%s4321 + $0xc8] sm:$0xff]
    %v4348 = vld [vmem:[%s4321 + $0xd0] sm:$0xff]
    %v4349 = vld [vmem:[%s4321 + $0xd8] sm:$0xff]
    %v4350 = vld [vmem:[%s4321 + $0xe0] sm:$0xff]
    %v4351 = vld [vmem:[%s4321 + $0xe8] sm:$0xff]
    %v4352 = vld [vmem:[%s4321 + $0xf0] sm:$0xff]
    %v4353 = vld [vmem:[%s4321 + $0xf8] sm:$0xff]
    %v4386 = vunpack.c.l.b16 %v4322
    %v4387 = vunpack.c.h.b16 %v4322
    %v4388 = vunpack.c.l.b16 %v4323
    %v4389 = vunpack.c.h.b16 %v4323
    %v4390 = vunpack.c.l.b16 %v4324
    %v4391 = vunpack.c.h.b16 %v4324
    %v4392 = vunpack.c.l.b16 %v4325
    %v4393 = vunpack.c.h.b16 %v4325
    %v4394 = vunpack.c.l.b16 %v4326
    %v4395 = vunpack.c.h.b16 %v4326
    %v4396 = vunpack.c.l.b16 %v4327
    %v4397 = vunpack.c.h.b16 %v4327
    %v4398 = vunpack.c.l.b16 %v4328
    %v4399 = vunpack.c.h.b16 %v4328
    %v4400 = vunpack.c.l.b16 %v4329
    %v4401 = vunpack.c.h.b16 %v4329
    %v4402 = vunpack.c.l.b16 %v4330
    %v4403 = vunpack.c.h.b16 %v4330
    %v4404 = vunpack.c.l.b16 %v4331
    %v4405 = vunpack.c.h.b16 %v4331
    %v4406 = vunpack.c.l.b16 %v4332
    %v4407 = vunpack.c.h.b16 %v4332
    %v4408 = vunpack.c.l.b16 %v4333
    %v4409 = vunpack.c.h.b16 %v4333
    %v4410 = vunpack.c.l.b16 %v4334
    %v4411 = vunpack.c.h.b16 %v4334
    %v4412 = vunpack.c.l.b16 %v4335
    %v4413 = vunpack.c.h.b16 %v4335
    %v4414 = vunpack.c.l.b16 %v4336
    %v4415 = vunpack.c.h.b16 %v4336
    %v4416 = vunpack.c.l.b16 %v4337
    %v4417 = vunpack.c.h.b16 %v4337
    %v4418 = vunpack.c.l.b16 %v4338
    %v4419 = vunpack.c.h.b16 %v4338
    %v4420 = vunpack.c.l.b16 %v4339
    %v4421 = vunpack.c.h.b16 %v4339
    %v4422 = vunpack.c.l.b16 %v4340
    %v4423 = vunpack.c.h.b16 %v4340
    %v4424 = vunpack.c.l.b16 %v4341
    %v4425 = vunpack.c.h.b16 %v4341
    %v4426 = vunpack.c.l.b16 %v4342
    %v4427 = vunpack.c.h.b16 %v4342
    %v4428 = vunpack.c.l.b16 %v4343
    %v4429 = vunpack.c.h.b16 %v4343
    %v4430 = vunpack.c.l.b16 %v4344
    %v4431 = vunpack.c.h.b16 %v4344
    %v4432 = vunpack.c.l.b16 %v4345
    %v4433 = vunpack.c.h.b16 %v4345
    %v4434 = vunpack.c.l.b16 %v4346
    %v4435 = vunpack.c.h.b16 %v4346
    %v4436 = vunpack.c.l.b16 %v4347
    %v4437 = vunpack.c.h.b16 %v4347
    %v4438 = vunpack.c.l.b16 %v4348
    %v4439 = vunpack.c.h.b16 %v4348
    %v4440 = vunpack.c.l.b16 %v4349
    %v4441 = vunpack.c.h.b16 %v4349
    %v4442 = vunpack.c.l.b16 %v4350
    %v4443 = vunpack.c.h.b16 %v4350
    %v4444 = vunpack.c.l.b16 %v4351
    %v4445 = vunpack.c.h.b16 %v4351
    %v4446 = vunpack.c.l.b16 %v4352
    %v4447 = vunpack.c.h.b16 %v4352
    %v4448 = vunpack.c.l.b16 %v4353
    %v4449 = vunpack.c.h.b16 %v4353
    %v4450 = vpack.c.b16 %v4388, %v4386
    %v4451 = vpack.c.b16 %v4389, %v4387
    %v4452 = vpack.c.b16 %v4392, %v4390
    %v4453 = vpack.c.b16 %v4393, %v4391
    %v4454 = vpack.c.b16 %v4396, %v4394
    %v4455 = vpack.c.b16 %v4397, %v4395
    %v4456 = vpack.c.b16 %v4400, %v4398
    %v4457 = vpack.c.b16 %v4401, %v4399
    %v4458 = vpack.c.b16 %v4404, %v4402
    %v4459 = vpack.c.b16 %v4405, %v4403
    %v4460 = vpack.c.b16 %v4408, %v4406
    %v4461 = vpack.c.b16 %v4409, %v4407
    %v4462 = vpack.c.b16 %v4412, %v4410
    %v4463 = vpack.c.b16 %v4413, %v4411
    %v4464 = vpack.c.b16 %v4416, %v4414
    %v4465 = vpack.c.b16 %v4417, %v4415
    %v4466 = vpack.c.b16 %v4420, %v4418
    %v4467 = vpack.c.b16 %v4421, %v4419
    %v4468 = vpack.c.b16 %v4424, %v4422
    %v4469 = vpack.c.b16 %v4425, %v4423
    %v4470 = vpack.c.b16 %v4428, %v4426
    %v4471 = vpack.c.b16 %v4429, %v4427
    %v4472 = vpack.c.b16 %v4432, %v4430
    %v4473 = vpack.c.b16 %v4433, %v4431
    %v4474 = vpack.c.b16 %v4436, %v4434
    %v4475 = vpack.c.b16 %v4437, %v4435
    %v4476 = vpack.c.b16 %v4440, %v4438
    %v4477 = vpack.c.b16 %v4441, %v4439
    %v4478 = vpack.c.b16 %v4444, %v4442
    %v4479 = vpack.c.b16 %v4445, %v4443
    %v4480 = vpack.c.b16 %v4448, %v4446
    %v4481 = vpack.c.b16 %v4449, %v4447
    %4514 = vmatpush.bf16.msra.mxu0 %v4464
    %4515 = vmatpush.bf16.msra.mxu0 %v4462
    %4516 = vmatpush.bf16.msra.mxu0 %v4460
    %4517 = vmatpush.bf16.msra.mxu0 %v4458
    %4518 = vmatpush.bf16.msra.mxu0 %v4456
    %4519 = vmatpush.bf16.msra.mxu0 %v4454
    %4520 = vmatpush.bf16.msra.mxu0 %v4452
    %4521 = vmatpush.bf16.msra.mxu0 %v4450
    %4522 = vmatmul.bf16.gmra.mxu0 %v4305
    %v4523 = vpop.f32.mrf.mxu0
    %v4524 = vadd.f32 0.0, %v4523
    %v4525 = vpop.f32.mrf.mxu0
    %v4526 = vadd.f32 0.0, %v4525
    %4527 = vmatmul.bf16.gmra.mxu0 %v4307
    %v4528 = vpop.f32.mrf.mxu0
    %v4529 = vadd.f32 0.0, %v4528
    %v4530 = vpop.f32.mrf.mxu0
    %v4531 = vadd.f32 0.0, %v4530
    %4532 = vmatmul.bf16.gmra.mxu0 %v4309
    %v4533 = vpop.f32.mrf.mxu0
    %v4534 = vadd.f32 0.0, %v4533
    %v4535 = vpop.f32.mrf.mxu0
    %v4536 = vadd.f32 0.0, %v4535
    %4537 = vmatmul.bf16.gmra.mxu0 %v4311
    %v4538 = vpop.f32.mrf.mxu0
    %v4539 = vadd.f32 0.0, %v4538
    %v4540 = vpop.f32.mrf.mxu0
    %v4541 = vadd.f32 0.0, %v4540
    %4542 = vmatmul.bf16.gmra.mxu0 %v4313
    %v4543 = vpop.f32.mrf.mxu0
    %v4544 = vadd.f32 0.0, %v4543
    %v4545 = vpop.f32.mrf.mxu0
    %v4546 = vadd.f32 0.0, %v4545
    %4547 = vmatmul.bf16.gmra.mxu0 %v4315
    %v4548 = vpop.f32.mrf.mxu0
    %v4549 = vadd.f32 0.0, %v4548
    %v4550 = vpop.f32.mrf.mxu0
    %v4551 = vadd.f32 0.0, %v4550
    %4552 = vmatmul.bf16.gmra.mxu0 %v4317
    %v4553 = vpop.f32.mrf.mxu0
    %v4554 = vadd.f32 0.0, %v4553
    %v4555 = vpop.f32.mrf.mxu0
    %v4556 = vadd.f32 0.0, %v4555
    %4557 = vmatmul.bf16.gmra.mxu0 %v4319
    %v4558 = vpop.f32.mrf.mxu0
    %v4559 = vadd.f32 0.0, %v4558
    %v4560 = vpop.f32.mrf.mxu0
    %v4561 = vadd.f32 0.0, %v4560
    %4562 = vdwg.mxu0
    %4563 = vmatpush.bf16.msra.mxu0 %v4480
    %4564 = vmatpush.bf16.msra.mxu0 %v4478
    %4565 = vmatpush.bf16.msra.mxu0 %v4476
    %4566 = vmatpush.bf16.msra.mxu0 %v4474
    %4567 = vmatpush.bf16.msra.mxu0 %v4472
    %4568 = vmatpush.bf16.msra.mxu0 %v4470
    %4569 = vmatpush.bf16.msra.mxu0 %v4468
    %4570 = vmatpush.bf16.msra.mxu0 %v4466
    %4571 = vmatmul.bf16.gmra.mxu0 %v4306
    %v4572 = vpop.f32.mrf.mxu0
    %v4573 = vadd.f32 %v4524, %v4572
    %v4574 = vpop.f32.mrf.mxu0
    %v4575 = vadd.f32 %v4526, %v4574
    %4576 = vmatmul.bf16.gmra.mxu0 %v4308
    %v4577 = vpop.f32.mrf.mxu0
    %v4578 = vadd.f32 %v4529, %v4577
    %v4579 = vpop.f32.mrf.mxu0
    %v4580 = vadd.f32 %v4531, %v4579
    %4581 = vmatmul.bf16.gmra.mxu0 %v4310
    %v4582 = vpop.f32.mrf.mxu0
    %v4583 = vadd.f32 %v4534, %v4582
    %v4584 = vpop.f32.mrf.mxu0
    %v4585 = vadd.f32 %v4536, %v4584
    %4586 = vmatmul.bf16.gmra.mxu0 %v4312
    %v4587 = vpop.f32.mrf.mxu0
    %v4588 = vadd.f32 %v4539, %v4587
    %v4589 = vpop.f32.mrf.mxu0
    %v4590 = vadd.f32 %v4541, %v4589
    %4591 = vmatmul.bf16.gmra.mxu0 %v4314
    %v4592 = vpop.f32.mrf.mxu0
    %v4593 = vadd.f32 %v4544, %v4592
    %v4594 = vpop.f32.mrf.mxu0
    %v4595 = vadd.f32 %v4546, %v4594
    %4596 = vmatmul.bf16.gmra.mxu0 %v4316
    %v4597 = vpop.f32.mrf.mxu0
    %v4598 = vadd.f32 %v4549, %v4597
    %v4599 = vpop.f32.mrf.mxu0
    %v4600 = vadd.f32 %v4551, %v4599
    %4601 = vmatmul.bf16.gmra.mxu0 %v4318
    %v4602 = vpop.f32.mrf.mxu0
    %v4603 = vadd.f32 %v4554, %v4602
    %v4604 = vpop.f32.mrf.mxu0
    %v4605 = vadd.f32 %v4556, %v4604
    %4606 = vmatmul.bf16.gmra.mxu0 %v4320
    %v4607 = vpop.f32.mrf.mxu0
    %v4608 = vadd.f32 %v4559, %v4607
    %v4609 = vpop.f32.mrf.mxu0
    %v4610 = vadd.f32 %v4561, %v4609
    %4611 = vdwg.mxu0
    %4612 = vmatpush.bf16.msra.mxu0 %v4465
    %4613 = vmatpush.bf16.msra.mxu0 %v4463
    %4614 = vmatpush.bf16.msra.mxu0 %v4461
    %4615 = vmatpush.bf16.msra.mxu0 %v4459
    %4616 = vmatpush.bf16.msra.mxu0 %v4457
    %4617 = vmatpush.bf16.msra.mxu0 %v4455
    %4618 = vmatpush.bf16.msra.mxu0 %v4453
    %4619 = vmatpush.bf16.msra.mxu0 %v4451
    %4620 = vmatmul.bf16.gmra.mxu0 %v4305
    %v4621 = vpop.f32.mrf.mxu0
    %v4622 = vadd.f32 0.0, %v4621
    %v4623 = vpop.f32.mrf.mxu0
    %v4624 = vadd.f32 0.0, %v4623
    %4625 = vmatmul.bf16.gmra.mxu0 %v4307
    %v4626 = vpop.f32.mrf.mxu0
    %v4627 = vadd.f32 0.0, %v4626
    %v4628 = vpop.f32.mrf.mxu0
    %v4629 = vadd.f32 0.0, %v4628
    %4630 = vmatmul.bf16.gmra.mxu0 %v4309
    %v4631 = vpop.f32.mrf.mxu0
    %v4632 = vadd.f32 0.0, %v4631
    %v4633 = vpop.f32.mrf.mxu0
    %v4634 = vadd.f32 0.0, %v4633
    %4635 = vmatmul.bf16.gmra.mxu0 %v4311
    %v4636 = vpop.f32.mrf.mxu0
    %v4637 = vadd.f32 0.0, %v4636
    %v4638 = vpop.f32.mrf.mxu0
    %v4639 = vadd.f32 0.0, %v4638
    %4640 = vmatmul.bf16.gmra.mxu0 %v4313
    %v4641 = vpop.f32.mrf.mxu0
    %v4642 = vadd.f32 0.0, %v4641
    %v4643 = vpop.f32.mrf.mxu0
    %v4644 = vadd.f32 0.0, %v4643
    %4645 = vmatmul.bf16.gmra.mxu0 %v4315
    %v4646 = vpop.f32.mrf.mxu0
    %v4647 = vadd.f32 0.0, %v4646
    %v4648 = vpop.f32.mrf.mxu0
    %v4649 = vadd.f32 0.0, %v4648
    %4650 = vmatmul.bf16.gmra.mxu0 %v4317
    %v4651 = vpop.f32.mrf.mxu0
    %v4652 = vadd.f32 0.0, %v4651
    %v4653 = vpop.f32.mrf.mxu0
    %v4654 = vadd.f32 0.0, %v4653
    %4655 = vmatmul.bf16.gmra.mxu0 %v4319
    %v4656 = vpop.f32.mrf.mxu0
    %v4657 = vadd.f32 0.0, %v4656
    %v4658 = vpop.f32.mrf.mxu0
    %v4659 = vadd.f32 0.0, %v4658
    %4660 = vdwg.mxu0
    %4661 = vmatpush.bf16.msra.mxu0 %v4481
    %4662 = vmatpush.bf16.msra.mxu0 %v4479
    %4663 = vmatpush.bf16.msra.mxu0 %v4477
    %4664 = vmatpush.bf16.msra.mxu0 %v4475
    %4665 = vmatpush.bf16.msra.mxu0 %v4473
    %4666 = vmatpush.bf16.msra.mxu0 %v4471
    %4667 = vmatpush.bf16.msra.mxu0 %v4469
    %4668 = vmatpush.bf16.msra.mxu0 %v4467
    %4669 = vmatmul.bf16.gmra.mxu0 %v4306
    %v4670 = vpop.f32.mrf.mxu0
    %v4671 = vadd.f32 %v4622, %v4670
    %v4672 = vpop.f32.mrf.mxu0
    %v4673 = vadd.f32 %v4624, %v4672
    %4674 = vmatmul.bf16.gmra.mxu0 %v4308
    %v4675 = vpop.f32.mrf.mxu0
    %v4676 = vadd.f32 %v4627, %v4675
    %v4677 = vpop.f32.mrf.mxu0
    %v4678 = vadd.f32 %v4629, %v4677
    %4679 = vmatmul.bf16.gmra.mxu0 %v4310
    %v4680 = vpop.f32.mrf.mxu0
    %v4681 = vadd.f32 %v4632, %v4680
    %v4682 = vpop.f32.mrf.mxu0
    %v4683 = vadd.f32 %v4634, %v4682
    %4684 = vmatmul.bf16.gmra.mxu0 %v4312
    %v4685 = vpop.f32.mrf.mxu0
    %v4686 = vadd.f32 %v4637, %v4685
    %v4687 = vpop.f32.mrf.mxu0
    %v4688 = vadd.f32 %v4639, %v4687
    %4689 = vmatmul.bf16.gmra.mxu0 %v4314
    %v4690 = vpop.f32.mrf.mxu0
    %v4691 = vadd.f32 %v4642, %v4690
    %v4692 = vpop.f32.mrf.mxu0
    %v4693 = vadd.f32 %v4644, %v4692
    %4694 = vmatmul.bf16.gmra.mxu0 %v4316
    %v4695 = vpop.f32.mrf.mxu0
    %v4696 = vadd.f32 %v4647, %v4695
    %v4697 = vpop.f32.mrf.mxu0
    %v4698 = vadd.f32 %v4649, %v4697
    %4699 = vmatmul.bf16.gmra.mxu0 %v4318
    %v4700 = vpop.f32.mrf.mxu0
    %v4701 = vadd.f32 %v4652, %v4700
    %v4702 = vpop.f32.mrf.mxu0
    %v4703 = vadd.f32 %v4654, %v4702
    %4704 = vmatmul.bf16.gmra.mxu0 %v4320
    %v4705 = vpop.f32.mrf.mxu0
    %v4706 = vadd.f32 %v4657, %v4705
    %v4707 = vpop.f32.mrf.mxu0
    %v4708 = vadd.f32 %v4659, %v4707
    %4709 = vdwg.mxu0
    %s4710 = scalar_lea.vmem [#allocation16], 2
    %v4711 = vld [vmem:[%s4710] sm:$0x3]
    %v4712 = vpack.c.bf16 %v4671, %v4573
    %v4713 = vpack.c.bf16 %v4673, %v4575
    %v4714 = vpack.c.bf16 %v4676, %v4578
    %v4715 = vpack.c.bf16 %v4678, %v4580
    %v4716 = vpack.c.bf16 %v4681, %v4583
    %v4717 = vpack.c.bf16 %v4683, %v4585
    %v4718 = vpack.c.bf16 %v4686, %v4588
    %v4719 = vpack.c.bf16 %v4688, %v4590
    %v4720 = vpack.c.bf16 %v4691, %v4593
    %v4721 = vpack.c.bf16 %v4693, %v4595
    %v4722 = vpack.c.bf16 %v4696, %v4598
    %v4723 = vpack.c.bf16 %v4698, %v4600
    %v4724 = vpack.c.bf16 %v4701, %v4603
    %v4725 = vpack.c.bf16 %v4703, %v4605
    %v4726 = vpack.c.bf16 %v4706, %v4608
    %v4727 = vpack.c.bf16 %v4708, %v4610
    %v4729 = vperm.slane %v4711, 0
    %v4730 = vperm.slane %v4711, 1
    %v4733 = vpack.c.bf16 %v4730, %v4729
    %v4735 = vunpack.c.l.b16 %v4733
    %v4736 = vunpack.c.h.b16 %v4733
    %v4737 = vpack.c.b16 %v4735, %v4735
    %v4738 = vpack.c.b16 %v4736, %v4736
    %v4740 = vpack.i.b16 %v4737, %v4737
    %v4742 = vperm.slane %v4740, 0
    %v4744 = vpack.i.b16 %v4738, %v4738
    %v4746 = vperm.slane %v4744, 0
    %v4747 = vunpack.c.l.bf16 %v4712
    %v4748 = vunpack.c.h.bf16 %v4712
    %v4749 = vunpack.c.l.bf16 %v4713
    %v4750 = vunpack.c.h.bf16 %v4713
    %v4751 = vunpack.c.l.bf16 %v4714
    %v4752 = vunpack.c.h.bf16 %v4714
    %v4753 = vunpack.c.l.bf16 %v4715
    %v4754 = vunpack.c.h.bf16 %v4715
    %v4755 = vunpack.c.l.bf16 %v4716
    %v4756 = vunpack.c.h.bf16 %v4716
    %v4757 = vunpack.c.l.bf16 %v4717
    %v4758 = vunpack.c.h.bf16 %v4717
    %v4759 = vunpack.c.l.bf16 %v4718
    %v4760 = vunpack.c.h.bf16 %v4718
    %v4761 = vunpack.c.l.bf16 %v4719
    %v4762 = vunpack.c.h.bf16 %v4719
    %v4763 = vunpack.c.l.bf16 %v4720
    %v4764 = vunpack.c.h.bf16 %v4720
    %v4765 = vunpack.c.l.bf16 %v4721
    %v4766 = vunpack.c.h.bf16 %v4721
    %v4767 = vunpack.c.l.bf16 %v4722
    %v4768 = vunpack.c.h.bf16 %v4722
    %v4769 = vunpack.c.l.bf16 %v4723
    %v4770 = vunpack.c.h.bf16 %v4723
    %v4771 = vunpack.c.l.bf16 %v4724
    %v4772 = vunpack.c.h.bf16 %v4724
    %v4773 = vunpack.c.l.bf16 %v4725
    %v4774 = vunpack.c.h.bf16 %v4725
    %v4775 = vunpack.c.l.bf16 %v4726
    %v4776 = vunpack.c.h.bf16 %v4726
    %v4777 = vunpack.c.l.bf16 %v4727
    %v4778 = vunpack.c.h.bf16 %v4727
    %v4779 = vunpack.c.l.bf16 %v4742
    %v4780 = vunpack.c.l.bf16 %v4746
    %v4781 = vadd.f32 %v4747, %v4779
    %v4782 = vadd.f32 %v4748, %v4780
    %v4783 = vadd.f32 %v4749, %v4779
    %v4784 = vadd.f32 %v4750, %v4780
    %v4785 = vadd.f32 %v4751, %v4779
    %v4786 = vadd.f32 %v4752, %v4780
    %v4787 = vadd.f32 %v4753, %v4779
    %v4788 = vadd.f32 %v4754, %v4780
    %v4789 = vadd.f32 %v4755, %v4779
    %v4790 = vadd.f32 %v4756, %v4780
    %v4791 = vadd.f32 %v4757, %v4779
    %v4792 = vadd.f32 %v4758, %v4780
    %v4793 = vadd.f32 %v4759, %v4779
    %v4794 = vadd.f32 %v4760, %v4780
    %v4795 = vadd.f32 %v4761, %v4779
    %v4796 = vadd.f32 %v4762, %v4780
    %v4797 = vadd.f32 %v4763, %v4779
    %v4798 = vadd.f32 %v4764, %v4780
    %v4799 = vadd.f32 %v4765, %v4779
    %v4800 = vadd.f32 %v4766, %v4780
    %v4801 = vadd.f32 %v4767, %v4779
    %v4802 = vadd.f32 %v4768, %v4780
    %v4803 = vadd.f32 %v4769, %v4779
    %v4804 = vadd.f32 %v4770, %v4780
    %v4805 = vadd.f32 %v4771, %v4779
    %v4806 = vadd.f32 %v4772, %v4780
    %v4807 = vadd.f32 %v4773, %v4779
    %v4808 = vadd.f32 %v4774, %v4780
    %v4809 = vadd.f32 %v4775, %v4779
    %v4810 = vadd.f32 %v4776, %v4780
    %v4811 = vadd.f32 %v4777, %v4779
    %v4812 = vadd.f32 %v4778, %v4780
    %v4813 = vpack.c.bf16 %v4782, %v4781
    %v4814 = vpack.c.bf16 %v4784, %v4783
    %v4815 = vpack.c.bf16 %v4786, %v4785
    %v4816 = vpack.c.bf16 %v4788, %v4787
    %v4817 = vpack.c.bf16 %v4790, %v4789
    %v4818 = vpack.c.bf16 %v4792, %v4791
    %v4819 = vpack.c.bf16 %v4794, %v4793
    %v4820 = vpack.c.bf16 %v4796, %v4795
    %v4821 = vpack.c.bf16 %v4798, %v4797
    %v4822 = vpack.c.bf16 %v4800, %v4799
    %v4823 = vpack.c.bf16 %v4802, %v4801
    %v4824 = vpack.c.bf16 %v4804, %v4803
    %v4825 = vpack.c.bf16 %v4806, %v4805
    %v4826 = vpack.c.bf16 %v4808, %v4807
    %v4827 = vpack.c.bf16 %v4810, %v4809
    %v4828 = vpack.c.bf16 %v4812, %v4811
    %v4829 = vunpack.c.l.bf16 %v4813
    %v4830 = vunpack.c.h.bf16 %v4813
    %v4831 = vunpack.c.l.bf16 %v4814
    %v4832 = vunpack.c.h.bf16 %v4814
    %v4833 = vunpack.c.l.bf16 %v4815
    %v4834 = vunpack.c.h.bf16 %v4815
    %v4835 = vunpack.c.l.bf16 %v4816
    %v4836 = vunpack.c.h.bf16 %v4816
    %v4837 = vunpack.c.l.bf16 %v4817
    %v4838 = vunpack.c.h.bf16 %v4817
    %v4839 = vunpack.c.l.bf16 %v4818
    %v4840 = vunpack.c.h.bf16 %v4818
    %v4841 = vunpack.c.l.bf16 %v4819
    %v4842 = vunpack.c.h.bf16 %v4819
    %v4843 = vunpack.c.l.bf16 %v4820
    %v4844 = vunpack.c.h.bf16 %v4820
    %v4845 = vunpack.c.l.bf16 %v4821
    %v4846 = vunpack.c.h.bf16 %v4821
    %v4847 = vunpack.c.l.bf16 %v4822
    %v4848 = vunpack.c.h.bf16 %v4822
    %v4849 = vunpack.c.l.bf16 %v4823
    %v4850 = vunpack.c.h.bf16 %v4823
    %v4851 = vunpack.c.l.bf16 %v4824
    %v4852 = vunpack.c.h.bf16 %v4824
    %v4853 = vunpack.c.l.bf16 %v4825
    %v4854 = vunpack.c.h.bf16 %v4825
    %v4855 = vunpack.c.l.bf16 %v4826
    %v4856 = vunpack.c.h.bf16 %v4826
    %v4857 = vunpack.c.l.bf16 %v4827
    %v4858 = vunpack.c.h.bf16 %v4827
    %v4859 = vunpack.c.l.bf16 %v4828
    %v4860 = vunpack.c.h.bf16 %v4828
    %v4861 = vmax.f32 %v4829, 0.0
    %v4862 = vmax.f32 %v4830, 0.0
    %v4863 = vmax.f32 %v4831, 0.0
    %v4864 = vmax.f32 %v4832, 0.0
    %v4865 = vmax.f32 %v4833, 0.0
    %v4866 = vmax.f32 %v4834, 0.0
    %v4867 = vmax.f32 %v4835, 0.0
    %v4868 = vmax.f32 %v4836, 0.0
    %v4869 = vmax.f32 %v4837, 0.0
    %v4870 = vmax.f32 %v4838, 0.0
    %v4871 = vmax.f32 %v4839, 0.0
    %v4872 = vmax.f32 %v4840, 0.0
    %v4873 = vmax.f32 %v4841, 0.0
    %v4874 = vmax.f32 %v4842, 0.0
    %v4875 = vmax.f32 %v4843, 0.0
    %v4876 = vmax.f32 %v4844, 0.0
    %v4877 = vmax.f32 %v4845, 0.0
    %v4878 = vmax.f32 %v4846, 0.0
    %v4879 = vmax.f32 %v4847, 0.0
    %v4880 = vmax.f32 %v4848, 0.0
    %v4881 = vmax.f32 %v4849, 0.0
    %v4882 = vmax.f32 %v4850, 0.0
    %v4883 = vmax.f32 %v4851, 0.0
    %v4884 = vmax.f32 %v4852, 0.0
    %v4885 = vmax.f32 %v4853, 0.0
    %v4886 = vmax.f32 %v4854, 0.0
    %v4887 = vmax.f32 %v4855, 0.0
    %v4888 = vmax.f32 %v4856, 0.0
    %v4889 = vmax.f32 %v4857, 0.0
    %v4890 = vmax.f32 %v4858, 0.0
    %v4891 = vmax.f32 %v4859, 0.0
    %v4892 = vmax.f32 %v4860, 0.0
    %v4893 = vpack.c.bf16 %v4863, %v4861
    %v4894 = vpack.c.bf16 %v4864, %v4862
    %v4895 = vpack.c.bf16 %v4867, %v4865
    %v4896 = vpack.c.bf16 %v4868, %v4866
    %v4897 = vpack.c.bf16 %v4871, %v4869
    %v4898 = vpack.c.bf16 %v4872, %v4870
    %v4899 = vpack.c.bf16 %v4875, %v4873
    %v4900 = vpack.c.bf16 %v4876, %v4874
    %v4901 = vpack.c.bf16 %v4879, %v4877
    %v4902 = vpack.c.bf16 %v4880, %v4878
    %v4903 = vpack.c.bf16 %v4883, %v4881
    %v4904 = vpack.c.bf16 %v4884, %v4882
    %v4905 = vpack.c.bf16 %v4887, %v4885
    %v4906 = vpack.c.bf16 %v4888, %v4886
    %v4907 = vpack.c.bf16 %v4891, %v4889
    %v4908 = vpack.c.bf16 %v4892, %v4890
    %v4909 = vld [vmem:[%s16] sm:$0xf]
    %v4910 = vld [vmem:[%s16 + $0x4] sm:$0xf]
    %v4911 = vld [vmem:[%s16 + $0x8] sm:$0xf]
    %v4912 = vld [vmem:[%s16 + $0xc] sm:$0xf]
    %v4913 = vld [vmem:[%s16 + $0x10] sm:$0xf]
    %v4914 = vld [vmem:[%s16 + $0x14] sm:$0xf]
    %v4915 = vld [vmem:[%s16 + $0x18] sm:$0xf]
    %v4916 = vld [vmem:[%s16 + $0x1c] sm:$0xf]
    %v4917 = vld [vmem:[%s16 + $0x20] sm:$0xf]
    %v4918 = vld [vmem:[%s16 + $0x24] sm:$0xf]
    %v4919 = vld [vmem:[%s16 + $0x28] sm:$0xf]
    %v4920 = vld [vmem:[%s16 + $0x2c] sm:$0xf]
    %v4921 = vld [vmem:[%s16 + $0x30] sm:$0xf]
    %v4922 = vld [vmem:[%s16 + $0x34] sm:$0xf]
    %v4923 = vld [vmem:[%s16 + $0x38] sm:$0xf]
    %v4924 = vld [vmem:[%s16 + $0x3c] sm:$0xf]
    %v4925 = vld [vmem:[%s16 + $0x40] sm:$0xf]
    %v4926 = vld [vmem:[%s16 + $0x44] sm:$0xf]
    %v4927 = vld [vmem:[%s16 + $0x48] sm:$0xf]
    %v4928 = vld [vmem:[%s16 + $0x4c] sm:$0xf]
    %v4929 = vld [vmem:[%s16 + $0x50] sm:$0xf]
    %v4930 = vld [vmem:[%s16 + $0x54] sm:$0xf]
    %v4931 = vld [vmem:[%s16 + $0x58] sm:$0xf]
    %v4932 = vld [vmem:[%s16 + $0x5c] sm:$0xf]
    %v4933 = vld [vmem:[%s16 + $0x60] sm:$0xf]
    %v4934 = vld [vmem:[%s16 + $0x64] sm:$0xf]
    %v4935 = vld [vmem:[%s16 + $0x68] sm:$0xf]
    %v4936 = vld [vmem:[%s16 + $0x6c] sm:$0xf]
    %v4937 = vld [vmem:[%s16 + $0x70] sm:$0xf]
    %v4938 = vld [vmem:[%s16 + $0x74] sm:$0xf]
    %v4939 = vld [vmem:[%s16 + $0x78] sm:$0xf]
    %v4940 = vld [vmem:[%s16 + $0x7c] sm:$0xf]
    %v4941 = vld [vmem:[#allocation20] sm:$0x1]
    %v4943 = vperm.slane %v4941, 0
    %v4977 = vunpack.c.l.b16 %v4909
    %v4978 = vunpack.c.l.b16 %v4910
    %v4979 = vunpack.c.l.b16 %v4911
    %v4980 = vunpack.c.l.b16 %v4912
    %v4981 = vunpack.c.l.b16 %v4913
    %v4982 = vunpack.c.l.b16 %v4914
    %v4983 = vunpack.c.l.b16 %v4915
    %v4984 = vunpack.c.l.b16 %v4916
    %v4985 = vunpack.c.l.b16 %v4917
    %v4986 = vunpack.c.l.b16 %v4918
    %v4987 = vunpack.c.l.b16 %v4919
    %v4988 = vunpack.c.l.b16 %v4920
    %v4989 = vunpack.c.l.b16 %v4921
    %v4990 = vunpack.c.l.b16 %v4922
    %v4991 = vunpack.c.l.b16 %v4923
    %v4992 = vunpack.c.l.b16 %v4924
    %v4993 = vunpack.c.l.b16 %v4925
    %v4994 = vunpack.c.l.b16 %v4926
    %v4995 = vunpack.c.l.b16 %v4927
    %v4996 = vunpack.c.l.b16 %v4928
    %v4997 = vunpack.c.l.b16 %v4929
    %v4998 = vunpack.c.l.b16 %v4930
    %v4999 = vunpack.c.l.b16 %v4931
    %v5000 = vunpack.c.l.b16 %v4932
    %v5001 = vunpack.c.l.b16 %v4933
    %v5002 = vunpack.c.l.b16 %v4934
    %v5003 = vunpack.c.l.b16 %v4935
    %v5004 = vunpack.c.l.b16 %v4936
    %v5005 = vunpack.c.l.b16 %v4937
    %v5006 = vunpack.c.l.b16 %v4938
    %v5007 = vunpack.c.l.b16 %v4939
    %v5008 = vunpack.c.l.b16 %v4940
    %v5009 = vpack.c.b16 %v4978, %v4977
    %v5010 = vpack.c.b16 %v4980, %v4979
    %v5011 = vpack.c.b16 %v4982, %v4981
    %v5012 = vpack.c.b16 %v4984, %v4983
    %v5013 = vpack.c.b16 %v4986, %v4985
    %v5014 = vpack.c.b16 %v4988, %v4987
    %v5015 = vpack.c.b16 %v4990, %v4989
    %v5016 = vpack.c.b16 %v4992, %v4991
    %v5017 = vpack.c.b16 %v4994, %v4993
    %v5018 = vpack.c.b16 %v4996, %v4995
    %v5019 = vpack.c.b16 %v4998, %v4997
    %v5020 = vpack.c.b16 %v5000, %v4999
    %v5021 = vpack.c.b16 %v5002, %v5001
    %v5022 = vpack.c.b16 %v5004, %v5003
    %v5023 = vpack.c.b16 %v5006, %v5005
    %v5024 = vpack.c.b16 %v5008, %v5007
    %5041 = vmatpush.bf16.msra.mxu0 %v5016
    %5042 = vmatpush.bf16.msra.mxu0 %v5015
    %5043 = vmatpush.bf16.msra.mxu0 %v5014
    %5044 = vmatpush.bf16.msra.mxu0 %v5013
    %5045 = vmatpush.bf16.msra.mxu0 %v5012
    %5046 = vmatpush.bf16.msra.mxu0 %v5011
    %5047 = vmatpush.bf16.msra.mxu0 %v5010
    %5048 = vmatpush.bf16.msra.mxu0 %v5009
    %5049 = vmatmul.bf16.gmra.mxu0 %v4893
    %v5050 = vpop.f32.mrf.mxu0
    %v5051 = vadd.f32 %v4943, %v5050
    %v5052 = vpop.f32.mrf.mxu0
    %v5053 = vadd.f32 %v4943, %v5052
    %5054 = vmatmul.bf16.gmra.mxu0 %v4895
    %v5055 = vpop.f32.mrf.mxu0
    %v5056 = vadd.f32 %v4943, %v5055
    %v5057 = vpop.f32.mrf.mxu0
    %v5058 = vadd.f32 %v4943, %v5057
    %5059 = vmatmul.bf16.gmra.mxu0 %v4897
    %v5060 = vpop.f32.mrf.mxu0
    %v5061 = vadd.f32 %v4943, %v5060
    %v5062 = vpop.f32.mrf.mxu0
    %v5063 = vadd.f32 %v4943, %v5062
    %5064 = vmatmul.bf16.gmra.mxu0 %v4899
    %v5065 = vpop.f32.mrf.mxu0
    %v5066 = vadd.f32 %v4943, %v5065
    %v5067 = vpop.f32.mrf.mxu0
    %v5068 = vadd.f32 %v4943, %v5067
    %5069 = vmatmul.bf16.gmra.mxu0 %v4901
    %v5070 = vpop.f32.mrf.mxu0
    %v5071 = vadd.f32 %v4943, %v5070
    %v5072 = vpop.f32.mrf.mxu0
    %v5073 = vadd.f32 %v4943, %v5072
    %5074 = vmatmul.bf16.gmra.mxu0 %v4903
    %v5075 = vpop.f32.mrf.mxu0
    %v5076 = vadd.f32 %v4943, %v5075
    %v5077 = vpop.f32.mrf.mxu0
    %v5078 = vadd.f32 %v4943, %v5077
    %5079 = vmatmul.bf16.gmra.mxu0 %v4905
    %v5080 = vpop.f32.mrf.mxu0
    %v5081 = vadd.f32 %v4943, %v5080
    %v5082 = vpop.f32.mrf.mxu0
    %v5083 = vadd.f32 %v4943, %v5082
    %5084 = vmatmul.bf16.gmra.mxu0 %v4907
    %v5085 = vpop.f32.mrf.mxu0
    %v5086 = vadd.f32 %v4943, %v5085
    %v5087 = vpop.f32.mrf.mxu0
    %v5088 = vadd.f32 %v4943, %v5087
    %5089 = vdwg.mxu0
    %5090 = vmatpush.bf16.msra.mxu0 %v5024
    %5091 = vmatpush.bf16.msra.mxu0 %v5023
    %5092 = vmatpush.bf16.msra.mxu0 %v5022
    %5093 = vmatpush.bf16.msra.mxu0 %v5021
    %5094 = vmatpush.bf16.msra.mxu0 %v5020
    %5095 = vmatpush.bf16.msra.mxu0 %v5019
    %5096 = vmatpush.bf16.msra.mxu0 %v5018
    %5097 = vmatpush.bf16.msra.mxu0 %v5017
    %5098 = vmatmul.bf16.gmra.mxu0 %v4894
    %v5099 = vpop.f32.mrf.mxu0
    %v5100 = vadd.f32 %v5051, %v5099
    %v5101 = vpop.f32.mrf.mxu0
    %v5102 = vadd.f32 %v5053, %v5101
    %5103 = vmatmul.bf16.gmra.mxu0 %v4896
    %v5104 = vpop.f32.mrf.mxu0
    %v5105 = vadd.f32 %v5056, %v5104
    %v5106 = vpop.f32.mrf.mxu0
    %v5107 = vadd.f32 %v5058, %v5106
    %5108 = vmatmul.bf16.gmra.mxu0 %v4898
    %v5109 = vpop.f32.mrf.mxu0
    %v5110 = vadd.f32 %v5061, %v5109
    %v5111 = vpop.f32.mrf.mxu0
    %v5112 = vadd.f32 %v5063, %v5111
    %5113 = vmatmul.bf16.gmra.mxu0 %v4900
    %v5114 = vpop.f32.mrf.mxu0
    %v5115 = vadd.f32 %v5066, %v5114
    %v5116 = vpop.f32.mrf.mxu0
    %v5117 = vadd.f32 %v5068, %v5116
    %5118 = vmatmul.bf16.gmra.mxu0 %v4902
    %v5119 = vpop.f32.mrf.mxu0
    %v5120 = vadd.f32 %v5071, %v5119
    %v5121 = vpop.f32.mrf.mxu0
    %v5122 = vadd.f32 %v5073, %v5121
    %5123 = vmatmul.bf16.gmra.mxu0 %v4904
    %v5124 = vpop.f32.mrf.mxu0
    %v5125 = vadd.f32 %v5076, %v5124
    %v5126 = vpop.f32.mrf.mxu0
    %v5127 = vadd.f32 %v5078, %v5126
    %5128 = vmatmul.bf16.gmra.mxu0 %v4906
    %v5129 = vpop.f32.mrf.mxu0
    %v5130 = vadd.f32 %v5081, %v5129
    %v5131 = vpop.f32.mrf.mxu0
    %v5132 = vadd.f32 %v5083, %v5131
    %5133 = vmatmul.bf16.gmra.mxu0 %v4908
    %v5134 = vpop.f32.mrf.mxu0
    %v5135 = vadd.f32 %v5086, %v5134
    %v5136 = vpop.f32.mrf.mxu0
    %v5137 = vadd.f32 %v5088, %v5136
    %5138 = vdwg.mxu0
    %v5139 = vld [vmem:[#allocation17] sm:$0xff]
    %v5140 = vld [vmem:[#allocation17 + $0x8] sm:$0xff]
    %v5141 = vld [vmem:[#allocation17 + $0x10] sm:$0xff]
    %v5142 = vld [vmem:[#allocation17 + $0x18] sm:$0xff]
    %v5143 = vld [vmem:[#allocation17 + $0x20] sm:$0xff]
    %v5144 = vld [vmem:[#allocation17 + $0x28] sm:$0xff]
    %v5145 = vld [vmem:[#allocation17 + $0x30] sm:$0xff]
    %v5146 = vld [vmem:[#allocation17 + $0x38] sm:$0xff]
    %v5147 = vld [vmem:[#allocation17 + $0x40] sm:$0xff]
    %v5148 = vld [vmem:[#allocation17 + $0x48] sm:$0xff]
    %v5149 = vld [vmem:[#allocation17 + $0x50] sm:$0xff]
    %v5150 = vld [vmem:[#allocation17 + $0x58] sm:$0xff]
    %v5151 = vld [vmem:[#allocation17 + $0x60] sm:$0xff]
    %v5152 = vld [vmem:[#allocation17 + $0x68] sm:$0xff]
    %v5153 = vld [vmem:[#allocation17 + $0x70] sm:$0xff]
    %v5154 = vld [vmem:[#allocation17 + $0x78] sm:$0xff]
    %v5155 = vld [vmem:[#allocation17 + $0x80] sm:$0xff]
    %v5156 = vld [vmem:[#allocation17 + $0x88] sm:$0xff]
    %v5157 = vld [vmem:[#allocation17 + $0x90] sm:$0xff]
    %v5158 = vld [vmem:[#allocation17 + $0x98] sm:$0xff]
    %v5159 = vld [vmem:[#allocation17 + $0xa0] sm:$0xff]
    %v5160 = vld [vmem:[#allocation17 + $0xa8] sm:$0xff]
    %v5161 = vld [vmem:[#allocation17 + $0xb0] sm:$0xff]
    %v5162 = vld [vmem:[#allocation17 + $0xb8] sm:$0xff]
    %v5163 = vld [vmem:[#allocation17 + $0xc0] sm:$0xff]
    %v5164 = vld [vmem:[#allocation17 + $0xc8] sm:$0xff]
    %v5165 = vld [vmem:[#allocation17 + $0xd0] sm:$0xff]
    %v5166 = vld [vmem:[#allocation17 + $0xd8] sm:$0xff]
    %v5167 = vld [vmem:[#allocation17 + $0xe0] sm:$0xff]
    %v5168 = vld [vmem:[#allocation17 + $0xe8] sm:$0xff]
    %v5169 = vld [vmem:[#allocation17 + $0xf0] sm:$0xff]
    %v5170 = vld [vmem:[#allocation17 + $0xf8] sm:$0xff]
    %v5171 = vld [vmem:[#allocation19] sm:$0x3]
    %v5173 = vperm.slane %v5171, 0
    %v5174 = vperm.slane %v5171, 1
    %v5209 = vunpack.c.l.b16 %v5139
    %v5210 = vunpack.c.h.b16 %v5139
    %v5211 = vunpack.c.l.b16 %v5140
    %v5212 = vunpack.c.h.b16 %v5140
    %v5213 = vunpack.c.l.b16 %v5141
    %v5214 = vunpack.c.h.b16 %v5141
    %v5215 = vunpack.c.l.b16 %v5142
    %v5216 = vunpack.c.h.b16 %v5142
    %v5217 = vunpack.c.l.b16 %v5143
    %v5218 = vunpack.c.h.b16 %v5143
    %v5219 = vunpack.c.l.b16 %v5144
    %v5220 = vunpack.c.h.b16 %v5144
    %v5221 = vunpack.c.l.b16 %v5145
    %v5222 = vunpack.c.h.b16 %v5145
    %v5223 = vunpack.c.l.b16 %v5146
    %v5224 = vunpack.c.h.b16 %v5146
    %v5225 = vunpack.c.l.b16 %v5147
    %v5226 = vunpack.c.h.b16 %v5147
    %v5227 = vunpack.c.l.b16 %v5148
    %v5228 = vunpack.c.h.b16 %v5148
    %v5229 = vunpack.c.l.b16 %v5149
    %v5230 = vunpack.c.h.b16 %v5149
    %v5231 = vunpack.c.l.b16 %v5150
    %v5232 = vunpack.c.h.b16 %v5150
    %v5233 = vunpack.c.l.b16 %v5151
    %v5234 = vunpack.c.h.b16 %v5151
    %v5235 = vunpack.c.l.b16 %v5152
    %v5236 = vunpack.c.h.b16 %v5152
    %v5237 = vunpack.c.l.b16 %v5153
    %v5238 = vunpack.c.h.b16 %v5153
    %v5239 = vunpack.c.l.b16 %v5154
    %v5240 = vunpack.c.h.b16 %v5154
    %v5241 = vunpack.c.l.b16 %v5155
    %v5242 = vunpack.c.h.b16 %v5155
    %v5243 = vunpack.c.l.b16 %v5156
    %v5244 = vunpack.c.h.b16 %v5156
    %v5245 = vunpack.c.l.b16 %v5157
    %v5246 = vunpack.c.h.b16 %v5157
    %v5247 = vunpack.c.l.b16 %v5158
    %v5248 = vunpack.c.h.b16 %v5158
    %v5249 = vunpack.c.l.b16 %v5159
    %v5250 = vunpack.c.h.b16 %v5159
    %v5251 = vunpack.c.l.b16 %v5160
    %v5252 = vunpack.c.h.b16 %v5160
    %v5253 = vunpack.c.l.b16 %v5161
    %v5254 = vunpack.c.h.b16 %v5161
    %v5255 = vunpack.c.l.b16 %v5162
    %v5256 = vunpack.c.h.b16 %v5162
    %v5257 = vunpack.c.l.b16 %v5163
    %v5258 = vunpack.c.h.b16 %v5163
    %v5259 = vunpack.c.l.b16 %v5164
    %v5260 = vunpack.c.h.b16 %v5164
    %v5261 = vunpack.c.l.b16 %v5165
    %v5262 = vunpack.c.h.b16 %v5165
    %v5263 = vunpack.c.l.b16 %v5166
    %v5264 = vunpack.c.h.b16 %v5166
    %v5265 = vunpack.c.l.b16 %v5167
    %v5266 = vunpack.c.h.b16 %v5167
    %v5267 = vunpack.c.l.b16 %v5168
    %v5268 = vunpack.c.h.b16 %v5168
    %v5269 = vunpack.c.l.b16 %v5169
    %v5270 = vunpack.c.h.b16 %v5169
    %v5271 = vunpack.c.l.b16 %v5170
    %v5272 = vunpack.c.h.b16 %v5170
    %v5273 = vpack.c.b16 %v5211, %v5209
    %v5274 = vpack.c.b16 %v5212, %v5210
    %v5275 = vpack.c.b16 %v5215, %v5213
    %v5276 = vpack.c.b16 %v5216, %v5214
    %v5277 = vpack.c.b16 %v5219, %v5217
    %v5278 = vpack.c.b16 %v5220, %v5218
    %v5279 = vpack.c.b16 %v5223, %v5221
    %v5280 = vpack.c.b16 %v5224, %v5222
    %v5281 = vpack.c.b16 %v5227, %v5225
    %v5282 = vpack.c.b16 %v5228, %v5226
    %v5283 = vpack.c.b16 %v5231, %v5229
    %v5284 = vpack.c.b16 %v5232, %v5230
    %v5285 = vpack.c.b16 %v5235, %v5233
    %v5286 = vpack.c.b16 %v5236, %v5234
    %v5287 = vpack.c.b16 %v5239, %v5237
    %v5288 = vpack.c.b16 %v5240, %v5238
    %v5289 = vpack.c.b16 %v5243, %v5241
    %v5290 = vpack.c.b16 %v5244, %v5242
    %v5291 = vpack.c.b16 %v5247, %v5245
    %v5292 = vpack.c.b16 %v5248, %v5246
    %v5293 = vpack.c.b16 %v5251, %v5249
    %v5294 = vpack.c.b16 %v5252, %v5250
    %v5295 = vpack.c.b16 %v5255, %v5253
    %v5296 = vpack.c.b16 %v5256, %v5254
    %v5297 = vpack.c.b16 %v5259, %v5257
    %v5298 = vpack.c.b16 %v5260, %v5258
    %v5299 = vpack.c.b16 %v5263, %v5261
    %v5300 = vpack.c.b16 %v5264, %v5262
    %v5301 = vpack.c.b16 %v5267, %v5265
    %v5302 = vpack.c.b16 %v5268, %v5266
    %v5303 = vpack.c.b16 %v5271, %v5269
    %v5304 = vpack.c.b16 %v5272, %v5270
    %5337 = vmatpush.bf16.msra.mxu0 %v5287
    %5338 = vmatpush.bf16.msra.mxu0 %v5285
    %5339 = vmatpush.bf16.msra.mxu0 %v5283
    %5340 = vmatpush.bf16.msra.mxu0 %v5281
    %5341 = vmatpush.bf16.msra.mxu0 %v5279
    %5342 = vmatpush.bf16.msra.mxu0 %v5277
    %5343 = vmatpush.bf16.msra.mxu0 %v5275
    %5344 = vmatpush.bf16.msra.mxu0 %v5273
    %5345 = vmatmul.bf16.gmra.mxu0 %v4893
    %v5346 = vpop.f32.mrf.mxu0
    %v5347 = vadd.f32 %v5173, %v5346
    %v5348 = vpop.f32.mrf.mxu0
    %v5349 = vadd.f32 %v5173, %v5348
    %5350 = vmatmul.bf16.gmra.mxu0 %v4895
    %v5351 = vpop.f32.mrf.mxu0
    %v5352 = vadd.f32 %v5173, %v5351
    %v5353 = vpop.f32.mrf.mxu0
    %v5354 = vadd.f32 %v5173, %v5353
    %5355 = vmatmul.bf16.gmra.mxu0 %v4897
    %v5356 = vpop.f32.mrf.mxu0
    %v5357 = vadd.f32 %v5173, %v5356
    %v5358 = vpop.f32.mrf.mxu0
    %v5359 = vadd.f32 %v5173, %v5358
    %5360 = vmatmul.bf16.gmra.mxu0 %v4899
    %v5361 = vpop.f32.mrf.mxu0
    %v5362 = vadd.f32 %v5173, %v5361
    %v5363 = vpop.f32.mrf.mxu0
    %v5364 = vadd.f32 %v5173, %v5363
    %5365 = vmatmul.bf16.gmra.mxu0 %v4901
    %v5366 = vpop.f32.mrf.mxu0
    %v5367 = vadd.f32 %v5173, %v5366
    %v5368 = vpop.f32.mrf.mxu0
    %v5369 = vadd.f32 %v5173, %v5368
    %5370 = vmatmul.bf16.gmra.mxu0 %v4903
    %v5371 = vpop.f32.mrf.mxu0
    %v5372 = vadd.f32 %v5173, %v5371
    %v5373 = vpop.f32.mrf.mxu0
    %v5374 = vadd.f32 %v5173, %v5373
    %5375 = vmatmul.bf16.gmra.mxu0 %v4905
    %v5376 = vpop.f32.mrf.mxu0
    %v5377 = vadd.f32 %v5173, %v5376
    %v5378 = vpop.f32.mrf.mxu0
    %v5379 = vadd.f32 %v5173, %v5378
    %5380 = vmatmul.bf16.gmra.mxu0 %v4907
    %v5381 = vpop.f32.mrf.mxu0
    %v5382 = vadd.f32 %v5173, %v5381
    %v5383 = vpop.f32.mrf.mxu0
    %v5384 = vadd.f32 %v5173, %v5383
    %5385 = vdwg.mxu0
    %5386 = vmatpush.bf16.msra.mxu0 %v5303
    %5387 = vmatpush.bf16.msra.mxu0 %v5301
    %5388 = vmatpush.bf16.msra.mxu0 %v5299
    %5389 = vmatpush.bf16.msra.mxu0 %v5297
    %5390 = vmatpush.bf16.msra.mxu0 %v5295
    %5391 = vmatpush.bf16.msra.mxu0 %v5293
    %5392 = vmatpush.bf16.msra.mxu0 %v5291
    %5393 = vmatpush.bf16.msra.mxu0 %v5289
    %5394 = vmatmul.bf16.gmra.mxu0 %v4894
    %v5395 = vpop.f32.mrf.mxu0
    %v5396 = vadd.f32 %v5347, %v5395
    %v5397 = vpop.f32.mrf.mxu0
    %v5398 = vadd.f32 %v5349, %v5397
    %5399 = vmatmul.bf16.gmra.mxu0 %v4896
    %v5400 = vpop.f32.mrf.mxu0
    %v5401 = vadd.f32 %v5352, %v5400
    %v5402 = vpop.f32.mrf.mxu0
    %v5403 = vadd.f32 %v5354, %v5402
    %5404 = vmatmul.bf16.gmra.mxu0 %v4898
    %v5405 = vpop.f32.mrf.mxu0
    %v5406 = vadd.f32 %v5357, %v5405
    %v5407 = vpop.f32.mrf.mxu0
    %v5408 = vadd.f32 %v5359, %v5407
    %5409 = vmatmul.bf16.gmra.mxu0 %v4900
    %v5410 = vpop.f32.mrf.mxu0
    %v5411 = vadd.f32 %v5362, %v5410
    %v5412 = vpop.f32.mrf.mxu0
    %v5413 = vadd.f32 %v5364, %v5412
    %5414 = vmatmul.bf16.gmra.mxu0 %v4902
    %v5415 = vpop.f32.mrf.mxu0
    %v5416 = vadd.f32 %v5367, %v5415
    %v5417 = vpop.f32.mrf.mxu0
    %v5418 = vadd.f32 %v5369, %v5417
    %5419 = vmatmul.bf16.gmra.mxu0 %v4904
    %v5420 = vpop.f32.mrf.mxu0
    %v5421 = vadd.f32 %v5372, %v5420
    %v5422 = vpop.f32.mrf.mxu0
    %v5423 = vadd.f32 %v5374, %v5422
    %5424 = vmatmul.bf16.gmra.mxu0 %v4906
    %v5425 = vpop.f32.mrf.mxu0
    %v5426 = vadd.f32 %v5377, %v5425
    %v5427 = vpop.f32.mrf.mxu0
    %v5428 = vadd.f32 %v5379, %v5427
    %5429 = vmatmul.bf16.gmra.mxu0 %v4908
    %v5430 = vpop.f32.mrf.mxu0
    %v5431 = vadd.f32 %v5382, %v5430
    %v5432 = vpop.f32.mrf.mxu0
    %v5433 = vadd.f32 %v5384, %v5432
    %5434 = vdwg.mxu0
    %5435 = vmatpush.bf16.msra.mxu0 %v5288
    %5436 = vmatpush.bf16.msra.mxu0 %v5286
    %5437 = vmatpush.bf16.msra.mxu0 %v5284
    %5438 = vmatpush.bf16.msra.mxu0 %v5282
    %5439 = vmatpush.bf16.msra.mxu0 %v5280
    %5440 = vmatpush.bf16.msra.mxu0 %v5278
    %5441 = vmatpush.bf16.msra.mxu0 %v5276
    %5442 = vmatpush.bf16.msra.mxu0 %v5274
    %5443 = vmatmul.bf16.gmra.mxu0 %v4893
    %v5444 = vpop.f32.mrf.mxu0
    %v5445 = vadd.f32 %v5174, %v5444
    %v5446 = vpop.f32.mrf.mxu0
    %v5447 = vadd.f32 %v5174, %v5446
    %5448 = vmatmul.bf16.gmra.mxu0 %v4895
    %v5449 = vpop.f32.mrf.mxu0
    %v5450 = vadd.f32 %v5174, %v5449
    %v5451 = vpop.f32.mrf.mxu0
    %v5452 = vadd.f32 %v5174, %v5451
    %5453 = vmatmul.bf16.gmra.mxu0 %v4897
    %v5454 = vpop.f32.mrf.mxu0
    %v5455 = vadd.f32 %v5174, %v5454
    %v5456 = vpop.f32.mrf.mxu0
    %v5457 = vadd.f32 %v5174, %v5456
    %5458 = vmatmul.bf16.gmra.mxu0 %v4899
    %v5459 = vpop.f32.mrf.mxu0
    %v5460 = vadd.f32 %v5174, %v5459
    %v5461 = vpop.f32.mrf.mxu0
    %v5462 = vadd.f32 %v5174, %v5461
    %5463 = vmatmul.bf16.gmra.mxu0 %v4901
    %v5464 = vpop.f32.mrf.mxu0
    %v5465 = vadd.f32 %v5174, %v5464
    %v5466 = vpop.f32.mrf.mxu0
    %v5467 = vadd.f32 %v5174, %v5466
    %5468 = vmatmul.bf16.gmra.mxu0 %v4903
    %v5469 = vpop.f32.mrf.mxu0
    %v5470 = vadd.f32 %v5174, %v5469
    %v5471 = vpop.f32.mrf.mxu0
    %v5472 = vadd.f32 %v5174, %v5471
    %5473 = vmatmul.bf16.gmra.mxu0 %v4905
    %v5474 = vpop.f32.mrf.mxu0
    %v5475 = vadd.f32 %v5174, %v5474
    %v5476 = vpop.f32.mrf.mxu0
    %v5477 = vadd.f32 %v5174, %v5476
    %5478 = vmatmul.bf16.gmra.mxu0 %v4907
    %v5479 = vpop.f32.mrf.mxu0
    %v5480 = vadd.f32 %v5174, %v5479
    %v5481 = vpop.f32.mrf.mxu0
    %v5482 = vadd.f32 %v5174, %v5481
    %5483 = vdwg.mxu0
    %5484 = vmatpush.bf16.msra.mxu0 %v5304
    %5485 = vmatpush.bf16.msra.mxu0 %v5302
    %5486 = vmatpush.bf16.msra.mxu0 %v5300
    %5487 = vmatpush.bf16.msra.mxu0 %v5298
    %5488 = vmatpush.bf16.msra.mxu0 %v5296
    %5489 = vmatpush.bf16.msra.mxu0 %v5294
    %5490 = vmatpush.bf16.msra.mxu0 %v5292
    %5491 = vmatpush.bf16.msra.mxu0 %v5290
    %5492 = vmatmul.bf16.gmra.mxu0 %v4894
    %v5493 = vpop.f32.mrf.mxu0
    %v5494 = vadd.f32 %v5445, %v5493
    %v5495 = vpop.f32.mrf.mxu0
    %v5496 = vadd.f32 %v5447, %v5495
    %5497 = vmatmul.bf16.gmra.mxu0 %v4896
    %v5498 = vpop.f32.mrf.mxu0
    %v5499 = vadd.f32 %v5450, %v5498
    %v5500 = vpop.f32.mrf.mxu0
    %v5501 = vadd.f32 %v5452, %v5500
    %5502 = vmatmul.bf16.gmra.mxu0 %v4898
    %v5503 = vpop.f32.mrf.mxu0
    %v5504 = vadd.f32 %v5455, %v5503
    %v5505 = vpop.f32.mrf.mxu0
    %v5506 = vadd.f32 %v5457, %v5505
    %5507 = vmatmul.bf16.gmra.mxu0 %v4900
    %v5508 = vpop.f32.mrf.mxu0
    %v5509 = vadd.f32 %v5460, %v5508
    %v5510 = vpop.f32.mrf.mxu0
    %v5511 = vadd.f32 %v5462, %v5510
    %5512 = vmatmul.bf16.gmra.mxu0 %v4902
    %v5513 = vpop.f32.mrf.mxu0
    %v5514 = vadd.f32 %v5465, %v5513
    %v5515 = vpop.f32.mrf.mxu0
    %v5516 = vadd.f32 %v5467, %v5515
    %5517 = vmatmul.bf16.gmra.mxu0 %v4904
    %v5518 = vpop.f32.mrf.mxu0
    %v5519 = vadd.f32 %v5470, %v5518
    %v5520 = vpop.f32.mrf.mxu0
    %v5521 = vadd.f32 %v5472, %v5520
    %5522 = vmatmul.bf16.gmra.mxu0 %v4906
    %v5523 = vpop.f32.mrf.mxu0
    %v5524 = vadd.f32 %v5475, %v5523
    %v5525 = vpop.f32.mrf.mxu0
    %v5526 = vadd.f32 %v5477, %v5525
    %5527 = vmatmul.bf16.gmra.mxu0 %v4908
    %v5528 = vpop.f32.mrf.mxu0
    %v5529 = vadd.f32 %v5480, %v5528
    %v5530 = vpop.f32.mrf.mxu0
    %v5531 = vadd.f32 %v5482, %v5530
    %5532 = vdwg.mxu0
    %v5533 = vpack.c.bf16 %v5398, %v5396
    %v5534 = vpack.c.bf16 %v5496, %v5494
    %v5535 = vpack.c.bf16 %v5403, %v5401
    %v5536 = vpack.c.bf16 %v5501, %v5499
    %v5537 = vpack.c.bf16 %v5408, %v5406
    %v5538 = vpack.c.bf16 %v5506, %v5504
    %v5539 = vpack.c.bf16 %v5413, %v5411
    %v5540 = vpack.c.bf16 %v5511, %v5509
    %v5541 = vpack.c.bf16 %v5418, %v5416
    %v5542 = vpack.c.bf16 %v5516, %v5514
    %v5543 = vpack.c.bf16 %v5423, %v5421
    %v5544 = vpack.c.bf16 %v5521, %v5519
    %v5545 = vpack.c.bf16 %v5428, %v5426
    %v5546 = vpack.c.bf16 %v5526, %v5524
    %v5547 = vpack.c.bf16 %v5433, %v5431
    %v5548 = vpack.c.bf16 %v5531, %v5529
    %v5549 = vld [vmem:[#allocation22] sm:$0xf]
    %v5550 = vld [vmem:[#allocation22 + $0x4] sm:$0xf]
    %v5551 = vld [vmem:[#allocation22 + $0x8] sm:$0xf]
    %v5552 = vld [vmem:[#allocation22 + $0xc] sm:$0xf]
    %v5553 = vld [vmem:[#allocation22 + $0x10] sm:$0xf]
    %v5554 = vld [vmem:[#allocation22 + $0x14] sm:$0xf]
    %v5555 = vld [vmem:[#allocation22 + $0x18] sm:$0xf]
    %v5556 = vld [vmem:[#allocation22 + $0x1c] sm:$0xf]
    %v5557 = vld [vmem:[#allocation22 + $0x20] sm:$0xf]
    %v5558 = vld [vmem:[#allocation22 + $0x24] sm:$0xf]
    %v5559 = vld [vmem:[#allocation22 + $0x28] sm:$0xf]
    %v5560 = vld [vmem:[#allocation22 + $0x2c] sm:$0xf]
    %v5561 = vld [vmem:[#allocation22 + $0x30] sm:$0xf]
    %v5562 = vld [vmem:[#allocation22 + $0x34] sm:$0xf]
    %v5563 = vld [vmem:[#allocation22 + $0x38] sm:$0xf]
    %v5564 = vld [vmem:[#allocation22 + $0x3c] sm:$0xf]
    %v5565 = vld [vmem:[#allocation22 + $0x40] sm:$0xf]
    %v5566 = vld [vmem:[#allocation22 + $0x44] sm:$0xf]
    %v5567 = vld [vmem:[#allocation22 + $0x48] sm:$0xf]
    %v5568 = vld [vmem:[#allocation22 + $0x4c] sm:$0xf]
    %v5569 = vld [vmem:[#allocation22 + $0x50] sm:$0xf]
    %v5570 = vld [vmem:[#allocation22 + $0x54] sm:$0xf]
    %v5571 = vld [vmem:[#allocation22 + $0x58] sm:$0xf]
    %v5572 = vld [vmem:[#allocation22 + $0x5c] sm:$0xf]
    %v5573 = vld [vmem:[#allocation22 + $0x60] sm:$0xf]
    %v5574 = vld [vmem:[#allocation22 + $0x64] sm:$0xf]
    %v5575 = vld [vmem:[#allocation22 + $0x68] sm:$0xf]
    %v5576 = vld [vmem:[#allocation22 + $0x6c] sm:$0xf]
    %v5577 = vld [vmem:[#allocation22 + $0x70] sm:$0xf]
    %v5578 = vld [vmem:[#allocation22 + $0x74] sm:$0xf]
    %v5579 = vld [vmem:[#allocation22 + $0x78] sm:$0xf]
    %v5580 = vld [vmem:[#allocation22 + $0x7c] sm:$0xf]
    %v5581 = vld [vmem:[#allocation23] sm:$0xf]
    %v5582 = vld [vmem:[#allocation23 + $0x4] sm:$0xf]
    %v5585 = vunpack.c.l.b16 %v5581
    %v5586 = vunpack.c.l.b16 %v5582
    %v5587 = vpack.c.b16 %v5586, %v5585
    %vm5589 = vcmask 130048
    %v5591 = vsel %vm5589, %v324, 0
    %v5594 = vsel %vm5589, %v325, 0
    %v5597 = vsel %vm5589, %v326, 0
    %v5600 = vsel %vm5589, %v327, 0
    %v5603 = vsel %vm5589, %v328, 0
    %v5606 = vsel %vm5589, %v329, 0
    %v5609 = vsel %vm5589, %v330, 0
    %v5612 = vsel %vm5589, %v331, 0
    %5614 = vmatpush.bf16.msra.mxu0 0
    %5615 = vmatpush.bf16.msra.mxu0 0
    %5616 = vmatpush.bf16.msra.mxu0 0
    %5617 = vmatpush.bf16.msra.mxu0 0
    %5618 = vmatpush.bf16.msra.mxu0 0
    %5619 = vmatpush.bf16.msra.mxu0 0
    %5620 = vmatpush.bf16.msra.mxu0 0
    %5621 = vmatpush.bf16.msra.mxu0 %v5587
    %5622 = vmatmul.bf16.gmra.mxu0 %v5591
    %v5623 = vpop.f32.mrf.mxu0
    %v5624 = vadd.f32 0.0, %v5623
    %v5625 = vpop.f32.mrf.mxu0
    %v5626 = vadd.f32 0.0, %v5625
    %5627 = vmatmul.bf16.gmra.mxu0 %v5594
    %v5628 = vpop.f32.mrf.mxu0
    %v5629 = vadd.f32 0.0, %v5628
    %v5630 = vpop.f32.mrf.mxu0
    %v5631 = vadd.f32 0.0, %v5630
    %5632 = vmatmul.bf16.gmra.mxu0 %v5597
    %v5633 = vpop.f32.mrf.mxu0
    %v5634 = vadd.f32 0.0, %v5633
    %v5635 = vpop.f32.mrf.mxu0
    %v5636 = vadd.f32 0.0, %v5635
    %5637 = vmatmul.bf16.gmra.mxu0 %v5600
    %v5638 = vpop.f32.mrf.mxu0
    %v5639 = vadd.f32 0.0, %v5638
    %v5640 = vpop.f32.mrf.mxu0
    %v5641 = vadd.f32 0.0, %v5640
    %5642 = vmatmul.bf16.gmra.mxu0 %v5603
    %v5643 = vpop.f32.mrf.mxu0
    %v5644 = vadd.f32 0.0, %v5643
    %v5645 = vpop.f32.mrf.mxu0
    %v5646 = vadd.f32 0.0, %v5645
    %5647 = vmatmul.bf16.gmra.mxu0 %v5606
    %v5648 = vpop.f32.mrf.mxu0
    %v5649 = vadd.f32 0.0, %v5648
    %v5650 = vpop.f32.mrf.mxu0
    %v5651 = vadd.f32 0.0, %v5650
    %5652 = vmatmul.bf16.gmra.mxu0 %v5609
    %v5653 = vpop.f32.mrf.mxu0
    %v5654 = vadd.f32 0.0, %v5653
    %v5655 = vpop.f32.mrf.mxu0
    %v5656 = vadd.f32 0.0, %v5655
    %5657 = vmatmul.bf16.gmra.mxu0 %v5612
    %v5658 = vpop.f32.mrf.mxu0
    %v5659 = vadd.f32 0.0, %v5658
    %v5660 = vpop.f32.mrf.mxu0
    %v5661 = vadd.f32 0.0, %v5660
    %5662 = vdwg.mxu0
    %v5695 = vunpack.c.l.b16 %v5549
    %v5696 = vunpack.c.l.b16 %v5550
    %v5697 = vunpack.c.l.b16 %v5551
    %v5698 = vunpack.c.l.b16 %v5552
    %v5699 = vunpack.c.l.b16 %v5553
    %v5700 = vunpack.c.l.b16 %v5554
    %v5701 = vunpack.c.l.b16 %v5555
    %v5702 = vunpack.c.l.b16 %v5556
    %v5703 = vunpack.c.l.b16 %v5557
    %v5704 = vunpack.c.l.b16 %v5558
    %v5705 = vunpack.c.l.b16 %v5559
    %v5706 = vunpack.c.l.b16 %v5560
    %v5707 = vunpack.c.l.b16 %v5561
    %v5708 = vunpack.c.l.b16 %v5562
    %v5709 = vunpack.c.l.b16 %v5563
    %v5710 = vunpack.c.l.b16 %v5564
    %v5711 = vunpack.c.l.b16 %v5565
    %v5712 = vunpack.c.l.b16 %v5566
    %v5713 = vunpack.c.l.b16 %v5567
    %v5714 = vunpack.c.l.b16 %v5568
    %v5715 = vunpack.c.l.b16 %v5569
    %v5716 = vunpack.c.l.b16 %v5570
    %v5717 = vunpack.c.l.b16 %v5571
    %v5718 = vunpack.c.l.b16 %v5572
    %v5719 = vunpack.c.l.b16 %v5573
    %v5720 = vunpack.c.l.b16 %v5574
    %v5721 = vunpack.c.l.b16 %v5575
    %v5722 = vunpack.c.l.b16 %v5576
    %v5723 = vunpack.c.l.b16 %v5577
    %v5724 = vunpack.c.l.b16 %v5578
    %v5725 = vunpack.c.l.b16 %v5579
    %v5726 = vunpack.c.l.b16 %v5580
    %v5727 = vpack.c.b16 %v5696, %v5695
    %v5728 = vpack.c.b16 %v5698, %v5697
    %v5729 = vpack.c.b16 %v5700, %v5699
    %v5730 = vpack.c.b16 %v5702, %v5701
    %v5731 = vpack.c.b16 %v5704, %v5703
    %v5732 = vpack.c.b16 %v5706, %v5705
    %v5733 = vpack.c.b16 %v5708, %v5707
    %v5734 = vpack.c.b16 %v5710, %v5709
    %v5735 = vpack.c.b16 %v5712, %v5711
    %v5736 = vpack.c.b16 %v5714, %v5713
    %v5737 = vpack.c.b16 %v5716, %v5715
    %v5738 = vpack.c.b16 %v5718, %v5717
    %v5739 = vpack.c.b16 %v5720, %v5719
    %v5740 = vpack.c.b16 %v5722, %v5721
    %v5741 = vpack.c.b16 %v5724, %v5723
    %v5742 = vpack.c.b16 %v5726, %v5725
    %5759 = vmatpush.bf16.msra.mxu0 %v5734
    %5760 = vmatpush.bf16.msra.mxu0 %v5733
    %5761 = vmatpush.bf16.msra.mxu0 %v5732
    %5762 = vmatpush.bf16.msra.mxu0 %v5731
    %5763 = vmatpush.bf16.msra.mxu0 %v5730
    %5764 = vmatpush.bf16.msra.mxu0 %v5729
    %5765 = vmatpush.bf16.msra.mxu0 %v5728
    %5766 = vmatpush.bf16.msra.mxu0 %v5727
    %5767 = vmatmul.bf16.gmra.mxu0 %v5533
    %v5768 = vpop.f32.mrf.mxu0
    %v5769 = vadd.f32 %v5624, %v5768
    %v5770 = vpop.f32.mrf.mxu0
    %v5771 = vadd.f32 %v5626, %v5770
    %5772 = vmatmul.bf16.gmra.mxu0 %v5535
    %v5773 = vpop.f32.mrf.mxu0
    %v5774 = vadd.f32 %v5629, %v5773
    %v5775 = vpop.f32.mrf.mxu0
    %v5776 = vadd.f32 %v5631, %v5775
    %5777 = vmatmul.bf16.gmra.mxu0 %v5537
    %v5778 = vpop.f32.mrf.mxu0
    %v5779 = vadd.f32 %v5634, %v5778
    %v5780 = vpop.f32.mrf.mxu0
    %v5781 = vadd.f32 %v5636, %v5780
    %5782 = vmatmul.bf16.gmra.mxu0 %v5539
    %v5783 = vpop.f32.mrf.mxu0
    %v5784 = vadd.f32 %v5639, %v5783
    %v5785 = vpop.f32.mrf.mxu0
    %v5786 = vadd.f32 %v5641, %v5785
    %5787 = vmatmul.bf16.gmra.mxu0 %v5541
    %v5788 = vpop.f32.mrf.mxu0
    %v5789 = vadd.f32 %v5644, %v5788
    %v5790 = vpop.f32.mrf.mxu0
    %v5791 = vadd.f32 %v5646, %v5790
    %5792 = vmatmul.bf16.gmra.mxu0 %v5543
    %v5793 = vpop.f32.mrf.mxu0
    %v5794 = vadd.f32 %v5649, %v5793
    %v5795 = vpop.f32.mrf.mxu0
    %v5796 = vadd.f32 %v5651, %v5795
    %5797 = vmatmul.bf16.gmra.mxu0 %v5545
    %v5798 = vpop.f32.mrf.mxu0
    %v5799 = vadd.f32 %v5654, %v5798
    %v5800 = vpop.f32.mrf.mxu0
    %v5801 = vadd.f32 %v5656, %v5800
    %5802 = vmatmul.bf16.gmra.mxu0 %v5547
    %v5803 = vpop.f32.mrf.mxu0
    %v5804 = vadd.f32 %v5659, %v5803
    %v5805 = vpop.f32.mrf.mxu0
    %v5806 = vadd.f32 %v5661, %v5805
    %5807 = vdwg.mxu0
    %5808 = vmatpush.bf16.msra.mxu0 %v5742
    %5809 = vmatpush.bf16.msra.mxu0 %v5741
    %5810 = vmatpush.bf16.msra.mxu0 %v5740
    %5811 = vmatpush.bf16.msra.mxu0 %v5739
    %5812 = vmatpush.bf16.msra.mxu0 %v5738
    %5813 = vmatpush.bf16.msra.mxu0 %v5737
    %5814 = vmatpush.bf16.msra.mxu0 %v5736
    %5815 = vmatpush.bf16.msra.mxu0 %v5735
    %5816 = vmatmul.bf16.gmra.mxu0 %v5534
    %v5817 = vpop.f32.mrf.mxu0
    %v5818 = vadd.f32 %v5769, %v5817
    %v5819 = vpop.f32.mrf.mxu0
    %v5820 = vadd.f32 %v5771, %v5819
    %5821 = vmatmul.bf16.gmra.mxu0 %v5536
    %v5822 = vpop.f32.mrf.mxu0
    %v5823 = vadd.f32 %v5774, %v5822
    %v5824 = vpop.f32.mrf.mxu0
    %v5825 = vadd.f32 %v5776, %v5824
    %5826 = vmatmul.bf16.gmra.mxu0 %v5538
    %v5827 = vpop.f32.mrf.mxu0
    %v5828 = vadd.f32 %v5779, %v5827
    %v5829 = vpop.f32.mrf.mxu0
    %v5830 = vadd.f32 %v5781, %v5829
    %5831 = vmatmul.bf16.gmra.mxu0 %v5540
    %v5832 = vpop.f32.mrf.mxu0
    %v5833 = vadd.f32 %v5784, %v5832
    %v5834 = vpop.f32.mrf.mxu0
    %v5835 = vadd.f32 %v5786, %v5834
    %5836 = vmatmul.bf16.gmra.mxu0 %v5542
    %v5837 = vpop.f32.mrf.mxu0
    %v5838 = vadd.f32 %v5789, %v5837
    %v5839 = vpop.f32.mrf.mxu0
    %v5840 = vadd.f32 %v5791, %v5839
    %5841 = vmatmul.bf16.gmra.mxu0 %v5544
    %v5842 = vpop.f32.mrf.mxu0
    %v5843 = vadd.f32 %v5794, %v5842
    %v5844 = vpop.f32.mrf.mxu0
    %v5845 = vadd.f32 %v5796, %v5844
    %5846 = vmatmul.bf16.gmra.mxu0 %v5546
    %v5847 = vpop.f32.mrf.mxu0
    %v5848 = vadd.f32 %v5799, %v5847
    %v5849 = vpop.f32.mrf.mxu0
    %v5850 = vadd.f32 %v5801, %v5849
    %5851 = vmatmul.bf16.gmra.mxu0 %v5548
    %v5852 = vpop.f32.mrf.mxu0
    %v5853 = vadd.f32 %v5804, %v5852
    %v5854 = vpop.f32.mrf.mxu0
    %v5855 = vadd.f32 %v5806, %v5854
    %5856 = vdwg.mxu0
    %v5857 = vld [vmem:[%s20] sm:$0x1]
    %v5858 = vpack.c.bf16 %v5818, %v5818
    %v5859 = vpack.c.bf16 %v5820, %v5820
    %v5860 = vpack.c.bf16 %v5823, %v5823
    %v5861 = vpack.c.bf16 %v5825, %v5825
    %v5862 = vpack.c.bf16 %v5828, %v5828
    %v5863 = vpack.c.bf16 %v5830, %v5830
    %v5864 = vpack.c.bf16 %v5833, %v5833
    %v5865 = vpack.c.bf16 %v5835, %v5835
    %v5866 = vpack.c.bf16 %v5838, %v5838
    %v5867 = vpack.c.bf16 %v5840, %v5840
    %v5868 = vpack.c.bf16 %v5843, %v5843
    %v5869 = vpack.c.bf16 %v5845, %v5845
    %v5870 = vpack.c.bf16 %v5848, %v5848
    %v5871 = vpack.c.bf16 %v5850, %v5850
    %v5872 = vpack.c.bf16 %v5853, %v5853
    %v5873 = vpack.c.bf16 %v5855, %v5855
    %v5874 = vpack.c.bf16 %v5857, %v5857
    %v5876 = vpack.i.b16 %v5874, %v5874
    %v5878 = vperm.slane %v5876, 0
    %v5879 = vunpack.c.l.bf16 %v5858
    %v5880 = vunpack.c.l.bf16 %v5859
    %v5881 = vunpack.c.l.bf16 %v5860
    %v5882 = vunpack.c.l.bf16 %v5861
    %v5883 = vunpack.c.l.bf16 %v5862
    %v5884 = vunpack.c.l.bf16 %v5863
    %v5885 = vunpack.c.l.bf16 %v5864
    %v5886 = vunpack.c.l.bf16 %v5865
    %v5887 = vunpack.c.l.bf16 %v5866
    %v5888 = vunpack.c.l.bf16 %v5867
    %v5889 = vunpack.c.l.bf16 %v5868
    %v5890 = vunpack.c.l.bf16 %v5869
    %v5891 = vunpack.c.l.bf16 %v5870
    %v5892 = vunpack.c.l.bf16 %v5871
    %v5893 = vunpack.c.l.bf16 %v5872
    %v5894 = vunpack.c.l.bf16 %v5873
    %v5895 = vunpack.c.l.bf16 %v5878
    %v5896 = vadd.f32 %v5879, %v5895
    %v5897 = vadd.f32 %v5880, %v5895
    %v5898 = vadd.f32 %v5881, %v5895
    %v5899 = vadd.f32 %v5882, %v5895
    %v5900 = vadd.f32 %v5883, %v5895
    %v5901 = vadd.f32 %v5884, %v5895
    %v5902 = vadd.f32 %v5885, %v5895
    %v5903 = vadd.f32 %v5886, %v5895
    %v5904 = vadd.f32 %v5887, %v5895
    %v5905 = vadd.f32 %v5888, %v5895
    %v5906 = vadd.f32 %v5889, %v5895
    %v5907 = vadd.f32 %v5890, %v5895
    %v5908 = vadd.f32 %v5891, %v5895
    %v5909 = vadd.f32 %v5892, %v5895
    %v5910 = vadd.f32 %v5893, %v5895
    %v5911 = vadd.f32 %v5894, %v5895
    %v5912 = vpack.c.bf16 %v5896, %v5896
    %v5913 = vpack.c.bf16 %v5897, %v5897
    %v5914 = vpack.c.bf16 %v5898, %v5898
    %v5915 = vpack.c.bf16 %v5899, %v5899
    %v5916 = vpack.c.bf16 %v5900, %v5900
    %v5917 = vpack.c.bf16 %v5901, %v5901
    %v5918 = vpack.c.bf16 %v5902, %v5902
    %v5919 = vpack.c.bf16 %v5903, %v5903
    %v5920 = vpack.c.bf16 %v5904, %v5904
    %v5921 = vpack.c.bf16 %v5905, %v5905
    %v5922 = vpack.c.bf16 %v5906, %v5906
    %v5923 = vpack.c.bf16 %v5907, %v5907
    %v5924 = vpack.c.bf16 %v5908, %v5908
    %v5925 = vpack.c.bf16 %v5909, %v5909
    %v5926 = vpack.c.bf16 %v5910, %v5910
    %v5927 = vpack.c.bf16 %v5911, %v5911
    %v5928 = vunpack.c.l.bf16 %v5912
    %v5929 = vunpack.c.l.bf16 %v5913
    %v5930 = vunpack.c.l.bf16 %v5914
    %v5931 = vunpack.c.l.bf16 %v5915
    %v5932 = vunpack.c.l.bf16 %v5916
    %v5933 = vunpack.c.l.bf16 %v5917
    %v5934 = vunpack.c.l.bf16 %v5918
    %v5935 = vunpack.c.l.bf16 %v5919
    %v5936 = vunpack.c.l.bf16 %v5920
    %v5937 = vunpack.c.l.bf16 %v5921
    %v5938 = vunpack.c.l.bf16 %v5922
    %v5939 = vunpack.c.l.bf16 %v5923
    %v5940 = vunpack.c.l.bf16 %v5924
    %v5941 = vunpack.c.l.bf16 %v5925
    %v5942 = vunpack.c.l.bf16 %v5926
    %v5943 = vunpack.c.l.bf16 %v5927
    %v5944 = vmax.f32 %v5928, 0.0
    %v5945 = vmax.f32 %v5929, 0.0
    %v5946 = vmax.f32 %v5930, 0.0
    %v5947 = vmax.f32 %v5931, 0.0
    %v5948 = vmax.f32 %v5932, 0.0
    %v5949 = vmax.f32 %v5933, 0.0
    %v5950 = vmax.f32 %v5934, 0.0
    %v5951 = vmax.f32 %v5935, 0.0
    %v5952 = vmax.f32 %v5936, 0.0
    %v5953 = vmax.f32 %v5937, 0.0
    %v5954 = vmax.f32 %v5938, 0.0
    %v5955 = vmax.f32 %v5939, 0.0
    %v5956 = vmax.f32 %v5940, 0.0
    %v5957 = vmax.f32 %v5941, 0.0
    %v5958 = vmax.f32 %v5942, 0.0
    %v5959 = vmax.f32 %v5943, 0.0
    %v5960 = vpack.c.bf16 %v5945, %v5944
    %v5961 = vpack.c.bf16 %v5947, %v5946
    %v5962 = vpack.c.bf16 %v5949, %v5948
    %v5963 = vpack.c.bf16 %v5951, %v5950
    %v5964 = vpack.c.bf16 %v5953, %v5952
    %v5965 = vpack.c.bf16 %v5955, %v5954
    %v5966 = vpack.c.bf16 %v5957, %v5956
    %v5967 = vpack.c.bf16 %v5959, %v5958
    %v5968 = vld [vmem:[%s21] sm:$0xf]
    %v5969 = vld [vmem:[%s21 + $0x4] sm:$0xf]
    %v5970 = vld [vmem:[%s21 + $0x8] sm:$0xf]
    %v5971 = vld [vmem:[%s21 + $0xc] sm:$0xf]
    %v5972 = vld [vmem:[%s21 + $0x10] sm:$0xf]
    %v5973 = vld [vmem:[%s21 + $0x14] sm:$0xf]
    %v5974 = vld [vmem:[%s21 + $0x18] sm:$0xf]
    %v5975 = vld [vmem:[%s21 + $0x1c] sm:$0xf]
    %v5976 = vld [vmem:[%s21 + $0x20] sm:$0xf]
    %v5977 = vld [vmem:[%s21 + $0x24] sm:$0xf]
    %v5978 = vld [vmem:[%s21 + $0x28] sm:$0xf]
    %v5979 = vld [vmem:[%s21 + $0x2c] sm:$0xf]
    %v5980 = vld [vmem:[%s21 + $0x30] sm:$0xf]
    %v5981 = vld [vmem:[%s21 + $0x34] sm:$0xf]
    %v5982 = vld [vmem:[%s21 + $0x38] sm:$0xf]
    %v5983 = vld [vmem:[%s21 + $0x3c] sm:$0xf]
    %v6000 = vunpack.c.l.b16 %v5968
    %v6001 = vunpack.c.l.b16 %v5969
    %v6002 = vunpack.c.l.b16 %v5970
    %v6003 = vunpack.c.l.b16 %v5971
    %v6004 = vunpack.c.l.b16 %v5972
    %v6005 = vunpack.c.l.b16 %v5973
    %v6006 = vunpack.c.l.b16 %v5974
    %v6007 = vunpack.c.l.b16 %v5975
    %v6008 = vunpack.c.l.b16 %v5976
    %v6009 = vunpack.c.l.b16 %v5977
    %v6010 = vunpack.c.l.b16 %v5978
    %v6011 = vunpack.c.l.b16 %v5979
    %v6012 = vunpack.c.l.b16 %v5980
    %v6013 = vunpack.c.l.b16 %v5981
    %v6014 = vunpack.c.l.b16 %v5982
    %v6015 = vunpack.c.l.b16 %v5983
    %v6016 = vpack.c.b16 %v6001, %v6000
    %v6017 = vpack.c.b16 %v6003, %v6002
    %v6018 = vpack.c.b16 %v6005, %v6004
    %v6019 = vpack.c.b16 %v6007, %v6006
    %v6020 = vpack.c.b16 %v6009, %v6008
    %v6021 = vpack.c.b16 %v6011, %v6010
    %v6022 = vpack.c.b16 %v6013, %v6012
    %v6023 = vpack.c.b16 %v6015, %v6014
    %6032 = vmatpush.bf16.msra.mxu0 %v6023
    %6033 = vmatpush.bf16.msra.mxu0 %v6022
    %6034 = vmatpush.bf16.msra.mxu0 %v6021
    %6035 = vmatpush.bf16.msra.mxu0 %v6020
    %6036 = vmatpush.bf16.msra.mxu0 %v6019
    %6037 = vmatpush.bf16.msra.mxu0 %v6018
    %6038 = vmatpush.bf16.msra.mxu0 %v6017
    %6039 = vmatpush.bf16.msra.mxu0 %v6016
    %6040 = vmatmul.bf16.gmra.mxu0 %v5960
    %v6041 = vpop.f32.mrf.mxu0
    %v6042 = vadd.f32 0.0, %v6041
    %v6043 = vpop.f32.mrf.mxu0
    %v6044 = vadd.f32 0.0, %v6043
    %6045 = vmatmul.bf16.gmra.mxu0 %v5961
    %v6046 = vpop.f32.mrf.mxu0
    %v6047 = vadd.f32 0.0, %v6046
    %v6048 = vpop.f32.mrf.mxu0
    %v6049 = vadd.f32 0.0, %v6048
    %6050 = vmatmul.bf16.gmra.mxu0 %v5962
    %v6051 = vpop.f32.mrf.mxu0
    %v6052 = vadd.f32 0.0, %v6051
    %v6053 = vpop.f32.mrf.mxu0
    %v6054 = vadd.f32 0.0, %v6053
    %6055 = vmatmul.bf16.gmra.mxu0 %v5963
    %v6056 = vpop.f32.mrf.mxu0
    %v6057 = vadd.f32 0.0, %v6056
    %v6058 = vpop.f32.mrf.mxu0
    %v6059 = vadd.f32 0.0, %v6058
    %6060 = vmatmul.bf16.gmra.mxu0 %v5964
    %v6061 = vpop.f32.mrf.mxu0
    %v6062 = vadd.f32 0.0, %v6061
    %v6063 = vpop.f32.mrf.mxu0
    %v6064 = vadd.f32 0.0, %v6063
    %6065 = vmatmul.bf16.gmra.mxu0 %v5965
    %v6066 = vpop.f32.mrf.mxu0
    %v6067 = vadd.f32 0.0, %v6066
    %v6068 = vpop.f32.mrf.mxu0
    %v6069 = vadd.f32 0.0, %v6068
    %6070 = vmatmul.bf16.gmra.mxu0 %v5966
    %v6071 = vpop.f32.mrf.mxu0
    %v6072 = vadd.f32 0.0, %v6071
    %v6073 = vpop.f32.mrf.mxu0
    %v6074 = vadd.f32 0.0, %v6073
    %6075 = vmatmul.bf16.gmra.mxu0 %v5967
    %v6076 = vpop.f32.mrf.mxu0
    %v6077 = vadd.f32 0.0, %v6076
    %v6078 = vpop.f32.mrf.mxu0
    %v6079 = vadd.f32 0.0, %v6078
    %6080 = vdwg.mxu0
    %v6081 = vadd.f32 %v5100, %v6042
    %v6082 = vadd.f32 %v5102, %v6044
    %v6083 = vadd.f32 %v5105, %v6047
    %v6084 = vadd.f32 %v5107, %v6049
    %v6085 = vadd.f32 %v5110, %v6052
    %v6086 = vadd.f32 %v5112, %v6054
    %v6087 = vadd.f32 %v5115, %v6057
    %v6088 = vadd.f32 %v5117, %v6059
    %v6089 = vadd.f32 %v5120, %v6062
    %v6090 = vadd.f32 %v5122, %v6064
    %v6091 = vadd.f32 %v5125, %v6067
    %v6092 = vadd.f32 %v5127, %v6069
    %v6093 = vadd.f32 %v5130, %v6072
    %v6094 = vadd.f32 %v5132, %v6074
    %v6095 = vadd.f32 %v5135, %v6077
    %v6096 = vadd.f32 %v5137, %v6079
    %v6097 = vld [vmem:[%s22] sm:$0x1]
    %v6099 = vperm.slane %v6097, 0
    %v6101 = vadd.f32 %v6081, %v6099
    %v6102 = vadd.f32 %v6082, %v6099
    %v6103 = vadd.f32 %v6083, %v6099
    %v6104 = vadd.f32 %v6084, %v6099
    %v6105 = vadd.f32 %v6085, %v6099
    %v6106 = vadd.f32 %v6086, %v6099
    %v6107 = vadd.f32 %v6087, %v6099
    %v6108 = vadd.f32 %v6088, %v6099
    %v6109 = vadd.f32 %v6089, %v6099
    %v6110 = vadd.f32 %v6090, %v6099
    %v6111 = vadd.f32 %v6091, %v6099
    %v6112 = vadd.f32 %v6092, %v6099
    %v6113 = vadd.f32 %v6093, %v6099
    %v6114 = vadd.f32 %v6094, %v6099
    %v6115 = vadd.f32 %v6095, %v6099
    %v6116 = vadd.f32 %v6096, %v6099
    %v6117 = vxor.u32 %v6101, 2147483648
    %v6118 = vxor.u32 %v6102, 2147483648
    %v6119 = vxor.u32 %v6103, 2147483648
    %v6120 = vxor.u32 %v6104, 2147483648
    %v6121 = vxor.u32 %v6105, 2147483648
    %v6122 = vxor.u32 %v6106, 2147483648
    %v6123 = vxor.u32 %v6107, 2147483648
    %v6124 = vxor.u32 %v6108, 2147483648
    %v6125 = vxor.u32 %v6109, 2147483648
    %v6126 = vxor.u32 %v6110, 2147483648
    %v6127 = vxor.u32 %v6111, 2147483648
    %v6128 = vxor.u32 %v6112, 2147483648
    %v6129 = vxor.u32 %v6113, 2147483648
    %v6130 = vxor.u32 %v6114, 2147483648
    %v6131 = vxor.u32 %v6115, 2147483648
    %v6132 = vxor.u32 %v6116, 2147483648
    %v6133 = vmul.f32 %v6117, 1.442695
    %v6134 = vpow.pop %v6133
    %v6135 = vmul.f32 %v6118, 1.442695
    %v6136 = vpow.pop %v6135
    %v6137 = vmul.f32 %v6119, 1.442695
    %v6138 = vpow.pop %v6137
    %v6139 = vmul.f32 %v6120, 1.442695
    %v6140 = vpow.pop %v6139
    %v6141 = vmul.f32 %v6121, 1.442695
    %v6142 = vpow.pop %v6141
    %v6143 = vmul.f32 %v6122, 1.442695
    %v6144 = vpow.pop %v6143
    %v6145 = vmul.f32 %v6123, 1.442695
    %v6146 = vpow.pop %v6145
    %v6147 = vmul.f32 %v6124, 1.442695
    %v6148 = vpow.pop %v6147
    %v6149 = vmul.f32 %v6125, 1.442695
    %v6150 = vpow.pop %v6149
    %v6151 = vmul.f32 %v6126, 1.442695
    %v6152 = vpow.pop %v6151
    %v6153 = vmul.f32 %v6127, 1.442695
    %v6154 = vpow.pop %v6153
    %v6155 = vmul.f32 %v6128, 1.442695
    %v6156 = vpow.pop %v6155
    %v6157 = vmul.f32 %v6129, 1.442695
    %v6158 = vpow.pop %v6157
    %v6159 = vmul.f32 %v6130, 1.442695
    %v6160 = vpow.pop %v6159
    %v6161 = vmul.f32 %v6131, 1.442695
    %v6162 = vpow.pop %v6161
    %v6163 = vmul.f32 %v6132, 1.442695
    %v6164 = vpow.pop %v6163
    %v6165 = vadd.f32 %v6134, 1.0
    %v6166 = vadd.f32 %v6136, 1.0
    %v6167 = vadd.f32 %v6138, 1.0
    %v6168 = vadd.f32 %v6140, 1.0
    %v6169 = vadd.f32 %v6142, 1.0
    %v6170 = vadd.f32 %v6144, 1.0
    %v6171 = vadd.f32 %v6146, 1.0
    %v6172 = vadd.f32 %v6148, 1.0
    %v6173 = vadd.f32 %v6150, 1.0
    %v6174 = vadd.f32 %v6152, 1.0
    %v6175 = vadd.f32 %v6154, 1.0
    %v6176 = vadd.f32 %v6156, 1.0
    %v6177 = vadd.f32 %v6158, 1.0
    %v6178 = vadd.f32 %v6160, 1.0
    %v6179 = vadd.f32 %v6162, 1.0
    %v6180 = vadd.f32 %v6164, 1.0
    %v6181 = vrcp.pop %v6165
    %v6182 = vmul.f32 %v6165, %v6181
    %v6183 = vsub.f32 1.0, %v6182
    %v6184 = vmul.f32 %v6181, %v6183
    %v6185 = vadd.f32 %v6181, %v6184
    %vm6186 = vweird.f32 %v6165
    %vm6187 = vweird.f32 %v6181
    %vm6188 = vmor %vm6186, %vm6187
    %v6189 = vsel %vm6188, %v6181, %v6185
    %v6190 = vand.u32 2147483647, %v6165
    %vm6191 = vcmp.eq.f32.partialorder %v6190, 8.507059e+37
    %v6192 = vand.u32 %v6165, 2147483648
    %v6193 = vor.u32 1.1754944e-38, %v6192
    %v6194 = vsel %vm6191, %v6193, %v6189
    %v6195 = vmul.f32 1.0, %v6194
    %v6196 = vrcp.pop %v6166
    %v6197 = vmul.f32 %v6166, %v6196
    %v6198 = vsub.f32 1.0, %v6197
    %v6199 = vmul.f32 %v6196, %v6198
    %v6200 = vadd.f32 %v6196, %v6199
    %vm6201 = vweird.f32 %v6166
    %vm6202 = vweird.f32 %v6196
    %vm6203 = vmor %vm6201, %vm6202
    %v6204 = vsel %vm6203, %v6196, %v6200
    %v6205 = vand.u32 2147483647, %v6166
    %vm6206 = vcmp.eq.f32.partialorder %v6205, 8.507059e+37
    %v6207 = vand.u32 %v6166, 2147483648
    %v6208 = vor.u32 1.1754944e-38, %v6207
    %v6209 = vsel %vm6206, %v6208, %v6204
    %v6210 = vmul.f32 1.0, %v6209
    %v6211 = vrcp.pop %v6167
    %v6212 = vmul.f32 %v6167, %v6211
    %v6213 = vsub.f32 1.0, %v6212
    %v6214 = vmul.f32 %v6211, %v6213
    %v6215 = vadd.f32 %v6211, %v6214
    %vm6216 = vweird.f32 %v6167
    %vm6217 = vweird.f32 %v6211
    %vm6218 = vmor %vm6216, %vm6217
    %v6219 = vsel %vm6218, %v6211, %v6215
    %v6220 = vand.u32 2147483647, %v6167
    %vm6221 = vcmp.eq.f32.partialorder %v6220, 8.507059e+37
    %v6222 = vand.u32 %v6167, 2147483648
    %v6223 = vor.u32 1.1754944e-38, %v6222
    %v6224 = vsel %vm6221, %v6223, %v6219
    %v6225 = vmul.f32 1.0, %v6224
    %v6226 = vrcp.pop %v6168
    %v6227 = vmul.f32 %v6168, %v6226
    %v6228 = vsub.f32 1.0, %v6227
    %v6229 = vmul.f32 %v6226, %v6228
    %v6230 = vadd.f32 %v6226, %v6229
    %vm6231 = vweird.f32 %v6168
    %vm6232 = vweird.f32 %v6226
    %vm6233 = vmor %vm6231, %vm6232
    %v6234 = vsel %vm6233, %v6226, %v6230
    %v6235 = vand.u32 2147483647, %v6168
    %vm6236 = vcmp.eq.f32.partialorder %v6235, 8.507059e+37
    %v6237 = vand.u32 %v6168, 2147483648
    %v6238 = vor.u32 1.1754944e-38, %v6237
    %v6239 = vsel %vm6236, %v6238, %v6234
    %v6240 = vmul.f32 1.0, %v6239
    %v6241 = vrcp.pop %v6169
    %v6242 = vmul.f32 %v6169, %v6241
    %v6243 = vsub.f32 1.0, %v6242
    %v6244 = vmul.f32 %v6241, %v6243
    %v6245 = vadd.f32 %v6241, %v6244
    %vm6246 = vweird.f32 %v6169
    %vm6247 = vweird.f32 %v6241
    %vm6248 = vmor %vm6246, %vm6247
    %v6249 = vsel %vm6248, %v6241, %v6245
    %v6250 = vand.u32 2147483647, %v6169
    %vm6251 = vcmp.eq.f32.partialorder %v6250, 8.507059e+37
    %v6252 = vand.u32 %v6169, 2147483648
    %v6253 = vor.u32 1.1754944e-38, %v6252
    %v6254 = vsel %vm6251, %v6253, %v6249
    %v6255 = vmul.f32 1.0, %v6254
    %v6256 = vrcp.pop %v6170
    %v6257 = vmul.f32 %v6170, %v6256
    %v6258 = vsub.f32 1.0, %v6257
    %v6259 = vmul.f32 %v6256, %v6258
    %v6260 = vadd.f32 %v6256, %v6259
    %vm6261 = vweird.f32 %v6170
    %vm6262 = vweird.f32 %v6256
    %vm6263 = vmor %vm6261, %vm6262
    %v6264 = vsel %vm6263, %v6256, %v6260
    %v6265 = vand.u32 2147483647, %v6170
    %vm6266 = vcmp.eq.f32.partialorder %v6265, 8.507059e+37
    %v6267 = vand.u32 %v6170, 2147483648
    %v6268 = vor.u32 1.1754944e-38, %v6267
    %v6269 = vsel %vm6266, %v6268, %v6264
    %v6270 = vmul.f32 1.0, %v6269
    %v6271 = vrcp.pop %v6171
    %v6272 = vmul.f32 %v6171, %v6271
    %v6273 = vsub.f32 1.0, %v6272
    %v6274 = vmul.f32 %v6271, %v6273
    %v6275 = vadd.f32 %v6271, %v6274
    %vm6276 = vweird.f32 %v6171
    %vm6277 = vweird.f32 %v6271
    %vm6278 = vmor %vm6276, %vm6277
    %v6279 = vsel %vm6278, %v6271, %v6275
    %v6280 = vand.u32 2147483647, %v6171
    %vm6281 = vcmp.eq.f32.partialorder %v6280, 8.507059e+37
    %v6282 = vand.u32 %v6171, 2147483648
    %v6283 = vor.u32 1.1754944e-38, %v6282
    %v6284 = vsel %vm6281, %v6283, %v6279
    %v6285 = vmul.f32 1.0, %v6284
    %v6286 = vrcp.pop %v6172
    %v6287 = vmul.f32 %v6172, %v6286
    %v6288 = vsub.f32 1.0, %v6287
    %v6289 = vmul.f32 %v6286, %v6288
    %v6290 = vadd.f32 %v6286, %v6289
    %vm6291 = vweird.f32 %v6172
    %vm6292 = vweird.f32 %v6286
    %vm6293 = vmor %vm6291, %vm6292
    %v6294 = vsel %vm6293, %v6286, %v6290
    %v6295 = vand.u32 2147483647, %v6172
    %vm6296 = vcmp.eq.f32.partialorder %v6295, 8.507059e+37
    %v6297 = vand.u32 %v6172, 2147483648
    %v6298 = vor.u32 1.1754944e-38, %v6297
    %v6299 = vsel %vm6296, %v6298, %v6294
    %v6300 = vmul.f32 1.0, %v6299
    %v6301 = vrcp.pop %v6173
    %v6302 = vmul.f32 %v6173, %v6301
    %v6303 = vsub.f32 1.0, %v6302
    %v6304 = vmul.f32 %v6301, %v6303
    %v6305 = vadd.f32 %v6301, %v6304
    %vm6306 = vweird.f32 %v6173
    %vm6307 = vweird.f32 %v6301
    %vm6308 = vmor %vm6306, %vm6307
    %v6309 = vsel %vm6308, %v6301, %v6305
    %v6310 = vand.u32 2147483647, %v6173
    %vm6311 = vcmp.eq.f32.partialorder %v6310, 8.507059e+37
    %v6312 = vand.u32 %v6173, 2147483648
    %v6313 = vor.u32 1.1754944e-38, %v6312
    %v6314 = vsel %vm6311, %v6313, %v6309
    %v6315 = vmul.f32 1.0, %v6314
    %v6316 = vrcp.pop %v6174
    %v6317 = vmul.f32 %v6174, %v6316
    %v6318 = vsub.f32 1.0, %v6317
    %v6319 = vmul.f32 %v6316, %v6318
    %v6320 = vadd.f32 %v6316, %v6319
    %vm6321 = vweird.f32 %v6174
    %vm6322 = vweird.f32 %v6316
    %vm6323 = vmor %vm6321, %vm6322
    %v6324 = vsel %vm6323, %v6316, %v6320
    %v6325 = vand.u32 2147483647, %v6174
    %vm6326 = vcmp.eq.f32.partialorder %v6325, 8.507059e+37
    %v6327 = vand.u32 %v6174, 2147483648
    %v6328 = vor.u32 1.1754944e-38, %v6327
    %v6329 = vsel %vm6326, %v6328, %v6324
    %v6330 = vmul.f32 1.0, %v6329
    %v6331 = vrcp.pop %v6175
    %v6332 = vmul.f32 %v6175, %v6331
    %v6333 = vsub.f32 1.0, %v6332
    %v6334 = vmul.f32 %v6331, %v6333
    %v6335 = vadd.f32 %v6331, %v6334
    %vm6336 = vweird.f32 %v6175
    %vm6337 = vweird.f32 %v6331
    %vm6338 = vmor %vm6336, %vm6337
    %v6339 = vsel %vm6338, %v6331, %v6335
    %v6340 = vand.u32 2147483647, %v6175
    %vm6341 = vcmp.eq.f32.partialorder %v6340, 8.507059e+37
    %v6342 = vand.u32 %v6175, 2147483648
    %v6343 = vor.u32 1.1754944e-38, %v6342
    %v6344 = vsel %vm6341, %v6343, %v6339
    %v6345 = vmul.f32 1.0, %v6344
    %v6346 = vrcp.pop %v6176
    %v6347 = vmul.f32 %v6176, %v6346
    %v6348 = vsub.f32 1.0, %v6347
    %v6349 = vmul.f32 %v6346, %v6348
    %v6350 = vadd.f32 %v6346, %v6349
    %vm6351 = vweird.f32 %v6176
    %vm6352 = vweird.f32 %v6346
    %vm6353 = vmor %vm6351, %vm6352
    %v6354 = vsel %vm6353, %v6346, %v6350
    %v6355 = vand.u32 2147483647, %v6176
    %vm6356 = vcmp.eq.f32.partialorder %v6355, 8.507059e+37
    %v6357 = vand.u32 %v6176, 2147483648
    %v6358 = vor.u32 1.1754944e-38, %v6357
    %v6359 = vsel %vm6356, %v6358, %v6354
    %v6360 = vmul.f32 1.0, %v6359
    %v6361 = vrcp.pop %v6177
    %v6362 = vmul.f32 %v6177, %v6361
    %v6363 = vsub.f32 1.0, %v6362
    %v6364 = vmul.f32 %v6361, %v6363
    %v6365 = vadd.f32 %v6361, %v6364
    %vm6366 = vweird.f32 %v6177
    %vm6367 = vweird.f32 %v6361
    %vm6368 = vmor %vm6366, %vm6367
    %v6369 = vsel %vm6368, %v6361, %v6365
    %v6370 = vand.u32 2147483647, %v6177
    %vm6371 = vcmp.eq.f32.partialorder %v6370, 8.507059e+37
    %v6372 = vand.u32 %v6177, 2147483648
    %v6373 = vor.u32 1.1754944e-38, %v6372
    %v6374 = vsel %vm6371, %v6373, %v6369
    %v6375 = vmul.f32 1.0, %v6374
    %v6376 = vrcp.pop %v6178
    %v6377 = vmul.f32 %v6178, %v6376
    %v6378 = vsub.f32 1.0, %v6377
    %v6379 = vmul.f32 %v6376, %v6378
    %v6380 = vadd.f32 %v6376, %v6379
    %vm6381 = vweird.f32 %v6178
    %vm6382 = vweird.f32 %v6376
    %vm6383 = vmor %vm6381, %vm6382
    %v6384 = vsel %vm6383, %v6376, %v6380
    %v6385 = vand.u32 2147483647, %v6178
    %vm6386 = vcmp.eq.f32.partialorder %v6385, 8.507059e+37
    %v6387 = vand.u32 %v6178, 2147483648
    %v6388 = vor.u32 1.1754944e-38, %v6387
    %v6389 = vsel %vm6386, %v6388, %v6384
    %v6390 = vmul.f32 1.0, %v6389
    %v6391 = vrcp.pop %v6179
    %v6392 = vmul.f32 %v6179, %v6391
    %v6393 = vsub.f32 1.0, %v6392
    %v6394 = vmul.f32 %v6391, %v6393
    %v6395 = vadd.f32 %v6391, %v6394
    %vm6396 = vweird.f32 %v6179
    %vm6397 = vweird.f32 %v6391
    %vm6398 = vmor %vm6396, %vm6397
    %v6399 = vsel %vm6398, %v6391, %v6395
    %v6400 = vand.u32 2147483647, %v6179
    %vm6401 = vcmp.eq.f32.partialorder %v6400, 8.507059e+37
    %v6402 = vand.u32 %v6179, 2147483648
    %v6403 = vor.u32 1.1754944e-38, %v6402
    %v6404 = vsel %vm6401, %v6403, %v6399
    %v6405 = vmul.f32 1.0, %v6404
    %v6406 = vrcp.pop %v6180
    %v6407 = vmul.f32 %v6180, %v6406
    %v6408 = vsub.f32 1.0, %v6407
    %v6409 = vmul.f32 %v6406, %v6408
    %v6410 = vadd.f32 %v6406, %v6409
    %vm6411 = vweird.f32 %v6180
    %vm6412 = vweird.f32 %v6406
    %vm6413 = vmor %vm6411, %vm6412
    %v6414 = vsel %vm6413, %v6406, %v6410
    %v6415 = vand.u32 2147483647, %v6180
    %vm6416 = vcmp.eq.f32.partialorder %v6415, 8.507059e+37
    %v6417 = vand.u32 %v6180, 2147483648
    %v6418 = vor.u32 1.1754944e-38, %v6417
    %v6419 = vsel %vm6416, %v6418, %v6414
    %v6420 = vmul.f32 1.0, %v6419
    %v6421 = vlaneseq
    %v6422 = vand.u32 %v6421, 127
    %vm6423 = vcmp.ge.s32.totalorder %v6422, 2
    %vm6424 = vcmp.lt.s32.totalorder %v6422, 5
    %vm6425 = vmand %vm6423, %vm6424
    %vm6426 = vcmp.ge.s32.totalorder %v6422, 8
    %vm6427 = vcmp.lt.s32.totalorder %v6422, 14
    %vm6428 = vmand %vm6426, %vm6427
    %vm6429 = vmor %vm6425, %vm6428
    %v6430 = vsel %vm6429, 1, 0
    %vm6431 = vcmp.eq.s32.totalorder %v6430, 1
    %v6432 = vsel %vm6431, %v6195, %v6101
    %v6433 = vsel %vm6431, %v6210, %v6102
    %v6434 = vsel %vm6431, %v6225, %v6103
    %v6435 = vsel %vm6431, %v6240, %v6104
    %v6436 = vsel %vm6431, %v6255, %v6105
    %v6437 = vsel %vm6431, %v6270, %v6106
    %v6438 = vsel %vm6431, %v6285, %v6107
    %v6439 = vsel %vm6431, %v6300, %v6108
    %v6440 = vsel %vm6431, %v6315, %v6109
    %v6441 = vsel %vm6431, %v6330, %v6110
    %v6442 = vsel %vm6431, %v6345, %v6111
    %v6443 = vsel %vm6431, %v6360, %v6112
    %v6444 = vsel %vm6431, %v6375, %v6113
    %v6445 = vsel %vm6431, %v6390, %v6114
    %v6446 = vsel %vm6431, %v6405, %v6115
    %v6447 = vsel %vm6431, %v6420, %v6116
    %v6448 = vld [vmem:[%s2] sm:$0xff]
    %v6449 = vld [vmem:[%s2 + $0x8] sm:$0xff]
    %v6450 = vld [vmem:[%s2 + $0x10] sm:$0xff]
    %v6451 = vld [vmem:[%s2 + $0x18] sm:$0xff]
    %v6452 = vld [vmem:[%s2 + $0x20] sm:$0xff]
    %v6453 = vld [vmem:[%s2 + $0x28] sm:$0xff]
    %v6454 = vld [vmem:[%s2 + $0x30] sm:$0xff]
    %v6455 = vld [vmem:[%s2 + $0x38] sm:$0xff]
    %v6456 = vld [vmem:[%s2 + $0x40] sm:$0xff]
    %v6457 = vld [vmem:[%s2 + $0x48] sm:$0xff]
    %v6458 = vld [vmem:[%s2 + $0x50] sm:$0xff]
    %v6459 = vld [vmem:[%s2 + $0x58] sm:$0xff]
    %v6460 = vld [vmem:[%s2 + $0x60] sm:$0xff]
    %v6461 = vld [vmem:[%s2 + $0x68] sm:$0xff]
    %v6462 = vld [vmem:[%s2 + $0x70] sm:$0xff]
    %v6463 = vld [vmem:[%s2 + $0x78] sm:$0xff]
    %v6464 = vld [vmem:[#allocation2] sm:$0x1]
    %v6466 = vperm.slane %v6464, 0
    %v6468 = vsub.f32 %v6448, %v6466
    %v6469 = vsub.f32 %v6449, %v6466
    %v6470 = vsub.f32 %v6450, %v6466
    %v6471 = vsub.f32 %v6451, %v6466
    %v6472 = vsub.f32 %v6452, %v6466
    %v6473 = vsub.f32 %v6453, %v6466
    %v6474 = vsub.f32 %v6454, %v6466
    %v6475 = vsub.f32 %v6455, %v6466
    %v6476 = vsub.f32 %v6456, %v6466
    %v6477 = vsub.f32 %v6457, %v6466
    %v6478 = vsub.f32 %v6458, %v6466
    %v6479 = vsub.f32 %v6459, %v6466
    %v6480 = vsub.f32 %v6460, %v6466
    %v6481 = vsub.f32 %v6461, %v6466
    %v6482 = vsub.f32 %v6462, %v6466
    %v6483 = vsub.f32 %v6463, %v6466
    %v6484 = vld [vmem:[#allocation5] sm:$0x1]
    %v6486 = vperm.slane %v6484, 0
    %v6488 = vsub.f32 %v6448, %v6486
    %v6489 = vsub.f32 %v6449, %v6486
    %v6490 = vsub.f32 %v6450, %v6486
    %v6491 = vsub.f32 %v6451, %v6486
    %v6492 = vsub.f32 %v6452, %v6486
    %v6493 = vsub.f32 %v6453, %v6486
    %v6494 = vsub.f32 %v6454, %v6486
    %v6495 = vsub.f32 %v6455, %v6486
    %v6496 = vsub.f32 %v6456, %v6486
    %v6497 = vsub.f32 %v6457, %v6486
    %v6498 = vsub.f32 %v6458, %v6486
    %v6499 = vsub.f32 %v6459, %v6486
    %v6500 = vsub.f32 %v6460, %v6486
    %v6501 = vsub.f32 %v6461, %v6486
    %v6502 = vsub.f32 %v6462, %v6486
    %v6503 = vsub.f32 %v6463, %v6486
    %v6504 = vmul.f32 %v6468, %v6468
    %v6505 = vmul.f32 %v6469, %v6469
    %v6506 = vmul.f32 %v6470, %v6470
    %v6507 = vmul.f32 %v6471, %v6471
    %v6508 = vmul.f32 %v6472, %v6472
    %v6509 = vmul.f32 %v6473, %v6473
    %v6510 = vmul.f32 %v6474, %v6474
    %v6511 = vmul.f32 %v6475, %v6475
    %v6512 = vmul.f32 %v6476, %v6476
    %v6513 = vmul.f32 %v6477, %v6477
    %v6514 = vmul.f32 %v6478, %v6478
    %v6515 = vmul.f32 %v6479, %v6479
    %v6516 = vmul.f32 %v6480, %v6480
    %v6517 = vmul.f32 %v6481, %v6481
    %v6518 = vmul.f32 %v6482, %v6482
    %v6519 = vmul.f32 %v6483, %v6483
    %6536 = vrot.lane.b32.xlu0 %v6504, 127
    %v6537 = vpop.permute.xlu0 %6536
    %6538 = vrot.lane.b32.xlu0 %v6505, 127
    %v6539 = vpop.permute.xlu0 %6538
    %6540 = vrot.lane.b32.xlu0 %v6506, 127
    %v6541 = vpop.permute.xlu0 %6540
    %6542 = vrot.lane.b32.xlu0 %v6507, 127
    %v6543 = vpop.permute.xlu0 %6542
    %6544 = vrot.lane.b32.xlu0 %v6508, 127
    %v6545 = vpop.permute.xlu0 %6544
    %6546 = vrot.lane.b32.xlu0 %v6509, 127
    %v6547 = vpop.permute.xlu0 %6546
    %6548 = vrot.lane.b32.xlu0 %v6510, 127
    %v6549 = vpop.permute.xlu0 %6548
    %6550 = vrot.lane.b32.xlu0 %v6511, 127
    %v6551 = vpop.permute.xlu0 %6550
    %6552 = vrot.lane.b32.xlu0 %v6512, 127
    %v6553 = vpop.permute.xlu0 %6552
    %6554 = vrot.lane.b32.xlu0 %v6513, 127
    %v6555 = vpop.permute.xlu0 %6554
    %6556 = vrot.lane.b32.xlu0 %v6514, 127
    %v6557 = vpop.permute.xlu0 %6556
    %6558 = vrot.lane.b32.xlu0 %v6515, 127
    %v6559 = vpop.permute.xlu0 %6558
    %6560 = vrot.lane.b32.xlu0 %v6516, 127
    %v6561 = vpop.permute.xlu0 %6560
    %6562 = vrot.lane.b32.xlu0 %v6517, 127
    %v6563 = vpop.permute.xlu0 %6562
    %6564 = vrot.lane.b32.xlu0 %v6518, 127
    %v6565 = vpop.permute.xlu0 %6564
    %6566 = vrot.lane.b32.xlu0 %v6519, 127
    %v6567 = vpop.permute.xlu0 %6566
    %v6584 = vadd.f32 %v6504, %v6537
    %v6585 = vadd.f32 %v6505, %v6539
    %v6586 = vadd.f32 %v6506, %v6541
    %v6587 = vadd.f32 %v6507, %v6543
    %v6588 = vadd.f32 %v6508, %v6545
    %v6589 = vadd.f32 %v6509, %v6547
    %v6590 = vadd.f32 %v6510, %v6549
    %v6591 = vadd.f32 %v6511, %v6551
    %v6592 = vadd.f32 %v6512, %v6553
    %v6593 = vadd.f32 %v6513, %v6555
    %v6594 = vadd.f32 %v6514, %v6557
    %v6595 = vadd.f32 %v6515, %v6559
    %v6596 = vadd.f32 %v6516, %v6561
    %v6597 = vadd.f32 %v6517, %v6563
    %v6598 = vadd.f32 %v6518, %v6565
    %v6599 = vadd.f32 %v6519, %v6567
    %6600 = vrot.lane.b32.xlu0 %v6504, 126
    %v6601 = vpop.permute.xlu0 %6600
    %6602 = vrot.lane.b32.xlu0 %v6505, 126
    %v6603 = vpop.permute.xlu0 %6602
    %6604 = vrot.lane.b32.xlu0 %v6506, 126
    %v6605 = vpop.permute.xlu0 %6604
    %6606 = vrot.lane.b32.xlu0 %v6507, 126
    %v6607 = vpop.permute.xlu0 %6606
    %6608 = vrot.lane.b32.xlu0 %v6508, 126
    %v6609 = vpop.permute.xlu0 %6608
    %6610 = vrot.lane.b32.xlu0 %v6509, 126
    %v6611 = vpop.permute.xlu0 %6610
    %6612 = vrot.lane.b32.xlu0 %v6510, 126
    %v6613 = vpop.permute.xlu0 %6612
    %6614 = vrot.lane.b32.xlu0 %v6511, 126
    %v6615 = vpop.permute.xlu0 %6614
    %6616 = vrot.lane.b32.xlu0 %v6512, 126
    %v6617 = vpop.permute.xlu0 %6616
    %6618 = vrot.lane.b32.xlu0 %v6513, 126
    %v6619 = vpop.permute.xlu0 %6618
    %6620 = vrot.lane.b32.xlu0 %v6514, 126
    %v6621 = vpop.permute.xlu0 %6620
    %6622 = vrot.lane.b32.xlu0 %v6515, 126
    %v6623 = vpop.permute.xlu0 %6622
    %6624 = vrot.lane.b32.xlu0 %v6516, 126
    %v6625 = vpop.permute.xlu0 %6624
    %6626 = vrot.lane.b32.xlu0 %v6517, 126
    %v6627 = vpop.permute.xlu0 %6626
    %6628 = vrot.lane.b32.xlu0 %v6518, 126
    %v6629 = vpop.permute.xlu0 %6628
    %6630 = vrot.lane.b32.xlu0 %v6519, 126
    %v6631 = vpop.permute.xlu0 %6630
    %v6648 = vadd.f32 %v6584, %v6601
    %v6649 = vadd.f32 %v6585, %v6603
    %v6650 = vadd.f32 %v6586, %v6605
    %v6651 = vadd.f32 %v6587, %v6607
    %v6652 = vadd.f32 %v6588, %v6609
    %v6653 = vadd.f32 %v6589, %v6611
    %v6654 = vadd.f32 %v6590, %v6613
    %v6655 = vadd.f32 %v6591, %v6615
    %v6656 = vadd.f32 %v6592, %v6617
    %v6657 = vadd.f32 %v6593, %v6619
    %v6658 = vadd.f32 %v6594, %v6621
    %v6659 = vadd.f32 %v6595, %v6623
    %v6660 = vadd.f32 %v6596, %v6625
    %v6661 = vadd.f32 %v6597, %v6627
    %v6662 = vadd.f32 %v6598, %v6629
    %v6663 = vadd.f32 %v6599, %v6631
    %v6664 = vmax.f32 %v6648, 1e-24
    %v6665 = vmax.f32 %v6649, 1e-24
    %v6666 = vmax.f32 %v6650, 1e-24
    %v6667 = vmax.f32 %v6651, 1e-24
    %v6668 = vmax.f32 %v6652, 1e-24
    %v6669 = vmax.f32 %v6653, 1e-24
    %v6670 = vmax.f32 %v6654, 1e-24
    %v6671 = vmax.f32 %v6655, 1e-24
    %v6672 = vmax.f32 %v6656, 1e-24
    %v6673 = vmax.f32 %v6657, 1e-24
    %v6674 = vmax.f32 %v6658, 1e-24
    %v6675 = vmax.f32 %v6659, 1e-24
    %v6676 = vmax.f32 %v6660, 1e-24
    %v6677 = vmax.f32 %v6661, 1e-24
    %v6678 = vmax.f32 %v6662, 1e-24
    %v6679 = vmax.f32 %v6663, 1e-24
    %v6680 = vrsqrt.pop %v6664
    %v6681 = vmul.f32 %v6680, %v6664
    %v6682 = vmul.f32 %v6681, %v6680
    %v6683 = vmul.f32 0.5, %v6682
    %v6684 = vsub.f32 1.5, %v6683
    %v6685 = vmul.f32 %v6680, %v6684
    %vm6686 = vweird.f32 %v6664
    %vm6687 = vweird.f32 %v6680
    %vm6688 = vmor %vm6686, %vm6687
    %v6689 = vsel %vm6688, %v6680, %v6685
    %v6690 = vrsqrt.pop %v6665
    %v6691 = vmul.f32 %v6690, %v6665
    %v6692 = vmul.f32 %v6691, %v6690
    %v6693 = vmul.f32 0.5, %v6692
    %v6694 = vsub.f32 1.5, %v6693
    %v6695 = vmul.f32 %v6690, %v6694
    %vm6696 = vweird.f32 %v6665
    %vm6697 = vweird.f32 %v6690
    %vm6698 = vmor %vm6696, %vm6697
    %v6699 = vsel %vm6698, %v6690, %v6695
    %v6700 = vrsqrt.pop %v6666
    %v6701 = vmul.f32 %v6700, %v6666
    %v6702 = vmul.f32 %v6701, %v6700
    %v6703 = vmul.f32 0.5, %v6702
    %v6704 = vsub.f32 1.5, %v6703
    %v6705 = vmul.f32 %v6700, %v6704
    %vm6706 = vweird.f32 %v6666
    %vm6707 = vweird.f32 %v6700
    %vm6708 = vmor %vm6706, %vm6707
    %v6709 = vsel %vm6708, %v6700, %v6705
    %v6710 = vrsqrt.pop %v6667
    %v6711 = vmul.f32 %v6710, %v6667
    %v6712 = vmul.f32 %v6711, %v6710
    %v6713 = vmul.f32 0.5, %v6712
    %v6714 = vsub.f32 1.5, %v6713
    %v6715 = vmul.f32 %v6710, %v6714
    %vm6716 = vweird.f32 %v6667
    %vm6717 = vweird.f32 %v6710
    %vm6718 = vmor %vm6716, %vm6717
    %v6719 = vsel %vm6718, %v6710, %v6715
    %v6720 = vrsqrt.pop %v6668
    %v6721 = vmul.f32 %v6720, %v6668
    %v6722 = vmul.f32 %v6721, %v6720
    %v6723 = vmul.f32 0.5, %v6722
    %v6724 = vsub.f32 1.5, %v6723
    %v6725 = vmul.f32 %v6720, %v6724
    %vm6726 = vweird.f32 %v6668
    %vm6727 = vweird.f32 %v6720
    %vm6728 = vmor %vm6726, %vm6727
    %v6729 = vsel %vm6728, %v6720, %v6725
    %v6730 = vrsqrt.pop %v6669
    %v6731 = vmul.f32 %v6730, %v6669
    %v6732 = vmul.f32 %v6731, %v6730
    %v6733 = vmul.f32 0.5, %v6732
    %v6734 = vsub.f32 1.5, %v6733
    %v6735 = vmul.f32 %v6730, %v6734
    %vm6736 = vweird.f32 %v6669
    %vm6737 = vweird.f32 %v6730
    %vm6738 = vmor %vm6736, %vm6737
    %v6739 = vsel %vm6738, %v6730, %v6735
    %v6740 = vrsqrt.pop %v6670
    %v6741 = vmul.f32 %v6740, %v6670
    %v6742 = vmul.f32 %v6741, %v6740
    %v6743 = vmul.f32 0.5, %v6742
    %v6744 = vsub.f32 1.5, %v6743
    %v6745 = vmul.f32 %v6740, %v6744
    %vm6746 = vweird.f32 %v6670
    %vm6747 = vweird.f32 %v6740
    %vm6748 = vmor %vm6746, %vm6747
    %v6749 = vsel %vm6748, %v6740, %v6745
    %v6750 = vrsqrt.pop %v6671
    %v6751 = vmul.f32 %v6750, %v6671
    %v6752 = vmul.f32 %v6751, %v6750
    %v6753 = vmul.f32 0.5, %v6752
    %v6754 = vsub.f32 1.5, %v6753
    %v6755 = vmul.f32 %v6750, %v6754
    %vm6756 = vweird.f32 %v6671
    %vm6757 = vweird.f32 %v6750
    %vm6758 = vmor %vm6756, %vm6757
    %v6759 = vsel %vm6758, %v6750, %v6755
    %v6760 = vrsqrt.pop %v6672
    %v6761 = vmul.f32 %v6760, %v6672
    %v6762 = vmul.f32 %v6761, %v6760
    %v6763 = vmul.f32 0.5, %v6762
    %v6764 = vsub.f32 1.5, %v6763
    %v6765 = vmul.f32 %v6760, %v6764
    %vm6766 = vweird.f32 %v6672
    %vm6767 = vweird.f32 %v6760
    %vm6768 = vmor %vm6766, %vm6767
    %v6769 = vsel %vm6768, %v6760, %v6765
    %v6770 = vrsqrt.pop %v6673
    %v6771 = vmul.f32 %v6770, %v6673
    %v6772 = vmul.f32 %v6771, %v6770
    %v6773 = vmul.f32 0.5, %v6772
    %v6774 = vsub.f32 1.5, %v6773
    %v6775 = vmul.f32 %v6770, %v6774
    %vm6776 = vweird.f32 %v6673
    %vm6777 = vweird.f32 %v6770
    %vm6778 = vmor %vm6776, %vm6777
    %v6779 = vsel %vm6778, %v6770, %v6775
    %v6780 = vrsqrt.pop %v6674
    %v6781 = vmul.f32 %v6780, %v6674
    %v6782 = vmul.f32 %v6781, %v6780
    %v6783 = vmul.f32 0.5, %v6782
    %v6784 = vsub.f32 1.5, %v6783
    %v6785 = vmul.f32 %v6780, %v6784
    %vm6786 = vweird.f32 %v6674
    %vm6787 = vweird.f32 %v6780
    %vm6788 = vmor %vm6786, %vm6787
    %v6789 = vsel %vm6788, %v6780, %v6785
    %v6790 = vrsqrt.pop %v6675
    %v6791 = vmul.f32 %v6790, %v6675
    %v6792 = vmul.f32 %v6791, %v6790
    %v6793 = vmul.f32 0.5, %v6792
    %v6794 = vsub.f32 1.5, %v6793
    %v6795 = vmul.f32 %v6790, %v6794
    %vm6796 = vweird.f32 %v6675
    %vm6797 = vweird.f32 %v6790
    %vm6798 = vmor %vm6796, %vm6797
    %v6799 = vsel %vm6798, %v6790, %v6795
    %v6800 = vrsqrt.pop %v6676
    %v6801 = vmul.f32 %v6800, %v6676
    %v6802 = vmul.f32 %v6801, %v6800
    %v6803 = vmul.f32 0.5, %v6802
    %v6804 = vsub.f32 1.5, %v6803
    %v6805 = vmul.f32 %v6800, %v6804
    %vm6806 = vweird.f32 %v6676
    %vm6807 = vweird.f32 %v6800
    %vm6808 = vmor %vm6806, %vm6807
    %v6809 = vsel %vm6808, %v6800, %v6805
    %v6810 = vrsqrt.pop %v6677
    %v6811 = vmul.f32 %v6810, %v6677
    %v6812 = vmul.f32 %v6811, %v6810
    %v6813 = vmul.f32 0.5, %v6812
    %v6814 = vsub.f32 1.5, %v6813
    %v6815 = vmul.f32 %v6810, %v6814
    %vm6816 = vweird.f32 %v6677
    %vm6817 = vweird.f32 %v6810
    %vm6818 = vmor %vm6816, %vm6817
    %v6819 = vsel %vm6818, %v6810, %v6815
    %v6820 = vrsqrt.pop %v6678
    %v6821 = vmul.f32 %v6820, %v6678
    %v6822 = vmul.f32 %v6821, %v6820
    %v6823 = vmul.f32 0.5, %v6822
    %v6824 = vsub.f32 1.5, %v6823
    %v6825 = vmul.f32 %v6820, %v6824
    %vm6826 = vweird.f32 %v6678
    %vm6827 = vweird.f32 %v6820
    %vm6828 = vmor %vm6826, %vm6827
    %v6829 = vsel %vm6828, %v6820, %v6825
    %v6830 = vrsqrt.pop %v6679
    %v6831 = vmul.f32 %v6830, %v6679
    %v6832 = vmul.f32 %v6831, %v6830
    %v6833 = vmul.f32 0.5, %v6832
    %v6834 = vsub.f32 1.5, %v6833
    %v6835 = vmul.f32 %v6830, %v6834
    %vm6836 = vweird.f32 %v6679
    %vm6837 = vweird.f32 %v6830
    %vm6838 = vmor %vm6836, %vm6837
    %v6839 = vsel %vm6838, %v6830, %v6835
    %6841 = vset.pattern.permute.xlu0 0
    %6842 = vperm.xlu0 %6841, %v6689
    %v6843 = vpop.permute.xlu0 %6842
    %6846 = vset.pattern.permute.xlu0 0
    %6847 = vperm.xlu0 %6846, %v6699
    %v6848 = vpop.permute.xlu0 %6847
    %6851 = vset.pattern.permute.xlu0 0
    %6852 = vperm.xlu0 %6851, %v6709
    %v6853 = vpop.permute.xlu0 %6852
    %6856 = vset.pattern.permute.xlu0 0
    %6857 = vperm.xlu0 %6856, %v6719
    %v6858 = vpop.permute.xlu0 %6857
    %6861 = vset.pattern.permute.xlu0 0
    %6862 = vperm.xlu0 %6861, %v6729
    %v6863 = vpop.permute.xlu0 %6862
    %6866 = vset.pattern.permute.xlu0 0
    %6867 = vperm.xlu0 %6866, %v6739
    %v6868 = vpop.permute.xlu0 %6867
    %6871 = vset.pattern.permute.xlu0 0
    %6872 = vperm.xlu0 %6871, %v6749
    %v6873 = vpop.permute.xlu0 %6872
    %6876 = vset.pattern.permute.xlu0 0
    %6877 = vperm.xlu0 %6876, %v6759
    %v6878 = vpop.permute.xlu0 %6877
    %6881 = vset.pattern.permute.xlu0 0
    %6882 = vperm.xlu0 %6881, %v6769
    %v6883 = vpop.permute.xlu0 %6882
    %6886 = vset.pattern.permute.xlu0 0
    %6887 = vperm.xlu0 %6886, %v6779
    %v6888 = vpop.permute.xlu0 %6887
    %6891 = vset.pattern.permute.xlu0 0
    %6892 = vperm.xlu0 %6891, %v6789
    %v6893 = vpop.permute.xlu0 %6892
    %6896 = vset.pattern.permute.xlu0 0
    %6897 = vperm.xlu0 %6896, %v6799
    %v6898 = vpop.permute.xlu0 %6897
    %6901 = vset.pattern.permute.xlu0 0
    %6902 = vperm.xlu0 %6901, %v6809
    %v6903 = vpop.permute.xlu0 %6902
    %6906 = vset.pattern.permute.xlu0 0
    %6907 = vperm.xlu0 %6906, %v6819
    %v6908 = vpop.permute.xlu0 %6907
    %6911 = vset.pattern.permute.xlu0 0
    %6912 = vperm.xlu0 %6911, %v6829
    %v6913 = vpop.permute.xlu0 %6912
    %6916 = vset.pattern.permute.xlu0 0
    %6917 = vperm.xlu0 %6916, %v6839
    %v6918 = vpop.permute.xlu0 %6917
    %v6920 = vmul.f32 %v6468, %v6843
    %v6921 = vmul.f32 %v6469, %v6848
    %v6922 = vmul.f32 %v6470, %v6853
    %v6923 = vmul.f32 %v6471, %v6858
    %v6924 = vmul.f32 %v6472, %v6863
    %v6925 = vmul.f32 %v6473, %v6868
    %v6926 = vmul.f32 %v6474, %v6873
    %v6927 = vmul.f32 %v6475, %v6878
    %v6928 = vmul.f32 %v6476, %v6883
    %v6929 = vmul.f32 %v6477, %v6888
    %v6930 = vmul.f32 %v6478, %v6893
    %v6931 = vmul.f32 %v6479, %v6898
    %v6932 = vmul.f32 %v6480, %v6903
    %v6933 = vmul.f32 %v6481, %v6908
    %v6934 = vmul.f32 %v6482, %v6913
    %v6935 = vmul.f32 %v6483, %v6918
    %v6936 = vmul.f32 %v6488, %v6488
    %v6937 = vmul.f32 %v6489, %v6489
    %v6938 = vmul.f32 %v6490, %v6490
    %v6939 = vmul.f32 %v6491, %v6491
    %v6940 = vmul.f32 %v6492, %v6492
    %v6941 = vmul.f32 %v6493, %v6493
    %v6942 = vmul.f32 %v6494, %v6494
    %v6943 = vmul.f32 %v6495, %v6495
    %v6944 = vmul.f32 %v6496, %v6496
    %v6945 = vmul.f32 %v6497, %v6497
    %v6946 = vmul.f32 %v6498, %v6498
    %v6947 = vmul.f32 %v6499, %v6499
    %v6948 = vmul.f32 %v6500, %v6500
    %v6949 = vmul.f32 %v6501, %v6501
    %v6950 = vmul.f32 %v6502, %v6502
    %v6951 = vmul.f32 %v6503, %v6503
    %6968 = vrot.lane.b32.xlu0 %v6936, 127
    %v6969 = vpop.permute.xlu0 %6968
    %6970 = vrot.lane.b32.xlu0 %v6937, 127
    %v6971 = vpop.permute.xlu0 %6970
    %6972 = vrot.lane.b32.xlu0 %v6938, 127
    %v6973 = vpop.permute.xlu0 %6972
    %6974 = vrot.lane.b32.xlu0 %v6939, 127
    %v6975 = vpop.permute.xlu0 %6974
    %6976 = vrot.lane.b32.xlu0 %v6940, 127
    %v6977 = vpop.permute.xlu0 %6976
    %6978 = vrot.lane.b32.xlu0 %v6941, 127
    %v6979 = vpop.permute.xlu0 %6978
    %6980 = vrot.lane.b32.xlu0 %v6942, 127
    %v6981 = vpop.permute.xlu0 %6980
    %6982 = vrot.lane.b32.xlu0 %v6943, 127
    %v6983 = vpop.permute.xlu0 %6982
    %6984 = vrot.lane.b32.xlu0 %v6944, 127
    %v6985 = vpop.permute.xlu0 %6984
    %6986 = vrot.lane.b32.xlu0 %v6945, 127
    %v6987 = vpop.permute.xlu0 %6986
    %6988 = vrot.lane.b32.xlu0 %v6946, 127
    %v6989 = vpop.permute.xlu0 %6988
    %6990 = vrot.lane.b32.xlu0 %v6947, 127
    %v6991 = vpop.permute.xlu0 %6990
    %6992 = vrot.lane.b32.xlu0 %v6948, 127
    %v6993 = vpop.permute.xlu0 %6992
    %6994 = vrot.lane.b32.xlu0 %v6949, 127
    %v6995 = vpop.permute.xlu0 %6994
    %6996 = vrot.lane.b32.xlu0 %v6950, 127
    %v6997 = vpop.permute.xlu0 %6996
    %6998 = vrot.lane.b32.xlu0 %v6951, 127
    %v6999 = vpop.permute.xlu0 %6998
    %v7016 = vadd.f32 %v6936, %v6969
    %v7017 = vadd.f32 %v6937, %v6971
    %v7018 = vadd.f32 %v6938, %v6973
    %v7019 = vadd.f32 %v6939, %v6975
    %v7020 = vadd.f32 %v6940, %v6977
    %v7021 = vadd.f32 %v6941, %v6979
    %v7022 = vadd.f32 %v6942, %v6981
    %v7023 = vadd.f32 %v6943, %v6983
    %v7024 = vadd.f32 %v6944, %v6985
    %v7025 = vadd.f32 %v6945, %v6987
    %v7026 = vadd.f32 %v6946, %v6989
    %v7027 = vadd.f32 %v6947, %v6991
    %v7028 = vadd.f32 %v6948, %v6993
    %v7029 = vadd.f32 %v6949, %v6995
    %v7030 = vadd.f32 %v6950, %v6997
    %v7031 = vadd.f32 %v6951, %v6999
    %7032 = vrot.lane.b32.xlu0 %v6936, 126
    %v7033 = vpop.permute.xlu0 %7032
    %7034 = vrot.lane.b32.xlu0 %v6937, 126
    %v7035 = vpop.permute.xlu0 %7034
    %7036 = vrot.lane.b32.xlu0 %v6938, 126
    %v7037 = vpop.permute.xlu0 %7036
    %7038 = vrot.lane.b32.xlu0 %v6939, 126
    %v7039 = vpop.permute.xlu0 %7038
    %7040 = vrot.lane.b32.xlu0 %v6940, 126
    %v7041 = vpop.permute.xlu0 %7040
    %7042 = vrot.lane.b32.xlu0 %v6941, 126
    %v7043 = vpop.permute.xlu0 %7042
    %7044 = vrot.lane.b32.xlu0 %v6942, 126
    %v7045 = vpop.permute.xlu0 %7044
    %7046 = vrot.lane.b32.xlu0 %v6943, 126
    %v7047 = vpop.permute.xlu0 %7046
    %7048 = vrot.lane.b32.xlu0 %v6944, 126
    %v7049 = vpop.permute.xlu0 %7048
    %7050 = vrot.lane.b32.xlu0 %v6945, 126
    %v7051 = vpop.permute.xlu0 %7050
    %7052 = vrot.lane.b32.xlu0 %v6946, 126
    %v7053 = vpop.permute.xlu0 %7052
    %7054 = vrot.lane.b32.xlu0 %v6947, 126
    %v7055 = vpop.permute.xlu0 %7054
    %7056 = vrot.lane.b32.xlu0 %v6948, 126
    %v7057 = vpop.permute.xlu0 %7056
    %7058 = vrot.lane.b32.xlu0 %v6949, 126
    %v7059 = vpop.permute.xlu0 %7058
    %7060 = vrot.lane.b32.xlu0 %v6950, 126
    %v7061 = vpop.permute.xlu0 %7060
    %7062 = vrot.lane.b32.xlu0 %v6951, 126
    %v7063 = vpop.permute.xlu0 %7062
    %v7080 = vadd.f32 %v7016, %v7033
    %v7081 = vadd.f32 %v7017, %v7035
    %v7082 = vadd.f32 %v7018, %v7037
    %v7083 = vadd.f32 %v7019, %v7039
    %v7084 = vadd.f32 %v7020, %v7041
    %v7085 = vadd.f32 %v7021, %v7043
    %v7086 = vadd.f32 %v7022, %v7045
    %v7087 = vadd.f32 %v7023, %v7047
    %v7088 = vadd.f32 %v7024, %v7049
    %v7089 = vadd.f32 %v7025, %v7051
    %v7090 = vadd.f32 %v7026, %v7053
    %v7091 = vadd.f32 %v7027, %v7055
    %v7092 = vadd.f32 %v7028, %v7057
    %v7093 = vadd.f32 %v7029, %v7059
    %v7094 = vadd.f32 %v7030, %v7061
    %v7095 = vadd.f32 %v7031, %v7063
    %v7096 = vmax.f32 %v7080, 1e-24
    %v7097 = vmax.f32 %v7081, 1e-24
    %v7098 = vmax.f32 %v7082, 1e-24
    %v7099 = vmax.f32 %v7083, 1e-24
    %v7100 = vmax.f32 %v7084, 1e-24
    %v7101 = vmax.f32 %v7085, 1e-24
    %v7102 = vmax.f32 %v7086, 1e-24
    %v7103 = vmax.f32 %v7087, 1e-24
    %v7104 = vmax.f32 %v7088, 1e-24
    %v7105 = vmax.f32 %v7089, 1e-24
    %v7106 = vmax.f32 %v7090, 1e-24
    %v7107 = vmax.f32 %v7091, 1e-24
    %v7108 = vmax.f32 %v7092, 1e-24
    %v7109 = vmax.f32 %v7093, 1e-24
    %v7110 = vmax.f32 %v7094, 1e-24
    %v7111 = vmax.f32 %v7095, 1e-24
    %v7112 = vrsqrt.pop %v7096
    %v7113 = vmul.f32 %v7112, %v7096
    %v7114 = vmul.f32 %v7113, %v7112
    %v7115 = vmul.f32 0.5, %v7114
    %v7116 = vsub.f32 1.5, %v7115
    %v7117 = vmul.f32 %v7112, %v7116
    %vm7118 = vweird.f32 %v7096
    %vm7119 = vweird.f32 %v7112
    %vm7120 = vmor %vm7118, %vm7119
    %v7121 = vsel %vm7120, %v7112, %v7117
    %v7122 = vrsqrt.pop %v7097
    %v7123 = vmul.f32 %v7122, %v7097
    %v7124 = vmul.f32 %v7123, %v7122
    %v7125 = vmul.f32 0.5, %v7124
    %v7126 = vsub.f32 1.5, %v7125
    %v7127 = vmul.f32 %v7122, %v7126
    %vm7128 = vweird.f32 %v7097
    %vm7129 = vweird.f32 %v7122
    %vm7130 = vmor %vm7128, %vm7129
    %v7131 = vsel %vm7130, %v7122, %v7127
    %v7132 = vrsqrt.pop %v7098
    %v7133 = vmul.f32 %v7132, %v7098
    %v7134 = vmul.f32 %v7133, %v7132
    %v7135 = vmul.f32 0.5, %v7134
    %v7136 = vsub.f32 1.5, %v7135
    %v7137 = vmul.f32 %v7132, %v7136
    %vm7138 = vweird.f32 %v7098
    %vm7139 = vweird.f32 %v7132
    %vm7140 = vmor %vm7138, %vm7139
    %v7141 = vsel %vm7140, %v7132, %v7137
    %v7142 = vrsqrt.pop %v7099
    %v7143 = vmul.f32 %v7142, %v7099
    %v7144 = vmul.f32 %v7143, %v7142
    %v7145 = vmul.f32 0.5, %v7144
    %v7146 = vsub.f32 1.5, %v7145
    %v7147 = vmul.f32 %v7142, %v7146
    %vm7148 = vweird.f32 %v7099
    %vm7149 = vweird.f32 %v7142
    %vm7150 = vmor %vm7148, %vm7149
    %v7151 = vsel %vm7150, %v7142, %v7147
    %v7152 = vrsqrt.pop %v7100
    %v7153 = vmul.f32 %v7152, %v7100
    %v7154 = vmul.f32 %v7153, %v7152
    %v7155 = vmul.f32 0.5, %v7154
    %v7156 = vsub.f32 1.5, %v7155
    %v7157 = vmul.f32 %v7152, %v7156
    %vm7158 = vweird.f32 %v7100
    %vm7159 = vweird.f32 %v7152
    %vm7160 = vmor %vm7158, %vm7159
    %v7161 = vsel %vm7160, %v7152, %v7157
    %v7162 = vrsqrt.pop %v7101
    %v7163 = vmul.f32 %v7162, %v7101
    %v7164 = vmul.f32 %v7163, %v7162
    %v7165 = vmul.f32 0.5, %v7164
    %v7166 = vsub.f32 1.5, %v7165
    %v7167 = vmul.f32 %v7162, %v7166
    %vm7168 = vweird.f32 %v7101
    %vm7169 = vweird.f32 %v7162
    %vm7170 = vmor %vm7168, %vm7169
    %v7171 = vsel %vm7170, %v7162, %v7167
    %v7172 = vrsqrt.pop %v7102
    %v7173 = vmul.f32 %v7172, %v7102
    %v7174 = vmul.f32 %v7173, %v7172
    %v7175 = vmul.f32 0.5, %v7174
    %v7176 = vsub.f32 1.5, %v7175
    %v7177 = vmul.f32 %v7172, %v7176
    %vm7178 = vweird.f32 %v7102
    %vm7179 = vweird.f32 %v7172
    %vm7180 = vmor %vm7178, %vm7179
    %v7181 = vsel %vm7180, %v7172, %v7177
    %v7182 = vrsqrt.pop %v7103
    %v7183 = vmul.f32 %v7182, %v7103
    %v7184 = vmul.f32 %v7183, %v7182
    %v7185 = vmul.f32 0.5, %v7184
    %v7186 = vsub.f32 1.5, %v7185
    %v7187 = vmul.f32 %v7182, %v7186
    %vm7188 = vweird.f32 %v7103
    %vm7189 = vweird.f32 %v7182
    %vm7190 = vmor %vm7188, %vm7189
    %v7191 = vsel %vm7190, %v7182, %v7187
    %v7192 = vrsqrt.pop %v7104
    %v7193 = vmul.f32 %v7192, %v7104
    %v7194 = vmul.f32 %v7193, %v7192
    %v7195 = vmul.f32 0.5, %v7194
    %v7196 = vsub.f32 1.5, %v7195
    %v7197 = vmul.f32 %v7192, %v7196
    %vm7198 = vweird.f32 %v7104
    %vm7199 = vweird.f32 %v7192
    %vm7200 = vmor %vm7198, %vm7199
    %v7201 = vsel %vm7200, %v7192, %v7197
    %v7202 = vrsqrt.pop %v7105
    %v7203 = vmul.f32 %v7202, %v7105
    %v7204 = vmul.f32 %v7203, %v7202
    %v7205 = vmul.f32 0.5, %v7204
    %v7206 = vsub.f32 1.5, %v7205
    %v7207 = vmul.f32 %v7202, %v7206
    %vm7208 = vweird.f32 %v7105
    %vm7209 = vweird.f32 %v7202
    %vm7210 = vmor %vm7208, %vm7209
    %v7211 = vsel %vm7210, %v7202, %v7207
    %v7212 = vrsqrt.pop %v7106
    %v7213 = vmul.f32 %v7212, %v7106
    %v7214 = vmul.f32 %v7213, %v7212
    %v7215 = vmul.f32 0.5, %v7214
    %v7216 = vsub.f32 1.5, %v7215
    %v7217 = vmul.f32 %v7212, %v7216
    %vm7218 = vweird.f32 %v7106
    %vm7219 = vweird.f32 %v7212
    %vm7220 = vmor %vm7218, %vm7219
    %v7221 = vsel %vm7220, %v7212, %v7217
    %v7222 = vrsqrt.pop %v7107
    %v7223 = vmul.f32 %v7222, %v7107
    %v7224 = vmul.f32 %v7223, %v7222
    %v7225 = vmul.f32 0.5, %v7224
    %v7226 = vsub.f32 1.5, %v7225
    %v7227 = vmul.f32 %v7222, %v7226
    %vm7228 = vweird.f32 %v7107
    %vm7229 = vweird.f32 %v7222
    %vm7230 = vmor %vm7228, %vm7229
    %v7231 = vsel %vm7230, %v7222, %v7227
    %v7232 = vrsqrt.pop %v7108
    %v7233 = vmul.f32 %v7232, %v7108
    %v7234 = vmul.f32 %v7233, %v7232
    %v7235 = vmul.f32 0.5, %v7234
    %v7236 = vsub.f32 1.5, %v7235
    %v7237 = vmul.f32 %v7232, %v7236
    %vm7238 = vweird.f32 %v7108
    %vm7239 = vweird.f32 %v7232
    %vm7240 = vmor %vm7238, %vm7239
    %v7241 = vsel %vm7240, %v7232, %v7237
    %v7242 = vrsqrt.pop %v7109
    %v7243 = vmul.f32 %v7242, %v7109
    %v7244 = vmul.f32 %v7243, %v7242
    %v7245 = vmul.f32 0.5, %v7244
    %v7246 = vsub.f32 1.5, %v7245
    %v7247 = vmul.f32 %v7242, %v7246
    %vm7248 = vweird.f32 %v7109
    %vm7249 = vweird.f32 %v7242
    %vm7250 = vmor %vm7248, %vm7249
    %v7251 = vsel %vm7250, %v7242, %v7247
    %v7252 = vrsqrt.pop %v7110
    %v7253 = vmul.f32 %v7252, %v7110
    %v7254 = vmul.f32 %v7253, %v7252
    %v7255 = vmul.f32 0.5, %v7254
    %v7256 = vsub.f32 1.5, %v7255
    %v7257 = vmul.f32 %v7252, %v7256
    %vm7258 = vweird.f32 %v7110
    %vm7259 = vweird.f32 %v7252
    %vm7260 = vmor %vm7258, %vm7259
    %v7261 = vsel %vm7260, %v7252, %v7257
    %v7262 = vrsqrt.pop %v7111
    %v7263 = vmul.f32 %v7262, %v7111
    %v7264 = vmul.f32 %v7263, %v7262
    %v7265 = vmul.f32 0.5, %v7264
    %v7266 = vsub.f32 1.5, %v7265
    %v7267 = vmul.f32 %v7262, %v7266
    %vm7268 = vweird.f32 %v7111
    %vm7269 = vweird.f32 %v7262
    %vm7270 = vmor %vm7268, %vm7269
    %v7271 = vsel %vm7270, %v7262, %v7267
    %7273 = vset.pattern.permute.xlu0 0
    %7274 = vperm.xlu0 %7273, %v7121
    %v7275 = vpop.permute.xlu0 %7274
    %7278 = vset.pattern.permute.xlu0 0
    %7279 = vperm.xlu0 %7278, %v7131
    %v7280 = vpop.permute.xlu0 %7279
    %7283 = vset.pattern.permute.xlu0 0
    %7284 = vperm.xlu0 %7283, %v7141
    %v7285 = vpop.permute.xlu0 %7284
    %7288 = vset.pattern.permute.xlu0 0
    %7289 = vperm.xlu0 %7288, %v7151
    %v7290 = vpop.permute.xlu0 %7289
    %7293 = vset.pattern.permute.xlu0 0
    %7294 = vperm.xlu0 %7293, %v7161
    %v7295 = vpop.permute.xlu0 %7294
    %7298 = vset.pattern.permute.xlu0 0
    %7299 = vperm.xlu0 %7298, %v7171
    %v7300 = vpop.permute.xlu0 %7299
    %7303 = vset.pattern.permute.xlu0 0
    %7304 = vperm.xlu0 %7303, %v7181
    %v7305 = vpop.permute.xlu0 %7304
    %7308 = vset.pattern.permute.xlu0 0
    %7309 = vperm.xlu0 %7308, %v7191
    %v7310 = vpop.permute.xlu0 %7309
    %7313 = vset.pattern.permute.xlu0 0
    %7314 = vperm.xlu0 %7313, %v7201
    %v7315 = vpop.permute.xlu0 %7314
    %7318 = vset.pattern.permute.xlu0 0
    %7319 = vperm.xlu0 %7318, %v7211
    %v7320 = vpop.permute.xlu0 %7319
    %7323 = vset.pattern.permute.xlu0 0
    %7324 = vperm.xlu0 %7323, %v7221
    %v7325 = vpop.permute.xlu0 %7324
    %7328 = vset.pattern.permute.xlu0 0
    %7329 = vperm.xlu0 %7328, %v7231
    %v7330 = vpop.permute.xlu0 %7329
    %7333 = vset.pattern.permute.xlu0 0
    %7334 = vperm.xlu0 %7333, %v7241
    %v7335 = vpop.permute.xlu0 %7334
    %7338 = vset.pattern.permute.xlu0 0
    %7339 = vperm.xlu0 %7338, %v7251
    %v7340 = vpop.permute.xlu0 %7339
    %7343 = vset.pattern.permute.xlu0 0
    %7344 = vperm.xlu0 %7343, %v7261
    %v7345 = vpop.permute.xlu0 %7344
    %7348 = vset.pattern.permute.xlu0 0
    %7349 = vperm.xlu0 %7348, %v7271
    %v7350 = vpop.permute.xlu0 %7349
    %v7352 = vmul.f32 %v6488, %v7275
    %v7353 = vmul.f32 %v6489, %v7280
    %v7354 = vmul.f32 %v6490, %v7285
    %v7355 = vmul.f32 %v6491, %v7290
    %v7356 = vmul.f32 %v6492, %v7295
    %v7357 = vmul.f32 %v6493, %v7300
    %v7358 = vmul.f32 %v6494, %v7305
    %v7359 = vmul.f32 %v6495, %v7310
    %v7360 = vmul.f32 %v6496, %v7315
    %v7361 = vmul.f32 %v6497, %v7320
    %v7362 = vmul.f32 %v6498, %v7325
    %v7363 = vmul.f32 %v6499, %v7330
    %v7364 = vmul.f32 %v6500, %v7335
    %v7365 = vmul.f32 %v6501, %v7340
    %v7366 = vmul.f32 %v6502, %v7345
    %v7367 = vmul.f32 %v6503, %v7350
    %v7368 = vmul.f32 %v6432, %v6432
    %v7369 = vmul.f32 %v6433, %v6433
    %v7370 = vmul.f32 %v6434, %v6434
    %v7371 = vmul.f32 %v6435, %v6435
    %v7372 = vmul.f32 %v6436, %v6436
    %v7373 = vmul.f32 %v6437, %v6437
    %v7374 = vmul.f32 %v6438, %v6438
    %v7375 = vmul.f32 %v6439, %v6439
    %v7376 = vmul.f32 %v6440, %v6440
    %v7377 = vmul.f32 %v6441, %v6441
    %v7378 = vmul.f32 %v6442, %v6442
    %v7379 = vmul.f32 %v6443, %v6443
    %v7380 = vmul.f32 %v6444, %v6444
    %v7381 = vmul.f32 %v6445, %v6445
    %v7382 = vmul.f32 %v6446, %v6446
    %v7383 = vmul.f32 %v6447, %v6447
    %7400 = vrot.lane.b32.xlu0 %v7368, 127
    %v7401 = vpop.permute.xlu0 %7400
    %7402 = vrot.lane.b32.xlu0 %v7369, 127
    %v7403 = vpop.permute.xlu0 %7402
    %7404 = vrot.lane.b32.xlu0 %v7370, 127
    %v7405 = vpop.permute.xlu0 %7404
    %7406 = vrot.lane.b32.xlu0 %v7371, 127
    %v7407 = vpop.permute.xlu0 %7406
    %7408 = vrot.lane.b32.xlu0 %v7372, 127
    %v7409 = vpop.permute.xlu0 %7408
    %7410 = vrot.lane.b32.xlu0 %v7373, 127
    %v7411 = vpop.permute.xlu0 %7410
    %7412 = vrot.lane.b32.xlu0 %v7374, 127
    %v7413 = vpop.permute.xlu0 %7412
    %7414 = vrot.lane.b32.xlu0 %v7375, 127
    %v7415 = vpop.permute.xlu0 %7414
    %7416 = vrot.lane.b32.xlu0 %v7376, 127
    %v7417 = vpop.permute.xlu0 %7416
    %7418 = vrot.lane.b32.xlu0 %v7377, 127
    %v7419 = vpop.permute.xlu0 %7418
    %7420 = vrot.lane.b32.xlu0 %v7378, 127
    %v7421 = vpop.permute.xlu0 %7420
    %7422 = vrot.lane.b32.xlu0 %v7379, 127
    %v7423 = vpop.permute.xlu0 %7422
    %7424 = vrot.lane.b32.xlu0 %v7380, 127
    %v7425 = vpop.permute.xlu0 %7424
    %7426 = vrot.lane.b32.xlu0 %v7381, 127
    %v7427 = vpop.permute.xlu0 %7426
    %7428 = vrot.lane.b32.xlu0 %v7382, 127
    %v7429 = vpop.permute.xlu0 %7428
    %7430 = vrot.lane.b32.xlu0 %v7383, 127
    %v7431 = vpop.permute.xlu0 %7430
    %v7448 = vadd.f32 %v7368, %v7401
    %v7449 = vadd.f32 %v7369, %v7403
    %v7450 = vadd.f32 %v7370, %v7405
    %v7451 = vadd.f32 %v7371, %v7407
    %v7452 = vadd.f32 %v7372, %v7409
    %v7453 = vadd.f32 %v7373, %v7411
    %v7454 = vadd.f32 %v7374, %v7413
    %v7455 = vadd.f32 %v7375, %v7415
    %v7456 = vadd.f32 %v7376, %v7417
    %v7457 = vadd.f32 %v7377, %v7419
    %v7458 = vadd.f32 %v7378, %v7421
    %v7459 = vadd.f32 %v7379, %v7423
    %v7460 = vadd.f32 %v7380, %v7425
    %v7461 = vadd.f32 %v7381, %v7427
    %v7462 = vadd.f32 %v7382, %v7429
    %v7463 = vadd.f32 %v7383, %v7431
    %7464 = vrot.lane.b32.xlu0 %v7368, 126
    %v7465 = vpop.permute.xlu0 %7464
    %7466 = vrot.lane.b32.xlu0 %v7369, 126
    %v7467 = vpop.permute.xlu0 %7466
    %7468 = vrot.lane.b32.xlu0 %v7370, 126
    %v7469 = vpop.permute.xlu0 %7468
    %7470 = vrot.lane.b32.xlu0 %v7371, 126
    %v7471 = vpop.permute.xlu0 %7470
    %7472 = vrot.lane.b32.xlu0 %v7372, 126
    %v7473 = vpop.permute.xlu0 %7472
    %7474 = vrot.lane.b32.xlu0 %v7373, 126
    %v7475 = vpop.permute.xlu0 %7474
    %7476 = vrot.lane.b32.xlu0 %v7374, 126
    %v7477 = vpop.permute.xlu0 %7476
    %7478 = vrot.lane.b32.xlu0 %v7375, 126
    %v7479 = vpop.permute.xlu0 %7478
    %7480 = vrot.lane.b32.xlu0 %v7376, 126
    %v7481 = vpop.permute.xlu0 %7480
    %7482 = vrot.lane.b32.xlu0 %v7377, 126
    %v7483 = vpop.permute.xlu0 %7482
    %7484 = vrot.lane.b32.xlu0 %v7378, 126
    %v7485 = vpop.permute.xlu0 %7484
    %7486 = vrot.lane.b32.xlu0 %v7379, 126
    %v7487 = vpop.permute.xlu0 %7486
    %7488 = vrot.lane.b32.xlu0 %v7380, 126
    %v7489 = vpop.permute.xlu0 %7488
    %7490 = vrot.lane.b32.xlu0 %v7381, 126
    %v7491 = vpop.permute.xlu0 %7490
    %7492 = vrot.lane.b32.xlu0 %v7382, 126
    %v7493 = vpop.permute.xlu0 %7492
    %7494 = vrot.lane.b32.xlu0 %v7383, 126
    %v7495 = vpop.permute.xlu0 %7494
    %v7512 = vadd.f32 %v7448, %v7465
    %v7513 = vadd.f32 %v7449, %v7467
    %v7514 = vadd.f32 %v7450, %v7469
    %v7515 = vadd.f32 %v7451, %v7471
    %v7516 = vadd.f32 %v7452, %v7473
    %v7517 = vadd.f32 %v7453, %v7475
    %v7518 = vadd.f32 %v7454, %v7477
    %v7519 = vadd.f32 %v7455, %v7479
    %v7520 = vadd.f32 %v7456, %v7481
    %v7521 = vadd.f32 %v7457, %v7483
    %v7522 = vadd.f32 %v7458, %v7485
    %v7523 = vadd.f32 %v7459, %v7487
    %v7524 = vadd.f32 %v7460, %v7489
    %v7525 = vadd.f32 %v7461, %v7491
    %v7526 = vadd.f32 %v7462, %v7493
    %v7527 = vadd.f32 %v7463, %v7495
    %v7528 = vmax.f32 %v7512, 1e-24
    %v7529 = vmax.f32 %v7513, 1e-24
    %v7530 = vmax.f32 %v7514, 1e-24
    %v7531 = vmax.f32 %v7515, 1e-24
    %v7532 = vmax.f32 %v7516, 1e-24
    %v7533 = vmax.f32 %v7517, 1e-24
    %v7534 = vmax.f32 %v7518, 1e-24
    %v7535 = vmax.f32 %v7519, 1e-24
    %v7536 = vmax.f32 %v7520, 1e-24
    %v7537 = vmax.f32 %v7521, 1e-24
    %v7538 = vmax.f32 %v7522, 1e-24
    %v7539 = vmax.f32 %v7523, 1e-24
    %v7540 = vmax.f32 %v7524, 1e-24
    %v7541 = vmax.f32 %v7525, 1e-24
    %v7542 = vmax.f32 %v7526, 1e-24
    %v7543 = vmax.f32 %v7527, 1e-24
    %v7544 = vrsqrt.pop %v7528
    %v7545 = vmul.f32 %v7544, %v7528
    %v7546 = vmul.f32 %v7545, %v7544
    %v7547 = vmul.f32 0.5, %v7546
    %v7548 = vsub.f32 1.5, %v7547
    %v7549 = vmul.f32 %v7544, %v7548
    %vm7550 = vweird.f32 %v7528
    %vm7551 = vweird.f32 %v7544
    %vm7552 = vmor %vm7550, %vm7551
    %v7553 = vsel %vm7552, %v7544, %v7549
    %v7554 = vrsqrt.pop %v7529
    %v7555 = vmul.f32 %v7554, %v7529
    %v7556 = vmul.f32 %v7555, %v7554
    %v7557 = vmul.f32 0.5, %v7556
    %v7558 = vsub.f32 1.5, %v7557
    %v7559 = vmul.f32 %v7554, %v7558
    %vm7560 = vweird.f32 %v7529
    %vm7561 = vweird.f32 %v7554
    %vm7562 = vmor %vm7560, %vm7561
    %v7563 = vsel %vm7562, %v7554, %v7559
    %v7564 = vrsqrt.pop %v7530
    %v7565 = vmul.f32 %v7564, %v7530
    %v7566 = vmul.f32 %v7565, %v7564
    %v7567 = vmul.f32 0.5, %v7566
    %v7568 = vsub.f32 1.5, %v7567
    %v7569 = vmul.f32 %v7564, %v7568
    %vm7570 = vweird.f32 %v7530
    %vm7571 = vweird.f32 %v7564
    %vm7572 = vmor %vm7570, %vm7571
    %v7573 = vsel %vm7572, %v7564, %v7569
    %v7574 = vrsqrt.pop %v7531
    %v7575 = vmul.f32 %v7574, %v7531
    %v7576 = vmul.f32 %v7575, %v7574
    %v7577 = vmul.f32 0.5, %v7576
    %v7578 = vsub.f32 1.5, %v7577
    %v7579 = vmul.f32 %v7574, %v7578
    %vm7580 = vweird.f32 %v7531
    %vm7581 = vweird.f32 %v7574
    %vm7582 = vmor %vm7580, %vm7581
    %v7583 = vsel %vm7582, %v7574, %v7579
    %v7584 = vrsqrt.pop %v7532
    %v7585 = vmul.f32 %v7584, %v7532
    %v7586 = vmul.f32 %v7585, %v7584
    %v7587 = vmul.f32 0.5, %v7586
    %v7588 = vsub.f32 1.5, %v7587
    %v7589 = vmul.f32 %v7584, %v7588
    %vm7590 = vweird.f32 %v7532
    %vm7591 = vweird.f32 %v7584
    %vm7592 = vmor %vm7590, %vm7591
    %v7593 = vsel %vm7592, %v7584, %v7589
    %v7594 = vrsqrt.pop %v7533
    %v7595 = vmul.f32 %v7594, %v7533
    %v7596 = vmul.f32 %v7595, %v7594
    %v7597 = vmul.f32 0.5, %v7596
    %v7598 = vsub.f32 1.5, %v7597
    %v7599 = vmul.f32 %v7594, %v7598
    %vm7600 = vweird.f32 %v7533
    %vm7601 = vweird.f32 %v7594
    %vm7602 = vmor %vm7600, %vm7601
    %v7603 = vsel %vm7602, %v7594, %v7599
    %v7604 = vrsqrt.pop %v7534
    %v7605 = vmul.f32 %v7604, %v7534
    %v7606 = vmul.f32 %v7605, %v7604
    %v7607 = vmul.f32 0.5, %v7606
    %v7608 = vsub.f32 1.5, %v7607
    %v7609 = vmul.f32 %v7604, %v7608
    %vm7610 = vweird.f32 %v7534
    %vm7611 = vweird.f32 %v7604
    %vm7612 = vmor %vm7610, %vm7611
    %v7613 = vsel %vm7612, %v7604, %v7609
    %v7614 = vrsqrt.pop %v7535
    %v7615 = vmul.f32 %v7614, %v7535
    %v7616 = vmul.f32 %v7615, %v7614
    %v7617 = vmul.f32 0.5, %v7616
    %v7618 = vsub.f32 1.5, %v7617
    %v7619 = vmul.f32 %v7614, %v7618
    %vm7620 = vweird.f32 %v7535
    %vm7621 = vweird.f32 %v7614
    %vm7622 = vmor %vm7620, %vm7621
    %v7623 = vsel %vm7622, %v7614, %v7619
    %v7624 = vrsqrt.pop %v7536
    %v7625 = vmul.f32 %v7624, %v7536
    %v7626 = vmul.f32 %v7625, %v7624
    %v7627 = vmul.f32 0.5, %v7626
    %v7628 = vsub.f32 1.5, %v7627
    %v7629 = vmul.f32 %v7624, %v7628
    %vm7630 = vweird.f32 %v7536
    %vm7631 = vweird.f32 %v7624
    %vm7632 = vmor %vm7630, %vm7631
    %v7633 = vsel %vm7632, %v7624, %v7629
    %v7634 = vrsqrt.pop %v7537
    %v7635 = vmul.f32 %v7634, %v7537
    %v7636 = vmul.f32 %v7635, %v7634
    %v7637 = vmul.f32 0.5, %v7636
    %v7638 = vsub.f32 1.5, %v7637
    %v7639 = vmul.f32 %v7634, %v7638
    %vm7640 = vweird.f32 %v7537
    %vm7641 = vweird.f32 %v7634
    %vm7642 = vmor %vm7640, %vm7641
    %v7643 = vsel %vm7642, %v7634, %v7639
    %v7644 = vrsqrt.pop %v7538
    %v7645 = vmul.f32 %v7644, %v7538
    %v7646 = vmul.f32 %v7645, %v7644
    %v7647 = vmul.f32 0.5, %v7646
    %v7648 = vsub.f32 1.5, %v7647
    %v7649 = vmul.f32 %v7644, %v7648
    %vm7650 = vweird.f32 %v7538
    %vm7651 = vweird.f32 %v7644
    %vm7652 = vmor %vm7650, %vm7651
    %v7653 = vsel %vm7652, %v7644, %v7649
    %v7654 = vrsqrt.pop %v7539
    %v7655 = vmul.f32 %v7654, %v7539
    %v7656 = vmul.f32 %v7655, %v7654
    %v7657 = vmul.f32 0.5, %v7656
    %v7658 = vsub.f32 1.5, %v7657
    %v7659 = vmul.f32 %v7654, %v7658
    %vm7660 = vweird.f32 %v7539
    %vm7661 = vweird.f32 %v7654
    %vm7662 = vmor %vm7660, %vm7661
    %v7663 = vsel %vm7662, %v7654, %v7659
    %v7664 = vrsqrt.pop %v7540
    %v7665 = vmul.f32 %v7664, %v7540
    %v7666 = vmul.f32 %v7665, %v7664
    %v7667 = vmul.f32 0.5, %v7666
    %v7668 = vsub.f32 1.5, %v7667
    %v7669 = vmul.f32 %v7664, %v7668
    %vm7670 = vweird.f32 %v7540
    %vm7671 = vweird.f32 %v7664
    %vm7672 = vmor %vm7670, %vm7671
    %v7673 = vsel %vm7672, %v7664, %v7669
    %v7674 = vrsqrt.pop %v7541
    %v7675 = vmul.f32 %v7674, %v7541
    %v7676 = vmul.f32 %v7675, %v7674
    %v7677 = vmul.f32 0.5, %v7676
    %v7678 = vsub.f32 1.5, %v7677
    %v7679 = vmul.f32 %v7674, %v7678
    %vm7680 = vweird.f32 %v7541
    %vm7681 = vweird.f32 %v7674
    %vm7682 = vmor %vm7680, %vm7681
    %v7683 = vsel %vm7682, %v7674, %v7679
    %v7684 = vrsqrt.pop %v7542
    %v7685 = vmul.f32 %v7684, %v7542
    %v7686 = vmul.f32 %v7685, %v7684
    %v7687 = vmul.f32 0.5, %v7686
    %v7688 = vsub.f32 1.5, %v7687
    %v7689 = vmul.f32 %v7684, %v7688
    %vm7690 = vweird.f32 %v7542
    %vm7691 = vweird.f32 %v7684
    %vm7692 = vmor %vm7690, %vm7691
    %v7693 = vsel %vm7692, %v7684, %v7689
    %v7694 = vrsqrt.pop %v7543
    %v7695 = vmul.f32 %v7694, %v7543
    %v7696 = vmul.f32 %v7695, %v7694
    %v7697 = vmul.f32 0.5, %v7696
    %v7698 = vsub.f32 1.5, %v7697
    %v7699 = vmul.f32 %v7694, %v7698
    %vm7700 = vweird.f32 %v7543
    %vm7701 = vweird.f32 %v7694
    %vm7702 = vmor %vm7700, %vm7701
    %v7703 = vsel %vm7702, %v7694, %v7699
    %7705 = vset.pattern.permute.xlu0 5
    %7706 = vperm.xlu0 %7705, %v7553
    %v7707 = vpop.permute.xlu0 %7706
    %7710 = vset.pattern.permute.xlu0 5
    %7711 = vperm.xlu0 %7710, %v7563
    %v7712 = vpop.permute.xlu0 %7711
    %7715 = vset.pattern.permute.xlu0 5
    %7716 = vperm.xlu0 %7715, %v7573
    %v7717 = vpop.permute.xlu0 %7716
    %7720 = vset.pattern.permute.xlu0 5
    %7721 = vperm.xlu0 %7720, %v7583
    %v7722 = vpop.permute.xlu0 %7721
    %7725 = vset.pattern.permute.xlu0 5
    %7726 = vperm.xlu0 %7725, %v7593
    %v7727 = vpop.permute.xlu0 %7726
    %7730 = vset.pattern.permute.xlu0 5
    %7731 = vperm.xlu0 %7730, %v7603
    %v7732 = vpop.permute.xlu0 %7731
    %7735 = vset.pattern.permute.xlu0 5
    %7736 = vperm.xlu0 %7735, %v7613
    %v7737 = vpop.permute.xlu0 %7736
    %7740 = vset.pattern.permute.xlu0 5
    %7741 = vperm.xlu0 %7740, %v7623
    %v7742 = vpop.permute.xlu0 %7741
    %7745 = vset.pattern.permute.xlu0 5
    %7746 = vperm.xlu0 %7745, %v7633
    %v7747 = vpop.permute.xlu0 %7746
    %7750 = vset.pattern.permute.xlu0 5
    %7751 = vperm.xlu0 %7750, %v7643
    %v7752 = vpop.permute.xlu0 %7751
    %7755 = vset.pattern.permute.xlu0 5
    %7756 = vperm.xlu0 %7755, %v7653
    %v7757 = vpop.permute.xlu0 %7756
    %7760 = vset.pattern.permute.xlu0 5
    %7761 = vperm.xlu0 %7760, %v7663
    %v7762 = vpop.permute.xlu0 %7761
    %7765 = vset.pattern.permute.xlu0 5
    %7766 = vperm.xlu0 %7765, %v7673
    %v7767 = vpop.permute.xlu0 %7766
    %7770 = vset.pattern.permute.xlu0 5
    %7771 = vperm.xlu0 %7770, %v7683
    %v7772 = vpop.permute.xlu0 %7771
    %7775 = vset.pattern.permute.xlu0 5
    %7776 = vperm.xlu0 %7775, %v7693
    %v7777 = vpop.permute.xlu0 %7776
    %7780 = vset.pattern.permute.xlu0 5
    %7781 = vperm.xlu0 %7780, %v7703
    %v7782 = vpop.permute.xlu0 %7781
    %v7784 = vmul.f32 %v6432, %v7707
    %v7785 = vmul.f32 %v6433, %v7712
    %v7786 = vmul.f32 %v6434, %v7717
    %v7787 = vmul.f32 %v6435, %v7722
    %v7788 = vmul.f32 %v6436, %v7727
    %v7789 = vmul.f32 %v6437, %v7732
    %v7790 = vmul.f32 %v6438, %v7737
    %v7791 = vmul.f32 %v6439, %v7742
    %v7792 = vmul.f32 %v6440, %v7747
    %v7793 = vmul.f32 %v6441, %v7752
    %v7794 = vmul.f32 %v6442, %v7757
    %v7795 = vmul.f32 %v6443, %v7762
    %v7796 = vmul.f32 %v6444, %v7767
    %v7797 = vmul.f32 %v6445, %v7772
    %v7798 = vmul.f32 %v6446, %v7777
    %v7799 = vmul.f32 %v6447, %v7782
    %7816 = vrot.lane.b32.xlu0 %v7352, 5
    %v7817 = vpop.permute.xlu0 %7816
    %7818 = vrot.lane.b32.xlu0 %v7353, 5
    %v7819 = vpop.permute.xlu0 %7818
    %7820 = vrot.lane.b32.xlu0 %v7354, 5
    %v7821 = vpop.permute.xlu0 %7820
    %7822 = vrot.lane.b32.xlu0 %v7355, 5
    %v7823 = vpop.permute.xlu0 %7822
    %7824 = vrot.lane.b32.xlu0 %v7356, 5
    %v7825 = vpop.permute.xlu0 %7824
    %7826 = vrot.lane.b32.xlu0 %v7357, 5
    %v7827 = vpop.permute.xlu0 %7826
    %7828 = vrot.lane.b32.xlu0 %v7358, 5
    %v7829 = vpop.permute.xlu0 %7828
    %7830 = vrot.lane.b32.xlu0 %v7359, 5
    %v7831 = vpop.permute.xlu0 %7830
    %7832 = vrot.lane.b32.xlu0 %v7360, 5
    %v7833 = vpop.permute.xlu0 %7832
    %7834 = vrot.lane.b32.xlu0 %v7361, 5
    %v7835 = vpop.permute.xlu0 %7834
    %7836 = vrot.lane.b32.xlu0 %v7362, 5
    %v7837 = vpop.permute.xlu0 %7836
    %7838 = vrot.lane.b32.xlu0 %v7363, 5
    %v7839 = vpop.permute.xlu0 %7838
    %7840 = vrot.lane.b32.xlu0 %v7364, 5
    %v7841 = vpop.permute.xlu0 %7840
    %7842 = vrot.lane.b32.xlu0 %v7365, 5
    %v7843 = vpop.permute.xlu0 %7842
    %7844 = vrot.lane.b32.xlu0 %v7366, 5
    %v7845 = vpop.permute.xlu0 %7844
    %7846 = vrot.lane.b32.xlu0 %v7367, 5
    %v7847 = vpop.permute.xlu0 %7846
    %v7864 = vmul.f32 %v7784, %v7817
    %v7865 = vmul.f32 %v7785, %v7819
    %v7866 = vmul.f32 %v7786, %v7821
    %v7867 = vmul.f32 %v7787, %v7823
    %v7868 = vmul.f32 %v7788, %v7825
    %v7869 = vmul.f32 %v7789, %v7827
    %v7870 = vmul.f32 %v7790, %v7829
    %v7871 = vmul.f32 %v7791, %v7831
    %v7872 = vmul.f32 %v7792, %v7833
    %v7873 = vmul.f32 %v7793, %v7835
    %v7874 = vmul.f32 %v7794, %v7837
    %v7875 = vmul.f32 %v7795, %v7839
    %v7876 = vmul.f32 %v7796, %v7841
    %v7877 = vmul.f32 %v7797, %v7843
    %v7878 = vmul.f32 %v7798, %v7845
    %v7879 = vmul.f32 %v7799, %v7847
    %7896 = vrot.lane.b32.xlu0 %v7864, 127
    %v7897 = vpop.permute.xlu0 %7896
    %7898 = vrot.lane.b32.xlu0 %v7865, 127
    %v7899 = vpop.permute.xlu0 %7898
    %7900 = vrot.lane.b32.xlu0 %v7866, 127
    %v7901 = vpop.permute.xlu0 %7900
    %7902 = vrot.lane.b32.xlu0 %v7867, 127
    %v7903 = vpop.permute.xlu0 %7902
    %7904 = vrot.lane.b32.xlu0 %v7868, 127
    %v7905 = vpop.permute.xlu0 %7904
    %7906 = vrot.lane.b32.xlu0 %v7869, 127
    %v7907 = vpop.permute.xlu0 %7906
    %7908 = vrot.lane.b32.xlu0 %v7870, 127
    %v7909 = vpop.permute.xlu0 %7908
    %7910 = vrot.lane.b32.xlu0 %v7871, 127
    %v7911 = vpop.permute.xlu0 %7910
    %7912 = vrot.lane.b32.xlu0 %v7872, 127
    %v7913 = vpop.permute.xlu0 %7912
    %7914 = vrot.lane.b32.xlu0 %v7873, 127
    %v7915 = vpop.permute.xlu0 %7914
    %7916 = vrot.lane.b32.xlu0 %v7874, 127
    %v7917 = vpop.permute.xlu0 %7916
    %7918 = vrot.lane.b32.xlu0 %v7875, 127
    %v7919 = vpop.permute.xlu0 %7918
    %7920 = vrot.lane.b32.xlu0 %v7876, 127
    %v7921 = vpop.permute.xlu0 %7920
    %7922 = vrot.lane.b32.xlu0 %v7877, 127
    %v7923 = vpop.permute.xlu0 %7922
    %7924 = vrot.lane.b32.xlu0 %v7878, 127
    %v7925 = vpop.permute.xlu0 %7924
    %7926 = vrot.lane.b32.xlu0 %v7879, 127
    %v7927 = vpop.permute.xlu0 %7926
    %v7944 = vadd.f32 %v7864, %v7897
    %v7945 = vadd.f32 %v7865, %v7899
    %v7946 = vadd.f32 %v7866, %v7901
    %v7947 = vadd.f32 %v7867, %v7903
    %v7948 = vadd.f32 %v7868, %v7905
    %v7949 = vadd.f32 %v7869, %v7907
    %v7950 = vadd.f32 %v7870, %v7909
    %v7951 = vadd.f32 %v7871, %v7911
    %v7952 = vadd.f32 %v7872, %v7913
    %v7953 = vadd.f32 %v7873, %v7915
    %v7954 = vadd.f32 %v7874, %v7917
    %v7955 = vadd.f32 %v7875, %v7919
    %v7956 = vadd.f32 %v7876, %v7921
    %v7957 = vadd.f32 %v7877, %v7923
    %v7958 = vadd.f32 %v7878, %v7925
    %v7959 = vadd.f32 %v7879, %v7927
    %7960 = vrot.lane.b32.xlu0 %v7864, 126
    %v7961 = vpop.permute.xlu0 %7960
    %7962 = vrot.lane.b32.xlu0 %v7865, 126
    %v7963 = vpop.permute.xlu0 %7962
    %7964 = vrot.lane.b32.xlu0 %v7866, 126
    %v7965 = vpop.permute.xlu0 %7964
    %7966 = vrot.lane.b32.xlu0 %v7867, 126
    %v7967 = vpop.permute.xlu0 %7966
    %7968 = vrot.lane.b32.xlu0 %v7868, 126
    %v7969 = vpop.permute.xlu0 %7968
    %7970 = vrot.lane.b32.xlu0 %v7869, 126
    %v7971 = vpop.permute.xlu0 %7970
    %7972 = vrot.lane.b32.xlu0 %v7870, 126
    %v7973 = vpop.permute.xlu0 %7972
    %7974 = vrot.lane.b32.xlu0 %v7871, 126
    %v7975 = vpop.permute.xlu0 %7974
    %7976 = vrot.lane.b32.xlu0 %v7872, 126
    %v7977 = vpop.permute.xlu0 %7976
    %7978 = vrot.lane.b32.xlu0 %v7873, 126
    %v7979 = vpop.permute.xlu0 %7978
    %7980 = vrot.lane.b32.xlu0 %v7874, 126
    %v7981 = vpop.permute.xlu0 %7980
    %7982 = vrot.lane.b32.xlu0 %v7875, 126
    %v7983 = vpop.permute.xlu0 %7982
    %7984 = vrot.lane.b32.xlu0 %v7876, 126
    %v7985 = vpop.permute.xlu0 %7984
    %7986 = vrot.lane.b32.xlu0 %v7877, 126
    %v7987 = vpop.permute.xlu0 %7986
    %7988 = vrot.lane.b32.xlu0 %v7878, 126
    %v7989 = vpop.permute.xlu0 %7988
    %7990 = vrot.lane.b32.xlu0 %v7879, 126
    %v7991 = vpop.permute.xlu0 %7990
    %v8008 = vadd.f32 %v7944, %v7961
    %v8009 = vadd.f32 %v7945, %v7963
    %v8010 = vadd.f32 %v7946, %v7965
    %v8011 = vadd.f32 %v7947, %v7967
    %v8012 = vadd.f32 %v7948, %v7969
    %v8013 = vadd.f32 %v7949, %v7971
    %v8014 = vadd.f32 %v7950, %v7973
    %v8015 = vadd.f32 %v7951, %v7975
    %v8016 = vadd.f32 %v7952, %v7977
    %v8017 = vadd.f32 %v7953, %v7979
    %v8018 = vadd.f32 %v7954, %v7981
    %v8019 = vadd.f32 %v7955, %v7983
    %v8020 = vadd.f32 %v7956, %v7985
    %v8021 = vadd.f32 %v7957, %v7987
    %v8022 = vadd.f32 %v7958, %v7989
    %v8023 = vadd.f32 %v7959, %v7991
    %v8024 = vmax.f32 %v8008, 0.0
    %v8025 = vmax.f32 %v8009, 0.0
    %v8026 = vmax.f32 %v8010, 0.0
    %v8027 = vmax.f32 %v8011, 0.0
    %v8028 = vmax.f32 %v8012, 0.0
    %v8029 = vmax.f32 %v8013, 0.0
    %v8030 = vmax.f32 %v8014, 0.0
    %v8031 = vmax.f32 %v8015, 0.0
    %v8032 = vmax.f32 %v8016, 0.0
    %v8033 = vmax.f32 %v8017, 0.0
    %v8034 = vmax.f32 %v8018, 0.0
    %v8035 = vmax.f32 %v8019, 0.0
    %v8036 = vmax.f32 %v8020, 0.0
    %v8037 = vmax.f32 %v8021, 0.0
    %v8038 = vmax.f32 %v8022, 0.0
    %v8039 = vmax.f32 %v8023, 0.0
    %v8040 = vmul.f32 %v8008, 2.0
    %v8041 = vmul.f32 %v8009, 2.0
    %v8042 = vmul.f32 %v8010, 2.0
    %v8043 = vmul.f32 %v8011, 2.0
    %v8044 = vmul.f32 %v8012, 2.0
    %v8045 = vmul.f32 %v8013, 2.0
    %v8046 = vmul.f32 %v8014, 2.0
    %v8047 = vmul.f32 %v8015, 2.0
    %v8048 = vmul.f32 %v8016, 2.0
    %v8049 = vmul.f32 %v8017, 2.0
    %v8050 = vmul.f32 %v8018, 2.0
    %v8051 = vmul.f32 %v8019, 2.0
    %v8052 = vmul.f32 %v8020, 2.0
    %v8053 = vmul.f32 %v8021, 2.0
    %v8054 = vmul.f32 %v8022, 2.0
    %v8055 = vmul.f32 %v8023, 2.0
    %8057 = vset.pattern.permute.xlu0 5
    %8058 = vperm.xlu0 %8057, %v8040
    %v8059 = vpop.permute.xlu0 %8058
    %8062 = vset.pattern.permute.xlu0 5
    %8063 = vperm.xlu0 %8062, %v8041
    %v8064 = vpop.permute.xlu0 %8063
    %8067 = vset.pattern.permute.xlu0 5
    %8068 = vperm.xlu0 %8067, %v8042
    %v8069 = vpop.permute.xlu0 %8068
    %8072 = vset.pattern.permute.xlu0 5
    %8073 = vperm.xlu0 %8072, %v8043
    %v8074 = vpop.permute.xlu0 %8073
    %8077 = vset.pattern.permute.xlu0 5
    %8078 = vperm.xlu0 %8077, %v8044
    %v8079 = vpop.permute.xlu0 %8078
    %8082 = vset.pattern.permute.xlu0 5
    %8083 = vperm.xlu0 %8082, %v8045
    %v8084 = vpop.permute.xlu0 %8083
    %8087 = vset.pattern.permute.xlu0 5
    %8088 = vperm.xlu0 %8087, %v8046
    %v8089 = vpop.permute.xlu0 %8088
    %8092 = vset.pattern.permute.xlu0 5
    %8093 = vperm.xlu0 %8092, %v8047
    %v8094 = vpop.permute.xlu0 %8093
    %8097 = vset.pattern.permute.xlu0 5
    %8098 = vperm.xlu0 %8097, %v8048
    %v8099 = vpop.permute.xlu0 %8098
    %8102 = vset.pattern.permute.xlu0 5
    %8103 = vperm.xlu0 %8102, %v8049
    %v8104 = vpop.permute.xlu0 %8103
    %8107 = vset.pattern.permute.xlu0 5
    %8108 = vperm.xlu0 %8107, %v8050
    %v8109 = vpop.permute.xlu0 %8108
    %8112 = vset.pattern.permute.xlu0 5
    %8113 = vperm.xlu0 %8112, %v8051
    %v8114 = vpop.permute.xlu0 %8113
    %8117 = vset.pattern.permute.xlu0 5
    %8118 = vperm.xlu0 %8117, %v8052
    %v8119 = vpop.permute.xlu0 %8118
    %8122 = vset.pattern.permute.xlu0 5
    %8123 = vperm.xlu0 %8122, %v8053
    %v8124 = vpop.permute.xlu0 %8123
    %8127 = vset.pattern.permute.xlu0 5
    %8128 = vperm.xlu0 %8127, %v8054
    %v8129 = vpop.permute.xlu0 %8128
    %8132 = vset.pattern.permute.xlu0 5
    %8133 = vperm.xlu0 %8132, %v8055
    %v8134 = vpop.permute.xlu0 %8133
    %v8136 = vmul.f32 %v8059, %v7784
    %v8137 = vmul.f32 %v8064, %v7785
    %v8138 = vmul.f32 %v8069, %v7786
    %v8139 = vmul.f32 %v8074, %v7787
    %v8140 = vmul.f32 %v8079, %v7788
    %v8141 = vmul.f32 %v8084, %v7789
    %v8142 = vmul.f32 %v8089, %v7790
    %v8143 = vmul.f32 %v8094, %v7791
    %v8144 = vmul.f32 %v8099, %v7792
    %v8145 = vmul.f32 %v8104, %v7793
    %v8146 = vmul.f32 %v8109, %v7794
    %v8147 = vmul.f32 %v8114, %v7795
    %v8148 = vmul.f32 %v8119, %v7796
    %v8149 = vmul.f32 %v8124, %v7797
    %v8150 = vmul.f32 %v8129, %v7798
    %v8151 = vmul.f32 %v8134, %v7799
    %8168 = vrot.lane.b32.xlu0 %v8136, 123
    %v8169 = vpop.permute.xlu0 %8168
    %8170 = vrot.lane.b32.xlu0 %v8137, 123
    %v8171 = vpop.permute.xlu0 %8170
    %8172 = vrot.lane.b32.xlu0 %v8138, 123
    %v8173 = vpop.permute.xlu0 %8172
    %8174 = vrot.lane.b32.xlu0 %v8139, 123
    %v8175 = vpop.permute.xlu0 %8174
    %8176 = vrot.lane.b32.xlu0 %v8140, 123
    %v8177 = vpop.permute.xlu0 %8176
    %8178 = vrot.lane.b32.xlu0 %v8141, 123
    %v8179 = vpop.permute.xlu0 %8178
    %8180 = vrot.lane.b32.xlu0 %v8142, 123
    %v8181 = vpop.permute.xlu0 %8180
    %8182 = vrot.lane.b32.xlu0 %v8143, 123
    %v8183 = vpop.permute.xlu0 %8182
    %8184 = vrot.lane.b32.xlu0 %v8144, 123
    %v8185 = vpop.permute.xlu0 %8184
    %8186 = vrot.lane.b32.xlu0 %v8145, 123
    %v8187 = vpop.permute.xlu0 %8186
    %8188 = vrot.lane.b32.xlu0 %v8146, 123
    %v8189 = vpop.permute.xlu0 %8188
    %8190 = vrot.lane.b32.xlu0 %v8147, 123
    %v8191 = vpop.permute.xlu0 %8190
    %8192 = vrot.lane.b32.xlu0 %v8148, 123
    %v8193 = vpop.permute.xlu0 %8192
    %8194 = vrot.lane.b32.xlu0 %v8149, 123
    %v8195 = vpop.permute.xlu0 %8194
    %8196 = vrot.lane.b32.xlu0 %v8150, 123
    %v8197 = vpop.permute.xlu0 %8196
    %8198 = vrot.lane.b32.xlu0 %v8151, 123
    %v8199 = vpop.permute.xlu0 %8198
    %v8216 = vsub.f32 %v6920, %v8169
    %v8217 = vsub.f32 %v6921, %v8171
    %v8218 = vsub.f32 %v6922, %v8173
    %v8219 = vsub.f32 %v6923, %v8175
    %v8220 = vsub.f32 %v6924, %v8177
    %v8221 = vsub.f32 %v6925, %v8179
    %v8222 = vsub.f32 %v6926, %v8181
    %v8223 = vsub.f32 %v6927, %v8183
    %v8224 = vsub.f32 %v6928, %v8185
    %v8225 = vsub.f32 %v6929, %v8187
    %v8226 = vsub.f32 %v6930, %v8189
    %v8227 = vsub.f32 %v6931, %v8191
    %v8228 = vsub.f32 %v6932, %v8193
    %v8229 = vsub.f32 %v6933, %v8195
    %v8230 = vsub.f32 %v6934, %v8197
    %v8231 = vsub.f32 %v6935, %v8199
    %v8232 = vmul.f32 %v6920, %v8216
    %v8233 = vmul.f32 %v6921, %v8217
    %v8234 = vmul.f32 %v6922, %v8218
    %v8235 = vmul.f32 %v6923, %v8219
    %v8236 = vmul.f32 %v6924, %v8220
    %v8237 = vmul.f32 %v6925, %v8221
    %v8238 = vmul.f32 %v6926, %v8222
    %v8239 = vmul.f32 %v6927, %v8223
    %v8240 = vmul.f32 %v6928, %v8224
    %v8241 = vmul.f32 %v6929, %v8225
    %v8242 = vmul.f32 %v6930, %v8226
    %v8243 = vmul.f32 %v6931, %v8227
    %v8244 = vmul.f32 %v6932, %v8228
    %v8245 = vmul.f32 %v6933, %v8229
    %v8246 = vmul.f32 %v6934, %v8230
    %v8247 = vmul.f32 %v6935, %v8231
    %8264 = vrot.lane.b32.xlu0 %v8232, 127
    %v8265 = vpop.permute.xlu0 %8264
    %8266 = vrot.lane.b32.xlu0 %v8233, 127
    %v8267 = vpop.permute.xlu0 %8266
    %8268 = vrot.lane.b32.xlu0 %v8234, 127
    %v8269 = vpop.permute.xlu0 %8268
    %8270 = vrot.lane.b32.xlu0 %v8235, 127
    %v8271 = vpop.permute.xlu0 %8270
    %8272 = vrot.lane.b32.xlu0 %v8236, 127
    %v8273 = vpop.permute.xlu0 %8272
    %8274 = vrot.lane.b32.xlu0 %v8237, 127
    %v8275 = vpop.permute.xlu0 %8274
    %8276 = vrot.lane.b32.xlu0 %v8238, 127
    %v8277 = vpop.permute.xlu0 %8276
    %8278 = vrot.lane.b32.xlu0 %v8239, 127
    %v8279 = vpop.permute.xlu0 %8278
    %8280 = vrot.lane.b32.xlu0 %v8240, 127
    %v8281 = vpop.permute.xlu0 %8280
    %8282 = vrot.lane.b32.xlu0 %v8241, 127
    %v8283 = vpop.permute.xlu0 %8282
    %8284 = vrot.lane.b32.xlu0 %v8242, 127
    %v8285 = vpop.permute.xlu0 %8284
    %8286 = vrot.lane.b32.xlu0 %v8243, 127
    %v8287 = vpop.permute.xlu0 %8286
    %8288 = vrot.lane.b32.xlu0 %v8244, 127
    %v8289 = vpop.permute.xlu0 %8288
    %8290 = vrot.lane.b32.xlu0 %v8245, 127
    %v8291 = vpop.permute.xlu0 %8290
    %8292 = vrot.lane.b32.xlu0 %v8246, 127
    %v8293 = vpop.permute.xlu0 %8292
    %8294 = vrot.lane.b32.xlu0 %v8247, 127
    %v8295 = vpop.permute.xlu0 %8294
    %v8312 = vadd.f32 %v8232, %v8265
    %v8313 = vadd.f32 %v8233, %v8267
    %v8314 = vadd.f32 %v8234, %v8269
    %v8315 = vadd.f32 %v8235, %v8271
    %v8316 = vadd.f32 %v8236, %v8273
    %v8317 = vadd.f32 %v8237, %v8275
    %v8318 = vadd.f32 %v8238, %v8277
    %v8319 = vadd.f32 %v8239, %v8279
    %v8320 = vadd.f32 %v8240, %v8281
    %v8321 = vadd.f32 %v8241, %v8283
    %v8322 = vadd.f32 %v8242, %v8285
    %v8323 = vadd.f32 %v8243, %v8287
    %v8324 = vadd.f32 %v8244, %v8289
    %v8325 = vadd.f32 %v8245, %v8291
    %v8326 = vadd.f32 %v8246, %v8293
    %v8327 = vadd.f32 %v8247, %v8295
    %8328 = vrot.lane.b32.xlu0 %v8232, 126
    %v8329 = vpop.permute.xlu0 %8328
    %8330 = vrot.lane.b32.xlu0 %v8233, 126
    %v8331 = vpop.permute.xlu0 %8330
    %8332 = vrot.lane.b32.xlu0 %v8234, 126
    %v8333 = vpop.permute.xlu0 %8332
    %8334 = vrot.lane.b32.xlu0 %v8235, 126
    %v8335 = vpop.permute.xlu0 %8334
    %8336 = vrot.lane.b32.xlu0 %v8236, 126
    %v8337 = vpop.permute.xlu0 %8336
    %8338 = vrot.lane.b32.xlu0 %v8237, 126
    %v8339 = vpop.permute.xlu0 %8338
    %8340 = vrot.lane.b32.xlu0 %v8238, 126
    %v8341 = vpop.permute.xlu0 %8340
    %8342 = vrot.lane.b32.xlu0 %v8239, 126
    %v8343 = vpop.permute.xlu0 %8342
    %8344 = vrot.lane.b32.xlu0 %v8240, 126
    %v8345 = vpop.permute.xlu0 %8344
    %8346 = vrot.lane.b32.xlu0 %v8241, 126
    %v8347 = vpop.permute.xlu0 %8346
    %8348 = vrot.lane.b32.xlu0 %v8242, 126
    %v8349 = vpop.permute.xlu0 %8348
    %8350 = vrot.lane.b32.xlu0 %v8243, 126
    %v8351 = vpop.permute.xlu0 %8350
    %8352 = vrot.lane.b32.xlu0 %v8244, 126
    %v8353 = vpop.permute.xlu0 %8352
    %8354 = vrot.lane.b32.xlu0 %v8245, 126
    %v8355 = vpop.permute.xlu0 %8354
    %8356 = vrot.lane.b32.xlu0 %v8246, 126
    %v8357 = vpop.permute.xlu0 %8356
    %8358 = vrot.lane.b32.xlu0 %v8247, 126
    %v8359 = vpop.permute.xlu0 %8358
    %v8376 = vadd.f32 %v8312, %v8329
    %v8377 = vadd.f32 %v8313, %v8331
    %v8378 = vadd.f32 %v8314, %v8333
    %v8379 = vadd.f32 %v8315, %v8335
    %v8380 = vadd.f32 %v8316, %v8337
    %v8381 = vadd.f32 %v8317, %v8339
    %v8382 = vadd.f32 %v8318, %v8341
    %v8383 = vadd.f32 %v8319, %v8343
    %v8384 = vadd.f32 %v8320, %v8345
    %v8385 = vadd.f32 %v8321, %v8347
    %v8386 = vadd.f32 %v8322, %v8349
    %v8387 = vadd.f32 %v8323, %v8351
    %v8388 = vadd.f32 %v8324, %v8353
    %v8389 = vadd.f32 %v8325, %v8355
    %v8390 = vadd.f32 %v8326, %v8357
    %v8391 = vadd.f32 %v8327, %v8359
    %v8392 = vmax.f32 %v8376, 0.0
    %v8393 = vmax.f32 %v8377, 0.0
    %v8394 = vmax.f32 %v8378, 0.0
    %v8395 = vmax.f32 %v8379, 0.0
    %v8396 = vmax.f32 %v8380, 0.0
    %v8397 = vmax.f32 %v8381, 0.0
    %v8398 = vmax.f32 %v8382, 0.0
    %v8399 = vmax.f32 %v8383, 0.0
    %v8400 = vmax.f32 %v8384, 0.0
    %v8401 = vmax.f32 %v8385, 0.0
    %v8402 = vmax.f32 %v8386, 0.0
    %v8403 = vmax.f32 %v8387, 0.0
    %v8404 = vmax.f32 %v8388, 0.0
    %v8405 = vmax.f32 %v8389, 0.0
    %v8406 = vmax.f32 %v8390, 0.0
    %v8407 = vmax.f32 %v8391, 0.0
    %v8408 = vmul.f32 %v8216, %v8216
    %v8409 = vmul.f32 %v8217, %v8217
    %v8410 = vmul.f32 %v8218, %v8218
    %v8411 = vmul.f32 %v8219, %v8219
    %v8412 = vmul.f32 %v8220, %v8220
    %v8413 = vmul.f32 %v8221, %v8221
    %v8414 = vmul.f32 %v8222, %v8222
    %v8415 = vmul.f32 %v8223, %v8223
    %v8416 = vmul.f32 %v8224, %v8224
    %v8417 = vmul.f32 %v8225, %v8225
    %v8418 = vmul.f32 %v8226, %v8226
    %v8419 = vmul.f32 %v8227, %v8227
    %v8420 = vmul.f32 %v8228, %v8228
    %v8421 = vmul.f32 %v8229, %v8229
    %v8422 = vmul.f32 %v8230, %v8230
    %v8423 = vmul.f32 %v8231, %v8231
    %8440 = vrot.lane.b32.xlu0 %v8408, 127
    %v8441 = vpop.permute.xlu0 %8440
    %8442 = vrot.lane.b32.xlu0 %v8409, 127
    %v8443 = vpop.permute.xlu0 %8442
    %8444 = vrot.lane.b32.xlu0 %v8410, 127
    %v8445 = vpop.permute.xlu0 %8444
    %8446 = vrot.lane.b32.xlu0 %v8411, 127
    %v8447 = vpop.permute.xlu0 %8446
    %8448 = vrot.lane.b32.xlu0 %v8412, 127
    %v8449 = vpop.permute.xlu0 %8448
    %8450 = vrot.lane.b32.xlu0 %v8413, 127
    %v8451 = vpop.permute.xlu0 %8450
    %8452 = vrot.lane.b32.xlu0 %v8414, 127
    %v8453 = vpop.permute.xlu0 %8452
    %8454 = vrot.lane.b32.xlu0 %v8415, 127
    %v8455 = vpop.permute.xlu0 %8454
    %8456 = vrot.lane.b32.xlu0 %v8416, 127
    %v8457 = vpop.permute.xlu0 %8456
    %8458 = vrot.lane.b32.xlu0 %v8417, 127
    %v8459 = vpop.permute.xlu0 %8458
    %8460 = vrot.lane.b32.xlu0 %v8418, 127
    %v8461 = vpop.permute.xlu0 %8460
    %8462 = vrot.lane.b32.xlu0 %v8419, 127
    %v8463 = vpop.permute.xlu0 %8462
    %8464 = vrot.lane.b32.xlu0 %v8420, 127
    %v8465 = vpop.permute.xlu0 %8464
    %8466 = vrot.lane.b32.xlu0 %v8421, 127
    %v8467 = vpop.permute.xlu0 %8466
    %8468 = vrot.lane.b32.xlu0 %v8422, 127
    %v8469 = vpop.permute.xlu0 %8468
    %8470 = vrot.lane.b32.xlu0 %v8423, 127
    %v8471 = vpop.permute.xlu0 %8470
    %v8488 = vadd.f32 %v8408, %v8441
    %v8489 = vadd.f32 %v8409, %v8443
    %v8490 = vadd.f32 %v8410, %v8445
    %v8491 = vadd.f32 %v8411, %v8447
    %v8492 = vadd.f32 %v8412, %v8449
    %v8493 = vadd.f32 %v8413, %v8451
    %v8494 = vadd.f32 %v8414, %v8453
    %v8495 = vadd.f32 %v8415, %v8455
    %v8496 = vadd.f32 %v8416, %v8457
    %v8497 = vadd.f32 %v8417, %v8459
    %v8498 = vadd.f32 %v8418, %v8461
    %v8499 = vadd.f32 %v8419, %v8463
    %v8500 = vadd.f32 %v8420, %v8465
    %v8501 = vadd.f32 %v8421, %v8467
    %v8502 = vadd.f32 %v8422, %v8469
    %v8503 = vadd.f32 %v8423, %v8471
    %8504 = vrot.lane.b32.xlu0 %v8408, 126
    %v8505 = vpop.permute.xlu0 %8504
    %8506 = vrot.lane.b32.xlu0 %v8409, 126
    %v8507 = vpop.permute.xlu0 %8506
    %8508 = vrot.lane.b32.xlu0 %v8410, 126
    %v8509 = vpop.permute.xlu0 %8508
    %8510 = vrot.lane.b32.xlu0 %v8411, 126
    %v8511 = vpop.permute.xlu0 %8510
    %8512 = vrot.lane.b32.xlu0 %v8412, 126
    %v8513 = vpop.permute.xlu0 %8512
    %8514 = vrot.lane.b32.xlu0 %v8413, 126
    %v8515 = vpop.permute.xlu0 %8514
    %8516 = vrot.lane.b32.xlu0 %v8414, 126
    %v8517 = vpop.permute.xlu0 %8516
    %8518 = vrot.lane.b32.xlu0 %v8415, 126
    %v8519 = vpop.permute.xlu0 %8518
    %8520 = vrot.lane.b32.xlu0 %v8416, 126
    %v8521 = vpop.permute.xlu0 %8520
    %8522 = vrot.lane.b32.xlu0 %v8417, 126
    %v8523 = vpop.permute.xlu0 %8522
    %8524 = vrot.lane.b32.xlu0 %v8418, 126
    %v8525 = vpop.permute.xlu0 %8524
    %8526 = vrot.lane.b32.xlu0 %v8419, 126
    %v8527 = vpop.permute.xlu0 %8526
    %8528 = vrot.lane.b32.xlu0 %v8420, 126
    %v8529 = vpop.permute.xlu0 %8528
    %8530 = vrot.lane.b32.xlu0 %v8421, 126
    %v8531 = vpop.permute.xlu0 %8530
    %8532 = vrot.lane.b32.xlu0 %v8422, 126
    %v8533 = vpop.permute.xlu0 %8532
    %8534 = vrot.lane.b32.xlu0 %v8423, 126
    %v8535 = vpop.permute.xlu0 %8534
    %v8552 = vadd.f32 %v8488, %v8505
    %v8553 = vadd.f32 %v8489, %v8507
    %v8554 = vadd.f32 %v8490, %v8509
    %v8555 = vadd.f32 %v8491, %v8511
    %v8556 = vadd.f32 %v8492, %v8513
    %v8557 = vadd.f32 %v8493, %v8515
    %v8558 = vadd.f32 %v8494, %v8517
    %v8559 = vadd.f32 %v8495, %v8519
    %v8560 = vadd.f32 %v8496, %v8521
    %v8561 = vadd.f32 %v8497, %v8523
    %v8562 = vadd.f32 %v8498, %v8525
    %v8563 = vadd.f32 %v8499, %v8527
    %v8564 = vadd.f32 %v8500, %v8529
    %v8565 = vadd.f32 %v8501, %v8531
    %v8566 = vadd.f32 %v8502, %v8533
    %v8567 = vadd.f32 %v8503, %v8535
    %v8568 = vmax.f32 %v8552, 1e-24
    %v8569 = vmax.f32 %v8553, 1e-24
    %v8570 = vmax.f32 %v8554, 1e-24
    %v8571 = vmax.f32 %v8555, 1e-24
    %v8572 = vmax.f32 %v8556, 1e-24
    %v8573 = vmax.f32 %v8557, 1e-24
    %v8574 = vmax.f32 %v8558, 1e-24
    %v8575 = vmax.f32 %v8559, 1e-24
    %v8576 = vmax.f32 %v8560, 1e-24
    %v8577 = vmax.f32 %v8561, 1e-24
    %v8578 = vmax.f32 %v8562, 1e-24
    %v8579 = vmax.f32 %v8563, 1e-24
    %v8580 = vmax.f32 %v8564, 1e-24
    %v8581 = vmax.f32 %v8565, 1e-24
    %v8582 = vmax.f32 %v8566, 1e-24
    %v8583 = vmax.f32 %v8567, 1e-24
    %v8584 = vrsqrt.pop %v8568
    %v8585 = vmul.f32 %v8584, %v8568
    %v8586 = vmul.f32 %v8585, %v8584
    %v8587 = vmul.f32 0.5, %v8586
    %v8588 = vsub.f32 1.5, %v8587
    %v8589 = vmul.f32 %v8584, %v8588
    %vm8590 = vweird.f32 %v8568
    %vm8591 = vweird.f32 %v8584
    %vm8592 = vmor %vm8590, %vm8591
    %v8593 = vsel %vm8592, %v8584, %v8589
    %v8594 = vrsqrt.pop %v8569
    %v8595 = vmul.f32 %v8594, %v8569
    %v8596 = vmul.f32 %v8595, %v8594
    %v8597 = vmul.f32 0.5, %v8596
    %v8598 = vsub.f32 1.5, %v8597
    %v8599 = vmul.f32 %v8594, %v8598
    %vm8600 = vweird.f32 %v8569
    %vm8601 = vweird.f32 %v8594
    %vm8602 = vmor %vm8600, %vm8601
    %v8603 = vsel %vm8602, %v8594, %v8599
    %v8604 = vrsqrt.pop %v8570
    %v8605 = vmul.f32 %v8604, %v8570
    %v8606 = vmul.f32 %v8605, %v8604
    %v8607 = vmul.f32 0.5, %v8606
    %v8608 = vsub.f32 1.5, %v8607
    %v8609 = vmul.f32 %v8604, %v8608
    %vm8610 = vweird.f32 %v8570
    %vm8611 = vweird.f32 %v8604
    %vm8612 = vmor %vm8610, %vm8611
    %v8613 = vsel %vm8612, %v8604, %v8609
    %v8614 = vrsqrt.pop %v8571
    %v8615 = vmul.f32 %v8614, %v8571
    %v8616 = vmul.f32 %v8615, %v8614
    %v8617 = vmul.f32 0.5, %v8616
    %v8618 = vsub.f32 1.5, %v8617
    %v8619 = vmul.f32 %v8614, %v8618
    %vm8620 = vweird.f32 %v8571
    %vm8621 = vweird.f32 %v8614
    %vm8622 = vmor %vm8620, %vm8621
    %v8623 = vsel %vm8622, %v8614, %v8619
    %v8624 = vrsqrt.pop %v8572
    %v8625 = vmul.f32 %v8624, %v8572
    %v8626 = vmul.f32 %v8625, %v8624
    %v8627 = vmul.f32 0.5, %v8626
    %v8628 = vsub.f32 1.5, %v8627
    %v8629 = vmul.f32 %v8624, %v8628
    %vm8630 = vweird.f32 %v8572
    %vm8631 = vweird.f32 %v8624
    %vm8632 = vmor %vm8630, %vm8631
    %v8633 = vsel %vm8632, %v8624, %v8629
    %v8634 = vrsqrt.pop %v8573
    %v8635 = vmul.f32 %v8634, %v8573
    %v8636 = vmul.f32 %v8635, %v8634
    %v8637 = vmul.f32 0.5, %v8636
    %v8638 = vsub.f32 1.5, %v8637
    %v8639 = vmul.f32 %v8634, %v8638
    %vm8640 = vweird.f32 %v8573
    %vm8641 = vweird.f32 %v8634
    %vm8642 = vmor %vm8640, %vm8641
    %v8643 = vsel %vm8642, %v8634, %v8639
    %v8644 = vrsqrt.pop %v8574
    %v8645 = vmul.f32 %v8644, %v8574
    %v8646 = vmul.f32 %v8645, %v8644
    %v8647 = vmul.f32 0.5, %v8646
    %v8648 = vsub.f32 1.5, %v8647
    %v8649 = vmul.f32 %v8644, %v8648
    %vm8650 = vweird.f32 %v8574
    %vm8651 = vweird.f32 %v8644
    %vm8652 = vmor %vm8650, %vm8651
    %v8653 = vsel %vm8652, %v8644, %v8649
    %v8654 = vrsqrt.pop %v8575
    %v8655 = vmul.f32 %v8654, %v8575
    %v8656 = vmul.f32 %v8655, %v8654
    %v8657 = vmul.f32 0.5, %v8656
    %v8658 = vsub.f32 1.5, %v8657
    %v8659 = vmul.f32 %v8654, %v8658
    %vm8660 = vweird.f32 %v8575
    %vm8661 = vweird.f32 %v8654
    %vm8662 = vmor %vm8660, %vm8661
    %v8663 = vsel %vm8662, %v8654, %v8659
    %v8664 = vrsqrt.pop %v8576
    %v8665 = vmul.f32 %v8664, %v8576
    %v8666 = vmul.f32 %v8665, %v8664
    %v8667 = vmul.f32 0.5, %v8666
    %v8668 = vsub.f32 1.5, %v8667
    %v8669 = vmul.f32 %v8664, %v8668
    %vm8670 = vweird.f32 %v8576
    %vm8671 = vweird.f32 %v8664
    %vm8672 = vmor %vm8670, %vm8671
    %v8673 = vsel %vm8672, %v8664, %v8669
    %v8674 = vrsqrt.pop %v8577
    %v8675 = vmul.f32 %v8674, %v8577
    %v8676 = vmul.f32 %v8675, %v8674
    %v8677 = vmul.f32 0.5, %v8676
    %v8678 = vsub.f32 1.5, %v8677
    %v8679 = vmul.f32 %v8674, %v8678
    %vm8680 = vweird.f32 %v8577
    %vm8681 = vweird.f32 %v8674
    %vm8682 = vmor %vm8680, %vm8681
    %v8683 = vsel %vm8682, %v8674, %v8679
    %v8684 = vrsqrt.pop %v8578
    %v8685 = vmul.f32 %v8684, %v8578
    %v8686 = vmul.f32 %v8685, %v8684
    %v8687 = vmul.f32 0.5, %v8686
    %v8688 = vsub.f32 1.5, %v8687
    %v8689 = vmul.f32 %v8684, %v8688
    %vm8690 = vweird.f32 %v8578
    %vm8691 = vweird.f32 %v8684
    %vm8692 = vmor %vm8690, %vm8691
    %v8693 = vsel %vm8692, %v8684, %v8689
    %v8694 = vrsqrt.pop %v8579
    %v8695 = vmul.f32 %v8694, %v8579
    %v8696 = vmul.f32 %v8695, %v8694
    %v8697 = vmul.f32 0.5, %v8696
    %v8698 = vsub.f32 1.5, %v8697
    %v8699 = vmul.f32 %v8694, %v8698
    %vm8700 = vweird.f32 %v8579
    %vm8701 = vweird.f32 %v8694
    %vm8702 = vmor %vm8700, %vm8701
    %v8703 = vsel %vm8702, %v8694, %v8699
    %v8704 = vrsqrt.pop %v8580
    %v8705 = vmul.f32 %v8704, %v8580
    %v8706 = vmul.f32 %v8705, %v8704
    %v8707 = vmul.f32 0.5, %v8706
    %v8708 = vsub.f32 1.5, %v8707
    %v8709 = vmul.f32 %v8704, %v8708
    %vm8710 = vweird.f32 %v8580
    %vm8711 = vweird.f32 %v8704
    %vm8712 = vmor %vm8710, %vm8711
    %v8713 = vsel %vm8712, %v8704, %v8709
    %v8714 = vrsqrt.pop %v8581
    %v8715 = vmul.f32 %v8714, %v8581
    %v8716 = vmul.f32 %v8715, %v8714
    %v8717 = vmul.f32 0.5, %v8716
    %v8718 = vsub.f32 1.5, %v8717
    %v8719 = vmul.f32 %v8714, %v8718
    %vm8720 = vweird.f32 %v8581
    %vm8721 = vweird.f32 %v8714
    %vm8722 = vmor %vm8720, %vm8721
    %v8723 = vsel %vm8722, %v8714, %v8719
    %v8724 = vrsqrt.pop %v8582
    %v8725 = vmul.f32 %v8724, %v8582
    %v8726 = vmul.f32 %v8725, %v8724
    %v8727 = vmul.f32 0.5, %v8726
    %v8728 = vsub.f32 1.5, %v8727
    %v8729 = vmul.f32 %v8724, %v8728
    %vm8730 = vweird.f32 %v8582
    %vm8731 = vweird.f32 %v8724
    %vm8732 = vmor %vm8730, %vm8731
    %v8733 = vsel %vm8732, %v8724, %v8729
    %v8734 = vrsqrt.pop %v8583
    %v8735 = vmul.f32 %v8734, %v8583
    %v8736 = vmul.f32 %v8735, %v8734
    %v8737 = vmul.f32 0.5, %v8736
    %v8738 = vsub.f32 1.5, %v8737
    %v8739 = vmul.f32 %v8734, %v8738
    %vm8740 = vweird.f32 %v8583
    %vm8741 = vweird.f32 %v8734
    %vm8742 = vmor %vm8740, %vm8741
    %v8743 = vsel %vm8742, %v8734, %v8739
    %v8744 = vmul.f32 %v8392, %v8593
    %v8745 = vmul.f32 %v8393, %v8603
    %v8746 = vmul.f32 %v8394, %v8613
    %v8747 = vmul.f32 %v8395, %v8623
    %v8748 = vmul.f32 %v8396, %v8633
    %v8749 = vmul.f32 %v8397, %v8643
    %v8750 = vmul.f32 %v8398, %v8653
    %v8751 = vmul.f32 %v8399, %v8663
    %v8752 = vmul.f32 %v8400, %v8673
    %v8753 = vmul.f32 %v8401, %v8683
    %v8754 = vmul.f32 %v8402, %v8693
    %v8755 = vmul.f32 %v8403, %v8703
    %v8756 = vmul.f32 %v8404, %v8713
    %v8757 = vmul.f32 %v8405, %v8723
    %v8758 = vmul.f32 %v8406, %v8733
    %v8759 = vmul.f32 %v8407, %v8743
    %8776 = vrot.lane.b32.xlu0 %v6195, 127
    %v8777 = vpop.permute.xlu0 %8776
    %8778 = vrot.lane.b32.xlu0 %v6210, 127
    %v8779 = vpop.permute.xlu0 %8778
    %8780 = vrot.lane.b32.xlu0 %v6225, 127
    %v8781 = vpop.permute.xlu0 %8780
    %8782 = vrot.lane.b32.xlu0 %v6240, 127
    %v8783 = vpop.permute.xlu0 %8782
    %8784 = vrot.lane.b32.xlu0 %v6255, 127
    %v8785 = vpop.permute.xlu0 %8784
    %8786 = vrot.lane.b32.xlu0 %v6270, 127
    %v8787 = vpop.permute.xlu0 %8786
    %8788 = vrot.lane.b32.xlu0 %v6285, 127
    %v8789 = vpop.permute.xlu0 %8788
    %8790 = vrot.lane.b32.xlu0 %v6300, 127
    %v8791 = vpop.permute.xlu0 %8790
    %8792 = vrot.lane.b32.xlu0 %v6315, 127
    %v8793 = vpop.permute.xlu0 %8792
    %8794 = vrot.lane.b32.xlu0 %v6330, 127
    %v8795 = vpop.permute.xlu0 %8794
    %8796 = vrot.lane.b32.xlu0 %v6345, 127
    %v8797 = vpop.permute.xlu0 %8796
    %8798 = vrot.lane.b32.xlu0 %v6360, 127
    %v8799 = vpop.permute.xlu0 %8798
    %8800 = vrot.lane.b32.xlu0 %v6375, 127
    %v8801 = vpop.permute.xlu0 %8800
    %8802 = vrot.lane.b32.xlu0 %v6390, 127
    %v8803 = vpop.permute.xlu0 %8802
    %8804 = vrot.lane.b32.xlu0 %v6405, 127
    %v8805 = vpop.permute.xlu0 %8804
    %8806 = vrot.lane.b32.xlu0 %v6420, 127
    %v8807 = vpop.permute.xlu0 %8806
    %v8824 = vmul.f32 %v8744, %v8777
    %v8825 = vmul.f32 %v8745, %v8779
    %v8826 = vmul.f32 %v8746, %v8781
    %v8827 = vmul.f32 %v8747, %v8783
    %v8828 = vmul.f32 %v8748, %v8785
    %v8829 = vmul.f32 %v8749, %v8787
    %v8830 = vmul.f32 %v8750, %v8789
    %v8831 = vmul.f32 %v8751, %v8791
    %v8832 = vmul.f32 %v8752, %v8793
    %v8833 = vmul.f32 %v8753, %v8795
    %v8834 = vmul.f32 %v8754, %v8797
    %v8835 = vmul.f32 %v8755, %v8799
    %v8836 = vmul.f32 %v8756, %v8801
    %v8837 = vmul.f32 %v8757, %v8803
    %v8838 = vmul.f32 %v8758, %v8805
    %v8839 = vmul.f32 %v8759, %v8807
    %8841 = vset.pattern.permute.xlu0 5
    %8842 = vperm.xlu0 %8841, %v8024
    %v8843 = vpop.permute.xlu0 %8842
    %8846 = vset.pattern.permute.xlu0 5
    %8847 = vperm.xlu0 %8846, %v8025
    %v8848 = vpop.permute.xlu0 %8847
    %8851 = vset.pattern.permute.xlu0 5
    %8852 = vperm.xlu0 %8851, %v8026
    %v8853 = vpop.permute.xlu0 %8852
    %8856 = vset.pattern.permute.xlu0 5
    %8857 = vperm.xlu0 %8856, %v8027
    %v8858 = vpop.permute.xlu0 %8857
    %8861 = vset.pattern.permute.xlu0 5
    %8862 = vperm.xlu0 %8861, %v8028
    %v8863 = vpop.permute.xlu0 %8862
    %8866 = vset.pattern.permute.xlu0 5
    %8867 = vperm.xlu0 %8866, %v8029
    %v8868 = vpop.permute.xlu0 %8867
    %8871 = vset.pattern.permute.xlu0 5
    %8872 = vperm.xlu0 %8871, %v8030
    %v8873 = vpop.permute.xlu0 %8872
    %8876 = vset.pattern.permute.xlu0 5
    %8877 = vperm.xlu0 %8876, %v8031
    %v8878 = vpop.permute.xlu0 %8877
    %8881 = vset.pattern.permute.xlu0 5
    %8882 = vperm.xlu0 %8881, %v8032
    %v8883 = vpop.permute.xlu0 %8882
    %8886 = vset.pattern.permute.xlu0 5
    %8887 = vperm.xlu0 %8886, %v8033
    %v8888 = vpop.permute.xlu0 %8887
    %8891 = vset.pattern.permute.xlu0 5
    %8892 = vperm.xlu0 %8891, %v8034
    %v8893 = vpop.permute.xlu0 %8892
    %8896 = vset.pattern.permute.xlu0 5
    %8897 = vperm.xlu0 %8896, %v8035
    %v8898 = vpop.permute.xlu0 %8897
    %8901 = vset.pattern.permute.xlu0 5
    %8902 = vperm.xlu0 %8901, %v8036
    %v8903 = vpop.permute.xlu0 %8902
    %8906 = vset.pattern.permute.xlu0 5
    %8907 = vperm.xlu0 %8906, %v8037
    %v8908 = vpop.permute.xlu0 %8907
    %8911 = vset.pattern.permute.xlu0 5
    %8912 = vperm.xlu0 %8911, %v8038
    %v8913 = vpop.permute.xlu0 %8912
    %8916 = vset.pattern.permute.xlu0 5
    %8917 = vperm.xlu0 %8916, %v8039
    %v8918 = vpop.permute.xlu0 %8917
    %v8920 = vmul.f32 %v8843, %v6432
    %v8921 = vmul.f32 %v8848, %v6433
    %v8922 = vmul.f32 %v8853, %v6434
    %v8923 = vmul.f32 %v8858, %v6435
    %v8924 = vmul.f32 %v8863, %v6436
    %v8925 = vmul.f32 %v8868, %v6437
    %v8926 = vmul.f32 %v8873, %v6438
    %v8927 = vmul.f32 %v8878, %v6439
    %v8928 = vmul.f32 %v8883, %v6440
    %v8929 = vmul.f32 %v8888, %v6441
    %v8930 = vmul.f32 %v8893, %v6442
    %v8931 = vmul.f32 %v8898, %v6443
    %v8932 = vmul.f32 %v8903, %v6444
    %v8933 = vmul.f32 %v8908, %v6445
    %v8934 = vmul.f32 %v8913, %v6446
    %v8935 = vmul.f32 %v8918, %v6447
    %8952 = vrot.lane.b32.xlu0 %v8920, 122
    %v8953 = vpop.permute.xlu0 %8952
    %8954 = vrot.lane.b32.xlu0 %v8921, 122
    %v8955 = vpop.permute.xlu0 %8954
    %8956 = vrot.lane.b32.xlu0 %v8922, 122
    %v8957 = vpop.permute.xlu0 %8956
    %8958 = vrot.lane.b32.xlu0 %v8923, 122
    %v8959 = vpop.permute.xlu0 %8958
    %8960 = vrot.lane.b32.xlu0 %v8924, 122
    %v8961 = vpop.permute.xlu0 %8960
    %8962 = vrot.lane.b32.xlu0 %v8925, 122
    %v8963 = vpop.permute.xlu0 %8962
    %8964 = vrot.lane.b32.xlu0 %v8926, 122
    %v8965 = vpop.permute.xlu0 %8964
    %8966 = vrot.lane.b32.xlu0 %v8927, 122
    %v8967 = vpop.permute.xlu0 %8966
    %8968 = vrot.lane.b32.xlu0 %v8928, 122
    %v8969 = vpop.permute.xlu0 %8968
    %8970 = vrot.lane.b32.xlu0 %v8929, 122
    %v8971 = vpop.permute.xlu0 %8970
    %8972 = vrot.lane.b32.xlu0 %v8930, 122
    %v8973 = vpop.permute.xlu0 %8972
    %8974 = vrot.lane.b32.xlu0 %v8931, 122
    %v8975 = vpop.permute.xlu0 %8974
    %8976 = vrot.lane.b32.xlu0 %v8932, 122
    %v8977 = vpop.permute.xlu0 %8976
    %8978 = vrot.lane.b32.xlu0 %v8933, 122
    %v8979 = vpop.permute.xlu0 %8978
    %8980 = vrot.lane.b32.xlu0 %v8934, 122
    %v8981 = vpop.permute.xlu0 %8980
    %8982 = vrot.lane.b32.xlu0 %v8935, 122
    %v8983 = vpop.permute.xlu0 %8982
    %v9000 = vadd.f32 %v6432, %v8953
    %v9001 = vadd.f32 %v6433, %v8955
    %v9002 = vadd.f32 %v6434, %v8957
    %v9003 = vadd.f32 %v6435, %v8959
    %v9004 = vadd.f32 %v6436, %v8961
    %v9005 = vadd.f32 %v6437, %v8963
    %v9006 = vadd.f32 %v6438, %v8965
    %v9007 = vadd.f32 %v6439, %v8967
    %v9008 = vadd.f32 %v6440, %v8969
    %v9009 = vadd.f32 %v6441, %v8971
    %v9010 = vadd.f32 %v6442, %v8973
    %v9011 = vadd.f32 %v6443, %v8975
    %v9012 = vadd.f32 %v6444, %v8977
    %v9013 = vadd.f32 %v6445, %v8979
    %v9014 = vadd.f32 %v6446, %v8981
    %v9015 = vadd.f32 %v6447, %v8983
    %9017 = vset.pattern.permute.xlu0 0
    %9018 = vperm.xlu0 %9017, %v8824
    %v9019 = vpop.permute.xlu0 %9018
    %9022 = vset.pattern.permute.xlu0 0
    %9023 = vperm.xlu0 %9022, %v8825
    %v9024 = vpop.permute.xlu0 %9023
    %9027 = vset.pattern.permute.xlu0 0
    %9028 = vperm.xlu0 %9027, %v8826
    %v9029 = vpop.permute.xlu0 %9028
    %9032 = vset.pattern.permute.xlu0 0
    %9033 = vperm.xlu0 %9032, %v8827
    %v9034 = vpop.permute.xlu0 %9033
    %9037 = vset.pattern.permute.xlu0 0
    %9038 = vperm.xlu0 %9037, %v8828
    %v9039 = vpop.permute.xlu0 %9038
    %9042 = vset.pattern.permute.xlu0 0
    %9043 = vperm.xlu0 %9042, %v8829
    %v9044 = vpop.permute.xlu0 %9043
    %9047 = vset.pattern.permute.xlu0 0
    %9048 = vperm.xlu0 %9047, %v8830
    %v9049 = vpop.permute.xlu0 %9048
    %9052 = vset.pattern.permute.xlu0 0
    %9053 = vperm.xlu0 %9052, %v8831
    %v9054 = vpop.permute.xlu0 %9053
    %9057 = vset.pattern.permute.xlu0 0
    %9058 = vperm.xlu0 %9057, %v8832
    %v9059 = vpop.permute.xlu0 %9058
    %9062 = vset.pattern.permute.xlu0 0
    %9063 = vperm.xlu0 %9062, %v8833
    %v9064 = vpop.permute.xlu0 %9063
    %9067 = vset.pattern.permute.xlu0 0
    %9068 = vperm.xlu0 %9067, %v8834
    %v9069 = vpop.permute.xlu0 %9068
    %9072 = vset.pattern.permute.xlu0 0
    %9073 = vperm.xlu0 %9072, %v8835
    %v9074 = vpop.permute.xlu0 %9073
    %9077 = vset.pattern.permute.xlu0 0
    %9078 = vperm.xlu0 %9077, %v8836
    %v9079 = vpop.permute.xlu0 %9078
    %9082 = vset.pattern.permute.xlu0 0
    %9083 = vperm.xlu0 %9082, %v8837
    %v9084 = vpop.permute.xlu0 %9083
    %9087 = vset.pattern.permute.xlu0 0
    %9088 = vperm.xlu0 %9087, %v8838
    %v9089 = vpop.permute.xlu0 %9088
    %9092 = vset.pattern.permute.xlu0 0
    %9093 = vperm.xlu0 %9092, %v8839
    %v9094 = vpop.permute.xlu0 %9093
    %v9096 = vmul.f32 %v9019, %v6432
    %v9097 = vmul.f32 %v9024, %v6433
    %v9098 = vmul.f32 %v9029, %v6434
    %v9099 = vmul.f32 %v9034, %v6435
    %v9100 = vmul.f32 %v9039, %v6436
    %v9101 = vmul.f32 %v9044, %v6437
    %v9102 = vmul.f32 %v9049, %v6438
    %v9103 = vmul.f32 %v9054, %v6439
    %v9104 = vmul.f32 %v9059, %v6440
    %v9105 = vmul.f32 %v9064, %v6441
    %v9106 = vmul.f32 %v9069, %v6442
    %v9107 = vmul.f32 %v9074, %v6443
    %v9108 = vmul.f32 %v9079, %v6444
    %v9109 = vmul.f32 %v9084, %v6445
    %v9110 = vmul.f32 %v9089, %v6446
    %v9111 = vmul.f32 %v9094, %v6447
    %9128 = vrot.lane.b32.xlu0 %v9096, 119
    %v9129 = vpop.permute.xlu0 %9128
    %9130 = vrot.lane.b32.xlu0 %v9097, 119
    %v9131 = vpop.permute.xlu0 %9130
    %9132 = vrot.lane.b32.xlu0 %v9098, 119
    %v9133 = vpop.permute.xlu0 %9132
    %9134 = vrot.lane.b32.xlu0 %v9099, 119
    %v9135 = vpop.permute.xlu0 %9134
    %9136 = vrot.lane.b32.xlu0 %v9100, 119
    %v9137 = vpop.permute.xlu0 %9136
    %9138 = vrot.lane.b32.xlu0 %v9101, 119
    %v9139 = vpop.permute.xlu0 %9138
    %9140 = vrot.lane.b32.xlu0 %v9102, 119
    %v9141 = vpop.permute.xlu0 %9140
    %9142 = vrot.lane.b32.xlu0 %v9103, 119
    %v9143 = vpop.permute.xlu0 %9142
    %9144 = vrot.lane.b32.xlu0 %v9104, 119
    %v9145 = vpop.permute.xlu0 %9144
    %9146 = vrot.lane.b32.xlu0 %v9105, 119
    %v9147 = vpop.permute.xlu0 %9146
    %9148 = vrot.lane.b32.xlu0 %v9106, 119
    %v9149 = vpop.permute.xlu0 %9148
    %9150 = vrot.lane.b32.xlu0 %v9107, 119
    %v9151 = vpop.permute.xlu0 %9150
    %9152 = vrot.lane.b32.xlu0 %v9108, 119
    %v9153 = vpop.permute.xlu0 %9152
    %9154 = vrot.lane.b32.xlu0 %v9109, 119
    %v9155 = vpop.permute.xlu0 %9154
    %9156 = vrot.lane.b32.xlu0 %v9110, 119
    %v9157 = vpop.permute.xlu0 %9156
    %9158 = vrot.lane.b32.xlu0 %v9111, 119
    %v9159 = vpop.permute.xlu0 %9158
    %v9176 = vadd.f32 %v9000, %v9129
    %v9177 = vadd.f32 %v9001, %v9131
    %v9178 = vadd.f32 %v9002, %v9133
    %v9179 = vadd.f32 %v9003, %v9135
    %v9180 = vadd.f32 %v9004, %v9137
    %v9181 = vadd.f32 %v9005, %v9139
    %v9182 = vadd.f32 %v9006, %v9141
    %v9183 = vadd.f32 %v9007, %v9143
    %v9184 = vadd.f32 %v9008, %v9145
    %v9185 = vadd.f32 %v9009, %v9147
    %v9186 = vadd.f32 %v9010, %v9149
    %v9187 = vadd.f32 %v9011, %v9151
    %v9188 = vadd.f32 %v9012, %v9153
    %v9189 = vadd.f32 %v9013, %v9155
    %v9190 = vadd.f32 %v9014, %v9157
    %v9191 = vadd.f32 %v9015, %v9159
    %9192 = vst [vmem:[#allocation25] sm:$0xff] %v6432
    %9193 = vst [vmem:[#allocation25 + $0x8] sm:$0xff] %v6433
    %9194 = vst [vmem:[#allocation25 + $0x10] sm:$0xff] %v6434
    %9195 = vst [vmem:[#allocation25 + $0x18] sm:$0xff] %v6435
    %9196 = vst [vmem:[#allocation25 + $0x20] sm:$0xff] %v6436
    %9197 = vst [vmem:[#allocation25 + $0x28] sm:$0xff] %v6437
    %9198 = vst [vmem:[#allocation25 + $0x30] sm:$0xff] %v6438
    %9199 = vst [vmem:[#allocation25 + $0x38] sm:$0xff] %v6439
    %9200 = vst [vmem:[#allocation25 + $0x40] sm:$0xff] %v6440
    %9201 = vst [vmem:[#allocation25 + $0x48] sm:$0xff] %v6441
    %9202 = vst [vmem:[#allocation25 + $0x50] sm:$0xff] %v6442
    %9203 = vst [vmem:[#allocation25 + $0x58] sm:$0xff] %v6443
    %9204 = vst [vmem:[#allocation25 + $0x60] sm:$0xff] %v6444
    %9205 = vst [vmem:[#allocation25 + $0x68] sm:$0xff] %v6445
    %9206 = vst [vmem:[#allocation25 + $0x70] sm:$0xff] %v6446
    %9207 = vst [vmem:[#allocation25 + $0x78] sm:$0xff] %v6447
    %9224 = vrot.lane.b32.xlu0 %v9176, 12
    %v9225 = vpop.permute.xlu0 %9224
    %9226 = vrot.lane.b32.xlu0 %v9177, 12
    %v9227 = vpop.permute.xlu0 %9226
    %9228 = vrot.lane.b32.xlu0 %v9178, 12
    %v9229 = vpop.permute.xlu0 %9228
    %9230 = vrot.lane.b32.xlu0 %v9179, 12
    %v9231 = vpop.permute.xlu0 %9230
    %9232 = vrot.lane.b32.xlu0 %v9180, 12
    %v9233 = vpop.permute.xlu0 %9232
    %9234 = vrot.lane.b32.xlu0 %v9181, 12
    %v9235 = vpop.permute.xlu0 %9234
    %9236 = vrot.lane.b32.xlu0 %v9182, 12
    %v9237 = vpop.permute.xlu0 %9236
    %9238 = vrot.lane.b32.xlu0 %v9183, 12
    %v9239 = vpop.permute.xlu0 %9238
    %9240 = vrot.lane.b32.xlu0 %v9184, 12
    %v9241 = vpop.permute.xlu0 %9240
    %9242 = vrot.lane.b32.xlu0 %v9185, 12
    %v9243 = vpop.permute.xlu0 %9242
    %9244 = vrot.lane.b32.xlu0 %v9186, 12
    %v9245 = vpop.permute.xlu0 %9244
    %9246 = vrot.lane.b32.xlu0 %v9187, 12
    %v9247 = vpop.permute.xlu0 %9246
    %9248 = vrot.lane.b32.xlu0 %v9188, 12
    %v9249 = vpop.permute.xlu0 %9248
    %9250 = vrot.lane.b32.xlu0 %v9189, 12
    %v9251 = vpop.permute.xlu0 %9250
    %9252 = vrot.lane.b32.xlu0 %v9190, 12
    %v9253 = vpop.permute.xlu0 %9252
    %9254 = vrot.lane.b32.xlu0 %v9191, 12
    %v9255 = vpop.permute.xlu0 %9254
    %vm9272 = vcmask 138352
    %9273 = vst.msk [vmem:[#allocation25] sm:$0xff] %vm9272, %v9225
    %9274 = vst.msk [vmem:[#allocation25 + $0x8] sm:$0xff] %vm9272, %v9227
    %9275 = vst.msk [vmem:[#allocation25 + $0x10] sm:$0xff] %vm9272, %v9229
    %9276 = vst.msk [vmem:[#allocation25 + $0x18] sm:$0xff] %vm9272, %v9231
    %9277 = vst.msk [vmem:[#allocation25 + $0x20] sm:$0xff] %vm9272, %v9233
    %9278 = vst.msk [vmem:[#allocation25 + $0x28] sm:$0xff] %vm9272, %v9235
    %9279 = vst.msk [vmem:[#allocation25 + $0x30] sm:$0xff] %vm9272, %v9237
    %9280 = vst.msk [vmem:[#allocation25 + $0x38] sm:$0xff] %vm9272, %v9239
    %9281 = vst.msk [vmem:[#allocation25 + $0x40] sm:$0xff] %vm9272, %v9241
    %9282 = vst.msk [vmem:[#allocation25 + $0x48] sm:$0xff] %vm9272, %v9243
    %9283 = vst.msk [vmem:[#allocation25 + $0x50] sm:$0xff] %vm9272, %v9245
    %9284 = vst.msk [vmem:[#allocation25 + $0x58] sm:$0xff] %vm9272, %v9247
    %9285 = vst.msk [vmem:[#allocation25 + $0x60] sm:$0xff] %vm9272, %v9249
    %9286 = vst.msk [vmem:[#allocation25 + $0x68] sm:$0xff] %vm9272, %v9251
    %9287 = vst.msk [vmem:[#allocation25 + $0x70] sm:$0xff] %vm9272, %v9253
    %9288 = vst.msk [vmem:[#allocation25 + $0x78] sm:$0xff] %vm9272, %v9255
    // Predicated region
    $region150: #{tpu_custom_call.1} parent=1 // pred_check
      _
    $region151: #{tpu_custom_call.1} parent=1 // pred_check_branch
      %9290 = sbr.rel (0) target = $region153
    $region152: #{tpu_custom_call.1} parent=1 // pred_region
      %9292 = vsyncadd [#allocation4], 0
      %s9293 = sshll.u32 [#allocation25], 4
      %s9294 = int_to_ptr.vmem [resolvable:$true] %s9293
      %s9295 = sshll.u32 %s23, 4
      %s9296 = int_to_ptr.hbm [resolvable:$true] %s9295
      %9301 = dma.vmem_to_hbm [thread:$0]  %s9294, 2048, %s9296, [#allocation4], 128, 128, 8
    $region153: #{tpu_custom_call.1} parent=1 // pred_fallthru
      _
    // Predicated region
    $region154: #{tpu_custom_call.1} parent=1 // pred_check
      _
    $region155: #{tpu_custom_call.1} parent=1 // pred_check_branch
      %9303 = sbr.rel (0) target = $region157
    $region156: #{tpu_custom_call.1} parent=1 // pred_region
      %9305 = dma.done [#allocation4], 2048
    $region157: #{tpu_custom_call.1} parent=1 // pred_fallthru
      _
    %9306 = vsyncpa [#allocation3], 1
    %9307 = vsyncpa [#allocation6], 1
    %9308 = vsyncpa [#allocation9], 1
    %9309 = vsyncpa [#allocation12], 1
    %9310 = vsyncpa [#allocation15], 1
    %9311 = vsyncpa [#allocation18], 1
    %9312 = vsyncpa [#allocation21], 1
    %9313 = vsyncpa [#allocation24], 1
    %9314 = vsyncpa [#allocation4], 1

</llo_original>
